<compile_context>
chip_gen: v7x
topology: tpu7x:2x2x1
jax: 0.10.0
libtpu: 0.0.40
codegen_flags: <defaults>
</compile_context>

<pallas_src>
import functools

import numpy as np
import jax
import jax.numpy as jnp
from jax import lax
from jax.experimental import pallas as pl
from jax.experimental.pallas import tpu as pltpu

LANE = 128
_VMEM_LIMIT = 32 * 1024 * 1024   # explicit, safe on v5e / v6e / v7x


def _round_up(x, m):
    return ((x + m - 1) // m) * m


def _tile_rows(m, pref):
    tr = min(pref, _round_up(m, 8))
    return tr, _round_up(m, tr)


def _pad_rows_to(x, mp):
    m = x.shape[0]
    if mp == m:
        return x
    return jnp.pad(x, ((0, mp - m),) + ((0, 0),) * (x.ndim - 1))


# ----------------------------------------------------------------------------
# Pallas kernels
# ----------------------------------------------------------------------------

def _matmul_kernel(a_ref, w_ref, o_ref):
    # Plain tiled matmul (only the 7x7/stride-2 stem conv uses it; K = 49).
    o_ref[...] = jnp.dot(a_ref[...], w_ref[...],
                         preferred_element_type=jnp.float32)


def _mm_bn_relu_kernel(x_ref, m_ref, s_ref, b_ref, w_ref, o_ref):
    # Fused 1x1 conv: out = (mask ? relu(x*scale+bias) : 0) @ W.
    # jnp.where (select) also kills any garbage/NaN sitting in unwritten guard rows.
    act = jnp.where(m_ref[...] > 0.0,
                    jnp.maximum(x_ref[...] * s_ref[...] + b_ref[...], 0.0),
                    0.0)
    o_ref[...] = jnp.dot(act, w_ref[...], preferred_element_type=jnp.float32)


def _conv3x3_bn_relu_kernel(x_hbm, m_hbm, s_ref, b_ref, w_ref, o_ref,
                            a_buf, m_buf, sem, *, tm, wp, cinp, coutp):
    # Fused 3x3 / stride-1 / pad-1 conv on the flattened padded frame:
    #   out[p] = sum_{di,dj} act(x[p + (di-1)*Wp + (dj-1)]) @ W[di,dj]
    # One haloed row window [(i+1)*tm - (Wp+1), +tm + 2*(Wp+1)) is DMAed to VMEM
    # per tile; the 9 taps are static row-shifted slices of that window.
    i = pl.program_id(0)
    g = wp + 1
    rows = tm + 2 * g
    start = (i + 1) * tm - g
    cp_a = pltpu.make_async_copy(x_hbm.at[pl.ds(start, rows), :], a_buf, sem.at[0])
    cp_m = pltpu.make_async_copy(m_hbm.at[pl.ds(start, rows), :], m_buf, sem.at[1])
    cp_a.start()
    cp_m.start()
    cp_a.wait()
    cp_m.wait()
    # BN + ReLU + zero-pad mask applied once to the whole haloed window.
    a_buf[...] = jnp.where(m_buf[...] > 0.0,
                           jnp.maximum(a_buf[...] * s_ref[...] + b_ref[...], 0.0),
                           0.0)
    acc = jnp.zeros((tm, coutp), jnp.float32)
    for di in range(3):
        for dj in range(3):
            off = di * wp + dj
            t = di * 3 + dj
            a_t = a_buf[off:off + tm, :]
            w_t = w_ref[t * cinp:(t + 1) * cinp, :]
            acc = acc + jnp.dot(a_t, w_t, preferred_element_type=jnp.float32)
    o_ref[...] = acc
    # TODO(synk): double-buffer the haloed-window DMA across grid steps.


def _bn_relu_mask_kernel(x_ref, s_ref, b_ref, m_ref, o_ref):
    o_ref[...] = jnp.where(m_ref[...] > 0.0,
                           jnp.maximum(x_ref[...] * s_ref[...] + b_ref[...], 0.0),
                           0.0)


def _pool_max_kernel(*refs):
    o_ref = refs[-1]
    acc = refs[0][...]
    for r in refs[1:-1]:
        acc = jnp.maximum(acc, r[...])
    o_ref[...] = acc


def _pool_avg_kernel(*refs):
    o_ref = refs[-1]
    acc = refs[0][...]
    for r in refs[1:-1]:
        acc = acc + r[...]
    o_ref[...] = acc * (1.0 / (len(refs) - 1))


def _gap_linear_kernel(f_ref, w_ref, b_ref, o_ref):
    # Global average pool over the spatial axis + classifier matmul, per image.
    m = jnp.mean(f_ref[0], axis=0, keepdims=True)          # (1, Cp)
    y = jnp.dot(m, w_ref[...], preferred_element_type=jnp.float32) + b_ref[...]
    o_ref[0] = y


# ----------------------------------------------------------------------------
# pallas_call wrappers
# ----------------------------------------------------------------------------

def pallas_matmul(a, w, tm_pref=512):
    """(M, K) @ (K, Np) -> (M, Np), row-tiled."""
    m, k = a.shape
    n = w.shape[1]
    tr, mp = _tile_rows(m, tm_pref)
    a_p = _pad_rows_to(a, mp)
    out = pl.pallas_call(
        _matmul_kernel,
        out_shape=jax.ShapeDtypeStruct((mp, n), jnp.float32),
        grid=(mp // tr,),
        in_specs=[pl.BlockSpec((tr, k), lambda i: (i, 0)),
                  pl.BlockSpec((k, n), lambda i: (0, 0))],
        out_specs=pl.BlockSpec((tr, n), lambda i: (i, 0)),
        compiler_params=pltpu.CompilerParams(
            dimension_semantics=("parallel",), vmem_limit_bytes=_VMEM_LIMIT),
    )(a_p, w)
    return out[:m]


def fused_conv1x1(x_g, mask_g, scale, bias, w, tm):
    """Guarded flat input (R, Cp) -> fused BN+ReLU+mask + 1x1 conv -> (R, Coutp)."""
    R, cp = x_g.shape
    coutp = w.shape[1]
    nblk = (R - 2 * tm) // tm
    return pl.pallas_call(
        _mm_bn_relu_kernel,
        out_shape=jax.ShapeDtypeStruct((R, coutp), jnp.float32),
        grid=(nblk,),
        in_specs=[pl.BlockSpec((tm, cp), lambda i: (i + 1, 0)),
                  pl.BlockSpec((tm, 1), lambda i: (i + 1, 0)),
                  pl.BlockSpec((1, cp), lambda i: (0, 0)),
                  pl.BlockSpec((1, cp), lambda i: (0, 0)),
                  pl.BlockSpec((cp, coutp), lambda i: (0, 0))],
        out_specs=pl.BlockSpec((tm, coutp), lambda i: (i + 1, 0)),
        compiler_params=pltpu.CompilerParams(
            dimension_semantics=("parallel",), vmem_limit_bytes=_VMEM_LIMIT),
    )(x_g, mask_g, scale, bias, w)


def fused_conv3x3(x_g, mask_g, scale, bias, w_packed, tm, wp):
    """Guarded flat input (R, Cinp) -> fused BN+ReLU+mask + 3x3 conv -> (R, Coutp)."""
    R, cinp = x_g.shape
    coutp = w_packed.shape[1]
    nblk = (R - 2 * tm) // tm
    g = wp + 1
    kern = functools.partial(_conv3x3_bn_relu_kernel,
                             tm=tm, wp=wp, cinp=cinp, coutp=coutp)
    return pl.pallas_call(
        kern,
        out_shape=jax.ShapeDtypeStruct((R, coutp), jnp.float32),
        grid=(nblk,),
        in_specs=[pl.BlockSpec(memory_space=pl.ANY),
                  pl.BlockSpec(memory_space=pl.ANY),
                  pl.BlockSpec((1, cinp), lambda i: (0, 0)),
                  pl.BlockSpec((1, cinp), lambda i: (0, 0)),
                  pl.BlockSpec((9 * cinp, coutp), lambda i: (0, 0))],
        out_specs=pl.BlockSpec((tm, coutp), lambda i: (i + 1, 0)),
        scratch_shapes=[pltpu.VMEM((tm + 2 * g, cinp), jnp.float32),
                        pltpu.VMEM((tm + 2 * g, 1), jnp.float32),
                        pltpu.SemaphoreType.DMA((2,))],
        compiler_params=pltpu.CompilerParams(
            dimension_semantics=("parallel",), vmem_limit_bytes=_VMEM_LIMIT),
    )(x_g, mask_g, scale, bias, w_packed)


def pallas_bn_relu(x2d, scale, bias, mask, tr_pref=512):
    """x2d: (M, C); scale/bias: (1, C); mask: (M, 1)."""
    m, c = x2d.shape
    tr, mp = _tile_rows(m, tr_pref)
    xp = _pad_rows_to(x2d, mp)
    mkp = _pad_rows_to(mask, mp)
    out = pl.pallas_call(
        _bn_relu_mask_kernel,
        out_shape=jax.ShapeDtypeStruct((mp, c), jnp.float32),
        grid=(mp // tr,),
        in_specs=[pl.BlockSpec((tr, c), lambda i: (i, 0)),
                  pl.BlockSpec((1, c), lambda i: (0, 0)),
                  pl.BlockSpec((1, c), lambda i: (0, 0)),
                  pl.BlockSpec((tr, 1), lambda i: (i, 0))],
        out_specs=pl.BlockSpec((tr, c), lambda i: (i, 0)),
        compiler_params=pltpu.CompilerParams(dimension_semantics=("parallel",)),
    )(xp, scale, bias, mkp)
    return out[:m]


def pallas_pool(parts, op, tr_pref=1024):
    """Elementwise max/avg over k equally shaped (M, C) strided views."""
    m, c = parts[0].shape
    tr, mp = _tile_rows(m, tr_pref)
    parts_p = [_pad_rows_to(p, mp) for p in parts]
    kern = _pool_max_kernel if op == 'max' else _pool_avg_kernel
    out = pl.pallas_call(
        kern,
        out_shape=jax.ShapeDtypeStruct((mp, c), jnp.float32),
        grid=(mp // tr,),
        in_specs=[pl.BlockSpec((tr, c), lambda i: (i, 0)) for _ in parts],
        out_specs=pl.BlockSpec((tr, c), lambda i: (i, 0)),
        compiler_params=pltpu.CompilerParams(dimension_semantics=("parallel",)),
    )(*parts_p)
    return out[:m]


def pallas_gap_linear(f3d, w, b):
    """f3d: (N, HW, Cp); w: (Cp, NCp); b: (1, NCp) -> (N, 1, NCp)."""
    n, hw, cp = f3d.shape
    ncp = w.shape[1]
    return pl.pallas_call(
        _gap_linear_kernel,
        out_shape=jax.ShapeDtypeStruct((n, 1, ncp), jnp.float32),
        grid=(n,),
        in_specs=[pl.BlockSpec((1, hw, cp), lambda i: (i, 0, 0)),
                  pl.BlockSpec((cp, ncp), lambda i: (0, 0)),
                  pl.BlockSpec((1, ncp), lambda i: (0, 0))],
        out_specs=pl.BlockSpec((1, 1, ncp), lambda i: (i, 0, 0)),
        compiler_params=pltpu.CompilerParams(dimension_semantics=("parallel",)),
    )(f3d, w, b)


# ----------------------------------------------------------------------------
# Parameter packing (fold BN, pad channels to lane-dense widths)
# ----------------------------------------------------------------------------

def _fold_bn(bn, c_pad, eps=1e-5):
    scale = bn['gamma'] / jnp.sqrt(bn['var'] + eps)
    bias = bn['beta'] - bn['mean'] * scale
    c = scale.shape[0]
    s = jnp.zeros((1, c_pad), jnp.float32).at[0, :c].set(scale)
    b = jnp.zeros((1, c_pad), jnp.float32).at[0, :c].set(bias)
    return s, b


def _pack_w1x1(w, cin_pad, cout_pad):
    cout, cin = w.shape[0], w.shape[1]
    m = w.reshape(cout, cin).T
    return jnp.zeros((cin_pad, cout_pad), jnp.float32).at[:cin, :cout].set(m)


def _pack_w3x3(w, cin_pad, cout_pad):
    cout, cin = w.shape[0], w.shape[1]
    m = jnp.transpose(w, (2, 3, 1, 0))                       # (3,3,cin,cout)
    buf = jnp.zeros((3, 3, cin_pad, cout_pad), jnp.float32)
    buf = buf.at[:, :, :cin, :cout].set(m)
    return buf.reshape(9 * cin_pad, cout_pad)


# ----------------------------------------------------------------------------
# DenseNet stages
# ----------------------------------------------------------------------------

def _stem(x_nchw, conv0_w, norm0):
    x = jnp.transpose(x_nchw, (0, 2, 3, 1)).astype(jnp.float32)   # NHWC
    n, h, w, cin = x.shape
    c0 = conv0_w.shape[0]
    c0p = _round_up(c0, LANE)
    # conv0: 7x7 / stride 2 / pad 3.
    # TODO(synk): stem im2col is still built in the wrapper (1 input channel, 49 taps,
    # one-time) -- negligible vs the dense blocks.
    k, s, p = 7, 2, 3
    ho = (h + 2 * p - k) // s + 1
    wo = (w + 2 * p - k) // s + 1
    xp = jnp.pad(x, ((0, 0), (p, p), (p, p), (0, 0)))
    cols = [xp[:, di:di + (ho - 1) * s + 1:s, dj:dj + (wo - 1) * s + 1:s, :]
            for di in range(k) for dj in range(k)]
    patches = jnp.concatenate(cols, axis=-1).reshape(n * ho * wo, k * k * cin)
    w0 = jnp.transpose(conv0_w, (2, 3, 1, 0)).reshape(k * k * cin, c0)
    w0p = jnp.zeros((k * k * cin, c0p), jnp.float32).at[:, :c0].set(w0)
    z = pallas_matmul(patches, w0p)                               # (N*Ho*Wo, C0p)
    # norm0 + relu0
    s0, b0 = _fold_bn(norm0, c0p)
    ones = jnp.ones((z.shape[0], 1), jnp.float32)
    z = pallas_bn_relu(z, s0, b0, ones)
    # pool0: maxpool 3x3 / stride 2 / pad 1 (9 strided views, fused max reduce).
    z4 = z.reshape(n, ho, wo, c0p)
    ho2 = (ho + 2 - 3) // 2 + 1
    wo2 = (wo + 2 - 3) // 2 + 1
    zp = jnp.pad(z4, ((0, 0), (1, 1), (1, 1), (0, 0)), constant_values=-np.inf)
    parts = [zp[:, di:di + (ho2 - 1) * 2 + 1:2,
                 dj:dj + (wo2 - 1) * 2 + 1:2, :].reshape(-1, c0p)
             for di in range(3) for dj in range(3)]
    pooled = pallas_pool(parts, 'max')
    return pooled.reshape(n, ho2, wo2, c0p)[..., :c0]


def _dense_block(x_real, layers, growth, tm_pref=512):
    """x_real: (N, H, W, Cin) real-channel NHWC features."""
    n, h, w, cin = x_real.shape
    num_layers = len(layers)
    c_total = cin + num_layers * growth
    cp = _round_up(c_total, LANE)
    hp, wp = h + 2, w + 2
    mpad = n * hp * wp
    tm = min(tm_pref, _round_up(mpad, 8))
    tm = max(tm, _round_up(wp + 2, 8))          # halo (Wp+1) must fit in one tile
    mp = _round_up(mpad, tm)
    r = mp + 2 * tm                              # one zero/guard tile on each side

    # Preallocated channel-padded slab (replaces per-layer torch.cat).
    x4 = jnp.zeros((n, hp, wp, cp), jnp.float32)
    x4 = x4.at[:, 1:h + 1, 1:w + 1, :cin].set(x_real)
    slab = jnp.zeros((r, cp), jnp.float32).at[tm:tm + mpad, :].set(x4.reshape(mpad, cp))
    m4 = jnp.zeros((n, hp, wp, 1), jnp.float32).at[:, 1:h + 1, 1:w + 1, :].set(1.0)
    mask = jnp.zeros((r, 1), jnp.float32).at[tm:tm + mpad, :].set(m4.reshape(mpad, 1))

    for j, lp in enumerate(layers):
        c_in_real = cin + j * growth
        kb = lp['conv1'].shape[0]               # bn_size * growth
        kbp = _round_up(kb, LANE)
        gp = _round_up(growth, LANE)
        s1, b1 = _fold_bn(lp['norm1'], cp)
        w1 = _pack_w1x1(lp['conv1'], cp, kbp)
        y1 = fused_conv1x1(slab, mask, s1, b1, w1, tm)          # (R, Kbp)
        s2, b2 = _fold_bn(lp['norm2'], kbp)
        w2 = _pack_w3x3(lp['conv2'], kbp, gp)
        y2 = fused_conv3x3(y1, mask, s2, b2, w2, tm, wp)        # (R, Gp)
        slab = lax.dynamic_update_slice(slab, y2[:, :growth], (0, c_in_real))

    geom = dict(N=n, H=h, W=w, Hp=hp, Wp=wp, mpad=mpad, tm=tm, cp=cp)
    return slab, mask, geom, c_total


def _transition(slab, mask, geom, c_real, tp):
    n, h, w = geom['N'], geom['H'], geom['W']
    hp, wp, mpad, tm, cp = geom['Hp'], geom['Wp'], geom['mpad'], geom['tm'], geom['cp']
    ct = c_real // 2
    ctp = _round_up(ct, LANE)
    s, b = _fold_bn(tp['norm'], cp)
    wt = _pack_w1x1(tp['conv'], cp, ctp)
    y = fused_conv1x1(slab, mask, s, b, wt, tm)                  # (R, Ctp)
    y4 = y[tm:tm + mpad].reshape(n, hp, wp, ctp)[:, 1:h + 1, 1:w + 1, :]
    assert h % 2 == 0 and w % 2 == 0, "AvgPool2d(2,2) expects even spatial dims"
    parts = [y4[:, di::2, dj::2, :].reshape(-1, ctp)
             for di in (0, 1) for dj in (0, 1)]
    pooled = pallas_pool(parts, 'avg')
    return pooled.reshape(n, h // 2, w // 2, ctp)[..., :ct]


def _head(slab, geom, c_final, norm5, cls_w, cls_b, num_class):
    n, h, w = geom['N'], geom['H'], geom['W']
    hp, wp, mpad, tm, cp = geom['Hp'], geom['Wp'], geom['mpad'], geom['tm'], geom['cp']
    x_int = slab[tm:tm + mpad].reshape(n, hp, wp, cp)[:, 1:h + 1, 1:w + 1, :]
    x_int = x_int.reshape(n * h * w, cp)
    s5, b5 = _fold_bn(norm5, cp)
    ones = jnp.ones((n * h * w, 1), jnp.float32)
    f = pallas_bn_relu(x_int, s5, b5, ones)                      # (N*H*W, Cp)
    features = jnp.transpose(f.reshape(n, h, w, cp)[..., :c_final], (0, 3, 1, 2))
    ncp = _round_up(num_class, LANE)
    wcp = jnp.zeros((cp, ncp), jnp.float32).at[:cls_w.shape[0], :num_class].set(cls_w)
    bcp = jnp.zeros((1, ncp), jnp.float32).at[0, :num_class].set(cls_b)
    logits = pallas_gap_linear(f.reshape(n, h * w, cp), wcp, bcp)[:, 0, :num_class]
    return logits, features


def densenet_forward(params, x_nchw, block_config, growth_rate, num_class):
    x = _stem(x_nchw, params['conv0'], params['norm0'])
    slab = mask = geom = None
    c_real = x.shape[-1]
    for i in range(len(block_config)):
        slab, mask, geom, c_real = _dense_block(x, params['blocks'][i], growth_rate)
        if i != len(block_config) - 1:
            x = _transition(slab, mask, geom, c_real, params['transitions'][i])
    return _head(slab, geom, c_real, params['norm5'],
                 params['classifier']['w'], params['classifier']['b'], num_class)


# ----------------------------------------------------------------------------
# Parameter init (deterministic, mirrors the module's __init__)
# ----------------------------------------------------------------------------

def _kaiming_normal(key, shape):
    fan_in = shape[1] * shape[2] * shape[3]
    std = np.sqrt(2.0 / fan_in)
    return std * jax.random.normal(key, shape, dtype=jnp.float32)


def init_densenet_params(key, growth_rate, block_config, num_init_features,
                         bn_size, num_class):
    keys = iter(jax.random.split(key, 512))

    def conv_w(cout, cin, kh, kw):
        return _kaiming_normal(next(keys), (cout, cin, kh, kw))

    def bn(c):
        return dict(gamma=jnp.ones((c,), jnp.float32),
                    beta=jnp.zeros((c,), jnp.float32),
                    mean=jnp.zeros((c,), jnp.float32),
                    var=jnp.ones((c,), jnp.float32))

    params = {
        'conv0': conv_w(num_init_features, 1, 7, 7),
        'norm0': bn(num_init_features),
    }
    blocks, transitions = [], []
    nf = num_init_features
    for i, num_layers in enumerate(block_config):
        layers = []
        for j in range(num_layers):
            cin = nf + j * growth_rate
            layers.append(dict(
                norm1=bn(cin),
                conv1=conv_w(bn_size * growth_rate, cin, 1, 1),
                norm2=bn(bn_size * growth_rate),
                conv2=conv_w(growth_rate, bn_size * growth_rate, 3, 3),
            ))
        blocks.append(layers)
        nf = nf + num_layers * growth_rate
        if i != len(block_config) - 1:
            transitions.append(dict(norm=bn(nf), conv=conv_w(nf // 2, nf, 1, 1)))
            nf = nf // 2
    params['blocks'] = blocks
    params['transitions'] = transitions
    params['norm5'] = bn(nf)
    params['classifier'] = dict(
        w=jax.random.normal(next(keys), (nf, num_class), jnp.float32) / np.sqrt(nf),
        b=jnp.zeros((num_class,), jnp.float32),
    )
    return params, nf


# ----------------------------------------------------------------------------
# Main
# ----------------------------------------------------------------------------

if __name__ == "__main__":
    growth_rate = 8
    block_config = (2, 2)
    num_init_features = 16
    bn_size = 2
    num_class = 3

    key = jax.random.PRNGKey(0)
    pkey, xkey = jax.random.split(key)
    params, num_features = init_densenet_params(
        pkey, growth_rate, block_config, num_init_features, bn_size, num_class)

    # Input: NCHW, 1 channel (conv0 expects 1 input channel).
    x = jax.random.normal(xkey, (2, 1, 32, 32), dtype=jnp.float32)

    fwd = jax.jit(functools.partial(
        densenet_forward, params,
        block_config=block_config, growth_rate=growth_rate, num_class=num_class))
    out, features = fwd(x)
    jax.block_until_ready((out, features))

    assert out.shape == (2, num_class)
    assert features.shape == (2, num_features, 4, 4)
    print("KERNEL_OK")
</pallas_src>

<mosaic_0001>
module attributes {stable_mosaic.version = 11 : i64} {
  func.func @_matmul_kernel(%arg0: i32, %arg1: memref<512x49xf32, #tpu.memory_space<vmem>>, %arg2: memref<49x128xf32, #tpu.memory_space<vmem>>, %arg3: memref<512x128xf32, #tpu.memory_space<vmem>>) attributes {dimension_semantics = [#tpu.dimension_semantics<parallel>], iteration_bounds = array<i64: 1>, scalar_prefetch = 0 : i64, scratch_operands = 0 : i64, tpu.core_type = #tpu.core_type<tc>, window_params = [{transform_indices = @transform_0, window_bounds = array<i64: 512, 49>}, {pipeline_mode = #tpu.pipeline_mode<synchronous>, transform_indices = @transform_1, window_bounds = array<i64: 49, 128>}, {transform_indices = @transform_2, window_bounds = array<i64: 512, 128>}]} {
    %c0 = arith.constant 0 : index
    %c0_0 = arith.constant 0 : index
    %0 = vector.load %arg1[%c0, %c0_0] : memref<512x49xf32, #tpu.memory_space<vmem>>, vector<512x49xf32>
    %c0_1 = arith.constant 0 : index
    %c0_2 = arith.constant 0 : index
    %1 = vector.load %arg2[%c0_1, %c0_2] : memref<49x128xf32, #tpu.memory_space<vmem>>, vector<49x128xf32>
    %cst = arith.constant dense<0.000000e+00> : vector<512x128xf32>
    %2 = tpu.matmul %0, %1, %cst {dimension_numbers = #tpu.dot_dimension_numbers<[1], [0], [0], [1], [0, 0, 1, 1], [], []>} : vector<512x49xf32>, vector<49x128xf32>, vector<512x128xf32> -> vector<512x128xf32>
    %c0_3 = arith.constant 0 : index
    %c0_4 = arith.constant 0 : index
    %3 = vector.load %arg3[%c0_3, %c0_4] : memref<512x128xf32, #tpu.memory_space<vmem>>, vector<512x128xf32>
    tpu.vector_store %arg3[%c0_3, %c0_4], %2 {strides = array<i32>} : memref<512x128xf32, #tpu.memory_space<vmem>>, vector<512x128xf32>,
    return
  }
  func.func @transform_0(%arg0: i32) -> (i32, i32) {
    %c0_i32 = arith.constant 0 : i32
    %c0_i32_0 = arith.constant 0 : i32
    return %arg0, %c0_i32 : i32, i32
  }
  func.func @transform_1(%arg0: i32) -> (i32, i32) {
    %c0_i32 = arith.constant 0 : i32
    %c0_i32_0 = arith.constant 0 : i32
    %c0_i32_1 = arith.constant 0 : i32
    return %c0_i32, %c0_i32_0 : i32, i32
  }
  func.func @transform_2(%arg0: i32) -> (i32, i32) {
    %c0_i32 = arith.constant 0 : i32
    %c0_i32_0 = arith.constant 0 : i32
    return %arg0, %c0_i32 : i32, i32
  }
}

module attributes {stable_mosaic.version = 11 : i64} {
  func.func @_pool_max_kernel(%arg0: i32, %arg1: memref<128x128xf32, #tpu.memory_space<vmem>>, %arg2: memref<128x128xf32, #tpu.memory_space<vmem>>, %arg3: memref<128x128xf32, #tpu.memory_space<vmem>>, %arg4: memref<128x128xf32, #tpu.memory_space<vmem>>, %arg5: memref<128x128xf32, #tpu.memory_space<vmem>>, %arg6: memref<128x128xf32, #tpu.memory_space<vmem>>, %arg7: memref<128x128xf32, #tpu.memory_space<vmem>>, %arg8: memref<128x128xf32, #tpu.memory_space<vmem>>, %arg9: memref<128x128xf32, #tpu.memory_space<vmem>>, %arg10: memref<128x128xf32, #tpu.memory_space<vmem>>) attributes {dimension_semantics = [#tpu.dimension_semantics<parallel>], iteration_bounds = array<i64: 1>, scalar_prefetch = 0 : i64, scratch_operands = 0 : i64, tpu.core_type = #tpu.core_type<tc>, window_params = [{transform_indices = @transform_0, window_bounds = array<i64: 128, 128>}, {transform_indices = @transform_1, window_bounds = array<i64: 128, 128>}, {transform_indices = @transform_2, window_bounds = array<i64: 128, 128>}, {transform_indices = @transform_3, window_bounds = array<i64: 128, 128>}, {transform_indices = @transform_4, window_bounds = array<i64: 128, 128>}, {transform_indices = @transform_5, window_bounds = array<i64: 128, 128>}, {transform_indices = @transform_6, window_bounds = array<i64: 128, 128>}, {transform_indices = @transform_7, window_bounds = array<i64: 128, 128>}, {transform_indices = @transform_8, window_bounds = array<i64: 128, 128>}, {transform_indices = @transform_9, window_bounds = array<i64: 128, 128>}]} {
    %c0 = arith.constant 0 : index
    %c0_0 = arith.constant 0 : index
    %0 = vector.load %arg1[%c0, %c0_0] : memref<128x128xf32, #tpu.memory_space<vmem>>, vector<128x128xf32>
    %c0_1 = arith.constant 0 : index
    %c0_2 = arith.constant 0 : index
    %1 = vector.load %arg2[%c0_1, %c0_2] : memref<128x128xf32, #tpu.memory_space<vmem>>, vector<128x128xf32>
    %2 = arith.maximumf %0, %1 : vector<128x128xf32>
    %c0_3 = arith.constant 0 : index
    %c0_4 = arith.constant 0 : index
    %3 = vector.load %arg3[%c0_3, %c0_4] : memref<128x128xf32, #tpu.memory_space<vmem>>, vector<128x128xf32>
    %4 = arith.maximumf %2, %3 : vector<128x128xf32>
    %c0_5 = arith.constant 0 : index
    %c0_6 = arith.constant 0 : index
    %5 = vector.load %arg4[%c0_5, %c0_6] : memref<128x128xf32, #tpu.memory_space<vmem>>, vector<128x128xf32>
    %6 = arith.maximumf %4, %5 : vector<128x128xf32>
    %c0_7 = arith.constant 0 : index
    %c0_8 = arith.constant 0 : index
    %7 = vector.load %arg5[%c0_7, %c0_8] : memref<128x128xf32, #tpu.memory_space<vmem>>, vector<128x128xf32>
    %8 = arith.maximumf %6, %7 : vector<128x128xf32>
    %c0_9 = arith.constant 0 : index
    %c0_10 = arith.constant 0 : index
    %9 = vector.load %arg6[%c0_9, %c0_10] : memref<128x128xf32, #tpu.memory_space<vmem>>, vector<128x128xf32>
    %10 = arith.maximumf %8, %9 : vector<128x128xf32>
    %c0_11 = arith.constant 0 : index
    %c0_12 = arith.constant 0 : index
    %11 = vector.load %arg7[%c0_11, %c0_12] : memref<128x128xf32, #tpu.memory_space<vmem>>, vector<128x128xf32>
    %12 = arith.maximumf %10, %11 : vector<128x128xf32>
    %c0_13 = arith.constant 0 : index
    %c0_14 = arith.constant 0 : index
    %13 = vector.load %arg8[%c0_13, %c0_14] : memref<128x128xf32, #tpu.memory_space<vmem>>, vector<128x128xf32>
    %14 = arith.maximumf %12, %13 : vector<128x128xf32>
    %c0_15 = arith.constant 0 : index
    %c0_16 = arith.constant 0 : index
    %15 = vector.load %arg9[%c0_15, %c0_16] : memref<128x128xf32, #tpu.memory_space<vmem>>, vector<128x128xf32>
    %16 = arith.maximumf %14, %15 : vector<128x128xf32>
    %c0_17 = arith.constant 0 : index
    %c0_18 = arith.constant 0 : index
    %17 = vector.load %arg10[%c0_17, %c0_18] : memref<128x128xf32, #tpu.memory_space<vmem>>, vector<128x128xf32>
    tpu.vector_store %arg10[%c0_17, %c0_18], %16 {strides = array<i32>} : memref<128x128xf32, #tpu.memory_space<vmem>>, vector<128x128xf32>,
    return
  }
  func.func @transform_0(%arg0: i32) -> (i32, i32) {
    %c0_i32 = arith.constant 0 : i32
    %c0_i32_0 = arith.constant 0 : i32
    return %arg0, %c0_i32 : i32, i32
  }
  func.func @transform_1(%arg0: i32) -> (i32, i32) {
    %c0_i32 = arith.constant 0 : i32
    %c0_i32_0 = arith.constant 0 : i32
    return %arg0, %c0_i32 : i32, i32
  }
  func.func @transform_2(%arg0: i32) -> (i32, i32) {
    %c0_i32 = arith.constant 0 : i32
    %c0_i32_0 = arith.constant 0 : i32
    return %arg0, %c0_i32 : i32, i32
  }
  func.func @transform_3(%arg0: i32) -> (i32, i32) {
    %c0_i32 = arith.constant 0 : i32
    %c0_i32_0 = arith.constant 0 : i32
    return %arg0, %c0_i32 : i32, i32
  }
  func.func @transform_4(%arg0: i32) -> (i32, i32) {
    %c0_i32 = arith.constant 0 : i32
    %c0_i32_0 = arith.constant 0 : i32
    return %arg0, %c0_i32 : i32, i32
  }
  func.func @transform_5(%arg0: i32) -> (i32, i32) {
    %c0_i32 = arith.constant 0 : i32
    %c0_i32_0 = arith.constant 0 : i32
    return %arg0, %c0_i32 : i32, i32
  }
  func.func @transform_6(%arg0: i32) -> (i32, i32) {
    %c0_i32 = arith.constant 0 : i32
    %c0_i32_0 = arith.constant 0 : i32
    return %arg0, %c0_i32 : i32, i32
  }
  func.func @transform_7(%arg0: i32) -> (i32, i32) {
    %c0_i32 = arith.constant 0 : i32
    %c0_i32_0 = arith.constant 0 : i32
    return %arg0, %c0_i32 : i32, i32
  }
  func.func @transform_8(%arg0: i32) -> (i32, i32) {
    %c0_i32 = arith.constant 0 : i32
    %c0_i32_0 = arith.constant 0 : i32
    return %arg0, %c0_i32 : i32, i32
  }
  func.func @transform_9(%arg0: i32) -> (i32, i32) {
    %c0_i32 = arith.constant 0 : i32
    %c0_i32_0 = arith.constant 0 : i32
    return %arg0, %c0_i32 : i32, i32
  }
}

module attributes {stable_mosaic.version = 11 : i64} {
  func.func @_bn_relu_mask_kernel(%arg0: i32, %arg1: memref<512x128xf32, #tpu.memory_space<vmem>>, %arg2: memref<1x128xf32, #tpu.memory_space<vmem>>, %arg3: memref<1x128xf32, #tpu.memory_space<vmem>>, %arg4: memref<512x1xf32, #tpu.memory_space<vmem>>, %arg5: memref<512x128xf32, #tpu.memory_space<vmem>>) attributes {dimension_semantics = [#tpu.dimension_semantics<parallel>], iteration_bounds = array<i64: 1>, scalar_prefetch = 0 : i64, scratch_operands = 0 : i64, tpu.core_type = #tpu.core_type<tc>, window_params = [{transform_indices = @transform_0, window_bounds = array<i64: 512, 128>}, {pipeline_mode = #tpu.pipeline_mode<synchronous>, transform_indices = @transform_1, window_bounds = array<i64: 1, 128>}, {pipeline_mode = #tpu.pipeline_mode<synchronous>, transform_indices = @transform_2, window_bounds = array<i64: 1, 128>}, {transform_indices = @transform_3, window_bounds = array<i64: 512, 1>}, {transform_indices = @transform_4, window_bounds = array<i64: 512, 128>}]} {
    %c0 = arith.constant 0 : index
    %c0_0 = arith.constant 0 : index
    %0 = vector.load %arg4[%c0, %c0_0] : memref<512x1xf32, #tpu.memory_space<vmem>>, vector<512x1xf32>
    %cst = arith.constant 0.000000e+00 : f32
    %1 = vector.broadcast %cst : f32 to vector<512x1xf32>
    %2 = arith.cmpf ogt, %0, %1 : vector<512x1xf32>
    %c0_1 = arith.constant 0 : index
    %c0_2 = arith.constant 0 : index
    %3 = vector.load %arg1[%c0_1, %c0_2] : memref<512x128xf32, #tpu.memory_space<vmem>>, vector<512x128xf32>
    %c0_3 = arith.constant 0 : index
    %c0_4 = arith.constant 0 : index
    %4 = vector.load %arg2[%c0_3, %c0_4] : memref<1x128xf32, #tpu.memory_space<vmem>>, vector<1x128xf32>
    %5 = vector.broadcast %4 : vector<1x128xf32> to vector<512x128xf32>
    %6 = arith.mulf %3, %5 : vector<512x128xf32>
    %c0_5 = arith.constant 0 : index
    %c0_6 = arith.constant 0 : index
    %7 = vector.load %arg3[%c0_5, %c0_6] : memref<1x128xf32, #tpu.memory_space<vmem>>, vector<1x128xf32>
    %8 = vector.broadcast %7 : vector<1x128xf32> to vector<512x128xf32>
    %9 = arith.addf %6, %8 : vector<512x128xf32>
    %cst_7 = arith.constant 0.000000e+00 : f32
    %10 = vector.broadcast %cst_7 : f32 to vector<512x128xf32>
    %11 = arith.maximumf %9, %10 : vector<512x128xf32>
    %cst_8 = arith.constant 0.000000e+00 : f32
    %12 = vector.shape_cast %2 : vector<512x1xi1> to vector<512x1xi1>
    %13 = vector.broadcast %12 : vector<512x1xi1> to vector<512x128xi1>
    %14 = vector.broadcast %cst_8 : f32 to vector<512x128xf32>
    %15 = arith.select %13, %11, %14 : vector<512x128xi1>, vector<512x128xf32>
    %c0_9 = arith.constant 0 : index
    %c0_10 = arith.constant 0 : index
    %16 = vector.load %arg5[%c0_9, %c0_10] : memref<512x128xf32, #tpu.memory_space<vmem>>, vector<512x128xf32>
    tpu.vector_store %arg5[%c0_9, %c0_10], %15 {strides = array<i32>} : memref<512x128xf32, #tpu.memory_space<vmem>>, vector<512x128xf32>,
    return
  }
  func.func @transform_0(%arg0: i32) -> (i32, i32) {
    %c0_i32 = arith.constant 0 : i32
    %c0_i32_0 = arith.constant 0 : i32
    return %arg0, %c0_i32 : i32, i32
  }
  func.func @transform_1(%arg0: i32) -> (i32, i32) {
    %c0_i32 = arith.constant 0 : i32
    %c0_i32_0 = arith.constant 0 : i32
    %c0_i32_1 = arith.constant 0 : i32
    return %c0_i32, %c0_i32_0 : i32, i32
  }
  func.func @transform_2(%arg0: i32) -> (i32, i32) {
    %c0_i32 = arith.constant 0 : i32
    %c0_i32_0 = arith.constant 0 : i32
    %c0_i32_1 = arith.constant 0 : i32
    return %c0_i32, %c0_i32_0 : i32, i32
  }
  func.func @transform_3(%arg0: i32) -> (i32, i32) {
    %c0_i32 = arith.constant 0 : i32
    %c0_i32_0 = arith.constant 0 : i32
    return %arg0, %c0_i32 : i32, i32
  }
  func.func @transform_4(%arg0: i32) -> (i32, i32) {
    %c0_i32 = arith.constant 0 : i32
    %c0_i32_0 = arith.constant 0 : i32
    return %arg0, %c0_i32 : i32, i32
  }
}

module attributes {stable_mosaic.version = 11 : i64} {
  func.func @_conv3x3_bn_relu_kernel(%arg0: i32, %arg1: memref<600x128xf32, #tpu.memory_space<any>>, %arg2: memref<600x1xf32, #tpu.memory_space<any>>, %arg3: memref<1x128xf32, #tpu.memory_space<vmem>>, %arg4: memref<1x128xf32, #tpu.memory_space<vmem>>, %arg5: memref<1152x128xf32, #tpu.memory_space<vmem>>, %arg6: memref<200x128xf32, #tpu.memory_space<vmem>>, %arg7: memref<222x128xf32, #tpu.memory_space<vmem>>, %arg8: memref<222x1xf32, #tpu.memory_space<vmem>>, %arg9: memref<2x!tpu.dma_semaphore, #tpu.memory_space<semaphore_mem>>) attributes {dimension_semantics = [#tpu.dimension_semantics<parallel>], iteration_bounds = array<i64: 1>, scalar_prefetch = 0 : i64, scratch_operands = 3 : i64, tpu.core_type = #tpu.core_type<tc>, window_params = [{}, {}, {pipeline_mode = #tpu.pipeline_mode<synchronous>, transform_indices = @transform_2, window_bounds = array<i64: 1, 128>}, {pipeline_mode = #tpu.pipeline_mode<synchronous>, transform_indices = @transform_3, window_bounds = array<i64: 1, 128>}, {pipeline_mode = #tpu.pipeline_mode<synchronous>, transform_indices = @transform_4, window_bounds = array<i64: 1152, 128>}, {transform_indices = @transform_5, window_bounds = array<i64: 200, 128>}]} {
    %c1_i32 = arith.constant 1 : i32
    %0 = arith.addi %arg0, %c1_i32 : i32
    %c200_i32 = arith.constant 200 : i32
    %1 = arith.muli %0, %c200_i32 : i32
    %c11_i32 = arith.constant 11 : i32
    %2 = arith.subi %1, %c11_i32 : i32
    %c0_i32 = arith.constant 0 : i32
    %c0_i32_0 = arith.constant 0 : i32
    %3 = tpu.memref_slice %arg1[%2, %c0_i32_0] : memref<600x128xf32, #tpu.memory_space<any>> -> memref<222x128xf32, #tpu.memory_space<any>>
    %4 = tpu.memref_slice %arg9[%c0_i32] : memref<2x!tpu.dma_semaphore, #tpu.memory_space<semaphore_mem>> -> memref<1x!tpu.dma_semaphore, #tpu.memory_space<semaphore_mem>>
    %5 = tpu.memref_squeeze %4 : memref<1x!tpu.dma_semaphore, #tpu.memory_space<semaphore_mem>> -> memref<!tpu.dma_semaphore, #tpu.memory_space<semaphore_mem>>
    tpu.enqueue_dma source(%3 : memref<222x128xf32, #tpu.memory_space<any>>) target(%arg7 : memref<222x128xf32, #tpu.memory_space<vmem>>) target_semaphore(%5 : memref<!tpu.dma_semaphore, #tpu.memory_space<semaphore_mem>>)
    %c1_i32_1 = arith.constant 1 : i32
    %c0_i32_2 = arith.constant 0 : i32
    %6 = tpu.memref_slice %arg2[%2, %c0_i32_2] : memref<600x1xf32, #tpu.memory_space<any>> -> memref<222x1xf32, #tpu.memory_space<any>>
    %7 = tpu.memref_slice %arg9[%c1_i32_1] : memref<2x!tpu.dma_semaphore, #tpu.memory_space<semaphore_mem>> -> memref<1x!tpu.dma_semaphore, #tpu.memory_space<semaphore_mem>>
    %8 = tpu.memref_squeeze %7 : memref<1x!tpu.dma_semaphore, #tpu.memory_space<semaphore_mem>> -> memref<!tpu.dma_semaphore, #tpu.memory_space<semaphore_mem>>
    tpu.enqueue_dma source(%6 : memref<222x1xf32, #tpu.memory_space<any>>) target(%arg8 : memref<222x1xf32, #tpu.memory_space<vmem>>) target_semaphore(%8 : memref<!tpu.dma_semaphore, #tpu.memory_space<semaphore_mem>>)
    %c0_i32_3 = arith.constant 0 : i32
    %c0_i32_4 = arith.constant 0 : i32
    %9 = tpu.memref_slice %arg1[%2, %c0_i32_4] : memref<600x128xf32, #tpu.memory_space<any>> -> memref<222x128xf32, #tpu.memory_space<any>>
    %10 = tpu.memref_slice %arg9[%c0_i32_3] : memref<2x!tpu.dma_semaphore, #tpu.memory_space<semaphore_mem>> -> memref<1x!tpu.dma_semaphore, #tpu.memory_space<semaphore_mem>>
    %11 = tpu.memref_squeeze %10 : memref<1x!tpu.dma_semaphore, #tpu.memory_space<semaphore_mem>> -> memref<!tpu.dma_semaphore, #tpu.memory_space<semaphore_mem>>
    tpu.wait_dma2 semaphore(%11 : memref<!tpu.dma_semaphore, #tpu.memory_space<semaphore_mem>>) src(%9 : memref<222x128xf32, #tpu.memory_space<any>>) dst(%arg7 : memref<222x128xf32, #tpu.memory_space<vmem>>)
    %c1_i32_5 = arith.constant 1 : i32
    %c0_i32_6 = arith.constant 0 : i32
    %12 = tpu.memref_slice %arg2[%2, %c0_i32_6] : memref<600x1xf32, #tpu.memory_space<any>> -> memref<222x1xf32, #tpu.memory_space<any>>
    %13 = tpu.memref_slice %arg9[%c1_i32_5] : memref<2x!tpu.dma_semaphore, #tpu.memory_space<semaphore_mem>> -> memref<1x!tpu.dma_semaphore, #tpu.memory_space<semaphore_mem>>
    %14 = tpu.memref_squeeze %13 : memref<1x!tpu.dma_semaphore, #tpu.memory_space<semaphore_mem>> -> memref<!tpu.dma_semaphore, #tpu.memory_space<semaphore_mem>>
    tpu.wait_dma2 semaphore(%14 : memref<!tpu.dma_semaphore, #tpu.memory_space<semaphore_mem>>) src(%12 : memref<222x1xf32, #tpu.memory_space<any>>) dst(%arg8 : memref<222x1xf32, #tpu.memory_space<vmem>>)
    %c0 = arith.constant 0 : index
    %c0_7 = arith.constant 0 : index
    %15 = vector.load %arg8[%c0, %c0_7] : memref<222x1xf32, #tpu.memory_space<vmem>>, vector<222x1xf32>
    %cst = arith.constant 0.000000e+00 : f32
    %16 = vector.broadcast %cst : f32 to vector<222x1xf32>
    %17 = arith.cmpf ogt, %15, %16 : vector<222x1xf32>
    %c0_8 = arith.constant 0 : index
    %c0_9 = arith.constant 0 : index
    %18 = vector.load %arg7[%c0_8, %c0_9] : memref<222x128xf32, #tpu.memory_space<vmem>>, vector<222x128xf32>
    %c0_10 = arith.constant 0 : index
    %c0_11 = arith.constant 0 : index
    %19 = vector.load %arg3[%c0_10, %c0_11] : memref<1x128xf32, #tpu.memory_space<vmem>>, vector<1x128xf32>
    %20 = vector.broadcast %19 : vector<1x128xf32> to vector<222x128xf32>
    %21 = arith.mulf %18, %20 : vector<222x128xf32>
    %c0_12 = arith.constant 0 : index
    %c0_13 = arith.constant 0 : index
    %22 = vector.load %arg4[%c0_12, %c0_13] : memref<1x128xf32, #tpu.memory_space<vmem>>, vector<1x128xf32>
    %23 = vector.broadcast %22 : vector<1x128xf32> to vector<222x128xf32>
    %24 = arith.addf %21, %23 : vector<222x128xf32>
    %cst_14 = arith.constant 0.000000e+00 : f32
    %25 = vector.broadcast %cst_14 : f32 to vector<222x128xf32>
    %26 = arith.maximumf %24, %25 : vector<222x128xf32>
    %cst_15 = arith.constant 0.000000e+00 : f32
    %27 = vector.shape_cast %17 : vector<222x1xi1> to vector<222x1xi1>
    %28 = vector.broadcast %27 : vector<222x1xi1> to vector<222x128xi1>
    %29 = vector.broadcast %cst_15 : f32 to vector<222x128xf32>
    %30 = arith.select %28, %26, %29 : vector<222x128xi1>, vector<222x128xf32>
    %c0_16 = arith.constant 0 : index
    %c0_17 = arith.constant 0 : index
    %31 = vector.load %arg7[%c0_16, %c0_17] : memref<222x128xf32, #tpu.memory_space<vmem>>, vector<222x128xf32>
    tpu.vector_store %arg7[%c0_16, %c0_17], %30 {strides = array<i32>} : memref<222x128xf32, #tpu.memory_space<vmem>>, vector<222x128xf32>,
    %cst_18 = arith.constant 0.000000e+00 : f32
    %32 = vector.broadcast %cst_18 : f32 to vector<200x128xf32>
    %c0_19 = arith.constant 0 : index
    %c0_20 = arith.constant 0 : index
    %33 = vector.load %arg7[%c0_19, %c0_20] : memref<222x128xf32, #tpu.memory_space<vmem>>, vector<200x128xf32>
    %c0_21 = arith.constant 0 : index
    %c0_22 = arith.constant 0 : index
    %34 = vector.load %arg5[%c0_21, %c0_22] : memref<1152x128xf32, #tpu.memory_space<vmem>>, vector<128x128xf32>
    %cst_23 = arith.constant dense<0.000000e+00> : vector<200x128xf32>
    %35 = tpu.matmul %33, %34, %cst_23 {dimension_numbers = #tpu.dot_dimension_numbers<[1], [0], [0], [1], [0, 0, 1, 1], [], []>} : vector<200x128xf32>, vector<128x128xf32>, vector<200x128xf32> -> vector<200x128xf32>
    %36 = arith.addf %32, %35 : vector<200x128xf32>
    %c1 = arith.constant 1 : index
    %c0_24 = arith.constant 0 : index
    %37 = vector.load %arg7[%c1, %c0_24] : memref<222x128xf32, #tpu.memory_space<vmem>>, vector<200x128xf32>
    %c128 = arith.constant 128 : index
    %c0_25 = arith.constant 0 : index
    %38 = vector.load %arg5[%c128, %c0_25] : memref<1152x128xf32, #tpu.memory_space<vmem>>, vector<128x128xf32>
    %cst_26 = arith.constant dense<0.000000e+00> : vector<200x128xf32>
    %39 = tpu.matmul %37, %38, %cst_26 {dimension_numbers = #tpu.dot_dimension_numbers<[1], [0], [0], [1], [0, 0, 1, 1], [], []>} : vector<200x128xf32>, vector<128x128xf32>, vector<200x128xf32> -> vector<200x128xf32>
    %40 = arith.addf %36, %39 : vector<200x128xf32>
    %c2 = arith.constant 2 : index
    %c0_27 = arith.constant 0 : index
    %41 = vector.load %arg7[%c2, %c0_27] : memref<222x128xf32, #tpu.memory_space<vmem>>, vector<200x128xf32>
    %c256 = arith.constant 256 : index
    %c0_28 = arith.constant 0 : index
    %42 = vector.load %arg5[%c256, %c0_28] : memref<1152x128xf32, #tpu.memory_space<vmem>>, vector<128x128xf32>
    %cst_29 = arith.constant dense<0.000000e+00> : vector<200x128xf32>
    %43 = tpu.matmul %41, %42, %cst_29 {dimension_numbers = #tpu.dot_dimension_numbers<[1], [0], [0], [1], [0, 0, 1, 1], [], []>} : vector<200x128xf32>, vector<128x128xf32>, vector<200x128xf32> -> vector<200x128xf32>
    %44 = arith.addf %40, %43 : vector<200x128xf32>
    %c10 = arith.constant 10 : index
    %c0_30 = arith.constant 0 : index
    %45 = vector.load %arg7[%c10, %c0_30] : memref<222x128xf32, #tpu.memory_space<vmem>>, vector<200x128xf32>
    %c384 = arith.constant 384 : index
    %c0_31 = arith.constant 0 : index
    %46 = vector.load %arg5[%c384, %c0_31] : memref<1152x128xf32, #tpu.memory_space<vmem>>, vector<128x128xf32>
    %cst_32 = arith.constant dense<0.000000e+00> : vector<200x128xf32>
    %47 = tpu.matmul %45, %46, %cst_32 {dimension_numbers = #tpu.dot_dimension_numbers<[1], [0], [0], [1], [0, 0, 1, 1], [], []>} : vector<200x128xf32>, vector<128x128xf32>, vector<200x128xf32> -> vector<200x128xf32>
    %48 = arith.addf %44, %47 : vector<200x128xf32>
    %c11 = arith.constant 11 : index
    %c0_33 = arith.constant 0 : index
    %49 = vector.load %arg7[%c11, %c0_33] : memref<222x128xf32, #tpu.memory_space<vmem>>, vector<200x128xf32>
    %c512 = arith.constant 512 : index
    %c0_34 = arith.constant 0 : index
    %50 = vector.load %arg5[%c512, %c0_34] : memref<1152x128xf32, #tpu.memory_space<vmem>>, vector<128x128xf32>
    %cst_35 = arith.constant dense<0.000000e+00> : vector<200x128xf32>
    %51 = tpu.matmul %49, %50, %cst_35 {dimension_numbers = #tpu.dot_dimension_numbers<[1], [0], [0], [1], [0, 0, 1, 1], [], []>} : vector<200x128xf32>, vector<128x128xf32>, vector<200x128xf32> -> vector<200x128xf32>
    %52 = arith.addf %48, %51 : vector<200x128xf32>
    %c12 = arith.constant 12 : index
    %c0_36 = arith.constant 0 : index
    %53 = vector.load %arg7[%c12, %c0_36] : memref<222x128xf32, #tpu.memory_space<vmem>>, vector<200x128xf32>
    %c640 = arith.constant 640 : index
    %c0_37 = arith.constant 0 : index
    %54 = vector.load %arg5[%c640, %c0_37] : memref<1152x128xf32, #tpu.memory_space<vmem>>, vector<128x128xf32>
    %cst_38 = arith.constant dense<0.000000e+00> : vector<200x128xf32>
    %55 = tpu.matmul %53, %54, %cst_38 {dimension_numbers = #tpu.dot_dimension_numbers<[1], [0], [0], [1], [0, 0, 1, 1], [], []>} : vector<200x128xf32>, vector<128x128xf32>, vector<200x128xf32> -> vector<200x128xf32>
    %56 = arith.addf %52, %55 : vector<200x128xf32>
    %c20 = arith.constant 20 : index
    %c0_39 = arith.constant 0 : index
    %57 = vector.load %arg7[%c20, %c0_39] : memref<222x128xf32, #tpu.memory_space<vmem>>, vector<200x128xf32>
    %c768 = arith.constant 768 : index
    %c0_40 = arith.constant 0 : index
    %58 = vector.load %arg5[%c768, %c0_40] : memref<1152x128xf32, #tpu.memory_space<vmem>>, vector<128x128xf32>
    %cst_41 = arith.constant dense<0.000000e+00> : vector<200x128xf32>
    %59 = tpu.matmul %57, %58, %cst_41 {dimension_numbers = #tpu.dot_dimension_numbers<[1], [0], [0], [1], [0, 0, 1, 1], [], []>} : vector<200x128xf32>, vector<128x128xf32>, vector<200x128xf32> -> vector<200x128xf32>
    %60 = arith.addf %56, %59 : vector<200x128xf32>
    %c21 = arith.constant 21 : index
    %c0_42 = arith.constant 0 : index
    %61 = vector.load %arg7[%c21, %c0_42] : memref<222x128xf32, #tpu.memory_space<vmem>>, vector<200x128xf32>
    %c896 = arith.constant 896 : index
    %c0_43 = arith.constant 0 : index
    %62 = vector.load %arg5[%c896, %c0_43] : memref<1152x128xf32, #tpu.memory_space<vmem>>, vector<128x128xf32>
    %cst_44 = arith.constant dense<0.000000e+00> : vector<200x128xf32>
    %63 = tpu.matmul %61, %62, %cst_44 {dimension_numbers = #tpu.dot_dimension_numbers<[1], [0], [0], [1], [0, 0, 1, 1], [], []>} : vector<200x128xf32>, vector<128x128xf32>, vector<200x128xf32> -> vector<200x128xf32>
    %64 = arith.addf %60, %63 : vector<200x128xf32>
    %c22 = arith.constant 22 : index
    %c0_45 = arith.constant 0 : index
    %65 = vector.load %arg7[%c22, %c0_45] : memref<222x128xf32, #tpu.memory_space<vmem>>, vector<200x128xf32>
    %c1024 = arith.constant 1024 : index
    %c0_46 = arith.constant 0 : index
    %66 = vector.load %arg5[%c1024, %c0_46] : memref<1152x128xf32, #tpu.memory_space<vmem>>, vector<128x128xf32>
    %cst_47 = arith.constant dense<0.000000e+00> : vector<200x128xf32>
    %67 = tpu.matmul %65, %66, %cst_47 {dimension_numbers = #tpu.dot_dimension_numbers<[1], [0], [0], [1], [0, 0, 1, 1], [], []>} : vector<200x128xf32>, vector<128x128xf32>, vector<200x128xf32> -> vector<200x128xf32>
    %68 = arith.addf %64, %67 : vector<200x128xf32>
    %c0_48 = arith.constant 0 : index
    %c0_49 = arith.constant 0 : index
    %69 = vector.load %arg6[%c0_48, %c0_49] : memref<200x128xf32, #tpu.memory_space<vmem>>, vector<200x128xf32>
    tpu.vector_store %arg6[%c0_48, %c0_49], %68 {strides = array<i32>} : memref<200x128xf32, #tpu.memory_space<vmem>>, vector<200x128xf32>,
    return
  }
  func.func @transform_2(%arg0: i32) -> (i32, i32) {
    %c0_i32 = arith.constant 0 : i32
    %c0_i32_0 = arith.constant 0 : i32
    %c0_i32_1 = arith.constant 0 : i32
    return %c0_i32, %c0_i32_0 : i32, i32
  }
  func.func @transform_3(%arg0: i32) -> (i32, i32) {
    %c0_i32 = arith.constant 0 : i32
    %c0_i32_0 = arith.constant 0 : i32
    %c0_i32_1 = arith.constant 0 : i32
    return %c0_i32, %c0_i32_0 : i32, i32
  }
  func.func @transform_4(%arg0: i32) -> (i32, i32) {
    %c0_i32 = arith.constant 0 : i32
    %c0_i32_0 = arith.constant 0 : i32
    %c0_i32_1 = arith.constant 0 : i32
    return %c0_i32, %c0_i32_0 : i32, i32
  }
  func.func @transform_5(%arg0: i32) -> (i32, i32) {
    %c1_i32 = arith.constant 1 : i32
    %0 = arith.addi %arg0, %c1_i32 : i32
    %c0_i32 = arith.constant 0 : i32
    %c0_i32_0 = arith.constant 0 : i32
    return %0, %c0_i32 : i32, i32
  }
}

module attributes {stable_mosaic.version = 11 : i64} {
  func.func @_mm_bn_relu_kernel(%arg0: i32, %arg1: memref<200x128xf32, #tpu.memory_space<vmem>>, %arg2: memref<200x1xf32, #tpu.memory_space<vmem>>, %arg3: memref<1x128xf32, #tpu.memory_space<vmem>>, %arg4: memref<1x128xf32, #tpu.memory_space<vmem>>, %arg5: memref<128x128xf32, #tpu.memory_space<vmem>>, %arg6: memref<200x128xf32, #tpu.memory_space<vmem>>) attributes {dimension_semantics = [#tpu.dimension_semantics<parallel>], iteration_bounds = array<i64: 1>, scalar_prefetch = 0 : i64, scratch_operands = 0 : i64, tpu.core_type = #tpu.core_type<tc>, window_params = [{transform_indices = @transform_0, window_bounds = array<i64: 200, 128>}, {transform_indices = @transform_1, window_bounds = array<i64: 200, 1>}, {pipeline_mode = #tpu.pipeline_mode<synchronous>, transform_indices = @transform_2, window_bounds = array<i64: 1, 128>}, {pipeline_mode = #tpu.pipeline_mode<synchronous>, transform_indices = @transform_3, window_bounds = array<i64: 1, 128>}, {pipeline_mode = #tpu.pipeline_mode<synchronous>, transform_indices = @transform_4, window_bounds = array<i64: 128, 128>}, {transform_indices = @transform_5, window_bounds = array<i64: 200, 128>}]} {
    %c0 = arith.constant 0 : index
    %c0_0 = arith.constant 0 : index
    %0 = vector.load %arg2[%c0, %c0_0] : memref<200x1xf32, #tpu.memory_space<vmem>>, vector<200x1xf32>
    %cst = arith.constant 0.000000e+00 : f32
    %1 = vector.broadcast %cst : f32 to vector<200x1xf32>
    %2 = arith.cmpf ogt, %0, %1 : vector<200x1xf32>
    %c0_1 = arith.constant 0 : index
    %c0_2 = arith.constant 0 : index
    %3 = vector.load %arg1[%c0_1, %c0_2] : memref<200x128xf32, #tpu.memory_space<vmem>>, vector<200x128xf32>
    %c0_3 = arith.constant 0 : index
    %c0_4 = arith.constant 0 : index
    %4 = vector.load %arg3[%c0_3, %c0_4] : memref<1x128xf32, #tpu.memory_space<vmem>>, vector<1x128xf32>
    %5 = vector.broadcast %4 : vector<1x128xf32> to vector<200x128xf32>
    %6 = arith.mulf %3, %5 : vector<200x128xf32>
    %c0_5 = arith.constant 0 : index
    %c0_6 = arith.constant 0 : index
    %7 = vector.load %arg4[%c0_5, %c0_6] : memref<1x128xf32, #tpu.memory_space<vmem>>, vector<1x128xf32>
    %8 = vector.broadcast %7 : vector<1x128xf32> to vector<200x128xf32>
    %9 = arith.addf %6, %8 : vector<200x128xf32>
    %cst_7 = arith.constant 0.000000e+00 : f32
    %10 = vector.broadcast %cst_7 : f32 to vector<200x128xf32>
    %11 = arith.maximumf %9, %10 : vector<200x128xf32>
    %cst_8 = arith.constant 0.000000e+00 : f32
    %12 = vector.shape_cast %2 : vector<200x1xi1> to vector<200x1xi1>
    %13 = vector.broadcast %12 : vector<200x1xi1> to vector<200x128xi1>
    %14 = vector.broadcast %cst_8 : f32 to vector<200x128xf32>
    %15 = arith.select %13, %11, %14 : vector<200x128xi1>, vector<200x128xf32>
    %c0_9 = arith.constant 0 : index
    %c0_10 = arith.constant 0 : index
    %16 = vector.load %arg5[%c0_9, %c0_10] : memref<128x128xf32, #tpu.memory_space<vmem>>, vector<128x128xf32>
    %cst_11 = arith.constant dense<0.000000e+00> : vector<200x128xf32>
    %17 = tpu.matmul %15, %16, %cst_11 {dimension_numbers = #tpu.dot_dimension_numbers<[1], [0], [0], [1], [0, 0, 1, 1], [], []>} : vector<200x128xf32>, vector<128x128xf32>, vector<200x128xf32> -> vector<200x128xf32>
    %c0_12 = arith.constant 0 : index
    %c0_13 = arith.constant 0 : index
    %18 = vector.load %arg6[%c0_12, %c0_13] : memref<200x128xf32, #tpu.memory_space<vmem>>, vector<200x128xf32>
    tpu.vector_store %arg6[%c0_12, %c0_13], %17 {strides = array<i32>} : memref<200x128xf32, #tpu.memory_space<vmem>>, vector<200x128xf32>,
    return
  }
  func.func @transform_0(%arg0: i32) -> (i32, i32) {
    %c1_i32 = arith.constant 1 : i32
    %0 = arith.addi %arg0, %c1_i32 : i32
    %c0_i32 = arith.constant 0 : i32
    %c0_i32_0 = arith.constant 0 : i32
    return %0, %c0_i32 : i32, i32
  }
  func.func @transform_1(%arg0: i32) -> (i32, i32) {
    %c1_i32 = arith.constant 1 : i32
    %0 = arith.addi %arg0, %c1_i32 : i32
    %c0_i32 = arith.constant 0 : i32
    %c0_i32_0 = arith.constant 0 : i32
    return %0, %c0_i32 : i32, i32
  }
  func.func @transform_2(%arg0: i32) -> (i32, i32) {
    %c0_i32 = arith.constant 0 : i32
    %c0_i32_0 = arith.constant 0 : i32
    %c0_i32_1 = arith.constant 0 : i32
    return %c0_i32, %c0_i32_0 : i32, i32
  }
  func.func @transform_3(%arg0: i32) -> (i32, i32) {
    %c0_i32 = arith.constant 0 : i32
    %c0_i32_0 = arith.constant 0 : i32
    %c0_i32_1 = arith.constant 0 : i32
    return %c0_i32, %c0_i32_0 : i32, i32
  }
  func.func @transform_4(%arg0: i32) -> (i32, i32) {
    %c0_i32 = arith.constant 0 : i32
    %c0_i32_0 = arith.constant 0 : i32
    %c0_i32_1 = arith.constant 0 : i32
    return %c0_i32, %c0_i32_0 : i32, i32
  }
  func.func @transform_5(%arg0: i32) -> (i32, i32) {
    %c1_i32 = arith.constant 1 : i32
    %0 = arith.addi %arg0, %c1_i32 : i32
    %c0_i32 = arith.constant 0 : i32
    %c0_i32_0 = arith.constant 0 : i32
    return %0, %c0_i32 : i32, i32
  }
}

module attributes {stable_mosaic.version = 11 : i64} {
  func.func @_pool_avg_kernel(%arg0: i32, %arg1: memref<32x128xf32, #tpu.memory_space<vmem>>, %arg2: memref<32x128xf32, #tpu.memory_space<vmem>>, %arg3: memref<32x128xf32, #tpu.memory_space<vmem>>, %arg4: memref<32x128xf32, #tpu.memory_space<vmem>>, %arg5: memref<32x128xf32, #tpu.memory_space<vmem>>) attributes {dimension_semantics = [#tpu.dimension_semantics<parallel>], iteration_bounds = array<i64: 1>, scalar_prefetch = 0 : i64, scratch_operands = 0 : i64, tpu.core_type = #tpu.core_type<tc>, window_params = [{transform_indices = @transform_0, window_bounds = array<i64: 32, 128>}, {transform_indices = @transform_1, window_bounds = array<i64: 32, 128>}, {transform_indices = @transform_2, window_bounds = array<i64: 32, 128>}, {transform_indices = @transform_3, window_bounds = array<i64: 32, 128>}, {transform_indices = @transform_4, window_bounds = array<i64: 32, 128>}]} {
    %c0 = arith.constant 0 : index
    %c0_0 = arith.constant 0 : index
    %0 = vector.load %arg1[%c0, %c0_0] : memref<32x128xf32, #tpu.memory_space<vmem>>, vector<32x128xf32>
    %c0_1 = arith.constant 0 : index
    %c0_2 = arith.constant 0 : index
    %1 = vector.load %arg2[%c0_1, %c0_2] : memref<32x128xf32, #tpu.memory_space<vmem>>, vector<32x128xf32>
    %2 = arith.addf %0, %1 : vector<32x128xf32>
    %c0_3 = arith.constant 0 : index
    %c0_4 = arith.constant 0 : index
    %3 = vector.load %arg3[%c0_3, %c0_4] : memref<32x128xf32, #tpu.memory_space<vmem>>, vector<32x128xf32>
    %4 = arith.addf %2, %3 : vector<32x128xf32>
    %c0_5 = arith.constant 0 : index
    %c0_6 = arith.constant 0 : index
    %5 = vector.load %arg4[%c0_5, %c0_6] : memref<32x128xf32, #tpu.memory_space<vmem>>, vector<32x128xf32>
    %6 = arith.addf %4, %5 : vector<32x128xf32>
    %cst = arith.constant 2.500000e-01 : f32
    %7 = vector.broadcast %cst : f32 to vector<32x128xf32>
    %8 = arith.mulf %6, %7 : vector<32x128xf32>
    %c0_7 = arith.constant 0 : index
    %c0_8 = arith.constant 0 : index
    %9 = vector.load %arg5[%c0_7, %c0_8] : memref<32x128xf32, #tpu.memory_space<vmem>>, vector<32x128xf32>
    tpu.vector_store %arg5[%c0_7, %c0_8], %8 {strides = array<i32>} : memref<32x128xf32, #tpu.memory_space<vmem>>, vector<32x128xf32>,
    return
  }
  func.func @transform_0(%arg0: i32) -> (i32, i32) {
    %c0_i32 = arith.constant 0 : i32
    %c0_i32_0 = arith.constant 0 : i32
    return %arg0, %c0_i32 : i32, i32
  }
  func.func @transform_1(%arg0: i32) -> (i32, i32) {
    %c0_i32 = arith.constant 0 : i32
    %c0_i32_0 = arith.constant 0 : i32
    return %arg0, %c0_i32 : i32, i32
  }
  func.func @transform_2(%arg0: i32) -> (i32, i32) {
    %c0_i32 = arith.constant 0 : i32
    %c0_i32_0 = arith.constant 0 : i32
    return %arg0, %c0_i32 : i32, i32
  }
  func.func @transform_3(%arg0: i32) -> (i32, i32) {
    %c0_i32 = arith.constant 0 : i32
    %c0_i32_0 = arith.constant 0 : i32
    return %arg0, %c0_i32 : i32, i32
  }
  func.func @transform_4(%arg0: i32) -> (i32, i32) {
    %c0_i32 = arith.constant 0 : i32
    %c0_i32_0 = arith.constant 0 : i32
    return %arg0, %c0_i32 : i32, i32
  }
}

module attributes {stable_mosaic.version = 11 : i64} {
  func.func @_mm_bn_relu_kernel(%arg0: i32, %arg1: memref<72x128xf32, #tpu.memory_space<vmem>>, %arg2: memref<72x1xf32, #tpu.memory_space<vmem>>, %arg3: memref<1x128xf32, #tpu.memory_space<vmem>>, %arg4: memref<1x128xf32, #tpu.memory_space<vmem>>, %arg5: memref<128x128xf32, #tpu.memory_space<vmem>>, %arg6: memref<72x128xf32, #tpu.memory_space<vmem>>) attributes {dimension_semantics = [#tpu.dimension_semantics<parallel>], iteration_bounds = array<i64: 1>, scalar_prefetch = 0 : i64, scratch_operands = 0 : i64, tpu.core_type = #tpu.core_type<tc>, window_params = [{transform_indices = @transform_0, window_bounds = array<i64: 72, 128>}, {transform_indices = @transform_1, window_bounds = array<i64: 72, 1>}, {pipeline_mode = #tpu.pipeline_mode<synchronous>, transform_indices = @transform_2, window_bounds = array<i64: 1, 128>}, {pipeline_mode = #tpu.pipeline_mode<synchronous>, transform_indices = @transform_3, window_bounds = array<i64: 1, 128>}, {pipeline_mode = #tpu.pipeline_mode<synchronous>, transform_indices = @transform_4, window_bounds = array<i64: 128, 128>}, {transform_indices = @transform_5, window_bounds = array<i64: 72, 128>}]} {
    %c0 = arith.constant 0 : index
    %c0_0 = arith.constant 0 : index
    %0 = vector.load %arg2[%c0, %c0_0] : memref<72x1xf32, #tpu.memory_space<vmem>>, vector<72x1xf32>
    %cst = arith.constant 0.000000e+00 : f32
    %1 = vector.broadcast %cst : f32 to vector<72x1xf32>
    %2 = arith.cmpf ogt, %0, %1 : vector<72x1xf32>
    %c0_1 = arith.constant 0 : index
    %c0_2 = arith.constant 0 : index
    %3 = vector.load %arg1[%c0_1, %c0_2] : memref<72x128xf32, #tpu.memory_space<vmem>>, vector<72x128xf32>
    %c0_3 = arith.constant 0 : index
    %c0_4 = arith.constant 0 : index
    %4 = vector.load %arg3[%c0_3, %c0_4] : memref<1x128xf32, #tpu.memory_space<vmem>>, vector<1x128xf32>
    %5 = vector.broadcast %4 : vector<1x128xf32> to vector<72x128xf32>
    %6 = arith.mulf %3, %5 : vector<72x128xf32>
    %c0_5 = arith.constant 0 : index
    %c0_6 = arith.constant 0 : index
    %7 = vector.load %arg4[%c0_5, %c0_6] : memref<1x128xf32, #tpu.memory_space<vmem>>, vector<1x128xf32>
    %8 = vector.broadcast %7 : vector<1x128xf32> to vector<72x128xf32>
    %9 = arith.addf %6, %8 : vector<72x128xf32>
    %cst_7 = arith.constant 0.000000e+00 : f32
    %10 = vector.broadcast %cst_7 : f32 to vector<72x128xf32>
    %11 = arith.maximumf %9, %10 : vector<72x128xf32>
    %cst_8 = arith.constant 0.000000e+00 : f32
    %12 = vector.shape_cast %2 : vector<72x1xi1> to vector<72x1xi1>
    %13 = vector.broadcast %12 : vector<72x1xi1> to vector<72x128xi1>
    %14 = vector.broadcast %cst_8 : f32 to vector<72x128xf32>
    %15 = arith.select %13, %11, %14 : vector<72x128xi1>, vector<72x128xf32>
    %c0_9 = arith.constant 0 : index
    %c0_10 = arith.constant 0 : index
    %16 = vector.load %arg5[%c0_9, %c0_10] : memref<128x128xf32, #tpu.memory_space<vmem>>, vector<128x128xf32>
    %cst_11 = arith.constant dense<0.000000e+00> : vector<72x128xf32>
    %17 = tpu.matmul %15, %16, %cst_11 {dimension_numbers = #tpu.dot_dimension_numbers<[1], [0], [0], [1], [0, 0, 1, 1], [], []>} : vector<72x128xf32>, vector<128x128xf32>, vector<72x128xf32> -> vector<72x128xf32>
    %c0_12 = arith.constant 0 : index
    %c0_13 = arith.constant 0 : index
    %18 = vector.load %arg6[%c0_12, %c0_13] : memref<72x128xf32, #tpu.memory_space<vmem>>, vector<72x128xf32>
    tpu.vector_store %arg6[%c0_12, %c0_13], %17 {strides = array<i32>} : memref<72x128xf32, #tpu.memory_space<vmem>>, vector<72x128xf32>,
    return
  }
  func.func @transform_0(%arg0: i32) -> (i32, i32) {
    %c1_i32 = arith.constant 1 : i32
    %0 = arith.addi %arg0, %c1_i32 : i32
    %c0_i32 = arith.constant 0 : i32
    %c0_i32_0 = arith.constant 0 : i32
    return %0, %c0_i32 : i32, i32
  }
  func.func @transform_1(%arg0: i32) -> (i32, i32) {
    %c1_i32 = arith.constant 1 : i32
    %0 = arith.addi %arg0, %c1_i32 : i32
    %c0_i32 = arith.constant 0 : i32
    %c0_i32_0 = arith.constant 0 : i32
    return %0, %c0_i32 : i32, i32
  }
  func.func @transform_2(%arg0: i32) -> (i32, i32) {
    %c0_i32 = arith.constant 0 : i32
    %c0_i32_0 = arith.constant 0 : i32
    %c0_i32_1 = arith.constant 0 : i32
    return %c0_i32, %c0_i32_0 : i32, i32
  }
  func.func @transform_3(%arg0: i32) -> (i32, i32) {
    %c0_i32 = arith.constant 0 : i32
    %c0_i32_0 = arith.constant 0 : i32
    %c0_i32_1 = arith.constant 0 : i32
    return %c0_i32, %c0_i32_0 : i32, i32
  }
  func.func @transform_4(%arg0: i32) -> (i32, i32) {
    %c0_i32 = arith.constant 0 : i32
    %c0_i32_0 = arith.constant 0 : i32
    %c0_i32_1 = arith.constant 0 : i32
    return %c0_i32, %c0_i32_0 : i32, i32
  }
  func.func @transform_5(%arg0: i32) -> (i32, i32) {
    %c1_i32 = arith.constant 1 : i32
    %0 = arith.addi %arg0, %c1_i32 : i32
    %c0_i32 = arith.constant 0 : i32
    %c0_i32_0 = arith.constant 0 : i32
    return %0, %c0_i32 : i32, i32
  }
}

module attributes {stable_mosaic.version = 11 : i64} {
  func.func @_conv3x3_bn_relu_kernel(%arg0: i32, %arg1: memref<216x128xf32, #tpu.memory_space<any>>, %arg2: memref<216x1xf32, #tpu.memory_space<any>>, %arg3: memref<1x128xf32, #tpu.memory_space<vmem>>, %arg4: memref<1x128xf32, #tpu.memory_space<vmem>>, %arg5: memref<1152x128xf32, #tpu.memory_space<vmem>>, %arg6: memref<72x128xf32, #tpu.memory_space<vmem>>, %arg7: memref<86x128xf32, #tpu.memory_space<vmem>>, %arg8: memref<86x1xf32, #tpu.memory_space<vmem>>, %arg9: memref<2x!tpu.dma_semaphore, #tpu.memory_space<semaphore_mem>>) attributes {dimension_semantics = [#tpu.dimension_semantics<parallel>], iteration_bounds = array<i64: 1>, scalar_prefetch = 0 : i64, scratch_operands = 3 : i64, tpu.core_type = #tpu.core_type<tc>, window_params = [{}, {}, {pipeline_mode = #tpu.pipeline_mode<synchronous>, transform_indices = @transform_2, window_bounds = array<i64: 1, 128>}, {pipeline_mode = #tpu.pipeline_mode<synchronous>, transform_indices = @transform_3, window_bounds = array<i64: 1, 128>}, {pipeline_mode = #tpu.pipeline_mode<synchronous>, transform_indices = @transform_4, window_bounds = array<i64: 1152, 128>}, {transform_indices = @transform_5, window_bounds = array<i64: 72, 128>}]} {
    %c1_i32 = arith.constant 1 : i32
    %0 = arith.addi %arg0, %c1_i32 : i32
    %c72_i32 = arith.constant 72 : i32
    %1 = arith.muli %0, %c72_i32 : i32
    %c7_i32 = arith.constant 7 : i32
    %2 = arith.subi %1, %c7_i32 : i32
    %c0_i32 = arith.constant 0 : i32
    %c0_i32_0 = arith.constant 0 : i32
    %3 = tpu.memref_slice %arg1[%2, %c0_i32_0] : memref<216x128xf32, #tpu.memory_space<any>> -> memref<86x128xf32, #tpu.memory_space<any>>
    %4 = tpu.memref_slice %arg9[%c0_i32] : memref<2x!tpu.dma_semaphore, #tpu.memory_space<semaphore_mem>> -> memref<1x!tpu.dma_semaphore, #tpu.memory_space<semaphore_mem>>
    %5 = tpu.memref_squeeze %4 : memref<1x!tpu.dma_semaphore, #tpu.memory_space<semaphore_mem>> -> memref<!tpu.dma_semaphore, #tpu.memory_space<semaphore_mem>>
    tpu.enqueue_dma source(%3 : memref<86x128xf32, #tpu.memory_space<any>>) target(%arg7 : memref<86x128xf32, #tpu.memory_space<vmem>>) target_semaphore(%5 : memref<!tpu.dma_semaphore, #tpu.memory_space<semaphore_mem>>)
    %c1_i32_1 = arith.constant 1 : i32
    %c0_i32_2 = arith.constant 0 : i32
    %6 = tpu.memref_slice %arg2[%2, %c0_i32_2] : memref<216x1xf32, #tpu.memory_space<any>> -> memref<86x1xf32, #tpu.memory_space<any>>
    %7 = tpu.memref_slice %arg9[%c1_i32_1] : memref<2x!tpu.dma_semaphore, #tpu.memory_space<semaphore_mem>> -> memref<1x!tpu.dma_semaphore, #tpu.memory_space<semaphore_mem>>
    %8 = tpu.memref_squeeze %7 : memref<1x!tpu.dma_semaphore, #tpu.memory_space<semaphore_mem>> -> memref<!tpu.dma_semaphore, #tpu.memory_space<semaphore_mem>>
    tpu.enqueue_dma source(%6 : memref<86x1xf32, #tpu.memory_space<any>>) target(%arg8 : memref<86x1xf32, #tpu.memory_space<vmem>>) target_semaphore(%8 : memref<!tpu.dma_semaphore, #tpu.memory_space<semaphore_mem>>)
    %c0_i32_3 = arith.constant 0 : i32
    %c0_i32_4 = arith.constant 0 : i32
    %9 = tpu.memref_slice %arg1[%2, %c0_i32_4] : memref<216x128xf32, #tpu.memory_space<any>> -> memref<86x128xf32, #tpu.memory_space<any>>
    %10 = tpu.memref_slice %arg9[%c0_i32_3] : memref<2x!tpu.dma_semaphore, #tpu.memory_space<semaphore_mem>> -> memref<1x!tpu.dma_semaphore, #tpu.memory_space<semaphore_mem>>
    %11 = tpu.memref_squeeze %10 : memref<1x!tpu.dma_semaphore, #tpu.memory_space<semaphore_mem>> -> memref<!tpu.dma_semaphore, #tpu.memory_space<semaphore_mem>>
    tpu.wait_dma2 semaphore(%11 : memref<!tpu.dma_semaphore, #tpu.memory_space<semaphore_mem>>) src(%9 : memref<86x128xf32, #tpu.memory_space<any>>) dst(%arg7 : memref<86x128xf32, #tpu.memory_space<vmem>>)
    %c1_i32_5 = arith.constant 1 : i32
    %c0_i32_6 = arith.constant 0 : i32
    %12 = tpu.memref_slice %arg2[%2, %c0_i32_6] : memref<216x1xf32, #tpu.memory_space<any>> -> memref<86x1xf32, #tpu.memory_space<any>>
    %13 = tpu.memref_slice %arg9[%c1_i32_5] : memref<2x!tpu.dma_semaphore, #tpu.memory_space<semaphore_mem>> -> memref<1x!tpu.dma_semaphore, #tpu.memory_space<semaphore_mem>>
    %14 = tpu.memref_squeeze %13 : memref<1x!tpu.dma_semaphore, #tpu.memory_space<semaphore_mem>> -> memref<!tpu.dma_semaphore, #tpu.memory_space<semaphore_mem>>
    tpu.wait_dma2 semaphore(%14 : memref<!tpu.dma_semaphore, #tpu.memory_space<semaphore_mem>>) src(%12 : memref<86x1xf32, #tpu.memory_space<any>>) dst(%arg8 : memref<86x1xf32, #tpu.memory_space<vmem>>)
    %c0 = arith.constant 0 : index
    %c0_7 = arith.constant 0 : index
    %15 = vector.load %arg8[%c0, %c0_7] : memref<86x1xf32, #tpu.memory_space<vmem>>, vector<86x1xf32>
    %cst = arith.constant 0.000000e+00 : f32
    %16 = vector.broadcast %cst : f32 to vector<86x1xf32>
    %17 = arith.cmpf ogt, %15, %16 : vector<86x1xf32>
    %c0_8 = arith.constant 0 : index
    %c0_9 = arith.constant 0 : index
    %18 = vector.load %arg7[%c0_8, %c0_9] : memref<86x128xf32, #tpu.memory_space<vmem>>, vector<86x128xf32>
    %c0_10 = arith.constant 0 : index
    %c0_11 = arith.constant 0 : index
    %19 = vector.load %arg3[%c0_10, %c0_11] : memref<1x128xf32, #tpu.memory_space<vmem>>, vector<1x128xf32>
    %20 = vector.broadcast %19 : vector<1x128xf32> to vector<86x128xf32>
    %21 = arith.mulf %18, %20 : vector<86x128xf32>
    %c0_12 = arith.constant 0 : index
    %c0_13 = arith.constant 0 : index
    %22 = vector.load %arg4[%c0_12, %c0_13] : memref<1x128xf32, #tpu.memory_space<vmem>>, vector<1x128xf32>
    %23 = vector.broadcast %22 : vector<1x128xf32> to vector<86x128xf32>
    %24 = arith.addf %21, %23 : vector<86x128xf32>
    %cst_14 = arith.constant 0.000000e+00 : f32
    %25 = vector.broadcast %cst_14 : f32 to vector<86x128xf32>
    %26 = arith.maximumf %24, %25 : vector<86x128xf32>
    %cst_15 = arith.constant 0.000000e+00 : f32
    %27 = vector.shape_cast %17 : vector<86x1xi1> to vector<86x1xi1>
    %28 = vector.broadcast %27 : vector<86x1xi1> to vector<86x128xi1>
    %29 = vector.broadcast %cst_15 : f32 to vector<86x128xf32>
    %30 = arith.select %28, %26, %29 : vector<86x128xi1>, vector<86x128xf32>
    %c0_16 = arith.constant 0 : index
    %c0_17 = arith.constant 0 : index
    %31 = vector.load %arg7[%c0_16, %c0_17] : memref<86x128xf32, #tpu.memory_space<vmem>>, vector<86x128xf32>
    tpu.vector_store %arg7[%c0_16, %c0_17], %30 {strides = array<i32>} : memref<86x128xf32, #tpu.memory_space<vmem>>, vector<86x128xf32>,
    %cst_18 = arith.constant 0.000000e+00 : f32
    %32 = vector.broadcast %cst_18 : f32 to vector<72x128xf32>
    %c0_19 = arith.constant 0 : index
    %c0_20 = arith.constant 0 : index
    %33 = vector.load %arg7[%c0_19, %c0_20] : memref<86x128xf32, #tpu.memory_space<vmem>>, vector<72x128xf32>
    %c0_21 = arith.constant 0 : index
    %c0_22 = arith.constant 0 : index
    %34 = vector.load %arg5[%c0_21, %c0_22] : memref<1152x128xf32, #tpu.memory_space<vmem>>, vector<128x128xf32>
    %cst_23 = arith.constant dense<0.000000e+00> : vector<72x128xf32>
    %35 = tpu.matmul %33, %34, %cst_23 {dimension_numbers = #tpu.dot_dimension_numbers<[1], [0], [0], [1], [0, 0, 1, 1], [], []>} : vector<72x128xf32>, vector<128x128xf32>, vector<72x128xf32> -> vector<72x128xf32>
    %36 = arith.addf %32, %35 : vector<72x128xf32>
    %c1 = arith.constant 1 : index
    %c0_24 = arith.constant 0 : index
    %37 = vector.load %arg7[%c1, %c0_24] : memref<86x128xf32, #tpu.memory_space<vmem>>, vector<72x128xf32>
    %c128 = arith.constant 128 : index
    %c0_25 = arith.constant 0 : index
    %38 = vector.load %arg5[%c128, %c0_25] : memref<1152x128xf32, #tpu.memory_space<vmem>>, vector<128x128xf32>
    %cst_26 = arith.constant dense<0.000000e+00> : vector<72x128xf32>
    %39 = tpu.matmul %37, %38, %cst_26 {dimension_numbers = #tpu.dot_dimension_numbers<[1], [0], [0], [1], [0, 0, 1, 1], [], []>} : vector<72x128xf32>, vector<128x128xf32>, vector<72x128xf32> -> vector<72x128xf32>
    %40 = arith.addf %36, %39 : vector<72x128xf32>
    %c2 = arith.constant 2 : index
    %c0_27 = arith.constant 0 : index
    %41 = vector.load %arg7[%c2, %c0_27] : memref<86x128xf32, #tpu.memory_space<vmem>>, vector<72x128xf32>
    %c256 = arith.constant 256 : index
    %c0_28 = arith.constant 0 : index
    %42 = vector.load %arg5[%c256, %c0_28] : memref<1152x128xf32, #tpu.memory_space<vmem>>, vector<128x128xf32>
    %cst_29 = arith.constant dense<0.000000e+00> : vector<72x128xf32>
    %43 = tpu.matmul %41, %42, %cst_29 {dimension_numbers = #tpu.dot_dimension_numbers<[1], [0], [0], [1], [0, 0, 1, 1], [], []>} : vector<72x128xf32>, vector<128x128xf32>, vector<72x128xf32> -> vector<72x128xf32>
    %44 = arith.addf %40, %43 : vector<72x128xf32>
    %c6 = arith.constant 6 : index
    %c0_30 = arith.constant 0 : index
    %45 = vector.load %arg7[%c6, %c0_30] : memref<86x128xf32, #tpu.memory_space<vmem>>, vector<72x128xf32>
    %c384 = arith.constant 384 : index
    %c0_31 = arith.constant 0 : index
    %46 = vector.load %arg5[%c384, %c0_31] : memref<1152x128xf32, #tpu.memory_space<vmem>>, vector<128x128xf32>
    %cst_32 = arith.constant dense<0.000000e+00> : vector<72x128xf32>
    %47 = tpu.matmul %45, %46, %cst_32 {dimension_numbers = #tpu.dot_dimension_numbers<[1], [0], [0], [1], [0, 0, 1, 1], [], []>} : vector<72x128xf32>, vector<128x128xf32>, vector<72x128xf32> -> vector<72x128xf32>
    %48 = arith.addf %44, %47 : vector<72x128xf32>
    %c7 = arith.constant 7 : index
    %c0_33 = arith.constant 0 : index
    %49 = vector.load %arg7[%c7, %c0_33] : memref<86x128xf32, #tpu.memory_space<vmem>>, vector<72x128xf32>
    %c512 = arith.constant 512 : index
    %c0_34 = arith.constant 0 : index
    %50 = vector.load %arg5[%c512, %c0_34] : memref<1152x128xf32, #tpu.memory_space<vmem>>, vector<128x128xf32>
    %cst_35 = arith.constant dense<0.000000e+00> : vector<72x128xf32>
    %51 = tpu.matmul %49, %50, %cst_35 {dimension_numbers = #tpu.dot_dimension_numbers<[1], [0], [0], [1], [0, 0, 1, 1], [], []>} : vector<72x128xf32>, vector<128x128xf32>, vector<72x128xf32> -> vector<72x128xf32>
    %52 = arith.addf %48, %51 : vector<72x128xf32>
    %c8 = arith.constant 8 : index
    %c0_36 = arith.constant 0 : index
    %53 = vector.load %arg7[%c8, %c0_36] : memref<86x128xf32, #tpu.memory_space<vmem>>, vector<72x128xf32>
    %c640 = arith.constant 640 : index
    %c0_37 = arith.constant 0 : index
    %54 = vector.load %arg5[%c640, %c0_37] : memref<1152x128xf32, #tpu.memory_space<vmem>>, vector<128x128xf32>
    %cst_38 = arith.constant dense<0.000000e+00> : vector<72x128xf32>
    %55 = tpu.matmul %53, %54, %cst_38 {dimension_numbers = #tpu.dot_dimension_numbers<[1], [0], [0], [1], [0, 0, 1, 1], [], []>} : vector<72x128xf32>, vector<128x128xf32>, vector<72x128xf32> -> vector<72x128xf32>
    %56 = arith.addf %52, %55 : vector<72x128xf32>
    %c12 = arith.constant 12 : index
    %c0_39 = arith.constant 0 : index
    %57 = vector.load %arg7[%c12, %c0_39] : memref<86x128xf32, #tpu.memory_space<vmem>>, vector<72x128xf32>
    %c768 = arith.constant 768 : index
    %c0_40 = arith.constant 0 : index
    %58 = vector.load %arg5[%c768, %c0_40] : memref<1152x128xf32, #tpu.memory_space<vmem>>, vector<128x128xf32>
    %cst_41 = arith.constant dense<0.000000e+00> : vector<72x128xf32>
    %59 = tpu.matmul %57, %58, %cst_41 {dimension_numbers = #tpu.dot_dimension_numbers<[1], [0], [0], [1], [0, 0, 1, 1], [], []>} : vector<72x128xf32>, vector<128x128xf32>, vector<72x128xf32> -> vector<72x128xf32>
    %60 = arith.addf %56, %59 : vector<72x128xf32>
    %c13 = arith.constant 13 : index
    %c0_42 = arith.constant 0 : index
    %61 = vector.load %arg7[%c13, %c0_42] : memref<86x128xf32, #tpu.memory_space<vmem>>, vector<72x128xf32>
    %c896 = arith.constant 896 : index
    %c0_43 = arith.constant 0 : index
    %62 = vector.load %arg5[%c896, %c0_43] : memref<1152x128xf32, #tpu.memory_space<vmem>>, vector<128x128xf32>
    %cst_44 = arith.constant dense<0.000000e+00> : vector<72x128xf32>
    %63 = tpu.matmul %61, %62, %cst_44 {dimension_numbers = #tpu.dot_dimension_numbers<[1], [0], [0], [1], [0, 0, 1, 1], [], []>} : vector<72x128xf32>, vector<128x128xf32>, vector<72x128xf32> -> vector<72x128xf32>
    %64 = arith.addf %60, %63 : vector<72x128xf32>
    %c14 = arith.constant 14 : index
    %c0_45 = arith.constant 0 : index
    %65 = vector.load %arg7[%c14, %c0_45] : memref<86x128xf32, #tpu.memory_space<vmem>>, vector<72x128xf32>
    %c1024 = arith.constant 1024 : index
    %c0_46 = arith.constant 0 : index
    %66 = vector.load %arg5[%c1024, %c0_46] : memref<1152x128xf32, #tpu.memory_space<vmem>>, vector<128x128xf32>
    %cst_47 = arith.constant dense<0.000000e+00> : vector<72x128xf32>
    %67 = tpu.matmul %65, %66, %cst_47 {dimension_numbers = #tpu.dot_dimension_numbers<[1], [0], [0], [1], [0, 0, 1, 1], [], []>} : vector<72x128xf32>, vector<128x128xf32>, vector<72x128xf32> -> vector<72x128xf32>
    %68 = arith.addf %64, %67 : vector<72x128xf32>
    %c0_48 = arith.constant 0 : index
    %c0_49 = arith.constant 0 : index
    %69 = vector.load %arg6[%c0_48, %c0_49] : memref<72x128xf32, #tpu.memory_space<vmem>>, vector<72x128xf32>
    tpu.vector_store %arg6[%c0_48, %c0_49], %68 {strides = array<i32>} : memref<72x128xf32, #tpu.memory_space<vmem>>, vector<72x128xf32>,
    return
  }
  func.func @transform_2(%arg0: i32) -> (i32, i32) {
    %c0_i32 = arith.constant 0 : i32
    %c0_i32_0 = arith.constant 0 : i32
    %c0_i32_1 = arith.constant 0 : i32
    return %c0_i32, %c0_i32_0 : i32, i32
  }
  func.func @transform_3(%arg0: i32) -> (i32, i32) {
    %c0_i32 = arith.constant 0 : i32
    %c0_i32_0 = arith.constant 0 : i32
    %c0_i32_1 = arith.constant 0 : i32
    return %c0_i32, %c0_i32_0 : i32, i32
  }
  func.func @transform_4(%arg0: i32) -> (i32, i32) {
    %c0_i32 = arith.constant 0 : i32
    %c0_i32_0 = arith.constant 0 : i32
    %c0_i32_1 = arith.constant 0 : i32
    return %c0_i32, %c0_i32_0 : i32, i32
  }
  func.func @transform_5(%arg0: i32) -> (i32, i32) {
    %c1_i32 = arith.constant 1 : i32
    %0 = arith.addi %arg0, %c1_i32 : i32
    %c0_i32 = arith.constant 0 : i32
    %c0_i32_0 = arith.constant 0 : i32
    return %0, %c0_i32 : i32, i32
  }
}

module attributes {stable_mosaic.version = 11 : i64} {
  func.func @_bn_relu_mask_kernel(%arg0: i32, %arg1: memref<32x128xf32, #tpu.memory_space<vmem>>, %arg2: memref<1x128xf32, #tpu.memory_space<vmem>>, %arg3: memref<1x128xf32, #tpu.memory_space<vmem>>, %arg4: memref<32x1xf32, #tpu.memory_space<vmem>>, %arg5: memref<32x128xf32, #tpu.memory_space<vmem>>) attributes {dimension_semantics = [#tpu.dimension_semantics<parallel>], iteration_bounds = array<i64: 1>, scalar_prefetch = 0 : i64, scratch_operands = 0 : i64, tpu.core_type = #tpu.core_type<tc>, window_params = [{transform_indices = @transform_0, window_bounds = array<i64: 32, 128>}, {pipeline_mode = #tpu.pipeline_mode<synchronous>, transform_indices = @transform_1, window_bounds = array<i64: 1, 128>}, {pipeline_mode = #tpu.pipeline_mode<synchronous>, transform_indices = @transform_2, window_bounds = array<i64: 1, 128>}, {transform_indices = @transform_3, window_bounds = array<i64: 32, 1>}, {transform_indices = @transform_4, window_bounds = array<i64: 32, 128>}]} {
    %c0 = arith.constant 0 : index
    %c0_0 = arith.constant 0 : index
    %0 = vector.load %arg4[%c0, %c0_0] : memref<32x1xf32, #tpu.memory_space<vmem>>, vector<32x1xf32>
    %cst = arith.constant 0.000000e+00 : f32
    %1 = vector.broadcast %cst : f32 to vector<32x1xf32>
    %2 = arith.cmpf ogt, %0, %1 : vector<32x1xf32>
    %c0_1 = arith.constant 0 : index
    %c0_2 = arith.constant 0 : index
    %3 = vector.load %arg1[%c0_1, %c0_2] : memref<32x128xf32, #tpu.memory_space<vmem>>, vector<32x128xf32>
    %c0_3 = arith.constant 0 : index
    %c0_4 = arith.constant 0 : index
    %4 = vector.load %arg2[%c0_3, %c0_4] : memref<1x128xf32, #tpu.memory_space<vmem>>, vector<1x128xf32>
    %5 = vector.broadcast %4 : vector<1x128xf32> to vector<32x128xf32>
    %6 = arith.mulf %3, %5 : vector<32x128xf32>
    %c0_5 = arith.constant 0 : index
    %c0_6 = arith.constant 0 : index
    %7 = vector.load %arg3[%c0_5, %c0_6] : memref<1x128xf32, #tpu.memory_space<vmem>>, vector<1x128xf32>
    %8 = vector.broadcast %7 : vector<1x128xf32> to vector<32x128xf32>
    %9 = arith.addf %6, %8 : vector<32x128xf32>
    %cst_7 = arith.constant 0.000000e+00 : f32
    %10 = vector.broadcast %cst_7 : f32 to vector<32x128xf32>
    %11 = arith.maximumf %9, %10 : vector<32x128xf32>
    %cst_8 = arith.constant 0.000000e+00 : f32
    %12 = vector.shape_cast %2 : vector<32x1xi1> to vector<32x1xi1>
    %13 = vector.broadcast %12 : vector<32x1xi1> to vector<32x128xi1>
    %14 = vector.broadcast %cst_8 : f32 to vector<32x128xf32>
    %15 = arith.select %13, %11, %14 : vector<32x128xi1>, vector<32x128xf32>
    %c0_9 = arith.constant 0 : index
    %c0_10 = arith.constant 0 : index
    %16 = vector.load %arg5[%c0_9, %c0_10] : memref<32x128xf32, #tpu.memory_space<vmem>>, vector<32x128xf32>
    tpu.vector_store %arg5[%c0_9, %c0_10], %15 {strides = array<i32>} : memref<32x128xf32, #tpu.memory_space<vmem>>, vector<32x128xf32>,
    return
  }
  func.func @transform_0(%arg0: i32) -> (i32, i32) {
    %c0_i32 = arith.constant 0 : i32
    %c0_i32_0 = arith.constant 0 : i32
    return %arg0, %c0_i32 : i32, i32
  }
  func.func @transform_1(%arg0: i32) -> (i32, i32) {
    %c0_i32 = arith.constant 0 : i32
    %c0_i32_0 = arith.constant 0 : i32
    %c0_i32_1 = arith.constant 0 : i32
    return %c0_i32, %c0_i32_0 : i32, i32
  }
  func.func @transform_2(%arg0: i32) -> (i32, i32) {
    %c0_i32 = arith.constant 0 : i32
    %c0_i32_0 = arith.constant 0 : i32
    %c0_i32_1 = arith.constant 0 : i32
    return %c0_i32, %c0_i32_0 : i32, i32
  }
  func.func @transform_3(%arg0: i32) -> (i32, i32) {
    %c0_i32 = arith.constant 0 : i32
    %c0_i32_0 = arith.constant 0 : i32
    return %arg0, %c0_i32 : i32, i32
  }
  func.func @transform_4(%arg0: i32) -> (i32, i32) {
    %c0_i32 = arith.constant 0 : i32
    %c0_i32_0 = arith.constant 0 : i32
    return %arg0, %c0_i32 : i32, i32
  }
}

module attributes {stable_mosaic.version = 11 : i64} {
  func.func @_gap_linear_kernel(%arg0: i32, %arg1: memref<1x16x128xf32, #tpu.memory_space<vmem>>, %arg2: memref<128x128xf32, #tpu.memory_space<vmem>>, %arg3: memref<1x128xf32, #tpu.memory_space<vmem>>, %arg4: memref<1x1x128xf32, #tpu.memory_space<vmem>>) attributes {dimension_semantics = [#tpu.dimension_semantics<parallel>], iteration_bounds = array<i64: 2>, scalar_prefetch = 0 : i64, scratch_operands = 0 : i64, tpu.core_type = #tpu.core_type<tc>, window_params = [{transform_indices = @transform_0, window_bounds = array<i64: 1, 16, 128>}, {pipeline_mode = #tpu.pipeline_mode<synchronous>, transform_indices = @transform_1, window_bounds = array<i64: 128, 128>}, {pipeline_mode = #tpu.pipeline_mode<synchronous>, transform_indices = @transform_2, window_bounds = array<i64: 1, 128>}, {transform_indices = @transform_3, window_bounds = array<i64: 1, 1, 128>}]} {
    %c0 = arith.constant 0 : index
    %c0_0 = arith.constant 0 : index
    %c0_1 = arith.constant 0 : index
    %0 = vector.load %arg1[%c0, %c0_0, %c0_1] : memref<1x16x128xf32, #tpu.memory_space<vmem>>, vector<1x16x128xf32>
    %1 = vector.shape_cast %0 : vector<1x16x128xf32> to vector<16x128xf32>
    %cst = arith.constant dense<0.000000e+00> : vector<128xf32>
    %2 = vector.multi_reduction <add>, %1, %cst [0] : vector<16x128xf32> to vector<128xf32>
    %3 = vector.shape_cast %2 : vector<128xf32> to vector<1x128xf32>
    %cst_2 = arith.constant 1.600000e+01 : f32
    %4 = vector.broadcast %cst_2 : f32 to vector<1x128xf32>
    %5 = arith.divf %3, %4 : vector<1x128xf32>
    %c0_3 = arith.constant 0 : index
    %c0_4 = arith.constant 0 : index
    %6 = vector.load %arg2[%c0_3, %c0_4] : memref<128x128xf32, #tpu.memory_space<vmem>>, vector<128x128xf32>
    %cst_5 = arith.constant dense<0.000000e+00> : vector<1x128xf32>
    %7 = tpu.matmul %5, %6, %cst_5 {dimension_numbers = #tpu.dot_dimension_numbers<[1], [0], [0], [1], [0, 0, 1, 1], [], []>} : vector<1x128xf32>, vector<128x128xf32>, vector<1x128xf32> -> vector<1x128xf32>
    %c0_6 = arith.constant 0 : index
    %c0_7 = arith.constant 0 : index
    %8 = vector.load %arg3[%c0_6, %c0_7] : memref<1x128xf32, #tpu.memory_space<vmem>>, vector<1x128xf32>
    %9 = arith.addf %7, %8 : vector<1x128xf32>
    %c0_8 = arith.constant 0 : index
    %c0_9 = arith.constant 0 : index
    %c0_10 = arith.constant 0 : index
    %10 = vector.load %arg4[%c0_8, %c0_9, %c0_10] : memref<1x1x128xf32, #tpu.memory_space<vmem>>, vector<1x1x128xf32>
    %11 = vector.shape_cast %10 : vector<1x1x128xf32> to vector<1x128xf32>
    %12 = vector.shape_cast %9 : vector<1x128xf32> to vector<1x1x128xf32>
    tpu.vector_store %arg4[%c0_8, %c0_9, %c0_10], %12 {strides = array<i32>} : memref<1x1x128xf32, #tpu.memory_space<vmem>>, vector<1x1x128xf32>,
    return
  }
  func.func @transform_0(%arg0: i32) -> (i32, i32, i32) {
    %c0_i32 = arith.constant 0 : i32
    %c0_i32_0 = arith.constant 0 : i32
    %c0_i32_1 = arith.constant 0 : i32
    return %arg0, %c0_i32, %c0_i32_0 : i32, i32, i32
  }
  func.func @transform_1(%arg0: i32) -> (i32, i32) {
    %c0_i32 = arith.constant 0 : i32
    %c0_i32_0 = arith.constant 0 : i32
    %c0_i32_1 = arith.constant 0 : i32
    return %c0_i32, %c0_i32_0 : i32, i32
  }
  func.func @transform_2(%arg0: i32) -> (i32, i32) {
    %c0_i32 = arith.constant 0 : i32
    %c0_i32_0 = arith.constant 0 : i32
    %c0_i32_1 = arith.constant 0 : i32
    return %c0_i32, %c0_i32_0 : i32, i32
  }
  func.func @transform_3(%arg0: i32) -> (i32, i32, i32) {
    %c0_i32 = arith.constant 0 : i32
    %c0_i32_0 = arith.constant 0 : i32
    %c0_i32_1 = arith.constant 0 : i32
    return %arg0, %c0_i32, %c0_i32_0 : i32, i32, i32
  }
}

</mosaic_0001>

<llo_original>
// kernel: densenet_forward.15
$region0: #{densenet_forward.15}
  #allocation0 [shape = 'u32[]', space=smem, size = 0x4, offset = 0x4, fixed_abs, tag = 'smem constant byte address 0x4 - core index']
  #allocation1 [shape = 'u32[144,128]{1,0:T(1,128)}', space=vmem, size = 0x12000, scoped, tag = 'internal scratch']
  %s0 = inlined_call_operand.vmem [shape: f32[512,49], index: 0, kind: input, shape index: {}]
  %s1 = inlined_call_operand.vmem [shape: f32[49,128], index: 1, kind: input, shape index: {}]
  %s2 = inlined_call_operand.vmem [shape: f32[512,128], index: 2, kind: output, shape index: {}]
  %s3 = sld [smem:[#allocation0]]
  $region18: #{densenet_forward.15} parent=0
    _
  %s5 = ssub.s32 1, %s3
  %s6 = scalar_select 0, %s5, %s3
  // Predicated region
  $region2: #{densenet_forward.15} parent=0 // pred_check
    _
  $region3: #{densenet_forward.15} parent=0 // pred_check_branch
    %8 = sbr.rel (0) target = $region5
  $region4: #{densenet_forward.15} parent=0 // pred_region
    _
  $region5: #{densenet_forward.15} parent=0 // pred_fallthru
    _
  // Predicated region
  $region6: #{densenet_forward.15} parent=0 // pred_check
    _
  $region7: #{densenet_forward.15} parent=0 // pred_check_branch
    %10 = sbr.rel (0) target = $region9
  $region8: #{densenet_forward.15} parent=0 // pred_region
    _
  $region9: #{densenet_forward.15} parent=0 // pred_fallthru
    _
  %v11 = vld [vmem:[%s0] sm:$0xff]
  %v12 = vld [vmem:[%s0 + $0x8] sm:$0xff]
  %v13 = vld [vmem:[%s0 + $0x10] sm:$0xff]
  %v14 = vld [vmem:[%s0 + $0x18] sm:$0xff]
  %v15 = vld [vmem:[%s0 + $0x20] sm:$0xff]
  %v16 = vld [vmem:[%s0 + $0x28] sm:$0xff]
  %v17 = vld [vmem:[%s0 + $0x30] sm:$0xff]
  %v18 = vld [vmem:[%s0 + $0x38] sm:$0xff]
  %v19 = vld [vmem:[%s0 + $0x40] sm:$0xff]
  %v20 = vld [vmem:[%s0 + $0x48] sm:$0xff]
  %v21 = vld [vmem:[%s0 + $0x50] sm:$0xff]
  %v22 = vld [vmem:[%s0 + $0x58] sm:$0xff]
  %v23 = vld [vmem:[%s0 + $0x60] sm:$0xff]
  %v24 = vld [vmem:[%s0 + $0x68] sm:$0xff]
  %v25 = vld [vmem:[%s0 + $0x70] sm:$0xff]
  %v26 = vld [vmem:[%s0 + $0x78] sm:$0xff]
  %v27 = vld [vmem:[%s0 + $0x80] sm:$0xff]
  %v28 = vld [vmem:[%s0 + $0x88] sm:$0xff]
  %v29 = vld [vmem:[%s0 + $0x90] sm:$0xff]
  %v30 = vld [vmem:[%s0 + $0x98] sm:$0xff]
  %v31 = vld [vmem:[%s0 + $0xa0] sm:$0xff]
  %v32 = vld [vmem:[%s0 + $0xa8] sm:$0xff]
  %v33 = vld [vmem:[%s0 + $0xb0] sm:$0xff]
  %v34 = vld [vmem:[%s0 + $0xb8] sm:$0xff]
  %v35 = vld [vmem:[%s0 + $0xc0] sm:$0xff]
  %v36 = vld [vmem:[%s0 + $0xc8] sm:$0xff]
  %v37 = vld [vmem:[%s0 + $0xd0] sm:$0xff]
  %v38 = vld [vmem:[%s0 + $0xd8] sm:$0xff]
  %v39 = vld [vmem:[%s0 + $0xe0] sm:$0xff]
  %v40 = vld [vmem:[%s0 + $0xe8] sm:$0xff]
  %v41 = vld [vmem:[%s0 + $0xf0] sm:$0xff]
  %v42 = vld [vmem:[%s0 + $0xf8] sm:$0xff]
  %v43 = vld [vmem:[%s0 + $0x100] sm:$0xff]
  %v44 = vld [vmem:[%s0 + $0x108] sm:$0xff]
  %v45 = vld [vmem:[%s0 + $0x110] sm:$0xff]
  %v46 = vld [vmem:[%s0 + $0x118] sm:$0xff]
  %v47 = vld [vmem:[%s0 + $0x120] sm:$0xff]
  %v48 = vld [vmem:[%s0 + $0x128] sm:$0xff]
  %v49 = vld [vmem:[%s0 + $0x130] sm:$0xff]
  %v50 = vld [vmem:[%s0 + $0x138] sm:$0xff]
  %v51 = vld [vmem:[%s0 + $0x140] sm:$0xff]
  %v52 = vld [vmem:[%s0 + $0x148] sm:$0xff]
  %v53 = vld [vmem:[%s0 + $0x150] sm:$0xff]
  %v54 = vld [vmem:[%s0 + $0x158] sm:$0xff]
  %v55 = vld [vmem:[%s0 + $0x160] sm:$0xff]
  %v56 = vld [vmem:[%s0 + $0x168] sm:$0xff]
  %v57 = vld [vmem:[%s0 + $0x170] sm:$0xff]
  %v58 = vld [vmem:[%s0 + $0x178] sm:$0xff]
  %v59 = vld [vmem:[%s0 + $0x180] sm:$0xff]
  %v60 = vld [vmem:[%s0 + $0x188] sm:$0xff]
  %v61 = vld [vmem:[%s0 + $0x190] sm:$0xff]
  %v62 = vld [vmem:[%s0 + $0x198] sm:$0xff]
  %v63 = vld [vmem:[%s0 + $0x1a0] sm:$0xff]
  %v64 = vld [vmem:[%s0 + $0x1a8] sm:$0xff]
  %v65 = vld [vmem:[%s0 + $0x1b0] sm:$0xff]
  %v66 = vld [vmem:[%s0 + $0x1b8] sm:$0xff]
  %v67 = vld [vmem:[%s0 + $0x1c0] sm:$0xff]
  %v68 = vld [vmem:[%s0 + $0x1c8] sm:$0xff]
  %v69 = vld [vmem:[%s0 + $0x1d0] sm:$0xff]
  %v70 = vld [vmem:[%s0 + $0x1d8] sm:$0xff]
  %v71 = vld [vmem:[%s0 + $0x1e0] sm:$0xff]
  %v72 = vld [vmem:[%s0 + $0x1e8] sm:$0xff]
  %v73 = vld [vmem:[%s0 + $0x1f0] sm:$0xff]
  %v74 = vld [vmem:[%s0 + $0x1f8] sm:$0xff]
  %v75 = vld [vmem:[%s1] sm:$0xff]
  %v76 = vld [vmem:[%s1 + $0x8] sm:$0xff]
  %v77 = vld [vmem:[%s1 + $0x10] sm:$0xff]
  %v78 = vld [vmem:[%s1 + $0x18] sm:$0xff]
  %v79 = vld [vmem:[%s1 + $0x20] sm:$0xff]
  %v80 = vld [vmem:[%s1 + $0x28] sm:$0xff]
  %v81 = vld [vmem:[%s1 + $0x30] sm:$0x1]
  %vm82 = vcmask 400384
  %v84 = vsel %vm82, %v11, 0
  %v87 = vsel %vm82, %v12, 0
  %v90 = vsel %vm82, %v13, 0
  %v93 = vsel %vm82, %v14, 0
  %v96 = vsel %vm82, %v15, 0
  %v99 = vsel %vm82, %v16, 0
  %v102 = vsel %vm82, %v17, 0
  %v105 = vsel %vm82, %v18, 0
  %v108 = vsel %vm82, %v19, 0
  %v111 = vsel %vm82, %v20, 0
  %v114 = vsel %vm82, %v21, 0
  %v117 = vsel %vm82, %v22, 0
  %v120 = vsel %vm82, %v23, 0
  %v123 = vsel %vm82, %v24, 0
  %v126 = vsel %vm82, %v25, 0
  %v129 = vsel %vm82, %v26, 0
  %v132 = vsel %vm82, %v27, 0
  %v135 = vsel %vm82, %v28, 0
  %v138 = vsel %vm82, %v29, 0
  %v141 = vsel %vm82, %v30, 0
  %v144 = vsel %vm82, %v31, 0
  %v147 = vsel %vm82, %v32, 0
  %v150 = vsel %vm82, %v33, 0
  %v153 = vsel %vm82, %v34, 0
  %v156 = vsel %vm82, %v35, 0
  %v159 = vsel %vm82, %v36, 0
  %v162 = vsel %vm82, %v37, 0
  %v165 = vsel %vm82, %v38, 0
  %v168 = vsel %vm82, %v39, 0
  %v171 = vsel %vm82, %v40, 0
  %v174 = vsel %vm82, %v41, 0
  %v177 = vsel %vm82, %v42, 0
  %v180 = vsel %vm82, %v43, 0
  %v183 = vsel %vm82, %v44, 0
  %v186 = vsel %vm82, %v45, 0
  %v189 = vsel %vm82, %v46, 0
  %v192 = vsel %vm82, %v47, 0
  %v195 = vsel %vm82, %v48, 0
  %v198 = vsel %vm82, %v49, 0
  %v201 = vsel %vm82, %v50, 0
  %v204 = vsel %vm82, %v51, 0
  %v207 = vsel %vm82, %v52, 0
  %v210 = vsel %vm82, %v53, 0
  %v213 = vsel %vm82, %v54, 0
  %v216 = vsel %vm82, %v55, 0
  %v219 = vsel %vm82, %v56, 0
  %v222 = vsel %vm82, %v57, 0
  %v225 = vsel %vm82, %v58, 0
  %v228 = vsel %vm82, %v59, 0
  %v231 = vsel %vm82, %v60, 0
  %v234 = vsel %vm82, %v61, 0
  %v237 = vsel %vm82, %v62, 0
  %v240 = vsel %vm82, %v63, 0
  %v243 = vsel %vm82, %v64, 0
  %v246 = vsel %vm82, %v65, 0
  %v249 = vsel %vm82, %v66, 0
  %v252 = vsel %vm82, %v67, 0
  %v255 = vsel %vm82, %v68, 0
  %v258 = vsel %vm82, %v69, 0
  %v261 = vsel %vm82, %v70, 0
  %v264 = vsel %vm82, %v71, 0
  %v267 = vsel %vm82, %v72, 0
  %v270 = vsel %vm82, %v73, 0
  %v273 = vsel %vm82, %v74, 0
  %vm275 = vcmask 1040384
  %v277 = vsel %vm275, %v81, 0
  %279 = vmatprep.subr.mxu0 0.0
  %280 = vmatpush1.msra.mxu0 %v75
  %281 = vmatprep.subr.mxu0 0.0
  %282 = vmatpush1.msra.mxu0 %v76
  %283 = vmatprep.subr.mxu0 0.0
  %284 = vmatpush1.msra.mxu0 %v77
  %285 = vmatprep.subr.mxu0 0.0
  %286 = vmatpush1.msra.mxu0 %v78
  %287 = vmatprep.subr.mxu0 0.0
  %288 = vmatpush1.msra.mxu0 %v79
  %289 = vmatprep.subr.mxu0 0.0
  %290 = vmatpush1.msra.mxu0 %v80
  %291 = vmatprep.subr.mxu0 0.0
  %292 = vmatpush1.msra.mxu0 %v277
  %293 = vmatprep.subr.mxu0 0.0
  %294 = vmatpush1.msra.mxu0 0.0
  %295 = vmatprep.subr.mxu0 0.0
  %296 = vmatpush1.msra.mxu0 0.0
  %297 = vmatprep.subr.mxu0 0.0
  %298 = vmatpush1.msra.mxu0 0.0
  %299 = vmatprep.subr.mxu0 0.0
  %300 = vmatpush1.msra.mxu0 0.0
  %301 = vmatprep.subr.mxu0 0.0
  %302 = vmatpush1.msra.mxu0 0.0
  %303 = vmatprep.subr.mxu0 0.0
  %304 = vmatpush1.msra.mxu0 0.0
  %305 = vmatprep.subr.mxu0 0.0
  %306 = vmatpush1.msra.mxu0 0.0
  %307 = vmatprep.subr.mxu0 0.0
  %308 = vmatpush1.msra.mxu0 0.0
  %309 = vmatprep.subr.mxu0 0.0
  %310 = vmatpush1.msra.mxu0 0.0
  %311 = vmatprep.subr.mxu0 0.0
  %312 = vmatpush1.msra.mxu0 0.0
  %313 = vmatprep.subr.mxu0 0.0
  %314 = vmatpush1.msra.mxu0 0.0
  %315 = vmatprep.subr.mxu0 0.0
  %316 = vmatpush1.msra.mxu0 0.0
  %317 = vmatprep.subr.mxu0 0.0
  %318 = vmatpush1.msra.mxu0 0.0
  %319 = vmatprep.subr.mxu0 0.0
  %320 = vmatpush1.msra.mxu0 0.0
  %321 = vmatprep.subr.mxu0 0.0
  %322 = vmatpush1.msra.mxu0 0.0
  %323 = vmatprep.subr.mxu0 0.0
  %324 = vmatpush1.msra.mxu0 0.0
  %325 = vmatprep.subr.mxu0 0.0
  %326 = vmatpush1.msra.mxu0 0.0
  %327 = vmatprep.subr.mxu0 0.0
  %328 = vmatpush1.msra.mxu0 0.0
  %329 = vmatprep.subr.mxu0 0.0
  %330 = vmatpush1.msra.mxu0 0.0
  %331 = vmatprep.subr.mxu0 0.0
  %332 = vmatpush1.msra.mxu0 0.0
  %333 = vmatprep.subr.mxu0 0.0
  %334 = vmatpush1.msra.mxu0 0.0
  %335 = vmatprep.subr.mxu0 0.0
  %336 = vmatpush1.msra.mxu0 0.0
  %337 = vmatprep.subr.mxu0 0.0
  %338 = vmatpush1.msra.mxu0 0.0
  %339 = vmatprep.subr.mxu0 0.0
  %340 = vmatpush1.msra.mxu0 0.0
  %341 = vmatprep.subr.mxu0 0.0
  %342 = vmatpush1.msra.mxu0 0.0
  %343 = vmatprep.mubr.f32.mxu0 0.0
  %344 = vmatmul.mubr.f32.gmra.mrb[0].mxu0 %v84
  %v345 = vpop.f32.mrb[0].mxu0
  %v346 = vadd.f32 0.0, %v345
  %v347 = vpop.f32.mrb[0].mxu0
  %348 = vmatprep.mubr.f32.mxu0 0.0
  %349 = vmatmul.mubr.f32.gmra.mrb[0].mxu0 %v87
  %v350 = vpop.f32.mrb[0].mxu0
  %v351 = vadd.f32 0.0, %v350
  %v352 = vpop.f32.mrb[0].mxu0
  %353 = vmatprep.mubr.f32.mxu0 0.0
  %354 = vmatmul.mubr.f32.gmra.mrb[0].mxu0 %v90
  %v355 = vpop.f32.mrb[0].mxu0
  %v356 = vadd.f32 0.0, %v355
  %v357 = vpop.f32.mrb[0].mxu0
  %358 = vmatprep.mubr.f32.mxu0 0.0
  %359 = vmatmul.mubr.f32.gmra.mrb[0].mxu0 %v93
  %v360 = vpop.f32.mrb[0].mxu0
  %v361 = vadd.f32 0.0, %v360
  %v362 = vpop.f32.mrb[0].mxu0
  %363 = vmatprep.mubr.f32.mxu0 0.0
  %364 = vmatmul.mubr.f32.gmra.mrb[0].mxu0 %v96
  %v365 = vpop.f32.mrb[0].mxu0
  %v366 = vadd.f32 0.0, %v365
  %v367 = vpop.f32.mrb[0].mxu0
  %368 = vmatprep.mubr.f32.mxu0 0.0
  %369 = vmatmul.mubr.f32.gmra.mrb[0].mxu0 %v99
  %v370 = vpop.f32.mrb[0].mxu0
  %v371 = vadd.f32 0.0, %v370
  %v372 = vpop.f32.mrb[0].mxu0
  %373 = vmatprep.mubr.f32.mxu0 0.0
  %374 = vmatmul.mubr.f32.gmra.mrb[0].mxu0 %v102
  %v375 = vpop.f32.mrb[0].mxu0
  %v376 = vadd.f32 0.0, %v375
  %v377 = vpop.f32.mrb[0].mxu0
  %378 = vmatprep.mubr.f32.mxu0 0.0
  %379 = vmatmul.mubr.f32.gmra.mrb[0].mxu0 %v105
  %v380 = vpop.f32.mrb[0].mxu0
  %v381 = vadd.f32 0.0, %v380
  %v382 = vpop.f32.mrb[0].mxu0
  %383 = vmatprep.mubr.f32.mxu0 0.0
  %384 = vmatmul.mubr.f32.gmra.mrb[0].mxu0 %v108
  %v385 = vpop.f32.mrb[0].mxu0
  %v386 = vadd.f32 0.0, %v385
  %v387 = vpop.f32.mrb[0].mxu0
  %388 = vmatprep.mubr.f32.mxu0 0.0
  %389 = vmatmul.mubr.f32.gmra.mrb[0].mxu0 %v111
  %v390 = vpop.f32.mrb[0].mxu0
  %v391 = vadd.f32 0.0, %v390
  %v392 = vpop.f32.mrb[0].mxu0
  %393 = vmatprep.mubr.f32.mxu0 0.0
  %394 = vmatmul.mubr.f32.gmra.mrb[0].mxu0 %v114
  %v395 = vpop.f32.mrb[0].mxu0
  %v396 = vadd.f32 0.0, %v395
  %v397 = vpop.f32.mrb[0].mxu0
  %398 = vmatprep.mubr.f32.mxu0 0.0
  %399 = vmatmul.mubr.f32.gmra.mrb[0].mxu0 %v117
  %v400 = vpop.f32.mrb[0].mxu0
  %v401 = vadd.f32 0.0, %v400
  %v402 = vpop.f32.mrb[0].mxu0
  %403 = vmatprep.mubr.f32.mxu0 0.0
  %404 = vmatmul.mubr.f32.gmra.mrb[0].mxu0 %v120
  %v405 = vpop.f32.mrb[0].mxu0
  %v406 = vadd.f32 0.0, %v405
  %v407 = vpop.f32.mrb[0].mxu0
  %408 = vmatprep.mubr.f32.mxu0 0.0
  %409 = vmatmul.mubr.f32.gmra.mrb[0].mxu0 %v123
  %v410 = vpop.f32.mrb[0].mxu0
  %v411 = vadd.f32 0.0, %v410
  %v412 = vpop.f32.mrb[0].mxu0
  %413 = vmatprep.mubr.f32.mxu0 0.0
  %414 = vmatmul.mubr.f32.gmra.mrb[0].mxu0 %v126
  %v415 = vpop.f32.mrb[0].mxu0
  %v416 = vadd.f32 0.0, %v415
  %v417 = vpop.f32.mrb[0].mxu0
  %418 = vmatprep.mubr.f32.mxu0 0.0
  %419 = vmatmul.mubr.f32.gmra.mrb[0].mxu0 %v129
  %v420 = vpop.f32.mrb[0].mxu0
  %v421 = vadd.f32 0.0, %v420
  %v422 = vpop.f32.mrb[0].mxu0
  %423 = vmatprep.mubr.f32.mxu0 0.0
  %424 = vmatmul.mubr.f32.gmra.mrb[0].mxu0 %v132
  %v425 = vpop.f32.mrb[0].mxu0
  %v426 = vadd.f32 0.0, %v425
  %v427 = vpop.f32.mrb[0].mxu0
  %428 = vmatprep.mubr.f32.mxu0 0.0
  %429 = vmatmul.mubr.f32.gmra.mrb[0].mxu0 %v135
  %v430 = vpop.f32.mrb[0].mxu0
  %v431 = vadd.f32 0.0, %v430
  %v432 = vpop.f32.mrb[0].mxu0
  %433 = vmatprep.mubr.f32.mxu0 0.0
  %434 = vmatmul.mubr.f32.gmra.mrb[0].mxu0 %v138
  %v435 = vpop.f32.mrb[0].mxu0
  %v436 = vadd.f32 0.0, %v435
  %v437 = vpop.f32.mrb[0].mxu0
  %438 = vmatprep.mubr.f32.mxu0 0.0
  %439 = vmatmul.mubr.f32.gmra.mrb[0].mxu0 %v141
  %v440 = vpop.f32.mrb[0].mxu0
  %v441 = vadd.f32 0.0, %v440
  %v442 = vpop.f32.mrb[0].mxu0
  %443 = vmatprep.mubr.f32.mxu0 0.0
  %444 = vmatmul.mubr.f32.gmra.mrb[0].mxu0 %v144
  %v445 = vpop.f32.mrb[0].mxu0
  %v446 = vadd.f32 0.0, %v445
  %v447 = vpop.f32.mrb[0].mxu0
  %448 = vmatprep.mubr.f32.mxu0 0.0
  %449 = vmatmul.mubr.f32.gmra.mrb[0].mxu0 %v147
  %v450 = vpop.f32.mrb[0].mxu0
  %v451 = vadd.f32 0.0, %v450
  %v452 = vpop.f32.mrb[0].mxu0
  %453 = vmatprep.mubr.f32.mxu0 0.0
  %454 = vmatmul.mubr.f32.gmra.mrb[0].mxu0 %v150
  %v455 = vpop.f32.mrb[0].mxu0
  %v456 = vadd.f32 0.0, %v455
  %v457 = vpop.f32.mrb[0].mxu0
  %458 = vmatprep.mubr.f32.mxu0 0.0
  %459 = vmatmul.mubr.f32.gmra.mrb[0].mxu0 %v153
  %v460 = vpop.f32.mrb[0].mxu0
  %v461 = vadd.f32 0.0, %v460
  %v462 = vpop.f32.mrb[0].mxu0
  %463 = vmatprep.mubr.f32.mxu0 0.0
  %464 = vmatmul.mubr.f32.gmra.mrb[0].mxu0 %v156
  %v465 = vpop.f32.mrb[0].mxu0
  %v466 = vadd.f32 0.0, %v465
  %v467 = vpop.f32.mrb[0].mxu0
  %468 = vmatprep.mubr.f32.mxu0 0.0
  %469 = vmatmul.mubr.f32.gmra.mrb[0].mxu0 %v159
  %v470 = vpop.f32.mrb[0].mxu0
  %v471 = vadd.f32 0.0, %v470
  %v472 = vpop.f32.mrb[0].mxu0
  %473 = vmatprep.mubr.f32.mxu0 0.0
  %474 = vmatmul.mubr.f32.gmra.mrb[0].mxu0 %v162
  %v475 = vpop.f32.mrb[0].mxu0
  %v476 = vadd.f32 0.0, %v475
  %v477 = vpop.f32.mrb[0].mxu0
  %478 = vmatprep.mubr.f32.mxu0 0.0
  %479 = vmatmul.mubr.f32.gmra.mrb[0].mxu0 %v165
  %v480 = vpop.f32.mrb[0].mxu0
  %v481 = vadd.f32 0.0, %v480
  %v482 = vpop.f32.mrb[0].mxu0
  %483 = vmatprep.mubr.f32.mxu0 0.0
  %484 = vmatmul.mubr.f32.gmra.mrb[0].mxu0 %v168
  %v485 = vpop.f32.mrb[0].mxu0
  %v486 = vadd.f32 0.0, %v485
  %v487 = vpop.f32.mrb[0].mxu0
  %488 = vmatprep.mubr.f32.mxu0 0.0
  %489 = vmatmul.mubr.f32.gmra.mrb[0].mxu0 %v171
  %v490 = vpop.f32.mrb[0].mxu0
  %v491 = vadd.f32 0.0, %v490
  %v492 = vpop.f32.mrb[0].mxu0
  %493 = vmatprep.mubr.f32.mxu0 0.0
  %494 = vmatmul.mubr.f32.gmra.mrb[0].mxu0 %v174
  %v495 = vpop.f32.mrb[0].mxu0
  %v496 = vadd.f32 0.0, %v495
  %v497 = vpop.f32.mrb[0].mxu0
  %498 = vmatprep.mubr.f32.mxu0 0.0
  %499 = vmatmul.mubr.f32.gmra.mrb[0].mxu0 %v177
  %v500 = vpop.f32.mrb[0].mxu0
  %v501 = vadd.f32 0.0, %v500
  %v502 = vpop.f32.mrb[0].mxu0
  %503 = vmatprep.mubr.f32.mxu0 0.0
  %504 = vmatmul.mubr.f32.gmra.mrb[0].mxu0 %v180
  %v505 = vpop.f32.mrb[0].mxu0
  %v506 = vadd.f32 0.0, %v505
  %v507 = vpop.f32.mrb[0].mxu0
  %508 = vmatprep.mubr.f32.mxu0 0.0
  %509 = vmatmul.mubr.f32.gmra.mrb[0].mxu0 %v183
  %v510 = vpop.f32.mrb[0].mxu0
  %v511 = vadd.f32 0.0, %v510
  %v512 = vpop.f32.mrb[0].mxu0
  %513 = vmatprep.mubr.f32.mxu0 0.0
  %514 = vmatmul.mubr.f32.gmra.mrb[0].mxu0 %v186
  %v515 = vpop.f32.mrb[0].mxu0
  %v516 = vadd.f32 0.0, %v515
  %v517 = vpop.f32.mrb[0].mxu0
  %518 = vmatprep.mubr.f32.mxu0 0.0
  %519 = vmatmul.mubr.f32.gmra.mrb[0].mxu0 %v189
  %v520 = vpop.f32.mrb[0].mxu0
  %v521 = vadd.f32 0.0, %v520
  %v522 = vpop.f32.mrb[0].mxu0
  %523 = vmatprep.mubr.f32.mxu0 0.0
  %524 = vmatmul.mubr.f32.gmra.mrb[0].mxu0 %v192
  %v525 = vpop.f32.mrb[0].mxu0
  %v526 = vadd.f32 0.0, %v525
  %v527 = vpop.f32.mrb[0].mxu0
  %528 = vmatprep.mubr.f32.mxu0 0.0
  %529 = vmatmul.mubr.f32.gmra.mrb[0].mxu0 %v195
  %v530 = vpop.f32.mrb[0].mxu0
  %v531 = vadd.f32 0.0, %v530
  %v532 = vpop.f32.mrb[0].mxu0
  %533 = vmatprep.mubr.f32.mxu0 0.0
  %534 = vmatmul.mubr.f32.gmra.mrb[0].mxu0 %v198
  %v535 = vpop.f32.mrb[0].mxu0
  %v536 = vadd.f32 0.0, %v535
  %v537 = vpop.f32.mrb[0].mxu0
  %538 = vmatprep.mubr.f32.mxu0 0.0
  %539 = vmatmul.mubr.f32.gmra.mrb[0].mxu0 %v201
  %v540 = vpop.f32.mrb[0].mxu0
  %v541 = vadd.f32 0.0, %v540
  %v542 = vpop.f32.mrb[0].mxu0
  %543 = vmatprep.mubr.f32.mxu0 0.0
  %544 = vmatmul.mubr.f32.gmra.mrb[0].mxu0 %v204
  %v545 = vpop.f32.mrb[0].mxu0
  %v546 = vadd.f32 0.0, %v545
  %v547 = vpop.f32.mrb[0].mxu0
  %548 = vmatprep.mubr.f32.mxu0 0.0
  %549 = vmatmul.mubr.f32.gmra.mrb[0].mxu0 %v207
  %v550 = vpop.f32.mrb[0].mxu0
  %v551 = vadd.f32 0.0, %v550
  %v552 = vpop.f32.mrb[0].mxu0
  %553 = vmatprep.mubr.f32.mxu0 0.0
  %554 = vmatmul.mubr.f32.gmra.mrb[0].mxu0 %v210
  %v555 = vpop.f32.mrb[0].mxu0
  %v556 = vadd.f32 0.0, %v555
  %v557 = vpop.f32.mrb[0].mxu0
  %558 = vmatprep.mubr.f32.mxu0 0.0
  %559 = vmatmul.mubr.f32.gmra.mrb[0].mxu0 %v213
  %v560 = vpop.f32.mrb[0].mxu0
  %v561 = vadd.f32 0.0, %v560
  %v562 = vpop.f32.mrb[0].mxu0
  %563 = vmatprep.mubr.f32.mxu0 0.0
  %564 = vmatmul.mubr.f32.gmra.mrb[0].mxu0 %v216
  %v565 = vpop.f32.mrb[0].mxu0
  %v566 = vadd.f32 0.0, %v565
  %v567 = vpop.f32.mrb[0].mxu0
  %568 = vmatprep.mubr.f32.mxu0 0.0
  %569 = vmatmul.mubr.f32.gmra.mrb[0].mxu0 %v219
  %v570 = vpop.f32.mrb[0].mxu0
  %v571 = vadd.f32 0.0, %v570
  %v572 = vpop.f32.mrb[0].mxu0
  %573 = vmatprep.mubr.f32.mxu0 0.0
  %574 = vmatmul.mubr.f32.gmra.mrb[0].mxu0 %v222
  %v575 = vpop.f32.mrb[0].mxu0
  %v576 = vadd.f32 0.0, %v575
  %v577 = vpop.f32.mrb[0].mxu0
  %578 = vmatprep.mubr.f32.mxu0 0.0
  %579 = vmatmul.mubr.f32.gmra.mrb[0].mxu0 %v225
  %v580 = vpop.f32.mrb[0].mxu0
  %v581 = vadd.f32 0.0, %v580
  %v582 = vpop.f32.mrb[0].mxu0
  %583 = vmatprep.mubr.f32.mxu0 0.0
  %584 = vmatmul.mubr.f32.gmra.mrb[0].mxu0 %v228
  %v585 = vpop.f32.mrb[0].mxu0
  %v586 = vadd.f32 0.0, %v585
  %v587 = vpop.f32.mrb[0].mxu0
  %588 = vmatprep.mubr.f32.mxu0 0.0
  %589 = vmatmul.mubr.f32.gmra.mrb[0].mxu0 %v231
  %v590 = vpop.f32.mrb[0].mxu0
  %v591 = vadd.f32 0.0, %v590
  %v592 = vpop.f32.mrb[0].mxu0
  %593 = vmatprep.mubr.f32.mxu0 0.0
  %594 = vmatmul.mubr.f32.gmra.mrb[0].mxu0 %v234
  %v595 = vpop.f32.mrb[0].mxu0
  %v596 = vadd.f32 0.0, %v595
  %v597 = vpop.f32.mrb[0].mxu0
  %598 = vmatprep.mubr.f32.mxu0 0.0
  %599 = vmatmul.mubr.f32.gmra.mrb[0].mxu0 %v237
  %v600 = vpop.f32.mrb[0].mxu0
  %v601 = vadd.f32 0.0, %v600
  %v602 = vpop.f32.mrb[0].mxu0
  %603 = vmatprep.mubr.f32.mxu0 0.0
  %604 = vmatmul.mubr.f32.gmra.mrb[0].mxu0 %v240
  %v605 = vpop.f32.mrb[0].mxu0
  %v606 = vadd.f32 0.0, %v605
  %v607 = vpop.f32.mrb[0].mxu0
  %608 = vmatprep.mubr.f32.mxu0 0.0
  %609 = vmatmul.mubr.f32.gmra.mrb[0].mxu0 %v243
  %v610 = vpop.f32.mrb[0].mxu0
  %v611 = vadd.f32 0.0, %v610
  %v612 = vpop.f32.mrb[0].mxu0
  %613 = vmatprep.mubr.f32.mxu0 0.0
  %614 = vmatmul.mubr.f32.gmra.mrb[0].mxu0 %v246
  %v615 = vpop.f32.mrb[0].mxu0
  %v616 = vadd.f32 0.0, %v615
  %v617 = vpop.f32.mrb[0].mxu0
  %618 = vmatprep.mubr.f32.mxu0 0.0
  %619 = vmatmul.mubr.f32.gmra.mrb[0].mxu0 %v249
  %v620 = vpop.f32.mrb[0].mxu0
  %v621 = vadd.f32 0.0, %v620
  %v622 = vpop.f32.mrb[0].mxu0
  %623 = vmatprep.mubr.f32.mxu0 0.0
  %624 = vmatmul.mubr.f32.gmra.mrb[0].mxu0 %v252
  %v625 = vpop.f32.mrb[0].mxu0
  %v626 = vadd.f32 0.0, %v625
  %v627 = vpop.f32.mrb[0].mxu0
  %628 = vmatprep.mubr.f32.mxu0 0.0
  %629 = vmatmul.mubr.f32.gmra.mrb[0].mxu0 %v255
  %v630 = vpop.f32.mrb[0].mxu0
  %v631 = vadd.f32 0.0, %v630
  %v632 = vpop.f32.mrb[0].mxu0
  %633 = vmatprep.mubr.f32.mxu0 0.0
  %634 = vmatmul.mubr.f32.gmra.mrb[0].mxu0 %v258
  %v635 = vpop.f32.mrb[0].mxu0
  %v636 = vadd.f32 0.0, %v635
  %v637 = vpop.f32.mrb[0].mxu0
  %638 = vmatprep.mubr.f32.mxu0 0.0
  %639 = vmatmul.mubr.f32.gmra.mrb[0].mxu0 %v261
  %v640 = vpop.f32.mrb[0].mxu0
  %v641 = vadd.f32 0.0, %v640
  %v642 = vpop.f32.mrb[0].mxu0
  %643 = vmatprep.mubr.f32.mxu0 0.0
  %644 = vmatmul.mubr.f32.gmra.mrb[0].mxu0 %v264
  %v645 = vpop.f32.mrb[0].mxu0
  %v646 = vadd.f32 0.0, %v645
  %v647 = vpop.f32.mrb[0].mxu0
  %648 = vmatprep.mubr.f32.mxu0 0.0
  %649 = vmatmul.mubr.f32.gmra.mrb[0].mxu0 %v267
  %v650 = vpop.f32.mrb[0].mxu0
  %v651 = vadd.f32 0.0, %v650
  %v652 = vpop.f32.mrb[0].mxu0
  %653 = vmatprep.mubr.f32.mxu0 0.0
  %654 = vmatmul.mubr.f32.gmra.mrb[0].mxu0 %v270
  %v655 = vpop.f32.mrb[0].mxu0
  %v656 = vadd.f32 0.0, %v655
  %v657 = vpop.f32.mrb[0].mxu0
  %658 = vmatprep.mubr.f32.mxu0 0.0
  %659 = vmatmul.mubr.f32.gmra.mrb[0].mxu0 %v273
  %v660 = vpop.f32.mrb[0].mxu0
  %v661 = vadd.f32 0.0, %v660
  %v662 = vpop.f32.mrb[0].mxu0
  %663 = vdwg.mxu0
  %664 = vst [vmem:[%s2] sm:$0xff] %v346
  %665 = vst [vmem:[%s2 + $0x8] sm:$0xff] %v351
  %666 = vst [vmem:[%s2 + $0x10] sm:$0xff] %v356
  %667 = vst [vmem:[%s2 + $0x18] sm:$0xff] %v361
  %668 = vst [vmem:[%s2 + $0x20] sm:$0xff] %v366
  %669 = vst [vmem:[%s2 + $0x28] sm:$0xff] %v371
  %670 = vst [vmem:[%s2 + $0x30] sm:$0xff] %v376
  %671 = vst [vmem:[%s2 + $0x38] sm:$0xff] %v381
  %672 = vst [vmem:[%s2 + $0x40] sm:$0xff] %v386
  %673 = vst [vmem:[%s2 + $0x48] sm:$0xff] %v391
  %674 = vst [vmem:[%s2 + $0x50] sm:$0xff] %v396
  %675 = vst [vmem:[%s2 + $0x58] sm:$0xff] %v401
  %676 = vst [vmem:[%s2 + $0x60] sm:$0xff] %v406
  %677 = vst [vmem:[%s2 + $0x68] sm:$0xff] %v411
  %678 = vst [vmem:[%s2 + $0x70] sm:$0xff] %v416
  %679 = vst [vmem:[%s2 + $0x78] sm:$0xff] %v421
  %680 = vst [vmem:[%s2 + $0x80] sm:$0xff] %v426
  %681 = vst [vmem:[%s2 + $0x88] sm:$0xff] %v431
  %682 = vst [vmem:[%s2 + $0x90] sm:$0xff] %v436
  %683 = vst [vmem:[%s2 + $0x98] sm:$0xff] %v441
  %684 = vst [vmem:[%s2 + $0xa0] sm:$0xff] %v446
  %685 = vst [vmem:[%s2 + $0xa8] sm:$0xff] %v451
  %686 = vst [vmem:[%s2 + $0xb0] sm:$0xff] %v456
  %687 = vst [vmem:[%s2 + $0xb8] sm:$0xff] %v461
  %688 = vst [vmem:[%s2 + $0xc0] sm:$0xff] %v466
  %689 = vst [vmem:[%s2 + $0xc8] sm:$0xff] %v471
  %690 = vst [vmem:[%s2 + $0xd0] sm:$0xff] %v476
  %691 = vst [vmem:[%s2 + $0xd8] sm:$0xff] %v481
  %692 = vst [vmem:[%s2 + $0xe0] sm:$0xff] %v486
  %693 = vst [vmem:[%s2 + $0xe8] sm:$0xff] %v491
  %694 = vst [vmem:[%s2 + $0xf0] sm:$0xff] %v496
  %695 = vst [vmem:[%s2 + $0xf8] sm:$0xff] %v501
  %696 = vst [vmem:[%s2 + $0x100] sm:$0xff] %v506
  %697 = vst [vmem:[%s2 + $0x108] sm:$0xff] %v511
  %698 = vst [vmem:[%s2 + $0x110] sm:$0xff] %v516
  %699 = vst [vmem:[%s2 + $0x118] sm:$0xff] %v521
  %700 = vst [vmem:[%s2 + $0x120] sm:$0xff] %v526
  %701 = vst [vmem:[%s2 + $0x128] sm:$0xff] %v531
  %702 = vst [vmem:[%s2 + $0x130] sm:$0xff] %v536
  %703 = vst [vmem:[%s2 + $0x138] sm:$0xff] %v541
  %704 = vst [vmem:[%s2 + $0x140] sm:$0xff] %v546
  %705 = vst [vmem:[%s2 + $0x148] sm:$0xff] %v551
  %706 = vst [vmem:[%s2 + $0x150] sm:$0xff] %v556
  %707 = vst [vmem:[%s2 + $0x158] sm:$0xff] %v561
  %708 = vst [vmem:[%s2 + $0x160] sm:$0xff] %v566
  %709 = vst [vmem:[%s2 + $0x168] sm:$0xff] %v571
  %710 = vst [vmem:[%s2 + $0x170] sm:$0xff] %v576
  %711 = vst [vmem:[%s2 + $0x178] sm:$0xff] %v581
  %712 = vst [vmem:[%s2 + $0x180] sm:$0xff] %v586
  %713 = vst [vmem:[%s2 + $0x188] sm:$0xff] %v591
  %714 = vst [vmem:[%s2 + $0x190] sm:$0xff] %v596
  %715 = vst [vmem:[%s2 + $0x198] sm:$0xff] %v601
  %716 = vst [vmem:[%s2 + $0x1a0] sm:$0xff] %v606
  %717 = vst [vmem:[%s2 + $0x1a8] sm:$0xff] %v611
  %718 = vst [vmem:[%s2 + $0x1b0] sm:$0xff] %v616
  %719 = vst [vmem:[%s2 + $0x1b8] sm:$0xff] %v621
  %720 = vst [vmem:[%s2 + $0x1c0] sm:$0xff] %v626
  %721 = vst [vmem:[%s2 + $0x1c8] sm:$0xff] %v631
  %722 = vst [vmem:[%s2 + $0x1d0] sm:$0xff] %v636
  %723 = vst [vmem:[%s2 + $0x1d8] sm:$0xff] %v641
  %724 = vst [vmem:[%s2 + $0x1e0] sm:$0xff] %v646
  %725 = vst [vmem:[%s2 + $0x1e8] sm:$0xff] %v651
  %726 = vst [vmem:[%s2 + $0x1f0] sm:$0xff] %v656
  %727 = vst [vmem:[%s2 + $0x1f8] sm:$0xff] %v661
  // Predicated region
  $region10: #{densenet_forward.15} parent=0 // pred_check
    _
  $region11: #{densenet_forward.15} parent=0 // pred_check_branch
    %729 = sbr.rel (0) target = $region13
  $region12: #{densenet_forward.15} parent=0 // pred_region
    _
  $region13: #{densenet_forward.15} parent=0 // pred_fallthru
    _
  // Predicated region
  $region14: #{densenet_forward.15} parent=0 // pred_check
    _
  $region15: #{densenet_forward.15} parent=0 // pred_check_branch
    %731 = sbr.rel (0) target = $region17
  $region16: #{densenet_forward.15} parent=0 // pred_region
    _
  $region17: #{densenet_forward.15} parent=0 // pred_fallthru
    _

// kernel: densenet_forward.17
$region0: #{densenet_forward.17}
  #allocation0 [shape = 'u32[]', space=smem, size = 0x4, offset = 0x4, fixed_abs, tag = 'smem constant byte address 0x4 - core index']
  #allocation1 [shape = 'u32[144,128]{1,0:T(1,128)}', space=vmem, size = 0x12000, scoped, tag = 'internal scratch']
  %s0 = inlined_call_operand.vmem [shape: f32[128,128], index: 0, kind: input, shape index: {}]
  %s1 = inlined_call_operand.vmem [shape: f32[128,128], index: 1, kind: input, shape index: {}]
  %s2 = inlined_call_operand.vmem [shape: f32[128,128], index: 2, kind: input, shape index: {}]
  %s3 = inlined_call_operand.vmem [shape: f32[128,128], index: 3, kind: input, shape index: {}]
  %s4 = inlined_call_operand.vmem [shape: f32[128,128], index: 4, kind: input, shape index: {}]
  %s5 = inlined_call_operand.vmem [shape: f32[128,128], index: 5, kind: input, shape index: {}]
  %s6 = inlined_call_operand.vmem [shape: f32[128,128], index: 6, kind: input, shape index: {}]
  %s7 = inlined_call_operand.vmem [shape: f32[128,128], index: 7, kind: input, shape index: {}]
  %s8 = inlined_call_operand.vmem [shape: f32[128,128], index: 8, kind: input, shape index: {}]
  %s9 = inlined_call_operand.vmem [shape: f32[128,128], index: 9, kind: output, shape index: {}]
  %s10 = sld [smem:[#allocation0]]
  $region46: #{densenet_forward.17} parent=0
    _
  %s12 = ssub.s32 1, %s10
  %s13 = scalar_select 0, %s12, %s10
  // Predicated region
  $region2: #{densenet_forward.17} parent=0 // pred_check
    _
  $region3: #{densenet_forward.17} parent=0 // pred_check_branch
    %15 = sbr.rel (0) target = $region5
  $region4: #{densenet_forward.17} parent=0 // pred_region
    _
  $region5: #{densenet_forward.17} parent=0 // pred_fallthru
    _
  // Predicated region
  $region6: #{densenet_forward.17} parent=0 // pred_check
    _
  $region7: #{densenet_forward.17} parent=0 // pred_check_branch
    %17 = sbr.rel (0) target = $region9
  $region8: #{densenet_forward.17} parent=0 // pred_region
    _
  $region9: #{densenet_forward.17} parent=0 // pred_fallthru
    _
  // Predicated region
  $region10: #{densenet_forward.17} parent=0 // pred_check
    _
  $region11: #{densenet_forward.17} parent=0 // pred_check_branch
    %19 = sbr.rel (0) target = $region13
  $region12: #{densenet_forward.17} parent=0 // pred_region
    _
  $region13: #{densenet_forward.17} parent=0 // pred_fallthru
    _
  // Predicated region
  $region14: #{densenet_forward.17} parent=0 // pred_check
    _
  $region15: #{densenet_forward.17} parent=0 // pred_check_branch
    %21 = sbr.rel (0) target = $region17
  $region16: #{densenet_forward.17} parent=0 // pred_region
    _
  $region17: #{densenet_forward.17} parent=0 // pred_fallthru
    _
  // Predicated region
  $region18: #{densenet_forward.17} parent=0 // pred_check
    _
  $region19: #{densenet_forward.17} parent=0 // pred_check_branch
    %23 = sbr.rel (0) target = $region21
  $region20: #{densenet_forward.17} parent=0 // pred_region
    _
  $region21: #{densenet_forward.17} parent=0 // pred_fallthru
    _
  // Predicated region
  $region22: #{densenet_forward.17} parent=0 // pred_check
    _
  $region23: #{densenet_forward.17} parent=0 // pred_check_branch
    %25 = sbr.rel (0) target = $region25
  $region24: #{densenet_forward.17} parent=0 // pred_region
    _
  $region25: #{densenet_forward.17} parent=0 // pred_fallthru
    _
  // Predicated region
  $region26: #{densenet_forward.17} parent=0 // pred_check
    _
  $region27: #{densenet_forward.17} parent=0 // pred_check_branch
    %27 = sbr.rel (0) target = $region29
  $region28: #{densenet_forward.17} parent=0 // pred_region
    _
  $region29: #{densenet_forward.17} parent=0 // pred_fallthru
    _
  // Predicated region
  $region30: #{densenet_forward.17} parent=0 // pred_check
    _
  $region31: #{densenet_forward.17} parent=0 // pred_check_branch
    %29 = sbr.rel (0) target = $region33
  $region32: #{densenet_forward.17} parent=0 // pred_region
    _
  $region33: #{densenet_forward.17} parent=0 // pred_fallthru
    _
  // Predicated region
  $region34: #{densenet_forward.17} parent=0 // pred_check
    _
  $region35: #{densenet_forward.17} parent=0 // pred_check_branch
    %31 = sbr.rel (0) target = $region37
  $region36: #{densenet_forward.17} parent=0 // pred_region
    _
  $region37: #{densenet_forward.17} parent=0 // pred_fallthru
    _
  %v32 = vld [vmem:[%s0] sm:$0xff]
  %v33 = vld [vmem:[%s0 + $0x8] sm:$0xff]
  %v34 = vld [vmem:[%s0 + $0x10] sm:$0xff]
  %v35 = vld [vmem:[%s0 + $0x18] sm:$0xff]
  %v36 = vld [vmem:[%s0 + $0x20] sm:$0xff]
  %v37 = vld [vmem:[%s0 + $0x28] sm:$0xff]
  %v38 = vld [vmem:[%s0 + $0x30] sm:$0xff]
  %v39 = vld [vmem:[%s0 + $0x38] sm:$0xff]
  %v40 = vld [vmem:[%s0 + $0x40] sm:$0xff]
  %v41 = vld [vmem:[%s0 + $0x48] sm:$0xff]
  %v42 = vld [vmem:[%s0 + $0x50] sm:$0xff]
  %v43 = vld [vmem:[%s0 + $0x58] sm:$0xff]
  %v44 = vld [vmem:[%s0 + $0x60] sm:$0xff]
  %v45 = vld [vmem:[%s0 + $0x68] sm:$0xff]
  %v46 = vld [vmem:[%s0 + $0x70] sm:$0xff]
  %v47 = vld [vmem:[%s0 + $0x78] sm:$0xff]
  %v48 = vld [vmem:[%s1] sm:$0xff]
  %v49 = vld [vmem:[%s1 + $0x8] sm:$0xff]
  %v50 = vld [vmem:[%s1 + $0x10] sm:$0xff]
  %v51 = vld [vmem:[%s1 + $0x18] sm:$0xff]
  %v52 = vld [vmem:[%s1 + $0x20] sm:$0xff]
  %v53 = vld [vmem:[%s1 + $0x28] sm:$0xff]
  %v54 = vld [vmem:[%s1 + $0x30] sm:$0xff]
  %v55 = vld [vmem:[%s1 + $0x38] sm:$0xff]
  %v56 = vld [vmem:[%s1 + $0x40] sm:$0xff]
  %v57 = vld [vmem:[%s1 + $0x48] sm:$0xff]
  %v58 = vld [vmem:[%s1 + $0x50] sm:$0xff]
  %v59 = vld [vmem:[%s1 + $0x58] sm:$0xff]
  %v60 = vld [vmem:[%s1 + $0x60] sm:$0xff]
  %v61 = vld [vmem:[%s1 + $0x68] sm:$0xff]
  %v62 = vld [vmem:[%s1 + $0x70] sm:$0xff]
  %v63 = vld [vmem:[%s1 + $0x78] sm:$0xff]
  %v64 = vmax.f32 %v32, %v48
  %v65 = vmax.f32 %v33, %v49
  %v66 = vmax.f32 %v34, %v50
  %v67 = vmax.f32 %v35, %v51
  %v68 = vmax.f32 %v36, %v52
  %v69 = vmax.f32 %v37, %v53
  %v70 = vmax.f32 %v38, %v54
  %v71 = vmax.f32 %v39, %v55
  %v72 = vmax.f32 %v40, %v56
  %v73 = vmax.f32 %v41, %v57
  %v74 = vmax.f32 %v42, %v58
  %v75 = vmax.f32 %v43, %v59
  %v76 = vmax.f32 %v44, %v60
  %v77 = vmax.f32 %v45, %v61
  %v78 = vmax.f32 %v46, %v62
  %v79 = vmax.f32 %v47, %v63
  %v80 = vld [vmem:[%s2] sm:$0xff]
  %v81 = vld [vmem:[%s2 + $0x8] sm:$0xff]
  %v82 = vld [vmem:[%s2 + $0x10] sm:$0xff]
  %v83 = vld [vmem:[%s2 + $0x18] sm:$0xff]
  %v84 = vld [vmem:[%s2 + $0x20] sm:$0xff]
  %v85 = vld [vmem:[%s2 + $0x28] sm:$0xff]
  %v86 = vld [vmem:[%s2 + $0x30] sm:$0xff]
  %v87 = vld [vmem:[%s2 + $0x38] sm:$0xff]
  %v88 = vld [vmem:[%s2 + $0x40] sm:$0xff]
  %v89 = vld [vmem:[%s2 + $0x48] sm:$0xff]
  %v90 = vld [vmem:[%s2 + $0x50] sm:$0xff]
  %v91 = vld [vmem:[%s2 + $0x58] sm:$0xff]
  %v92 = vld [vmem:[%s2 + $0x60] sm:$0xff]
  %v93 = vld [vmem:[%s2 + $0x68] sm:$0xff]
  %v94 = vld [vmem:[%s2 + $0x70] sm:$0xff]
  %v95 = vld [vmem:[%s2 + $0x78] sm:$0xff]
  %v96 = vmax.f32 %v64, %v80
  %v97 = vmax.f32 %v65, %v81
  %v98 = vmax.f32 %v66, %v82
  %v99 = vmax.f32 %v67, %v83
  %v100 = vmax.f32 %v68, %v84
  %v101 = vmax.f32 %v69, %v85
  %v102 = vmax.f32 %v70, %v86
  %v103 = vmax.f32 %v71, %v87
  %v104 = vmax.f32 %v72, %v88
  %v105 = vmax.f32 %v73, %v89
  %v106 = vmax.f32 %v74, %v90
  %v107 = vmax.f32 %v75, %v91
  %v108 = vmax.f32 %v76, %v92
  %v109 = vmax.f32 %v77, %v93
  %v110 = vmax.f32 %v78, %v94
  %v111 = vmax.f32 %v79, %v95
  %v112 = vld [vmem:[%s3] sm:$0xff]
  %v113 = vld [vmem:[%s3 + $0x8] sm:$0xff]
  %v114 = vld [vmem:[%s3 + $0x10] sm:$0xff]
  %v115 = vld [vmem:[%s3 + $0x18] sm:$0xff]
  %v116 = vld [vmem:[%s3 + $0x20] sm:$0xff]
  %v117 = vld [vmem:[%s3 + $0x28] sm:$0xff]
  %v118 = vld [vmem:[%s3 + $0x30] sm:$0xff]
  %v119 = vld [vmem:[%s3 + $0x38] sm:$0xff]
  %v120 = vld [vmem:[%s3 + $0x40] sm:$0xff]
  %v121 = vld [vmem:[%s3 + $0x48] sm:$0xff]
  %v122 = vld [vmem:[%s3 + $0x50] sm:$0xff]
  %v123 = vld [vmem:[%s3 + $0x58] sm:$0xff]
  %v124 = vld [vmem:[%s3 + $0x60] sm:$0xff]
  %v125 = vld [vmem:[%s3 + $0x68] sm:$0xff]
  %v126 = vld [vmem:[%s3 + $0x70] sm:$0xff]
  %v127 = vld [vmem:[%s3 + $0x78] sm:$0xff]
  %v128 = vmax.f32 %v96, %v112
  %v129 = vmax.f32 %v97, %v113
  %v130 = vmax.f32 %v98, %v114
  %v131 = vmax.f32 %v99, %v115
  %v132 = vmax.f32 %v100, %v116
  %v133 = vmax.f32 %v101, %v117
  %v134 = vmax.f32 %v102, %v118
  %v135 = vmax.f32 %v103, %v119
  %v136 = vmax.f32 %v104, %v120
  %v137 = vmax.f32 %v105, %v121
  %v138 = vmax.f32 %v106, %v122
  %v139 = vmax.f32 %v107, %v123
  %v140 = vmax.f32 %v108, %v124
  %v141 = vmax.f32 %v109, %v125
  %v142 = vmax.f32 %v110, %v126
  %v143 = vmax.f32 %v111, %v127
  %v144 = vld [vmem:[%s4] sm:$0xff]
  %v145 = vld [vmem:[%s4 + $0x8] sm:$0xff]
  %v146 = vld [vmem:[%s4 + $0x10] sm:$0xff]
  %v147 = vld [vmem:[%s4 + $0x18] sm:$0xff]
  %v148 = vld [vmem:[%s4 + $0x20] sm:$0xff]
  %v149 = vld [vmem:[%s4 + $0x28] sm:$0xff]
  %v150 = vld [vmem:[%s4 + $0x30] sm:$0xff]
  %v151 = vld [vmem:[%s4 + $0x38] sm:$0xff]
  %v152 = vld [vmem:[%s4 + $0x40] sm:$0xff]
  %v153 = vld [vmem:[%s4 + $0x48] sm:$0xff]
  %v154 = vld [vmem:[%s4 + $0x50] sm:$0xff]
  %v155 = vld [vmem:[%s4 + $0x58] sm:$0xff]
  %v156 = vld [vmem:[%s4 + $0x60] sm:$0xff]
  %v157 = vld [vmem:[%s4 + $0x68] sm:$0xff]
  %v158 = vld [vmem:[%s4 + $0x70] sm:$0xff]
  %v159 = vld [vmem:[%s4 + $0x78] sm:$0xff]
  %v160 = vmax.f32 %v128, %v144
  %v161 = vmax.f32 %v129, %v145
  %v162 = vmax.f32 %v130, %v146
  %v163 = vmax.f32 %v131, %v147
  %v164 = vmax.f32 %v132, %v148
  %v165 = vmax.f32 %v133, %v149
  %v166 = vmax.f32 %v134, %v150
  %v167 = vmax.f32 %v135, %v151
  %v168 = vmax.f32 %v136, %v152
  %v169 = vmax.f32 %v137, %v153
  %v170 = vmax.f32 %v138, %v154
  %v171 = vmax.f32 %v139, %v155
  %v172 = vmax.f32 %v140, %v156
  %v173 = vmax.f32 %v141, %v157
  %v174 = vmax.f32 %v142, %v158
  %v175 = vmax.f32 %v143, %v159
  %v176 = vld [vmem:[%s5] sm:$0xff]
  %v177 = vld [vmem:[%s5 + $0x8] sm:$0xff]
  %v178 = vld [vmem:[%s5 + $0x10] sm:$0xff]
  %v179 = vld [vmem:[%s5 + $0x18] sm:$0xff]
  %v180 = vld [vmem:[%s5 + $0x20] sm:$0xff]
  %v181 = vld [vmem:[%s5 + $0x28] sm:$0xff]
  %v182 = vld [vmem:[%s5 + $0x30] sm:$0xff]
  %v183 = vld [vmem:[%s5 + $0x38] sm:$0xff]
  %v184 = vld [vmem:[%s5 + $0x40] sm:$0xff]
  %v185 = vld [vmem:[%s5 + $0x48] sm:$0xff]
  %v186 = vld [vmem:[%s5 + $0x50] sm:$0xff]
  %v187 = vld [vmem:[%s5 + $0x58] sm:$0xff]
  %v188 = vld [vmem:[%s5 + $0x60] sm:$0xff]
  %v189 = vld [vmem:[%s5 + $0x68] sm:$0xff]
  %v190 = vld [vmem:[%s5 + $0x70] sm:$0xff]
  %v191 = vld [vmem:[%s5 + $0x78] sm:$0xff]
  %v192 = vmax.f32 %v160, %v176
  %v193 = vmax.f32 %v161, %v177
  %v194 = vmax.f32 %v162, %v178
  %v195 = vmax.f32 %v163, %v179
  %v196 = vmax.f32 %v164, %v180
  %v197 = vmax.f32 %v165, %v181
  %v198 = vmax.f32 %v166, %v182
  %v199 = vmax.f32 %v167, %v183
  %v200 = vmax.f32 %v168, %v184
  %v201 = vmax.f32 %v169, %v185
  %v202 = vmax.f32 %v170, %v186
  %v203 = vmax.f32 %v171, %v187
  %v204 = vmax.f32 %v172, %v188
  %v205 = vmax.f32 %v173, %v189
  %v206 = vmax.f32 %v174, %v190
  %v207 = vmax.f32 %v175, %v191
  %v208 = vld [vmem:[%s6] sm:$0xff]
  %v209 = vld [vmem:[%s6 + $0x8] sm:$0xff]
  %v210 = vld [vmem:[%s6 + $0x10] sm:$0xff]
  %v211 = vld [vmem:[%s6 + $0x18] sm:$0xff]
  %v212 = vld [vmem:[%s6 + $0x20] sm:$0xff]
  %v213 = vld [vmem:[%s6 + $0x28] sm:$0xff]
  %v214 = vld [vmem:[%s6 + $0x30] sm:$0xff]
  %v215 = vld [vmem:[%s6 + $0x38] sm:$0xff]
  %v216 = vld [vmem:[%s6 + $0x40] sm:$0xff]
  %v217 = vld [vmem:[%s6 + $0x48] sm:$0xff]
  %v218 = vld [vmem:[%s6 + $0x50] sm:$0xff]
  %v219 = vld [vmem:[%s6 + $0x58] sm:$0xff]
  %v220 = vld [vmem:[%s6 + $0x60] sm:$0xff]
  %v221 = vld [vmem:[%s6 + $0x68] sm:$0xff]
  %v222 = vld [vmem:[%s6 + $0x70] sm:$0xff]
  %v223 = vld [vmem:[%s6 + $0x78] sm:$0xff]
  %v224 = vmax.f32 %v192, %v208
  %v225 = vmax.f32 %v193, %v209
  %v226 = vmax.f32 %v194, %v210
  %v227 = vmax.f32 %v195, %v211
  %v228 = vmax.f32 %v196, %v212
  %v229 = vmax.f32 %v197, %v213
  %v230 = vmax.f32 %v198, %v214
  %v231 = vmax.f32 %v199, %v215
  %v232 = vmax.f32 %v200, %v216
  %v233 = vmax.f32 %v201, %v217
  %v234 = vmax.f32 %v202, %v218
  %v235 = vmax.f32 %v203, %v219
  %v236 = vmax.f32 %v204, %v220
  %v237 = vmax.f32 %v205, %v221
  %v238 = vmax.f32 %v206, %v222
  %v239 = vmax.f32 %v207, %v223
  %v240 = vld [vmem:[%s7] sm:$0xff]
  %v241 = vld [vmem:[%s7 + $0x8] sm:$0xff]
  %v242 = vld [vmem:[%s7 + $0x10] sm:$0xff]
  %v243 = vld [vmem:[%s7 + $0x18] sm:$0xff]
  %v244 = vld [vmem:[%s7 + $0x20] sm:$0xff]
  %v245 = vld [vmem:[%s7 + $0x28] sm:$0xff]
  %v246 = vld [vmem:[%s7 + $0x30] sm:$0xff]
  %v247 = vld [vmem:[%s7 + $0x38] sm:$0xff]
  %v248 = vld [vmem:[%s7 + $0x40] sm:$0xff]
  %v249 = vld [vmem:[%s7 + $0x48] sm:$0xff]
  %v250 = vld [vmem:[%s7 + $0x50] sm:$0xff]
  %v251 = vld [vmem:[%s7 + $0x58] sm:$0xff]
  %v252 = vld [vmem:[%s7 + $0x60] sm:$0xff]
  %v253 = vld [vmem:[%s7 + $0x68] sm:$0xff]
  %v254 = vld [vmem:[%s7 + $0x70] sm:$0xff]
  %v255 = vld [vmem:[%s7 + $0x78] sm:$0xff]
  %v256 = vmax.f32 %v224, %v240
  %v257 = vmax.f32 %v225, %v241
  %v258 = vmax.f32 %v226, %v242
  %v259 = vmax.f32 %v227, %v243
  %v260 = vmax.f32 %v228, %v244
  %v261 = vmax.f32 %v229, %v245
  %v262 = vmax.f32 %v230, %v246
  %v263 = vmax.f32 %v231, %v247
  %v264 = vmax.f32 %v232, %v248
  %v265 = vmax.f32 %v233, %v249
  %v266 = vmax.f32 %v234, %v250
  %v267 = vmax.f32 %v235, %v251
  %v268 = vmax.f32 %v236, %v252
  %v269 = vmax.f32 %v237, %v253
  %v270 = vmax.f32 %v238, %v254
  %v271 = vmax.f32 %v239, %v255
  %v272 = vld [vmem:[%s8] sm:$0xff]
  %v273 = vld [vmem:[%s8 + $0x8] sm:$0xff]
  %v274 = vld [vmem:[%s8 + $0x10] sm:$0xff]
  %v275 = vld [vmem:[%s8 + $0x18] sm:$0xff]
  %v276 = vld [vmem:[%s8 + $0x20] sm:$0xff]
  %v277 = vld [vmem:[%s8 + $0x28] sm:$0xff]
  %v278 = vld [vmem:[%s8 + $0x30] sm:$0xff]
  %v279 = vld [vmem:[%s8 + $0x38] sm:$0xff]
  %v280 = vld [vmem:[%s8 + $0x40] sm:$0xff]
  %v281 = vld [vmem:[%s8 + $0x48] sm:$0xff]
  %v282 = vld [vmem:[%s8 + $0x50] sm:$0xff]
  %v283 = vld [vmem:[%s8 + $0x58] sm:$0xff]
  %v284 = vld [vmem:[%s8 + $0x60] sm:$0xff]
  %v285 = vld [vmem:[%s8 + $0x68] sm:$0xff]
  %v286 = vld [vmem:[%s8 + $0x70] sm:$0xff]
  %v287 = vld [vmem:[%s8 + $0x78] sm:$0xff]
  %v288 = vmax.f32 %v256, %v272
  %v289 = vmax.f32 %v257, %v273
  %v290 = vmax.f32 %v258, %v274
  %v291 = vmax.f32 %v259, %v275
  %v292 = vmax.f32 %v260, %v276
  %v293 = vmax.f32 %v261, %v277
  %v294 = vmax.f32 %v262, %v278
  %v295 = vmax.f32 %v263, %v279
  %v296 = vmax.f32 %v264, %v280
  %v297 = vmax.f32 %v265, %v281
  %v298 = vmax.f32 %v266, %v282
  %v299 = vmax.f32 %v267, %v283
  %v300 = vmax.f32 %v268, %v284
  %v301 = vmax.f32 %v269, %v285
  %v302 = vmax.f32 %v270, %v286
  %v303 = vmax.f32 %v271, %v287
  %304 = vst [vmem:[%s9] sm:$0xff] %v288
  %305 = vst [vmem:[%s9 + $0x8] sm:$0xff] %v289
  %306 = vst [vmem:[%s9 + $0x10] sm:$0xff] %v290
  %307 = vst [vmem:[%s9 + $0x18] sm:$0xff] %v291
  %308 = vst [vmem:[%s9 + $0x20] sm:$0xff] %v292
  %309 = vst [vmem:[%s9 + $0x28] sm:$0xff] %v293
  %310 = vst [vmem:[%s9 + $0x30] sm:$0xff] %v294
  %311 = vst [vmem:[%s9 + $0x38] sm:$0xff] %v295
  %312 = vst [vmem:[%s9 + $0x40] sm:$0xff] %v296
  %313 = vst [vmem:[%s9 + $0x48] sm:$0xff] %v297
  %314 = vst [vmem:[%s9 + $0x50] sm:$0xff] %v298
  %315 = vst [vmem:[%s9 + $0x58] sm:$0xff] %v299
  %316 = vst [vmem:[%s9 + $0x60] sm:$0xff] %v300
  %317 = vst [vmem:[%s9 + $0x68] sm:$0xff] %v301
  %318 = vst [vmem:[%s9 + $0x70] sm:$0xff] %v302
  %319 = vst [vmem:[%s9 + $0x78] sm:$0xff] %v303
  // Predicated region
  $region38: #{densenet_forward.17} parent=0 // pred_check
    _
  $region39: #{densenet_forward.17} parent=0 // pred_check_branch
    %321 = sbr.rel (0) target = $region41
  $region40: #{densenet_forward.17} parent=0 // pred_region
    _
  $region41: #{densenet_forward.17} parent=0 // pred_fallthru
    _
  // Predicated region
  $region42: #{densenet_forward.17} parent=0 // pred_check
    _
  $region43: #{densenet_forward.17} parent=0 // pred_check_branch
    %323 = sbr.rel (0) target = $region45
  $region44: #{densenet_forward.17} parent=0 // pred_region
    _
  $region45: #{densenet_forward.17} parent=0 // pred_fallthru
    _

// kernel: densenet_forward.16
$region0: #{densenet_forward.16}
  #allocation0 [shape = 'u32[]', space=smem, size = 0x4, offset = 0x4, fixed_abs, tag = 'smem constant byte address 0x4 - core index']
  #allocation1 [shape = 'u32[144,128]{1,0:T(1,128)}', space=vmem, size = 0x12000, scoped, tag = 'internal scratch']
  %s0 = inlined_call_operand.vmem [shape: f32[512,128], index: 0, kind: input, shape index: {}]
  %s1 = inlined_call_operand.vmem [shape: f32[1,128], index: 1, kind: input, shape index: {}]
  %s2 = inlined_call_operand.vmem [shape: f32[1,128], index: 2, kind: input, shape index: {}]
  %s3 = inlined_call_operand.vmem [shape: f32[512,1], index: 3, kind: input, shape index: {}]
  %s4 = inlined_call_operand.vmem [shape: f32[512,128], index: 4, kind: output, shape index: {}]
  %s5 = sld [smem:[#allocation0]]
  $region26: #{densenet_forward.16} parent=0
    _
  %s7 = ssub.s32 1, %s5
  %s8 = scalar_select 0, %s7, %s5
  // Predicated region
  $region2: #{densenet_forward.16} parent=0 // pred_check
    _
  $region3: #{densenet_forward.16} parent=0 // pred_check_branch
    %10 = sbr.rel (0) target = $region5
  $region4: #{densenet_forward.16} parent=0 // pred_region
    _
  $region5: #{densenet_forward.16} parent=0 // pred_fallthru
    _
  // Predicated region
  $region6: #{densenet_forward.16} parent=0 // pred_check
    _
  $region7: #{densenet_forward.16} parent=0 // pred_check_branch
    %12 = sbr.rel (0) target = $region9
  $region8: #{densenet_forward.16} parent=0 // pred_region
    _
  $region9: #{densenet_forward.16} parent=0 // pred_fallthru
    _
  // Predicated region
  $region10: #{densenet_forward.16} parent=0 // pred_check
    _
  $region11: #{densenet_forward.16} parent=0 // pred_check_branch
    %14 = sbr.rel (0) target = $region13
  $region12: #{densenet_forward.16} parent=0 // pred_region
    _
  $region13: #{densenet_forward.16} parent=0 // pred_fallthru
    _
  // Predicated region
  $region14: #{densenet_forward.16} parent=0 // pred_check
    _
  $region15: #{densenet_forward.16} parent=0 // pred_check_branch
    %16 = sbr.rel (0) target = $region17
  $region16: #{densenet_forward.16} parent=0 // pred_region
    _
  $region17: #{densenet_forward.16} parent=0 // pred_fallthru
    _
  %v17 = vld [vmem:[%s3] sm:$0xff]
  %v18 = vld [vmem:[%s3 + $0x8] sm:$0xff]
  %v19 = vld [vmem:[%s3 + $0x10] sm:$0xff]
  %v20 = vld [vmem:[%s3 + $0x18] sm:$0xff]
  %v21 = vld [vmem:[%s3 + $0x20] sm:$0xff]
  %v22 = vld [vmem:[%s3 + $0x28] sm:$0xff]
  %v23 = vld [vmem:[%s3 + $0x30] sm:$0xff]
  %v24 = vld [vmem:[%s3 + $0x38] sm:$0xff]
  %v25 = vld [vmem:[%s3 + $0x40] sm:$0xff]
  %v26 = vld [vmem:[%s3 + $0x48] sm:$0xff]
  %v27 = vld [vmem:[%s3 + $0x50] sm:$0xff]
  %v28 = vld [vmem:[%s3 + $0x58] sm:$0xff]
  %v29 = vld [vmem:[%s3 + $0x60] sm:$0xff]
  %v30 = vld [vmem:[%s3 + $0x68] sm:$0xff]
  %v31 = vld [vmem:[%s3 + $0x70] sm:$0xff]
  %v32 = vld [vmem:[%s3 + $0x78] sm:$0xff]
  %v33 = vld [vmem:[%s3 + $0x80] sm:$0xff]
  %v34 = vld [vmem:[%s3 + $0x88] sm:$0xff]
  %v35 = vld [vmem:[%s3 + $0x90] sm:$0xff]
  %v36 = vld [vmem:[%s3 + $0x98] sm:$0xff]
  %v37 = vld [vmem:[%s3 + $0xa0] sm:$0xff]
  %v38 = vld [vmem:[%s3 + $0xa8] sm:$0xff]
  %v39 = vld [vmem:[%s3 + $0xb0] sm:$0xff]
  %v40 = vld [vmem:[%s3 + $0xb8] sm:$0xff]
  %v41 = vld [vmem:[%s3 + $0xc0] sm:$0xff]
  %v42 = vld [vmem:[%s3 + $0xc8] sm:$0xff]
  %v43 = vld [vmem:[%s3 + $0xd0] sm:$0xff]
  %v44 = vld [vmem:[%s3 + $0xd8] sm:$0xff]
  %v45 = vld [vmem:[%s3 + $0xe0] sm:$0xff]
  %v46 = vld [vmem:[%s3 + $0xe8] sm:$0xff]
  %v47 = vld [vmem:[%s3 + $0xf0] sm:$0xff]
  %v48 = vld [vmem:[%s3 + $0xf8] sm:$0xff]
  %v49 = vld [vmem:[%s3 + $0x100] sm:$0xff]
  %v50 = vld [vmem:[%s3 + $0x108] sm:$0xff]
  %v51 = vld [vmem:[%s3 + $0x110] sm:$0xff]
  %v52 = vld [vmem:[%s3 + $0x118] sm:$0xff]
  %v53 = vld [vmem:[%s3 + $0x120] sm:$0xff]
  %v54 = vld [vmem:[%s3 + $0x128] sm:$0xff]
  %v55 = vld [vmem:[%s3 + $0x130] sm:$0xff]
  %v56 = vld [vmem:[%s3 + $0x138] sm:$0xff]
  %v57 = vld [vmem:[%s3 + $0x140] sm:$0xff]
  %v58 = vld [vmem:[%s3 + $0x148] sm:$0xff]
  %v59 = vld [vmem:[%s3 + $0x150] sm:$0xff]
  %v60 = vld [vmem:[%s3 + $0x158] sm:$0xff]
  %v61 = vld [vmem:[%s3 + $0x160] sm:$0xff]
  %v62 = vld [vmem:[%s3 + $0x168] sm:$0xff]
  %v63 = vld [vmem:[%s3 + $0x170] sm:$0xff]
  %v64 = vld [vmem:[%s3 + $0x178] sm:$0xff]
  %v65 = vld [vmem:[%s3 + $0x180] sm:$0xff]
  %v66 = vld [vmem:[%s3 + $0x188] sm:$0xff]
  %v67 = vld [vmem:[%s3 + $0x190] sm:$0xff]
  %v68 = vld [vmem:[%s3 + $0x198] sm:$0xff]
  %v69 = vld [vmem:[%s3 + $0x1a0] sm:$0xff]
  %v70 = vld [vmem:[%s3 + $0x1a8] sm:$0xff]
  %v71 = vld [vmem:[%s3 + $0x1b0] sm:$0xff]
  %v72 = vld [vmem:[%s3 + $0x1b8] sm:$0xff]
  %v73 = vld [vmem:[%s3 + $0x1c0] sm:$0xff]
  %v74 = vld [vmem:[%s3 + $0x1c8] sm:$0xff]
  %v75 = vld [vmem:[%s3 + $0x1d0] sm:$0xff]
  %v76 = vld [vmem:[%s3 + $0x1d8] sm:$0xff]
  %v77 = vld [vmem:[%s3 + $0x1e0] sm:$0xff]
  %v78 = vld [vmem:[%s3 + $0x1e8] sm:$0xff]
  %v79 = vld [vmem:[%s3 + $0x1f0] sm:$0xff]
  %v80 = vld [vmem:[%s3 + $0x1f8] sm:$0xff]
  %vm81 = vcmp.gt.f32.partialorder %v17, 0.0
  %vm82 = vcmp.gt.f32.partialorder %v18, 0.0
  %vm83 = vcmp.gt.f32.partialorder %v19, 0.0
  %vm84 = vcmp.gt.f32.partialorder %v20, 0.0
  %vm85 = vcmp.gt.f32.partialorder %v21, 0.0
  %vm86 = vcmp.gt.f32.partialorder %v22, 0.0
  %vm87 = vcmp.gt.f32.partialorder %v23, 0.0
  %vm88 = vcmp.gt.f32.partialorder %v24, 0.0
  %vm89 = vcmp.gt.f32.partialorder %v25, 0.0
  %vm90 = vcmp.gt.f32.partialorder %v26, 0.0
  %vm91 = vcmp.gt.f32.partialorder %v27, 0.0
  %vm92 = vcmp.gt.f32.partialorder %v28, 0.0
  %vm93 = vcmp.gt.f32.partialorder %v29, 0.0
  %vm94 = vcmp.gt.f32.partialorder %v30, 0.0
  %vm95 = vcmp.gt.f32.partialorder %v31, 0.0
  %vm96 = vcmp.gt.f32.partialorder %v32, 0.0
  %vm97 = vcmp.gt.f32.partialorder %v33, 0.0
  %vm98 = vcmp.gt.f32.partialorder %v34, 0.0
  %vm99 = vcmp.gt.f32.partialorder %v35, 0.0
  %vm100 = vcmp.gt.f32.partialorder %v36, 0.0
  %vm101 = vcmp.gt.f32.partialorder %v37, 0.0
  %vm102 = vcmp.gt.f32.partialorder %v38, 0.0
  %vm103 = vcmp.gt.f32.partialorder %v39, 0.0
  %vm104 = vcmp.gt.f32.partialorder %v40, 0.0
  %vm105 = vcmp.gt.f32.partialorder %v41, 0.0
  %vm106 = vcmp.gt.f32.partialorder %v42, 0.0
  %vm107 = vcmp.gt.f32.partialorder %v43, 0.0
  %vm108 = vcmp.gt.f32.partialorder %v44, 0.0
  %vm109 = vcmp.gt.f32.partialorder %v45, 0.0
  %vm110 = vcmp.gt.f32.partialorder %v46, 0.0
  %vm111 = vcmp.gt.f32.partialorder %v47, 0.0
  %vm112 = vcmp.gt.f32.partialorder %v48, 0.0
  %vm113 = vcmp.gt.f32.partialorder %v49, 0.0
  %vm114 = vcmp.gt.f32.partialorder %v50, 0.0
  %vm115 = vcmp.gt.f32.partialorder %v51, 0.0
  %vm116 = vcmp.gt.f32.partialorder %v52, 0.0
  %vm117 = vcmp.gt.f32.partialorder %v53, 0.0
  %vm118 = vcmp.gt.f32.partialorder %v54, 0.0
  %vm119 = vcmp.gt.f32.partialorder %v55, 0.0
  %vm120 = vcmp.gt.f32.partialorder %v56, 0.0
  %vm121 = vcmp.gt.f32.partialorder %v57, 0.0
  %vm122 = vcmp.gt.f32.partialorder %v58, 0.0
  %vm123 = vcmp.gt.f32.partialorder %v59, 0.0
  %vm124 = vcmp.gt.f32.partialorder %v60, 0.0
  %vm125 = vcmp.gt.f32.partialorder %v61, 0.0
  %vm126 = vcmp.gt.f32.partialorder %v62, 0.0
  %vm127 = vcmp.gt.f32.partialorder %v63, 0.0
  %vm128 = vcmp.gt.f32.partialorder %v64, 0.0
  %vm129 = vcmp.gt.f32.partialorder %v65, 0.0
  %vm130 = vcmp.gt.f32.partialorder %v66, 0.0
  %vm131 = vcmp.gt.f32.partialorder %v67, 0.0
  %vm132 = vcmp.gt.f32.partialorder %v68, 0.0
  %vm133 = vcmp.gt.f32.partialorder %v69, 0.0
  %vm134 = vcmp.gt.f32.partialorder %v70, 0.0
  %vm135 = vcmp.gt.f32.partialorder %v71, 0.0
  %vm136 = vcmp.gt.f32.partialorder %v72, 0.0
  %vm137 = vcmp.gt.f32.partialorder %v73, 0.0
  %vm138 = vcmp.gt.f32.partialorder %v74, 0.0
  %vm139 = vcmp.gt.f32.partialorder %v75, 0.0
  %vm140 = vcmp.gt.f32.partialorder %v76, 0.0
  %vm141 = vcmp.gt.f32.partialorder %v77, 0.0
  %vm142 = vcmp.gt.f32.partialorder %v78, 0.0
  %vm143 = vcmp.gt.f32.partialorder %v79, 0.0
  %vm144 = vcmp.gt.f32.partialorder %v80, 0.0
  %v145 = vld [vmem:[%s0] sm:$0xff]
  %v146 = vld [vmem:[%s0 + $0x8] sm:$0xff]
  %v147 = vld [vmem:[%s0 + $0x10] sm:$0xff]
  %v148 = vld [vmem:[%s0 + $0x18] sm:$0xff]
  %v149 = vld [vmem:[%s0 + $0x20] sm:$0xff]
  %v150 = vld [vmem:[%s0 + $0x28] sm:$0xff]
  %v151 = vld [vmem:[%s0 + $0x30] sm:$0xff]
  %v152 = vld [vmem:[%s0 + $0x38] sm:$0xff]
  %v153 = vld [vmem:[%s0 + $0x40] sm:$0xff]
  %v154 = vld [vmem:[%s0 + $0x48] sm:$0xff]
  %v155 = vld [vmem:[%s0 + $0x50] sm:$0xff]
  %v156 = vld [vmem:[%s0 + $0x58] sm:$0xff]
  %v157 = vld [vmem:[%s0 + $0x60] sm:$0xff]
  %v158 = vld [vmem:[%s0 + $0x68] sm:$0xff]
  %v159 = vld [vmem:[%s0 + $0x70] sm:$0xff]
  %v160 = vld [vmem:[%s0 + $0x78] sm:$0xff]
  %v161 = vld [vmem:[%s0 + $0x80] sm:$0xff]
  %v162 = vld [vmem:[%s0 + $0x88] sm:$0xff]
  %v163 = vld [vmem:[%s0 + $0x90] sm:$0xff]
  %v164 = vld [vmem:[%s0 + $0x98] sm:$0xff]
  %v165 = vld [vmem:[%s0 + $0xa0] sm:$0xff]
  %v166 = vld [vmem:[%s0 + $0xa8] sm:$0xff]
  %v167 = vld [vmem:[%s0 + $0xb0] sm:$0xff]
  %v168 = vld [vmem:[%s0 + $0xb8] sm:$0xff]
  %v169 = vld [vmem:[%s0 + $0xc0] sm:$0xff]
  %v170 = vld [vmem:[%s0 + $0xc8] sm:$0xff]
  %v171 = vld [vmem:[%s0 + $0xd0] sm:$0xff]
  %v172 = vld [vmem:[%s0 + $0xd8] sm:$0xff]
  %v173 = vld [vmem:[%s0 + $0xe0] sm:$0xff]
  %v174 = vld [vmem:[%s0 + $0xe8] sm:$0xff]
  %v175 = vld [vmem:[%s0 + $0xf0] sm:$0xff]
  %v176 = vld [vmem:[%s0 + $0xf8] sm:$0xff]
  %v177 = vld [vmem:[%s0 + $0x100] sm:$0xff]
  %v178 = vld [vmem:[%s0 + $0x108] sm:$0xff]
  %v179 = vld [vmem:[%s0 + $0x110] sm:$0xff]
  %v180 = vld [vmem:[%s0 + $0x118] sm:$0xff]
  %v181 = vld [vmem:[%s0 + $0x120] sm:$0xff]
  %v182 = vld [vmem:[%s0 + $0x128] sm:$0xff]
  %v183 = vld [vmem:[%s0 + $0x130] sm:$0xff]
  %v184 = vld [vmem:[%s0 + $0x138] sm:$0xff]
  %v185 = vld [vmem:[%s0 + $0x140] sm:$0xff]
  %v186 = vld [vmem:[%s0 + $0x148] sm:$0xff]
  %v187 = vld [vmem:[%s0 + $0x150] sm:$0xff]
  %v188 = vld [vmem:[%s0 + $0x158] sm:$0xff]
  %v189 = vld [vmem:[%s0 + $0x160] sm:$0xff]
  %v190 = vld [vmem:[%s0 + $0x168] sm:$0xff]
  %v191 = vld [vmem:[%s0 + $0x170] sm:$0xff]
  %v192 = vld [vmem:[%s0 + $0x178] sm:$0xff]
  %v193 = vld [vmem:[%s0 + $0x180] sm:$0xff]
  %v194 = vld [vmem:[%s0 + $0x188] sm:$0xff]
  %v195 = vld [vmem:[%s0 + $0x190] sm:$0xff]
  %v196 = vld [vmem:[%s0 + $0x198] sm:$0xff]
  %v197 = vld [vmem:[%s0 + $0x1a0] sm:$0xff]
  %v198 = vld [vmem:[%s0 + $0x1a8] sm:$0xff]
  %v199 = vld [vmem:[%s0 + $0x1b0] sm:$0xff]
  %v200 = vld [vmem:[%s0 + $0x1b8] sm:$0xff]
  %v201 = vld [vmem:[%s0 + $0x1c0] sm:$0xff]
  %v202 = vld [vmem:[%s0 + $0x1c8] sm:$0xff]
  %v203 = vld [vmem:[%s0 + $0x1d0] sm:$0xff]
  %v204 = vld [vmem:[%s0 + $0x1d8] sm:$0xff]
  %v205 = vld [vmem:[%s0 + $0x1e0] sm:$0xff]
  %v206 = vld [vmem:[%s0 + $0x1e8] sm:$0xff]
  %v207 = vld [vmem:[%s0 + $0x1f0] sm:$0xff]
  %v208 = vld [vmem:[%s0 + $0x1f8] sm:$0xff]
  %v209 = vld [vmem:[%s1] sm:$0x1]
  %v211 = vlaneseq
  %v212 = vshrl.u32 %v211, 7
  %v213 = vsub.s32 0, %v212
  %v214 = vrot.slane %v209, %v213
  %v216 = vmul.f32 %v145, %v214
  %v217 = vmul.f32 %v146, %v214
  %v218 = vmul.f32 %v147, %v214
  %v219 = vmul.f32 %v148, %v214
  %v220 = vmul.f32 %v149, %v214
  %v221 = vmul.f32 %v150, %v214
  %v222 = vmul.f32 %v151, %v214
  %v223 = vmul.f32 %v152, %v214
  %v224 = vmul.f32 %v153, %v214
  %v225 = vmul.f32 %v154, %v214
  %v226 = vmul.f32 %v155, %v214
  %v227 = vmul.f32 %v156, %v214
  %v228 = vmul.f32 %v157, %v214
  %v229 = vmul.f32 %v158, %v214
  %v230 = vmul.f32 %v159, %v214
  %v231 = vmul.f32 %v160, %v214
  %v232 = vmul.f32 %v161, %v214
  %v233 = vmul.f32 %v162, %v214
  %v234 = vmul.f32 %v163, %v214
  %v235 = vmul.f32 %v164, %v214
  %v236 = vmul.f32 %v165, %v214
  %v237 = vmul.f32 %v166, %v214
  %v238 = vmul.f32 %v167, %v214
  %v239 = vmul.f32 %v168, %v214
  %v240 = vmul.f32 %v169, %v214
  %v241 = vmul.f32 %v170, %v214
  %v242 = vmul.f32 %v171, %v214
  %v243 = vmul.f32 %v172, %v214
  %v244 = vmul.f32 %v173, %v214
  %v245 = vmul.f32 %v174, %v214
  %v246 = vmul.f32 %v175, %v214
  %v247 = vmul.f32 %v176, %v214
  %v248 = vmul.f32 %v177, %v214
  %v249 = vmul.f32 %v178, %v214
  %v250 = vmul.f32 %v179, %v214
  %v251 = vmul.f32 %v180, %v214
  %v252 = vmul.f32 %v181, %v214
  %v253 = vmul.f32 %v182, %v214
  %v254 = vmul.f32 %v183, %v214
  %v255 = vmul.f32 %v184, %v214
  %v256 = vmul.f32 %v185, %v214
  %v257 = vmul.f32 %v186, %v214
  %v258 = vmul.f32 %v187, %v214
  %v259 = vmul.f32 %v188, %v214
  %v260 = vmul.f32 %v189, %v214
  %v261 = vmul.f32 %v190, %v214
  %v262 = vmul.f32 %v191, %v214
  %v263 = vmul.f32 %v192, %v214
  %v264 = vmul.f32 %v193, %v214
  %v265 = vmul.f32 %v194, %v214
  %v266 = vmul.f32 %v195, %v214
  %v267 = vmul.f32 %v196, %v214
  %v268 = vmul.f32 %v197, %v214
  %v269 = vmul.f32 %v198, %v214
  %v270 = vmul.f32 %v199, %v214
  %v271 = vmul.f32 %v200, %v214
  %v272 = vmul.f32 %v201, %v214
  %v273 = vmul.f32 %v202, %v214
  %v274 = vmul.f32 %v203, %v214
  %v275 = vmul.f32 %v204, %v214
  %v276 = vmul.f32 %v205, %v214
  %v277 = vmul.f32 %v206, %v214
  %v278 = vmul.f32 %v207, %v214
  %v279 = vmul.f32 %v208, %v214
  %v280 = vld [vmem:[%s2] sm:$0x1]
  %v282 = vlaneseq
  %v283 = vshrl.u32 %v282, 7
  %v284 = vsub.s32 0, %v283
  %v285 = vrot.slane %v280, %v284
  %v287 = vadd.f32 %v216, %v285
  %v288 = vadd.f32 %v217, %v285
  %v289 = vadd.f32 %v218, %v285
  %v290 = vadd.f32 %v219, %v285
  %v291 = vadd.f32 %v220, %v285
  %v292 = vadd.f32 %v221, %v285
  %v293 = vadd.f32 %v222, %v285
  %v294 = vadd.f32 %v223, %v285
  %v295 = vadd.f32 %v224, %v285
  %v296 = vadd.f32 %v225, %v285
  %v297 = vadd.f32 %v226, %v285
  %v298 = vadd.f32 %v227, %v285
  %v299 = vadd.f32 %v228, %v285
  %v300 = vadd.f32 %v229, %v285
  %v301 = vadd.f32 %v230, %v285
  %v302 = vadd.f32 %v231, %v285
  %v303 = vadd.f32 %v232, %v285
  %v304 = vadd.f32 %v233, %v285
  %v305 = vadd.f32 %v234, %v285
  %v306 = vadd.f32 %v235, %v285
  %v307 = vadd.f32 %v236, %v285
  %v308 = vadd.f32 %v237, %v285
  %v309 = vadd.f32 %v238, %v285
  %v310 = vadd.f32 %v239, %v285
  %v311 = vadd.f32 %v240, %v285
  %v312 = vadd.f32 %v241, %v285
  %v313 = vadd.f32 %v242, %v285
  %v314 = vadd.f32 %v243, %v285
  %v315 = vadd.f32 %v244, %v285
  %v316 = vadd.f32 %v245, %v285
  %v317 = vadd.f32 %v246, %v285
  %v318 = vadd.f32 %v247, %v285
  %v319 = vadd.f32 %v248, %v285
  %v320 = vadd.f32 %v249, %v285
  %v321 = vadd.f32 %v250, %v285
  %v322 = vadd.f32 %v251, %v285
  %v323 = vadd.f32 %v252, %v285
  %v324 = vadd.f32 %v253, %v285
  %v325 = vadd.f32 %v254, %v285
  %v326 = vadd.f32 %v255, %v285
  %v327 = vadd.f32 %v256, %v285
  %v328 = vadd.f32 %v257, %v285
  %v329 = vadd.f32 %v258, %v285
  %v330 = vadd.f32 %v259, %v285
  %v331 = vadd.f32 %v260, %v285
  %v332 = vadd.f32 %v261, %v285
  %v333 = vadd.f32 %v262, %v285
  %v334 = vadd.f32 %v263, %v285
  %v335 = vadd.f32 %v264, %v285
  %v336 = vadd.f32 %v265, %v285
  %v337 = vadd.f32 %v266, %v285
  %v338 = vadd.f32 %v267, %v285
  %v339 = vadd.f32 %v268, %v285
  %v340 = vadd.f32 %v269, %v285
  %v341 = vadd.f32 %v270, %v285
  %v342 = vadd.f32 %v271, %v285
  %v343 = vadd.f32 %v272, %v285
  %v344 = vadd.f32 %v273, %v285
  %v345 = vadd.f32 %v274, %v285
  %v346 = vadd.f32 %v275, %v285
  %v347 = vadd.f32 %v276, %v285
  %v348 = vadd.f32 %v277, %v285
  %v349 = vadd.f32 %v278, %v285
  %v350 = vadd.f32 %v279, %v285
  %v351 = vmax.f32 %v287, 0.0
  %v352 = vmax.f32 %v288, 0.0
  %v353 = vmax.f32 %v289, 0.0
  %v354 = vmax.f32 %v290, 0.0
  %v355 = vmax.f32 %v291, 0.0
  %v356 = vmax.f32 %v292, 0.0
  %v357 = vmax.f32 %v293, 0.0
  %v358 = vmax.f32 %v294, 0.0
  %v359 = vmax.f32 %v295, 0.0
  %v360 = vmax.f32 %v296, 0.0
  %v361 = vmax.f32 %v297, 0.0
  %v362 = vmax.f32 %v298, 0.0
  %v363 = vmax.f32 %v299, 0.0
  %v364 = vmax.f32 %v300, 0.0
  %v365 = vmax.f32 %v301, 0.0
  %v366 = vmax.f32 %v302, 0.0
  %v367 = vmax.f32 %v303, 0.0
  %v368 = vmax.f32 %v304, 0.0
  %v369 = vmax.f32 %v305, 0.0
  %v370 = vmax.f32 %v306, 0.0
  %v371 = vmax.f32 %v307, 0.0
  %v372 = vmax.f32 %v308, 0.0
  %v373 = vmax.f32 %v309, 0.0
  %v374 = vmax.f32 %v310, 0.0
  %v375 = vmax.f32 %v311, 0.0
  %v376 = vmax.f32 %v312, 0.0
  %v377 = vmax.f32 %v313, 0.0
  %v378 = vmax.f32 %v314, 0.0
  %v379 = vmax.f32 %v315, 0.0
  %v380 = vmax.f32 %v316, 0.0
  %v381 = vmax.f32 %v317, 0.0
  %v382 = vmax.f32 %v318, 0.0
  %v383 = vmax.f32 %v319, 0.0
  %v384 = vmax.f32 %v320, 0.0
  %v385 = vmax.f32 %v321, 0.0
  %v386 = vmax.f32 %v322, 0.0
  %v387 = vmax.f32 %v323, 0.0
  %v388 = vmax.f32 %v324, 0.0
  %v389 = vmax.f32 %v325, 0.0
  %v390 = vmax.f32 %v326, 0.0
  %v391 = vmax.f32 %v327, 0.0
  %v392 = vmax.f32 %v328, 0.0
  %v393 = vmax.f32 %v329, 0.0
  %v394 = vmax.f32 %v330, 0.0
  %v395 = vmax.f32 %v331, 0.0
  %v396 = vmax.f32 %v332, 0.0
  %v397 = vmax.f32 %v333, 0.0
  %v398 = vmax.f32 %v334, 0.0
  %v399 = vmax.f32 %v335, 0.0
  %v400 = vmax.f32 %v336, 0.0
  %v401 = vmax.f32 %v337, 0.0
  %v402 = vmax.f32 %v338, 0.0
  %v403 = vmax.f32 %v339, 0.0
  %v404 = vmax.f32 %v340, 0.0
  %v405 = vmax.f32 %v341, 0.0
  %v406 = vmax.f32 %v342, 0.0
  %v407 = vmax.f32 %v343, 0.0
  %v408 = vmax.f32 %v344, 0.0
  %v409 = vmax.f32 %v345, 0.0
  %v410 = vmax.f32 %v346, 0.0
  %v411 = vmax.f32 %v347, 0.0
  %v412 = vmax.f32 %v348, 0.0
  %v413 = vmax.f32 %v349, 0.0
  %v414 = vmax.f32 %v350, 0.0
  %v415 = vsel %vm81, 1, 0
  %v416 = vsel %vm82, 1, 0
  %v417 = vsel %vm83, 1, 0
  %v418 = vsel %vm84, 1, 0
  %v419 = vsel %vm85, 1, 0
  %v420 = vsel %vm86, 1, 0
  %v421 = vsel %vm87, 1, 0
  %v422 = vsel %vm88, 1, 0
  %v423 = vsel %vm89, 1, 0
  %v424 = vsel %vm90, 1, 0
  %v425 = vsel %vm91, 1, 0
  %v426 = vsel %vm92, 1, 0
  %v427 = vsel %vm93, 1, 0
  %v428 = vsel %vm94, 1, 0
  %v429 = vsel %vm95, 1, 0
  %v430 = vsel %vm96, 1, 0
  %v431 = vsel %vm97, 1, 0
  %v432 = vsel %vm98, 1, 0
  %v433 = vsel %vm99, 1, 0
  %v434 = vsel %vm100, 1, 0
  %v435 = vsel %vm101, 1, 0
  %v436 = vsel %vm102, 1, 0
  %v437 = vsel %vm103, 1, 0
  %v438 = vsel %vm104, 1, 0
  %v439 = vsel %vm105, 1, 0
  %v440 = vsel %vm106, 1, 0
  %v441 = vsel %vm107, 1, 0
  %v442 = vsel %vm108, 1, 0
  %v443 = vsel %vm109, 1, 0
  %v444 = vsel %vm110, 1, 0
  %v445 = vsel %vm111, 1, 0
  %v446 = vsel %vm112, 1, 0
  %v447 = vsel %vm113, 1, 0
  %v448 = vsel %vm114, 1, 0
  %v449 = vsel %vm115, 1, 0
  %v450 = vsel %vm116, 1, 0
  %v451 = vsel %vm117, 1, 0
  %v452 = vsel %vm118, 1, 0
  %v453 = vsel %vm119, 1, 0
  %v454 = vsel %vm120, 1, 0
  %v455 = vsel %vm121, 1, 0
  %v456 = vsel %vm122, 1, 0
  %v457 = vsel %vm123, 1, 0
  %v458 = vsel %vm124, 1, 0
  %v459 = vsel %vm125, 1, 0
  %v460 = vsel %vm126, 1, 0
  %v461 = vsel %vm127, 1, 0
  %v462 = vsel %vm128, 1, 0
  %v463 = vsel %vm129, 1, 0
  %v464 = vsel %vm130, 1, 0
  %v465 = vsel %vm131, 1, 0
  %v466 = vsel %vm132, 1, 0
  %v467 = vsel %vm133, 1, 0
  %v468 = vsel %vm134, 1, 0
  %v469 = vsel %vm135, 1, 0
  %v470 = vsel %vm136, 1, 0
  %v471 = vsel %vm137, 1, 0
  %v472 = vsel %vm138, 1, 0
  %v473 = vsel %vm139, 1, 0
  %v474 = vsel %vm140, 1, 0
  %v475 = vsel %vm141, 1, 0
  %v476 = vsel %vm142, 1, 0
  %v477 = vsel %vm143, 1, 0
  %v478 = vsel %vm144, 1, 0
  %479 = vset.pattern.permute.xlu0 0
  %480 = vperm.xlu0 %479, %v415
  %v481 = vpop.permute.xlu0 %480
  %482 = vset.pattern.permute.xlu0 0
  %483 = vperm.xlu0 %482, %v416
  %v484 = vpop.permute.xlu0 %483
  %485 = vset.pattern.permute.xlu0 0
  %486 = vperm.xlu0 %485, %v417
  %v487 = vpop.permute.xlu0 %486
  %488 = vset.pattern.permute.xlu0 0
  %489 = vperm.xlu0 %488, %v418
  %v490 = vpop.permute.xlu0 %489
  %491 = vset.pattern.permute.xlu0 0
  %492 = vperm.xlu0 %491, %v419
  %v493 = vpop.permute.xlu0 %492
  %494 = vset.pattern.permute.xlu0 0
  %495 = vperm.xlu0 %494, %v420
  %v496 = vpop.permute.xlu0 %495
  %497 = vset.pattern.permute.xlu0 0
  %498 = vperm.xlu0 %497, %v421
  %v499 = vpop.permute.xlu0 %498
  %500 = vset.pattern.permute.xlu0 0
  %501 = vperm.xlu0 %500, %v422
  %v502 = vpop.permute.xlu0 %501
  %503 = vset.pattern.permute.xlu0 0
  %504 = vperm.xlu0 %503, %v423
  %v505 = vpop.permute.xlu0 %504
  %506 = vset.pattern.permute.xlu0 0
  %507 = vperm.xlu0 %506, %v424
  %v508 = vpop.permute.xlu0 %507
  %509 = vset.pattern.permute.xlu0 0
  %510 = vperm.xlu0 %509, %v425
  %v511 = vpop.permute.xlu0 %510
  %512 = vset.pattern.permute.xlu0 0
  %513 = vperm.xlu0 %512, %v426
  %v514 = vpop.permute.xlu0 %513
  %515 = vset.pattern.permute.xlu0 0
  %516 = vperm.xlu0 %515, %v427
  %v517 = vpop.permute.xlu0 %516
  %518 = vset.pattern.permute.xlu0 0
  %519 = vperm.xlu0 %518, %v428
  %v520 = vpop.permute.xlu0 %519
  %521 = vset.pattern.permute.xlu0 0
  %522 = vperm.xlu0 %521, %v429
  %v523 = vpop.permute.xlu0 %522
  %524 = vset.pattern.permute.xlu0 0
  %525 = vperm.xlu0 %524, %v430
  %v526 = vpop.permute.xlu0 %525
  %527 = vset.pattern.permute.xlu0 0
  %528 = vperm.xlu0 %527, %v431
  %v529 = vpop.permute.xlu0 %528
  %530 = vset.pattern.permute.xlu0 0
  %531 = vperm.xlu0 %530, %v432
  %v532 = vpop.permute.xlu0 %531
  %533 = vset.pattern.permute.xlu0 0
  %534 = vperm.xlu0 %533, %v433
  %v535 = vpop.permute.xlu0 %534
  %536 = vset.pattern.permute.xlu0 0
  %537 = vperm.xlu0 %536, %v434
  %v538 = vpop.permute.xlu0 %537
  %539 = vset.pattern.permute.xlu0 0
  %540 = vperm.xlu0 %539, %v435
  %v541 = vpop.permute.xlu0 %540
  %542 = vset.pattern.permute.xlu0 0
  %543 = vperm.xlu0 %542, %v436
  %v544 = vpop.permute.xlu0 %543
  %545 = vset.pattern.permute.xlu0 0
  %546 = vperm.xlu0 %545, %v437
  %v547 = vpop.permute.xlu0 %546
  %548 = vset.pattern.permute.xlu0 0
  %549 = vperm.xlu0 %548, %v438
  %v550 = vpop.permute.xlu0 %549
  %551 = vset.pattern.permute.xlu0 0
  %552 = vperm.xlu0 %551, %v439
  %v553 = vpop.permute.xlu0 %552
  %554 = vset.pattern.permute.xlu0 0
  %555 = vperm.xlu0 %554, %v440
  %v556 = vpop.permute.xlu0 %555
  %557 = vset.pattern.permute.xlu0 0
  %558 = vperm.xlu0 %557, %v441
  %v559 = vpop.permute.xlu0 %558
  %560 = vset.pattern.permute.xlu0 0
  %561 = vperm.xlu0 %560, %v442
  %v562 = vpop.permute.xlu0 %561
  %563 = vset.pattern.permute.xlu0 0
  %564 = vperm.xlu0 %563, %v443
  %v565 = vpop.permute.xlu0 %564
  %566 = vset.pattern.permute.xlu0 0
  %567 = vperm.xlu0 %566, %v444
  %v568 = vpop.permute.xlu0 %567
  %569 = vset.pattern.permute.xlu0 0
  %570 = vperm.xlu0 %569, %v445
  %v571 = vpop.permute.xlu0 %570
  %572 = vset.pattern.permute.xlu0 0
  %573 = vperm.xlu0 %572, %v446
  %v574 = vpop.permute.xlu0 %573
  %575 = vset.pattern.permute.xlu0 0
  %576 = vperm.xlu0 %575, %v447
  %v577 = vpop.permute.xlu0 %576
  %578 = vset.pattern.permute.xlu0 0
  %579 = vperm.xlu0 %578, %v448
  %v580 = vpop.permute.xlu0 %579
  %581 = vset.pattern.permute.xlu0 0
  %582 = vperm.xlu0 %581, %v449
  %v583 = vpop.permute.xlu0 %582
  %584 = vset.pattern.permute.xlu0 0
  %585 = vperm.xlu0 %584, %v450
  %v586 = vpop.permute.xlu0 %585
  %587 = vset.pattern.permute.xlu0 0
  %588 = vperm.xlu0 %587, %v451
  %v589 = vpop.permute.xlu0 %588
  %590 = vset.pattern.permute.xlu0 0
  %591 = vperm.xlu0 %590, %v452
  %v592 = vpop.permute.xlu0 %591
  %593 = vset.pattern.permute.xlu0 0
  %594 = vperm.xlu0 %593, %v453
  %v595 = vpop.permute.xlu0 %594
  %596 = vset.pattern.permute.xlu0 0
  %597 = vperm.xlu0 %596, %v454
  %v598 = vpop.permute.xlu0 %597
  %599 = vset.pattern.permute.xlu0 0
  %600 = vperm.xlu0 %599, %v455
  %v601 = vpop.permute.xlu0 %600
  %602 = vset.pattern.permute.xlu0 0
  %603 = vperm.xlu0 %602, %v456
  %v604 = vpop.permute.xlu0 %603
  %605 = vset.pattern.permute.xlu0 0
  %606 = vperm.xlu0 %605, %v457
  %v607 = vpop.permute.xlu0 %606
  %608 = vset.pattern.permute.xlu0 0
  %609 = vperm.xlu0 %608, %v458
  %v610 = vpop.permute.xlu0 %609
  %611 = vset.pattern.permute.xlu0 0
  %612 = vperm.xlu0 %611, %v459
  %v613 = vpop.permute.xlu0 %612
  %614 = vset.pattern.permute.xlu0 0
  %615 = vperm.xlu0 %614, %v460
  %v616 = vpop.permute.xlu0 %615
  %617 = vset.pattern.permute.xlu0 0
  %618 = vperm.xlu0 %617, %v461
  %v619 = vpop.permute.xlu0 %618
  %620 = vset.pattern.permute.xlu0 0
  %621 = vperm.xlu0 %620, %v462
  %v622 = vpop.permute.xlu0 %621
  %623 = vset.pattern.permute.xlu0 0
  %624 = vperm.xlu0 %623, %v463
  %v625 = vpop.permute.xlu0 %624
  %626 = vset.pattern.permute.xlu0 0
  %627 = vperm.xlu0 %626, %v464
  %v628 = vpop.permute.xlu0 %627
  %629 = vset.pattern.permute.xlu0 0
  %630 = vperm.xlu0 %629, %v465
  %v631 = vpop.permute.xlu0 %630
  %632 = vset.pattern.permute.xlu0 0
  %633 = vperm.xlu0 %632, %v466
  %v634 = vpop.permute.xlu0 %633
  %635 = vset.pattern.permute.xlu0 0
  %636 = vperm.xlu0 %635, %v467
  %v637 = vpop.permute.xlu0 %636
  %638 = vset.pattern.permute.xlu0 0
  %639 = vperm.xlu0 %638, %v468
  %v640 = vpop.permute.xlu0 %639
  %641 = vset.pattern.permute.xlu0 0
  %642 = vperm.xlu0 %641, %v469
  %v643 = vpop.permute.xlu0 %642
  %644 = vset.pattern.permute.xlu0 0
  %645 = vperm.xlu0 %644, %v470
  %v646 = vpop.permute.xlu0 %645
  %647 = vset.pattern.permute.xlu0 0
  %648 = vperm.xlu0 %647, %v471
  %v649 = vpop.permute.xlu0 %648
  %650 = vset.pattern.permute.xlu0 0
  %651 = vperm.xlu0 %650, %v472
  %v652 = vpop.permute.xlu0 %651
  %653 = vset.pattern.permute.xlu0 0
  %654 = vperm.xlu0 %653, %v473
  %v655 = vpop.permute.xlu0 %654
  %656 = vset.pattern.permute.xlu0 0
  %657 = vperm.xlu0 %656, %v474
  %v658 = vpop.permute.xlu0 %657
  %659 = vset.pattern.permute.xlu0 0
  %660 = vperm.xlu0 %659, %v475
  %v661 = vpop.permute.xlu0 %660
  %662 = vset.pattern.permute.xlu0 0
  %663 = vperm.xlu0 %662, %v476
  %v664 = vpop.permute.xlu0 %663
  %665 = vset.pattern.permute.xlu0 0
  %666 = vperm.xlu0 %665, %v477
  %v667 = vpop.permute.xlu0 %666
  %668 = vset.pattern.permute.xlu0 0
  %669 = vperm.xlu0 %668, %v478
  %v670 = vpop.permute.xlu0 %669
  %vm671 = vcmp.eq.s32.totalorder %v481, 1
  %vm672 = vcmp.eq.s32.totalorder %v484, 1
  %vm673 = vcmp.eq.s32.totalorder %v487, 1
  %vm674 = vcmp.eq.s32.totalorder %v490, 1
  %vm675 = vcmp.eq.s32.totalorder %v493, 1
  %vm676 = vcmp.eq.s32.totalorder %v496, 1
  %vm677 = vcmp.eq.s32.totalorder %v499, 1
  %vm678 = vcmp.eq.s32.totalorder %v502, 1
  %vm679 = vcmp.eq.s32.totalorder %v505, 1
  %vm680 = vcmp.eq.s32.totalorder %v508, 1
  %vm681 = vcmp.eq.s32.totalorder %v511, 1
  %vm682 = vcmp.eq.s32.totalorder %v514, 1
  %vm683 = vcmp.eq.s32.totalorder %v517, 1
  %vm684 = vcmp.eq.s32.totalorder %v520, 1
  %vm685 = vcmp.eq.s32.totalorder %v523, 1
  %vm686 = vcmp.eq.s32.totalorder %v526, 1
  %vm687 = vcmp.eq.s32.totalorder %v529, 1
  %vm688 = vcmp.eq.s32.totalorder %v532, 1
  %vm689 = vcmp.eq.s32.totalorder %v535, 1
  %vm690 = vcmp.eq.s32.totalorder %v538, 1
  %vm691 = vcmp.eq.s32.totalorder %v541, 1
  %vm692 = vcmp.eq.s32.totalorder %v544, 1
  %vm693 = vcmp.eq.s32.totalorder %v547, 1
  %vm694 = vcmp.eq.s32.totalorder %v550, 1
  %vm695 = vcmp.eq.s32.totalorder %v553, 1
  %vm696 = vcmp.eq.s32.totalorder %v556, 1
  %vm697 = vcmp.eq.s32.totalorder %v559, 1
  %vm698 = vcmp.eq.s32.totalorder %v562, 1
  %vm699 = vcmp.eq.s32.totalorder %v565, 1
  %vm700 = vcmp.eq.s32.totalorder %v568, 1
  %vm701 = vcmp.eq.s32.totalorder %v571, 1
  %vm702 = vcmp.eq.s32.totalorder %v574, 1
  %vm703 = vcmp.eq.s32.totalorder %v577, 1
  %vm704 = vcmp.eq.s32.totalorder %v580, 1
  %vm705 = vcmp.eq.s32.totalorder %v583, 1
  %vm706 = vcmp.eq.s32.totalorder %v586, 1
  %vm707 = vcmp.eq.s32.totalorder %v589, 1
  %vm708 = vcmp.eq.s32.totalorder %v592, 1
  %vm709 = vcmp.eq.s32.totalorder %v595, 1
  %vm710 = vcmp.eq.s32.totalorder %v598, 1
  %vm711 = vcmp.eq.s32.totalorder %v601, 1
  %vm712 = vcmp.eq.s32.totalorder %v604, 1
  %vm713 = vcmp.eq.s32.totalorder %v607, 1
  %vm714 = vcmp.eq.s32.totalorder %v610, 1
  %vm715 = vcmp.eq.s32.totalorder %v613, 1
  %vm716 = vcmp.eq.s32.totalorder %v616, 1
  %vm717 = vcmp.eq.s32.totalorder %v619, 1
  %vm718 = vcmp.eq.s32.totalorder %v622, 1
  %vm719 = vcmp.eq.s32.totalorder %v625, 1
  %vm720 = vcmp.eq.s32.totalorder %v628, 1
  %vm721 = vcmp.eq.s32.totalorder %v631, 1
  %vm722 = vcmp.eq.s32.totalorder %v634, 1
  %vm723 = vcmp.eq.s32.totalorder %v637, 1
  %vm724 = vcmp.eq.s32.totalorder %v640, 1
  %vm725 = vcmp.eq.s32.totalorder %v643, 1
  %vm726 = vcmp.eq.s32.totalorder %v646, 1
  %vm727 = vcmp.eq.s32.totalorder %v649, 1
  %vm728 = vcmp.eq.s32.totalorder %v652, 1
  %vm729 = vcmp.eq.s32.totalorder %v655, 1
  %vm730 = vcmp.eq.s32.totalorder %v658, 1
  %vm731 = vcmp.eq.s32.totalorder %v661, 1
  %vm732 = vcmp.eq.s32.totalorder %v664, 1
  %vm733 = vcmp.eq.s32.totalorder %v667, 1
  %vm734 = vcmp.eq.s32.totalorder %v670, 1
  %v735 = vsel %vm671, %v351, 0.0
  %v736 = vsel %vm672, %v352, 0.0
  %v737 = vsel %vm673, %v353, 0.0
  %v738 = vsel %vm674, %v354, 0.0
  %v739 = vsel %vm675, %v355, 0.0
  %v740 = vsel %vm676, %v356, 0.0
  %v741 = vsel %vm677, %v357, 0.0
  %v742 = vsel %vm678, %v358, 0.0
  %v743 = vsel %vm679, %v359, 0.0
  %v744 = vsel %vm680, %v360, 0.0
  %v745 = vsel %vm681, %v361, 0.0
  %v746 = vsel %vm682, %v362, 0.0
  %v747 = vsel %vm683, %v363, 0.0
  %v748 = vsel %vm684, %v364, 0.0
  %v749 = vsel %vm685, %v365, 0.0
  %v750 = vsel %vm686, %v366, 0.0
  %v751 = vsel %vm687, %v367, 0.0
  %v752 = vsel %vm688, %v368, 0.0
  %v753 = vsel %vm689, %v369, 0.0
  %v754 = vsel %vm690, %v370, 0.0
  %v755 = vsel %vm691, %v371, 0.0
  %v756 = vsel %vm692, %v372, 0.0
  %v757 = vsel %vm693, %v373, 0.0
  %v758 = vsel %vm694, %v374, 0.0
  %v759 = vsel %vm695, %v375, 0.0
  %v760 = vsel %vm696, %v376, 0.0
  %v761 = vsel %vm697, %v377, 0.0
  %v762 = vsel %vm698, %v378, 0.0
  %v763 = vsel %vm699, %v379, 0.0
  %v764 = vsel %vm700, %v380, 0.0
  %v765 = vsel %vm701, %v381, 0.0
  %v766 = vsel %vm702, %v382, 0.0
  %v767 = vsel %vm703, %v383, 0.0
  %v768 = vsel %vm704, %v384, 0.0
  %v769 = vsel %vm705, %v385, 0.0
  %v770 = vsel %vm706, %v386, 0.0
  %v771 = vsel %vm707, %v387, 0.0
  %v772 = vsel %vm708, %v388, 0.0
  %v773 = vsel %vm709, %v389, 0.0
  %v774 = vsel %vm710, %v390, 0.0
  %v775 = vsel %vm711, %v391, 0.0
  %v776 = vsel %vm712, %v392, 0.0
  %v777 = vsel %vm713, %v393, 0.0
  %v778 = vsel %vm714, %v394, 0.0
  %v779 = vsel %vm715, %v395, 0.0
  %v780 = vsel %vm716, %v396, 0.0
  %v781 = vsel %vm717, %v397, 0.0
  %v782 = vsel %vm718, %v398, 0.0
  %v783 = vsel %vm719, %v399, 0.0
  %v784 = vsel %vm720, %v400, 0.0
  %v785 = vsel %vm721, %v401, 0.0
  %v786 = vsel %vm722, %v402, 0.0
  %v787 = vsel %vm723, %v403, 0.0
  %v788 = vsel %vm724, %v404, 0.0
  %v789 = vsel %vm725, %v405, 0.0
  %v790 = vsel %vm726, %v406, 0.0
  %v791 = vsel %vm727, %v407, 0.0
  %v792 = vsel %vm728, %v408, 0.0
  %v793 = vsel %vm729, %v409, 0.0
  %v794 = vsel %vm730, %v410, 0.0
  %v795 = vsel %vm731, %v411, 0.0
  %v796 = vsel %vm732, %v412, 0.0
  %v797 = vsel %vm733, %v413, 0.0
  %v798 = vsel %vm734, %v414, 0.0
  %799 = vst [vmem:[%s4] sm:$0xff] %v735
  %800 = vst [vmem:[%s4 + $0x8] sm:$0xff] %v736
  %801 = vst [vmem:[%s4 + $0x10] sm:$0xff] %v737
  %802 = vst [vmem:[%s4 + $0x18] sm:$0xff] %v738
  %803 = vst [vmem:[%s4 + $0x20] sm:$0xff] %v739
  %804 = vst [vmem:[%s4 + $0x28] sm:$0xff] %v740
  %805 = vst [vmem:[%s4 + $0x30] sm:$0xff] %v741
  %806 = vst [vmem:[%s4 + $0x38] sm:$0xff] %v742
  %807 = vst [vmem:[%s4 + $0x40] sm:$0xff] %v743
  %808 = vst [vmem:[%s4 + $0x48] sm:$0xff] %v744
  %809 = vst [vmem:[%s4 + $0x50] sm:$0xff] %v745
  %810 = vst [vmem:[%s4 + $0x58] sm:$0xff] %v746
  %811 = vst [vmem:[%s4 + $0x60] sm:$0xff] %v747
  %812 = vst [vmem:[%s4 + $0x68] sm:$0xff] %v748
  %813 = vst [vmem:[%s4 + $0x70] sm:$0xff] %v749
  %814 = vst [vmem:[%s4 + $0x78] sm:$0xff] %v750
  %815 = vst [vmem:[%s4 + $0x80] sm:$0xff] %v751
  %816 = vst [vmem:[%s4 + $0x88] sm:$0xff] %v752
  %817 = vst [vmem:[%s4 + $0x90] sm:$0xff] %v753
  %818 = vst [vmem:[%s4 + $0x98] sm:$0xff] %v754
  %819 = vst [vmem:[%s4 + $0xa0] sm:$0xff] %v755
  %820 = vst [vmem:[%s4 + $0xa8] sm:$0xff] %v756
  %821 = vst [vmem:[%s4 + $0xb0] sm:$0xff] %v757
  %822 = vst [vmem:[%s4 + $0xb8] sm:$0xff] %v758
  %823 = vst [vmem:[%s4 + $0xc0] sm:$0xff] %v759
  %824 = vst [vmem:[%s4 + $0xc8] sm:$0xff] %v760
  %825 = vst [vmem:[%s4 + $0xd0] sm:$0xff] %v761
  %826 = vst [vmem:[%s4 + $0xd8] sm:$0xff] %v762
  %827 = vst [vmem:[%s4 + $0xe0] sm:$0xff] %v763
  %828 = vst [vmem:[%s4 + $0xe8] sm:$0xff] %v764
  %829 = vst [vmem:[%s4 + $0xf0] sm:$0xff] %v765
  %830 = vst [vmem:[%s4 + $0xf8] sm:$0xff] %v766
  %831 = vst [vmem:[%s4 + $0x100] sm:$0xff] %v767
  %832 = vst [vmem:[%s4 + $0x108] sm:$0xff] %v768
  %833 = vst [vmem:[%s4 + $0x110] sm:$0xff] %v769
  %834 = vst [vmem:[%s4 + $0x118] sm:$0xff] %v770
  %835 = vst [vmem:[%s4 + $0x120] sm:$0xff] %v771
  %836 = vst [vmem:[%s4 + $0x128] sm:$0xff] %v772
  %837 = vst [vmem:[%s4 + $0x130] sm:$0xff] %v773
  %838 = vst [vmem:[%s4 + $0x138] sm:$0xff] %v774
  %839 = vst [vmem:[%s4 + $0x140] sm:$0xff] %v775
  %840 = vst [vmem:[%s4 + $0x148] sm:$0xff] %v776
  %841 = vst [vmem:[%s4 + $0x150] sm:$0xff] %v777
  %842 = vst [vmem:[%s4 + $0x158] sm:$0xff] %v778
  %843 = vst [vmem:[%s4 + $0x160] sm:$0xff] %v779
  %844 = vst [vmem:[%s4 + $0x168] sm:$0xff] %v780
  %845 = vst [vmem:[%s4 + $0x170] sm:$0xff] %v781
  %846 = vst [vmem:[%s4 + $0x178] sm:$0xff] %v782
  %847 = vst [vmem:[%s4 + $0x180] sm:$0xff] %v783
  %848 = vst [vmem:[%s4 + $0x188] sm:$0xff] %v784
  %849 = vst [vmem:[%s4 + $0x190] sm:$0xff] %v785
  %850 = vst [vmem:[%s4 + $0x198] sm:$0xff] %v786
  %851 = vst [vmem:[%s4 + $0x1a0] sm:$0xff] %v787
  %852 = vst [vmem:[%s4 + $0x1a8] sm:$0xff] %v788
  %853 = vst [vmem:[%s4 + $0x1b0] sm:$0xff] %v789
  %854 = vst [vmem:[%s4 + $0x1b8] sm:$0xff] %v790
  %855 = vst [vmem:[%s4 + $0x1c0] sm:$0xff] %v791
  %856 = vst [vmem:[%s4 + $0x1c8] sm:$0xff] %v792
  %857 = vst [vmem:[%s4 + $0x1d0] sm:$0xff] %v793
  %858 = vst [vmem:[%s4 + $0x1d8] sm:$0xff] %v794
  %859 = vst [vmem:[%s4 + $0x1e0] sm:$0xff] %v795
  %860 = vst [vmem:[%s4 + $0x1e8] sm:$0xff] %v796
  %861 = vst [vmem:[%s4 + $0x1f0] sm:$0xff] %v797
  %862 = vst [vmem:[%s4 + $0x1f8] sm:$0xff] %v798
  // Predicated region
  $region18: #{densenet_forward.16} parent=0 // pred_check
    _
  $region19: #{densenet_forward.16} parent=0 // pred_check_branch
    %864 = sbr.rel (0) target = $region21
  $region20: #{densenet_forward.16} parent=0 // pred_region
    _
  $region21: #{densenet_forward.16} parent=0 // pred_fallthru
    _
  // Predicated region
  $region22: #{densenet_forward.16} parent=0 // pred_check
    _
  $region23: #{densenet_forward.16} parent=0 // pred_check_branch
    %866 = sbr.rel (0) target = $region25
  $region24: #{densenet_forward.16} parent=0 // pred_region
    _
  $region25: #{densenet_forward.16} parent=0 // pred_fallthru
    _

// kernel: densenet_forward.18
$region0: #{densenet_forward.18}
  #allocation0 [shape = 'u32[]', space=smem, size = 0x4, offset = 0x4, fixed_abs, tag = 'smem constant byte address 0x4 - core index']
  #allocation1 [shape = 'u32[144,128]{1,0:T(1,128)}', space=vmem, size = 0x12000, scoped, tag = 'internal scratch']
  %s0 = inlined_call_operand.vmem [shape: f32[600,128], index: 0, kind: input, shape index: {}]
  %s1 = inlined_call_operand.vmem [shape: f32[600,1], index: 1, kind: input, shape index: {}]
  %s2 = inlined_call_operand.vmem [shape: f32[1,128], index: 2, kind: input, shape index: {}]
  %s3 = inlined_call_operand.vmem [shape: f32[1,128], index: 3, kind: input, shape index: {}]
  %s4 = inlined_call_operand.vmem [shape: f32[128,128], index: 4, kind: input, shape index: {}]
  %s5 = inlined_call_operand.vmem [shape: f32[600,128], index: 5, kind: output, shape index: {}]
  %s6 = sld [smem:[#allocation0]]
  $region30: #{densenet_forward.18} parent=0
    _
  %s8 = ssub.s32 1, %s6
  %s9 = scalar_select 0, %s8, %s6
  // Predicated region
  $region2: #{densenet_forward.18} parent=0 // pred_check
    _
  $region3: #{densenet_forward.18} parent=0 // pred_check_branch
    %11 = sbr.rel (0) target = $region5
  $region4: #{densenet_forward.18} parent=0 // pred_region
    %s12 = sadd.s32 0, 1
    %s13 = smul.u32 25, %s12
    %p14 = scmp.lt.s32.totalorder %s13, 74
    %s15 = scalar_select %p14, %s13, 74
    %s16 = smul.addr %s15, 8
    %s17 = scalar_lea.vmem %s0, %s16
    %s18 = sadd.s32 0, 1
    %s19 = smul.u32 25, %s18
  $region5: #{densenet_forward.18} parent=0 // pred_fallthru
    _
  // Predicated region
  $region6: #{densenet_forward.18} parent=0 // pred_check
    _
  $region7: #{densenet_forward.18} parent=0 // pred_check_branch
    %21 = sbr.rel (0) target = $region9
  $region8: #{densenet_forward.18} parent=0 // pred_region
    %s22 = sadd.s32 0, 1
    %s23 = smul.u32 25, %s22
    %p24 = scmp.lt.s32.totalorder %s23, 74
    %s25 = scalar_select %p24, %s23, 74
    %s26 = smul.addr %s25, 8
    %s27 = scalar_lea.vmem %s1, %s26
    %s28 = sadd.s32 0, 1
    %s29 = smul.u32 25, %s28
  $region9: #{densenet_forward.18} parent=0 // pred_fallthru
    _
  // Predicated region
  $region10: #{densenet_forward.18} parent=0 // pred_check
    _
  $region11: #{densenet_forward.18} parent=0 // pred_check_branch
    %31 = sbr.rel (0) target = $region13
  $region12: #{densenet_forward.18} parent=0 // pred_region
    _
  $region13: #{densenet_forward.18} parent=0 // pred_fallthru
    _
  // Predicated region
  $region14: #{densenet_forward.18} parent=0 // pred_check
    _
  $region15: #{densenet_forward.18} parent=0 // pred_check_branch
    %33 = sbr.rel (0) target = $region17
  $region16: #{densenet_forward.18} parent=0 // pred_region
    _
  $region17: #{densenet_forward.18} parent=0 // pred_fallthru
    _
  // Predicated region
  $region18: #{densenet_forward.18} parent=0 // pred_check
    _
  $region19: #{densenet_forward.18} parent=0 // pred_check_branch
    %35 = sbr.rel (0) target = $region21
  $region20: #{densenet_forward.18} parent=0 // pred_region
    _
  $region21: #{densenet_forward.18} parent=0 // pred_fallthru
    _
  %s36 = sadd.s32 0, 1
  %s37 = smul.u32 25, %s36
  %p38 = scmp.lt.s32.totalorder %s37, 74
  %s39 = scalar_select %p38, %s37, 74
  %s40 = smul.addr %s39, 8
  %s41 = scalar_lea.vmem %s0, %s40
  %s42 = sadd.s32 0, 1
  %s43 = smul.u32 25, %s42
  %p44 = scmp.lt.s32.totalorder %s43, 74
  %s45 = scalar_select %p44, %s43, 74
  %s46 = smul.addr %s45, 8
  %s47 = scalar_lea.vmem %s1, %s46
  %s48 = sadd.s32 0, 1
  %s49 = smul.u32 25, %s48
  %p50 = scmp.lt.s32.totalorder %s49, 74
  %s51 = scalar_select %p50, %s49, 74
  %s52 = smul.addr %s51, 8
  %s53 = scalar_lea.vmem %s5, %s52
  %s54 = sadd.s32 0, 1
  %s55 = smul.u32 25, %s54
  %p56 = scmp.lt.s32.totalorder %s55, 74
  %s57 = scalar_select %p56, %s55, 74
  %s58 = smul.addr %s57, 8
  %s59 = scalar_lea.vmem %s0, %s58
  %s60 = sadd.s32 0, 1
  %s61 = smul.u32 25, %s60
  %s62 = sadd.s32 0, 1
  %s63 = smul.u32 25, %s62
  %p64 = scmp.lt.s32.totalorder %s63, 74
  %s65 = scalar_select %p64, %s63, 74
  %s66 = smul.addr %s65, 8
  %s67 = scalar_lea.vmem %s1, %s66
  %s68 = sadd.s32 0, 1
  %s69 = smul.u32 25, %s68
  %s70 = sadd.s32 0, 1
  %s71 = smul.u32 25, %s70
  %p72 = scmp.lt.s32.totalorder %s71, 74
  %s73 = scalar_select %p72, %s71, 74
  %s74 = smul.addr %s73, 8
  %s75 = scalar_lea.vmem %s5, %s74
  %s76 = sadd.s32 0, 1
  %s77 = smul.u32 25, %s76
  %v78 = vld [vmem:[%s67] sm:$0xff]
  %v79 = vld [vmem:[%s67 + $0x8] sm:$0xff]
  %v80 = vld [vmem:[%s67 + $0x10] sm:$0xff]
  %v81 = vld [vmem:[%s67 + $0x18] sm:$0xff]
  %v82 = vld [vmem:[%s67 + $0x20] sm:$0xff]
  %v83 = vld [vmem:[%s67 + $0x28] sm:$0xff]
  %v84 = vld [vmem:[%s67 + $0x30] sm:$0xff]
  %v85 = vld [vmem:[%s67 + $0x38] sm:$0xff]
  %v86 = vld [vmem:[%s67 + $0x40] sm:$0xff]
  %v87 = vld [vmem:[%s67 + $0x48] sm:$0xff]
  %v88 = vld [vmem:[%s67 + $0x50] sm:$0xff]
  %v89 = vld [vmem:[%s67 + $0x58] sm:$0xff]
  %v90 = vld [vmem:[%s67 + $0x60] sm:$0xff]
  %v91 = vld [vmem:[%s67 + $0x68] sm:$0xff]
  %v92 = vld [vmem:[%s67 + $0x70] sm:$0xff]
  %v93 = vld [vmem:[%s67 + $0x78] sm:$0xff]
  %v94 = vld [vmem:[%s67 + $0x80] sm:$0xff]
  %v95 = vld [vmem:[%s67 + $0x88] sm:$0xff]
  %v96 = vld [vmem:[%s67 + $0x90] sm:$0xff]
  %v97 = vld [vmem:[%s67 + $0x98] sm:$0xff]
  %v98 = vld [vmem:[%s67 + $0xa0] sm:$0xff]
  %v99 = vld [vmem:[%s67 + $0xa8] sm:$0xff]
  %v100 = vld [vmem:[%s67 + $0xb0] sm:$0xff]
  %v101 = vld [vmem:[%s67 + $0xb8] sm:$0xff]
  %v102 = vld [vmem:[%s67 + $0xc0] sm:$0xff]
  %vm103 = vcmp.gt.f32.partialorder %v78, 0.0
  %vm104 = vcmp.gt.f32.partialorder %v79, 0.0
  %vm105 = vcmp.gt.f32.partialorder %v80, 0.0
  %vm106 = vcmp.gt.f32.partialorder %v81, 0.0
  %vm107 = vcmp.gt.f32.partialorder %v82, 0.0
  %vm108 = vcmp.gt.f32.partialorder %v83, 0.0
  %vm109 = vcmp.gt.f32.partialorder %v84, 0.0
  %vm110 = vcmp.gt.f32.partialorder %v85, 0.0
  %vm111 = vcmp.gt.f32.partialorder %v86, 0.0
  %vm112 = vcmp.gt.f32.partialorder %v87, 0.0
  %vm113 = vcmp.gt.f32.partialorder %v88, 0.0
  %vm114 = vcmp.gt.f32.partialorder %v89, 0.0
  %vm115 = vcmp.gt.f32.partialorder %v90, 0.0
  %vm116 = vcmp.gt.f32.partialorder %v91, 0.0
  %vm117 = vcmp.gt.f32.partialorder %v92, 0.0
  %vm118 = vcmp.gt.f32.partialorder %v93, 0.0
  %vm119 = vcmp.gt.f32.partialorder %v94, 0.0
  %vm120 = vcmp.gt.f32.partialorder %v95, 0.0
  %vm121 = vcmp.gt.f32.partialorder %v96, 0.0
  %vm122 = vcmp.gt.f32.partialorder %v97, 0.0
  %vm123 = vcmp.gt.f32.partialorder %v98, 0.0
  %vm124 = vcmp.gt.f32.partialorder %v99, 0.0
  %vm125 = vcmp.gt.f32.partialorder %v100, 0.0
  %vm126 = vcmp.gt.f32.partialorder %v101, 0.0
  %vm127 = vcmp.gt.f32.partialorder %v102, 0.0
  %v128 = vld [vmem:[%s59] sm:$0xff]
  %v129 = vld [vmem:[%s59 + $0x8] sm:$0xff]
  %v130 = vld [vmem:[%s59 + $0x10] sm:$0xff]
  %v131 = vld [vmem:[%s59 + $0x18] sm:$0xff]
  %v132 = vld [vmem:[%s59 + $0x20] sm:$0xff]
  %v133 = vld [vmem:[%s59 + $0x28] sm:$0xff]
  %v134 = vld [vmem:[%s59 + $0x30] sm:$0xff]
  %v135 = vld [vmem:[%s59 + $0x38] sm:$0xff]
  %v136 = vld [vmem:[%s59 + $0x40] sm:$0xff]
  %v137 = vld [vmem:[%s59 + $0x48] sm:$0xff]
  %v138 = vld [vmem:[%s59 + $0x50] sm:$0xff]
  %v139 = vld [vmem:[%s59 + $0x58] sm:$0xff]
  %v140 = vld [vmem:[%s59 + $0x60] sm:$0xff]
  %v141 = vld [vmem:[%s59 + $0x68] sm:$0xff]
  %v142 = vld [vmem:[%s59 + $0x70] sm:$0xff]
  %v143 = vld [vmem:[%s59 + $0x78] sm:$0xff]
  %v144 = vld [vmem:[%s59 + $0x80] sm:$0xff]
  %v145 = vld [vmem:[%s59 + $0x88] sm:$0xff]
  %v146 = vld [vmem:[%s59 + $0x90] sm:$0xff]
  %v147 = vld [vmem:[%s59 + $0x98] sm:$0xff]
  %v148 = vld [vmem:[%s59 + $0xa0] sm:$0xff]
  %v149 = vld [vmem:[%s59 + $0xa8] sm:$0xff]
  %v150 = vld [vmem:[%s59 + $0xb0] sm:$0xff]
  %v151 = vld [vmem:[%s59 + $0xb8] sm:$0xff]
  %v152 = vld [vmem:[%s59 + $0xc0] sm:$0xff]
  %v153 = vld [vmem:[%s2] sm:$0x1]
  %v155 = vlaneseq
  %v156 = vshrl.u32 %v155, 7
  %v157 = vsub.s32 0, %v156
  %v158 = vrot.slane %v153, %v157
  %v160 = vmul.f32 %v128, %v158
  %v161 = vmul.f32 %v129, %v158
  %v162 = vmul.f32 %v130, %v158
  %v163 = vmul.f32 %v131, %v158
  %v164 = vmul.f32 %v132, %v158
  %v165 = vmul.f32 %v133, %v158
  %v166 = vmul.f32 %v134, %v158
  %v167 = vmul.f32 %v135, %v158
  %v168 = vmul.f32 %v136, %v158
  %v169 = vmul.f32 %v137, %v158
  %v170 = vmul.f32 %v138, %v158
  %v171 = vmul.f32 %v139, %v158
  %v172 = vmul.f32 %v140, %v158
  %v173 = vmul.f32 %v141, %v158
  %v174 = vmul.f32 %v142, %v158
  %v175 = vmul.f32 %v143, %v158
  %v176 = vmul.f32 %v144, %v158
  %v177 = vmul.f32 %v145, %v158
  %v178 = vmul.f32 %v146, %v158
  %v179 = vmul.f32 %v147, %v158
  %v180 = vmul.f32 %v148, %v158
  %v181 = vmul.f32 %v149, %v158
  %v182 = vmul.f32 %v150, %v158
  %v183 = vmul.f32 %v151, %v158
  %v184 = vmul.f32 %v152, %v158
  %v185 = vld [vmem:[%s3] sm:$0x1]
  %v187 = vlaneseq
  %v188 = vshrl.u32 %v187, 7
  %v189 = vsub.s32 0, %v188
  %v190 = vrot.slane %v185, %v189
  %v192 = vadd.f32 %v160, %v190
  %v193 = vadd.f32 %v161, %v190
  %v194 = vadd.f32 %v162, %v190
  %v195 = vadd.f32 %v163, %v190
  %v196 = vadd.f32 %v164, %v190
  %v197 = vadd.f32 %v165, %v190
  %v198 = vadd.f32 %v166, %v190
  %v199 = vadd.f32 %v167, %v190
  %v200 = vadd.f32 %v168, %v190
  %v201 = vadd.f32 %v169, %v190
  %v202 = vadd.f32 %v170, %v190
  %v203 = vadd.f32 %v171, %v190
  %v204 = vadd.f32 %v172, %v190
  %v205 = vadd.f32 %v173, %v190
  %v206 = vadd.f32 %v174, %v190
  %v207 = vadd.f32 %v175, %v190
  %v208 = vadd.f32 %v176, %v190
  %v209 = vadd.f32 %v177, %v190
  %v210 = vadd.f32 %v178, %v190
  %v211 = vadd.f32 %v179, %v190
  %v212 = vadd.f32 %v180, %v190
  %v213 = vadd.f32 %v181, %v190
  %v214 = vadd.f32 %v182, %v190
  %v215 = vadd.f32 %v183, %v190
  %v216 = vadd.f32 %v184, %v190
  %v217 = vmax.f32 %v192, 0.0
  %v218 = vmax.f32 %v193, 0.0
  %v219 = vmax.f32 %v194, 0.0
  %v220 = vmax.f32 %v195, 0.0
  %v221 = vmax.f32 %v196, 0.0
  %v222 = vmax.f32 %v197, 0.0
  %v223 = vmax.f32 %v198, 0.0
  %v224 = vmax.f32 %v199, 0.0
  %v225 = vmax.f32 %v200, 0.0
  %v226 = vmax.f32 %v201, 0.0
  %v227 = vmax.f32 %v202, 0.0
  %v228 = vmax.f32 %v203, 0.0
  %v229 = vmax.f32 %v204, 0.0
  %v230 = vmax.f32 %v205, 0.0
  %v231 = vmax.f32 %v206, 0.0
  %v232 = vmax.f32 %v207, 0.0
  %v233 = vmax.f32 %v208, 0.0
  %v234 = vmax.f32 %v209, 0.0
  %v235 = vmax.f32 %v210, 0.0
  %v236 = vmax.f32 %v211, 0.0
  %v237 = vmax.f32 %v212, 0.0
  %v238 = vmax.f32 %v213, 0.0
  %v239 = vmax.f32 %v214, 0.0
  %v240 = vmax.f32 %v215, 0.0
  %v241 = vmax.f32 %v216, 0.0
  %v242 = vsel %vm103, 1, 0
  %v243 = vsel %vm104, 1, 0
  %v244 = vsel %vm105, 1, 0
  %v245 = vsel %vm106, 1, 0
  %v246 = vsel %vm107, 1, 0
  %v247 = vsel %vm108, 1, 0
  %v248 = vsel %vm109, 1, 0
  %v249 = vsel %vm110, 1, 0
  %v250 = vsel %vm111, 1, 0
  %v251 = vsel %vm112, 1, 0
  %v252 = vsel %vm113, 1, 0
  %v253 = vsel %vm114, 1, 0
  %v254 = vsel %vm115, 1, 0
  %v255 = vsel %vm116, 1, 0
  %v256 = vsel %vm117, 1, 0
  %v257 = vsel %vm118, 1, 0
  %v258 = vsel %vm119, 1, 0
  %v259 = vsel %vm120, 1, 0
  %v260 = vsel %vm121, 1, 0
  %v261 = vsel %vm122, 1, 0
  %v262 = vsel %vm123, 1, 0
  %v263 = vsel %vm124, 1, 0
  %v264 = vsel %vm125, 1, 0
  %v265 = vsel %vm126, 1, 0
  %v266 = vsel %vm127, 1, 0
  %267 = vset.pattern.permute.xlu0 0
  %268 = vperm.xlu0 %267, %v242
  %v269 = vpop.permute.xlu0 %268
  %270 = vset.pattern.permute.xlu0 0
  %271 = vperm.xlu0 %270, %v243
  %v272 = vpop.permute.xlu0 %271
  %273 = vset.pattern.permute.xlu0 0
  %274 = vperm.xlu0 %273, %v244
  %v275 = vpop.permute.xlu0 %274
  %276 = vset.pattern.permute.xlu0 0
  %277 = vperm.xlu0 %276, %v245
  %v278 = vpop.permute.xlu0 %277
  %279 = vset.pattern.permute.xlu0 0
  %280 = vperm.xlu0 %279, %v246
  %v281 = vpop.permute.xlu0 %280
  %282 = vset.pattern.permute.xlu0 0
  %283 = vperm.xlu0 %282, %v247
  %v284 = vpop.permute.xlu0 %283
  %285 = vset.pattern.permute.xlu0 0
  %286 = vperm.xlu0 %285, %v248
  %v287 = vpop.permute.xlu0 %286
  %288 = vset.pattern.permute.xlu0 0
  %289 = vperm.xlu0 %288, %v249
  %v290 = vpop.permute.xlu0 %289
  %291 = vset.pattern.permute.xlu0 0
  %292 = vperm.xlu0 %291, %v250
  %v293 = vpop.permute.xlu0 %292
  %294 = vset.pattern.permute.xlu0 0
  %295 = vperm.xlu0 %294, %v251
  %v296 = vpop.permute.xlu0 %295
  %297 = vset.pattern.permute.xlu0 0
  %298 = vperm.xlu0 %297, %v252
  %v299 = vpop.permute.xlu0 %298
  %300 = vset.pattern.permute.xlu0 0
  %301 = vperm.xlu0 %300, %v253
  %v302 = vpop.permute.xlu0 %301
  %303 = vset.pattern.permute.xlu0 0
  %304 = vperm.xlu0 %303, %v254
  %v305 = vpop.permute.xlu0 %304
  %306 = vset.pattern.permute.xlu0 0
  %307 = vperm.xlu0 %306, %v255
  %v308 = vpop.permute.xlu0 %307
  %309 = vset.pattern.permute.xlu0 0
  %310 = vperm.xlu0 %309, %v256
  %v311 = vpop.permute.xlu0 %310
  %312 = vset.pattern.permute.xlu0 0
  %313 = vperm.xlu0 %312, %v257
  %v314 = vpop.permute.xlu0 %313
  %315 = vset.pattern.permute.xlu0 0
  %316 = vperm.xlu0 %315, %v258
  %v317 = vpop.permute.xlu0 %316
  %318 = vset.pattern.permute.xlu0 0
  %319 = vperm.xlu0 %318, %v259
  %v320 = vpop.permute.xlu0 %319
  %321 = vset.pattern.permute.xlu0 0
  %322 = vperm.xlu0 %321, %v260
  %v323 = vpop.permute.xlu0 %322
  %324 = vset.pattern.permute.xlu0 0
  %325 = vperm.xlu0 %324, %v261
  %v326 = vpop.permute.xlu0 %325
  %327 = vset.pattern.permute.xlu0 0
  %328 = vperm.xlu0 %327, %v262
  %v329 = vpop.permute.xlu0 %328
  %330 = vset.pattern.permute.xlu0 0
  %331 = vperm.xlu0 %330, %v263
  %v332 = vpop.permute.xlu0 %331
  %333 = vset.pattern.permute.xlu0 0
  %334 = vperm.xlu0 %333, %v264
  %v335 = vpop.permute.xlu0 %334
  %336 = vset.pattern.permute.xlu0 0
  %337 = vperm.xlu0 %336, %v265
  %v338 = vpop.permute.xlu0 %337
  %339 = vset.pattern.permute.xlu0 0
  %340 = vperm.xlu0 %339, %v266
  %v341 = vpop.permute.xlu0 %340
  %vm342 = vcmp.eq.s32.totalorder %v269, 1
  %vm343 = vcmp.eq.s32.totalorder %v272, 1
  %vm344 = vcmp.eq.s32.totalorder %v275, 1
  %vm345 = vcmp.eq.s32.totalorder %v278, 1
  %vm346 = vcmp.eq.s32.totalorder %v281, 1
  %vm347 = vcmp.eq.s32.totalorder %v284, 1
  %vm348 = vcmp.eq.s32.totalorder %v287, 1
  %vm349 = vcmp.eq.s32.totalorder %v290, 1
  %vm350 = vcmp.eq.s32.totalorder %v293, 1
  %vm351 = vcmp.eq.s32.totalorder %v296, 1
  %vm352 = vcmp.eq.s32.totalorder %v299, 1
  %vm353 = vcmp.eq.s32.totalorder %v302, 1
  %vm354 = vcmp.eq.s32.totalorder %v305, 1
  %vm355 = vcmp.eq.s32.totalorder %v308, 1
  %vm356 = vcmp.eq.s32.totalorder %v311, 1
  %vm357 = vcmp.eq.s32.totalorder %v314, 1
  %vm358 = vcmp.eq.s32.totalorder %v317, 1
  %vm359 = vcmp.eq.s32.totalorder %v320, 1
  %vm360 = vcmp.eq.s32.totalorder %v323, 1
  %vm361 = vcmp.eq.s32.totalorder %v326, 1
  %vm362 = vcmp.eq.s32.totalorder %v329, 1
  %vm363 = vcmp.eq.s32.totalorder %v332, 1
  %vm364 = vcmp.eq.s32.totalorder %v335, 1
  %vm365 = vcmp.eq.s32.totalorder %v338, 1
  %vm366 = vcmp.eq.s32.totalorder %v341, 1
  %v367 = vsel %vm342, %v217, 0.0
  %v368 = vsel %vm343, %v218, 0.0
  %v369 = vsel %vm344, %v219, 0.0
  %v370 = vsel %vm345, %v220, 0.0
  %v371 = vsel %vm346, %v221, 0.0
  %v372 = vsel %vm347, %v222, 0.0
  %v373 = vsel %vm348, %v223, 0.0
  %v374 = vsel %vm349, %v224, 0.0
  %v375 = vsel %vm350, %v225, 0.0
  %v376 = vsel %vm351, %v226, 0.0
  %v377 = vsel %vm352, %v227, 0.0
  %v378 = vsel %vm353, %v228, 0.0
  %v379 = vsel %vm354, %v229, 0.0
  %v380 = vsel %vm355, %v230, 0.0
  %v381 = vsel %vm356, %v231, 0.0
  %v382 = vsel %vm357, %v232, 0.0
  %v383 = vsel %vm358, %v233, 0.0
  %v384 = vsel %vm359, %v234, 0.0
  %v385 = vsel %vm360, %v235, 0.0
  %v386 = vsel %vm361, %v236, 0.0
  %v387 = vsel %vm362, %v237, 0.0
  %v388 = vsel %vm363, %v238, 0.0
  %v389 = vsel %vm364, %v239, 0.0
  %v390 = vsel %vm365, %v240, 0.0
  %v391 = vsel %vm366, %v241, 0.0
  %v392 = vld [vmem:[%s4] sm:$0xff]
  %v393 = vld [vmem:[%s4 + $0x8] sm:$0xff]
  %v394 = vld [vmem:[%s4 + $0x10] sm:$0xff]
  %v395 = vld [vmem:[%s4 + $0x18] sm:$0xff]
  %v396 = vld [vmem:[%s4 + $0x20] sm:$0xff]
  %v397 = vld [vmem:[%s4 + $0x28] sm:$0xff]
  %v398 = vld [vmem:[%s4 + $0x30] sm:$0xff]
  %v399 = vld [vmem:[%s4 + $0x38] sm:$0xff]
  %v400 = vld [vmem:[%s4 + $0x40] sm:$0xff]
  %v401 = vld [vmem:[%s4 + $0x48] sm:$0xff]
  %v402 = vld [vmem:[%s4 + $0x50] sm:$0xff]
  %v403 = vld [vmem:[%s4 + $0x58] sm:$0xff]
  %v404 = vld [vmem:[%s4 + $0x60] sm:$0xff]
  %v405 = vld [vmem:[%s4 + $0x68] sm:$0xff]
  %v406 = vld [vmem:[%s4 + $0x70] sm:$0xff]
  %v407 = vld [vmem:[%s4 + $0x78] sm:$0xff]
  %408 = vmatprep.subr.mxu0 0.0
  %409 = vmatpush1.msra.mxu0 %v392
  %410 = vmatprep.subr.mxu0 0.0
  %411 = vmatpush1.msra.mxu0 %v393
  %412 = vmatprep.subr.mxu0 0.0
  %413 = vmatpush1.msra.mxu0 %v394
  %414 = vmatprep.subr.mxu0 0.0
  %415 = vmatpush1.msra.mxu0 %v395
  %416 = vmatprep.subr.mxu0 0.0
  %417 = vmatpush1.msra.mxu0 %v396
  %418 = vmatprep.subr.mxu0 0.0
  %419 = vmatpush1.msra.mxu0 %v397
  %420 = vmatprep.subr.mxu0 0.0
  %421 = vmatpush1.msra.mxu0 %v398
  %422 = vmatprep.subr.mxu0 0.0
  %423 = vmatpush1.msra.mxu0 %v399
  %424 = vmatprep.subr.mxu0 0.0
  %425 = vmatpush1.msra.mxu0 %v400
  %426 = vmatprep.subr.mxu0 0.0
  %427 = vmatpush1.msra.mxu0 %v401
  %428 = vmatprep.subr.mxu0 0.0
  %429 = vmatpush1.msra.mxu0 %v402
  %430 = vmatprep.subr.mxu0 0.0
  %431 = vmatpush1.msra.mxu0 %v403
  %432 = vmatprep.subr.mxu0 0.0
  %433 = vmatpush1.msra.mxu0 %v404
  %434 = vmatprep.subr.mxu0 0.0
  %435 = vmatpush1.msra.mxu0 %v405
  %436 = vmatprep.subr.mxu0 0.0
  %437 = vmatpush1.msra.mxu0 %v406
  %438 = vmatprep.subr.mxu0 0.0
  %439 = vmatpush1.msra.mxu0 %v407
  %440 = vmatprep.subr.mxu0 0.0
  %441 = vmatpush1.msra.mxu0 0.0
  %442 = vmatprep.subr.mxu0 0.0
  %443 = vmatpush1.msra.mxu0 0.0
  %444 = vmatprep.subr.mxu0 0.0
  %445 = vmatpush1.msra.mxu0 0.0
  %446 = vmatprep.subr.mxu0 0.0
  %447 = vmatpush1.msra.mxu0 0.0
  %448 = vmatprep.subr.mxu0 0.0
  %449 = vmatpush1.msra.mxu0 0.0
  %450 = vmatprep.subr.mxu0 0.0
  %451 = vmatpush1.msra.mxu0 0.0
  %452 = vmatprep.subr.mxu0 0.0
  %453 = vmatpush1.msra.mxu0 0.0
  %454 = vmatprep.subr.mxu0 0.0
  %455 = vmatpush1.msra.mxu0 0.0
  %456 = vmatprep.subr.mxu0 0.0
  %457 = vmatpush1.msra.mxu0 0.0
  %458 = vmatprep.subr.mxu0 0.0
  %459 = vmatpush1.msra.mxu0 0.0
  %460 = vmatprep.subr.mxu0 0.0
  %461 = vmatpush1.msra.mxu0 0.0
  %462 = vmatprep.subr.mxu0 0.0
  %463 = vmatpush1.msra.mxu0 0.0
  %464 = vmatprep.subr.mxu0 0.0
  %465 = vmatpush1.msra.mxu0 0.0
  %466 = vmatprep.subr.mxu0 0.0
  %467 = vmatpush1.msra.mxu0 0.0
  %468 = vmatprep.subr.mxu0 0.0
  %469 = vmatpush1.msra.mxu0 0.0
  %470 = vmatprep.subr.mxu0 0.0
  %471 = vmatpush1.msra.mxu0 0.0
  %472 = vmatprep.mubr.f32.mxu0 0.0
  %473 = vmatmul.mubr.f32.gmra.mrb[0].mxu0 %v367
  %v474 = vpop.f32.mrb[0].mxu0
  %v475 = vadd.f32 0.0, %v474
  %v476 = vpop.f32.mrb[0].mxu0
  %477 = vmatprep.mubr.f32.mxu0 0.0
  %478 = vmatmul.mubr.f32.gmra.mrb[0].mxu0 %v368
  %v479 = vpop.f32.mrb[0].mxu0
  %v480 = vadd.f32 0.0, %v479
  %v481 = vpop.f32.mrb[0].mxu0
  %482 = vmatprep.mubr.f32.mxu0 0.0
  %483 = vmatmul.mubr.f32.gmra.mrb[0].mxu0 %v369
  %v484 = vpop.f32.mrb[0].mxu0
  %v485 = vadd.f32 0.0, %v484
  %v486 = vpop.f32.mrb[0].mxu0
  %487 = vmatprep.mubr.f32.mxu0 0.0
  %488 = vmatmul.mubr.f32.gmra.mrb[0].mxu0 %v370
  %v489 = vpop.f32.mrb[0].mxu0
  %v490 = vadd.f32 0.0, %v489
  %v491 = vpop.f32.mrb[0].mxu0
  %492 = vmatprep.mubr.f32.mxu0 0.0
  %493 = vmatmul.mubr.f32.gmra.mrb[0].mxu0 %v371
  %v494 = vpop.f32.mrb[0].mxu0
  %v495 = vadd.f32 0.0, %v494
  %v496 = vpop.f32.mrb[0].mxu0
  %497 = vmatprep.mubr.f32.mxu0 0.0
  %498 = vmatmul.mubr.f32.gmra.mrb[0].mxu0 %v372
  %v499 = vpop.f32.mrb[0].mxu0
  %v500 = vadd.f32 0.0, %v499
  %v501 = vpop.f32.mrb[0].mxu0
  %502 = vmatprep.mubr.f32.mxu0 0.0
  %503 = vmatmul.mubr.f32.gmra.mrb[0].mxu0 %v373
  %v504 = vpop.f32.mrb[0].mxu0
  %v505 = vadd.f32 0.0, %v504
  %v506 = vpop.f32.mrb[0].mxu0
  %507 = vmatprep.mubr.f32.mxu0 0.0
  %508 = vmatmul.mubr.f32.gmra.mrb[0].mxu0 %v374
  %v509 = vpop.f32.mrb[0].mxu0
  %v510 = vadd.f32 0.0, %v509
  %v511 = vpop.f32.mrb[0].mxu0
  %512 = vmatprep.mubr.f32.mxu0 0.0
  %513 = vmatmul.mubr.f32.gmra.mrb[0].mxu0 %v375
  %v514 = vpop.f32.mrb[0].mxu0
  %v515 = vadd.f32 0.0, %v514
  %v516 = vpop.f32.mrb[0].mxu0
  %517 = vmatprep.mubr.f32.mxu0 0.0
  %518 = vmatmul.mubr.f32.gmra.mrb[0].mxu0 %v376
  %v519 = vpop.f32.mrb[0].mxu0
  %v520 = vadd.f32 0.0, %v519
  %v521 = vpop.f32.mrb[0].mxu0
  %522 = vmatprep.mubr.f32.mxu0 0.0
  %523 = vmatmul.mubr.f32.gmra.mrb[0].mxu0 %v377
  %v524 = vpop.f32.mrb[0].mxu0
  %v525 = vadd.f32 0.0, %v524
  %v526 = vpop.f32.mrb[0].mxu0
  %527 = vmatprep.mubr.f32.mxu0 0.0
  %528 = vmatmul.mubr.f32.gmra.mrb[0].mxu0 %v378
  %v529 = vpop.f32.mrb[0].mxu0
  %v530 = vadd.f32 0.0, %v529
  %v531 = vpop.f32.mrb[0].mxu0
  %532 = vmatprep.mubr.f32.mxu0 0.0
  %533 = vmatmul.mubr.f32.gmra.mrb[0].mxu0 %v379
  %v534 = vpop.f32.mrb[0].mxu0
  %v535 = vadd.f32 0.0, %v534
  %v536 = vpop.f32.mrb[0].mxu0
  %537 = vmatprep.mubr.f32.mxu0 0.0
  %538 = vmatmul.mubr.f32.gmra.mrb[0].mxu0 %v380
  %v539 = vpop.f32.mrb[0].mxu0
  %v540 = vadd.f32 0.0, %v539
  %v541 = vpop.f32.mrb[0].mxu0
  %542 = vmatprep.mubr.f32.mxu0 0.0
  %543 = vmatmul.mubr.f32.gmra.mrb[0].mxu0 %v381
  %v544 = vpop.f32.mrb[0].mxu0
  %v545 = vadd.f32 0.0, %v544
  %v546 = vpop.f32.mrb[0].mxu0
  %547 = vmatprep.mubr.f32.mxu0 0.0
  %548 = vmatmul.mubr.f32.gmra.mrb[0].mxu0 %v382
  %v549 = vpop.f32.mrb[0].mxu0
  %v550 = vadd.f32 0.0, %v549
  %v551 = vpop.f32.mrb[0].mxu0
  %552 = vmatprep.mubr.f32.mxu0 0.0
  %553 = vmatmul.mubr.f32.gmra.mrb[0].mxu0 %v383
  %v554 = vpop.f32.mrb[0].mxu0
  %v555 = vadd.f32 0.0, %v554
  %v556 = vpop.f32.mrb[0].mxu0
  %557 = vmatprep.mubr.f32.mxu0 0.0
  %558 = vmatmul.mubr.f32.gmra.mrb[0].mxu0 %v384
  %v559 = vpop.f32.mrb[0].mxu0
  %v560 = vadd.f32 0.0, %v559
  %v561 = vpop.f32.mrb[0].mxu0
  %562 = vmatprep.mubr.f32.mxu0 0.0
  %563 = vmatmul.mubr.f32.gmra.mrb[0].mxu0 %v385
  %v564 = vpop.f32.mrb[0].mxu0
  %v565 = vadd.f32 0.0, %v564
  %v566 = vpop.f32.mrb[0].mxu0
  %567 = vmatprep.mubr.f32.mxu0 0.0
  %568 = vmatmul.mubr.f32.gmra.mrb[0].mxu0 %v386
  %v569 = vpop.f32.mrb[0].mxu0
  %v570 = vadd.f32 0.0, %v569
  %v571 = vpop.f32.mrb[0].mxu0
  %572 = vmatprep.mubr.f32.mxu0 0.0
  %573 = vmatmul.mubr.f32.gmra.mrb[0].mxu0 %v387
  %v574 = vpop.f32.mrb[0].mxu0
  %v575 = vadd.f32 0.0, %v574
  %v576 = vpop.f32.mrb[0].mxu0
  %577 = vmatprep.mubr.f32.mxu0 0.0
  %578 = vmatmul.mubr.f32.gmra.mrb[0].mxu0 %v388
  %v579 = vpop.f32.mrb[0].mxu0
  %v580 = vadd.f32 0.0, %v579
  %v581 = vpop.f32.mrb[0].mxu0
  %582 = vmatprep.mubr.f32.mxu0 0.0
  %583 = vmatmul.mubr.f32.gmra.mrb[0].mxu0 %v389
  %v584 = vpop.f32.mrb[0].mxu0
  %v585 = vadd.f32 0.0, %v584
  %v586 = vpop.f32.mrb[0].mxu0
  %587 = vmatprep.mubr.f32.mxu0 0.0
  %588 = vmatmul.mubr.f32.gmra.mrb[0].mxu0 %v390
  %v589 = vpop.f32.mrb[0].mxu0
  %v590 = vadd.f32 0.0, %v589
  %v591 = vpop.f32.mrb[0].mxu0
  %592 = vmatprep.mubr.f32.mxu0 0.0
  %593 = vmatmul.mubr.f32.gmra.mrb[0].mxu0 %v391
  %v594 = vpop.f32.mrb[0].mxu0
  %v595 = vadd.f32 0.0, %v594
  %v596 = vpop.f32.mrb[0].mxu0
  %597 = vdwg.mxu0
  %598 = vst [vmem:[%s75] sm:$0xff] %v475
  %599 = vst [vmem:[%s75 + $0x8] sm:$0xff] %v480
  %600 = vst [vmem:[%s75 + $0x10] sm:$0xff] %v485
  %601 = vst [vmem:[%s75 + $0x18] sm:$0xff] %v490
  %602 = vst [vmem:[%s75 + $0x20] sm:$0xff] %v495
  %603 = vst [vmem:[%s75 + $0x28] sm:$0xff] %v500
  %604 = vst [vmem:[%s75 + $0x30] sm:$0xff] %v505
  %605 = vst [vmem:[%s75 + $0x38] sm:$0xff] %v510
  %606 = vst [vmem:[%s75 + $0x40] sm:$0xff] %v515
  %607 = vst [vmem:[%s75 + $0x48] sm:$0xff] %v520
  %608 = vst [vmem:[%s75 + $0x50] sm:$0xff] %v525
  %609 = vst [vmem:[%s75 + $0x58] sm:$0xff] %v530
  %610 = vst [vmem:[%s75 + $0x60] sm:$0xff] %v535
  %611 = vst [vmem:[%s75 + $0x68] sm:$0xff] %v540
  %612 = vst [vmem:[%s75 + $0x70] sm:$0xff] %v545
  %613 = vst [vmem:[%s75 + $0x78] sm:$0xff] %v550
  %614 = vst [vmem:[%s75 + $0x80] sm:$0xff] %v555
  %615 = vst [vmem:[%s75 + $0x88] sm:$0xff] %v560
  %616 = vst [vmem:[%s75 + $0x90] sm:$0xff] %v565
  %617 = vst [vmem:[%s75 + $0x98] sm:$0xff] %v570
  %618 = vst [vmem:[%s75 + $0xa0] sm:$0xff] %v575
  %619 = vst [vmem:[%s75 + $0xa8] sm:$0xff] %v580
  %620 = vst [vmem:[%s75 + $0xb0] sm:$0xff] %v585
  %621 = vst [vmem:[%s75 + $0xb8] sm:$0xff] %v590
  %622 = vst [vmem:[%s75 + $0xc0] sm:$0xff] %v595
  %s623 = sadd.s32 0, 1
  %s624 = smul.u32 25, %s623
  %p625 = scmp.lt.s32.totalorder %s624, 74
  %s626 = scalar_select %p625, %s624, 74
  %s627 = smul.addr %s626, 8
  %s628 = scalar_lea.vmem %s5, %s627
  // Predicated region
  $region22: #{densenet_forward.18} parent=0 // pred_check
    _
  $region23: #{densenet_forward.18} parent=0 // pred_check_branch
    %630 = sbr.rel (0) target = $region25
  $region24: #{densenet_forward.18} parent=0 // pred_region
    %s631 = sadd.s32 0, 1
    %s632 = smul.u32 25, %s631
  $region25: #{densenet_forward.18} parent=0 // pred_fallthru
    _
  // Predicated region
  $region26: #{densenet_forward.18} parent=0 // pred_check
    _
  $region27: #{densenet_forward.18} parent=0 // pred_check_branch
    %634 = sbr.rel (0) target = $region29
  $region28: #{densenet_forward.18} parent=0 // pred_region
    %s635 = sadd.s32 0, 1
    %s636 = smul.u32 25, %s635
    %p637 = scmp.lt.s32.totalorder %s636, 74
    %s638 = scalar_select %p637, %s636, 74
    %s639 = smul.addr %s638, 8
    %s640 = scalar_lea.vmem %s5, %s639
  $region29: #{densenet_forward.18} parent=0 // pred_fallthru
    _

// kernel: densenet_forward.19
$region0: #{densenet_forward.19}
  #allocation0 [shape = 'u32[]', space=smem, size = 0x4, offset = 0x4, fixed_abs, tag = 'smem constant byte address 0x4 - core index']
  #allocation1 [shape = 'u32[144,128]{1,0:T(1,128)}', space=vmem, size = 0x12000, scoped, tag = 'internal scratch']
  #allocation2 [shape = 'f32[222,128]{1,0:T(8,128)}', space=vmem, size = 0x1c000, scoped, tag = 'scratch operand']
  #allocation3 [shape = 'f32[222,1]{1,0:T(8,128)}', space=vmem, size = 0x1c000, scoped, tag = 'scratch operand']
  #allocation4 [shape = 's32[2]{0}', space=sflag, size = 0x8, scoped, tag = 'scratch operand']
  #allocation5 [shape = 's32[]', space=sflag, size = 0x4, offset = 0, fixed_abs, tag = 'sflag constant byte address 0x0 - dummy sync flag']
  #allocation6 [shape = 's32[]', space=sflag, size = 0x4, offset = 0, fixed_abs, tag = 'sflag constant byte address 0x0 - dummy sync flag']
  %s0 = inlined_call_operand.vmem [shape: f32[600,128], index: 0, kind: input, shape index: {}]
  %s1 = inlined_call_operand.vmem [shape: f32[600,1], index: 1, kind: input, shape index: {}]
  %s2 = inlined_call_operand.vmem [shape: f32[1,128], index: 2, kind: input, shape index: {}]
  %s3 = inlined_call_operand.vmem [shape: f32[1,128], index: 3, kind: input, shape index: {}]
  %s4 = inlined_call_operand.vmem [shape: f32[1152,128], index: 4, kind: input, shape index: {}]
  %s5 = inlined_call_operand.vmem [shape: f32[600,128], index: 5, kind: output, shape index: {}]
  %s6 = sld [smem:[#allocation0]]
  $region96: #{densenet_forward.19} parent=0
    _
  %s8 = ssub.s32 1, %s6
  %s9 = scalar_select 0, %s8, %s6
  // Predicated region
  $region2: #{densenet_forward.19} parent=0 // pred_check
    _
  $region3: #{densenet_forward.19} parent=0 // pred_check_branch
    %11 = sbr.rel (0) target = $region5
  $region4: #{densenet_forward.19} parent=0 // pred_region
    _
  $region5: #{densenet_forward.19} parent=0 // pred_fallthru
    _
  // Predicated region
  $region6: #{densenet_forward.19} parent=0 // pred_check
    _
  $region7: #{densenet_forward.19} parent=0 // pred_check_branch
    %13 = sbr.rel (0) target = $region9
  $region8: #{densenet_forward.19} parent=0 // pred_region
    _
  $region9: #{densenet_forward.19} parent=0 // pred_fallthru
    _
  // Predicated region
  $region10: #{densenet_forward.19} parent=0 // pred_check
    _
  $region11: #{densenet_forward.19} parent=0 // pred_check_branch
    %15 = sbr.rel (0) target = $region13
  $region12: #{densenet_forward.19} parent=0 // pred_region
    _
  $region13: #{densenet_forward.19} parent=0 // pred_fallthru
    _
  %s16 = sadd.s32 0, 1
  %s17 = smul.u32 25, %s16
  %p18 = scmp.lt.s32.totalorder %s17, 74
  %s19 = scalar_select %p18, %s17, 74
  %s20 = smul.addr %s19, 8
  %s21 = scalar_lea.vmem %s5, %s20
  %s22 = sadd.s32 0, 1
  %s23 = smul.u32 25, %s22
  %p24 = scmp.lt.s32.totalorder %s23, 74
  %s25 = scalar_select %p24, %s23, 74
  %s26 = smul.addr %s25, 8
  %s27 = scalar_lea.vmem %s5, %s26
  %s28 = sadd.s32 0, 1
  %s29 = smul.u32 25, %s28
  %s30 = sadd.s32 0, 1
  %s31 = smul.u32 %s30, 200
  %s32 = ssub.s32 %s31, 11
  %s33 = scalar_lea.vmem %s0, %s32
  %p35 = scmp.lt.u32.totalorder 222, 8
  %p36 = pneg %p35
  // Predicated region
  $region14: #{densenet_forward.19} parent=0 // pred_check
    _
  $region15: #{densenet_forward.19} parent=0 // pred_check_branch
    %38 = sbr.rel (%p35) target = $region17
  $region16: #{densenet_forward.19} parent=0 // pred_region
    %s53 = sand.u32 222, 7
    %p54 = scmp.eq.s32.totalorder %s53, 0
    %p55 = pneg %p54
    // Predicated region
    $region29: #{densenet_forward.19} parent=16 // pred_check
      _
    $region30: #{densenet_forward.19} parent=16 // pred_check_branch
      %57 = sbr.rel (%p54) target = $region32
    $region31: #{densenet_forward.19} parent=16 // pred_region
      %s58 = sand.u32 222, 7
      %s59 = ssub.s32 222, %s58
      %s60 = scalar_lea.vmem %s33, %s59
      %s61 = ssub.s32 222, %s58
      %s62 = scalar_lea.vmem [#allocation2], %s61
      loop: start=0, step=1, limit=1
      $region33: #{densenet_forward.19} parent=31 // loop_pre_header
        _
      $region34: #{densenet_forward.19} parent=31 // loop_header
        %s64 = sphi 0, %s68
        %p65 = scmp.ge.s32.totalorder %s64, 1
        %s69 = sphi %s33, %s33
        %s70 = sphi [#allocation2], [#allocation2]
      $region35: #{densenet_forward.19} parent=31 // loop_header_branch
        %67 = sbr.rel (%p65) target = $region39
      $region36: #{densenet_forward.19} parent=31 // loop_body
        %v71 = vld [vmem:[%s69] sm:$0xff]
        %72 = vst [vmem:[%s70] sm:$0xff] %v71
        %v73 = vld [vmem:[%s69 + $0x8] sm:$0xff]
        %74 = vst [vmem:[%s70 + $0x8] sm:$0xff] %v73
        %v75 = vld [vmem:[%s69 + $0x10] sm:$0xff]
        %76 = vst [vmem:[%s70 + $0x10] sm:$0xff] %v75
        %v77 = vld [vmem:[%s69 + $0x18] sm:$0xff]
        %78 = vst [vmem:[%s70 + $0x18] sm:$0xff] %v77
        %v79 = vld [vmem:[%s69 + $0x20] sm:$0xff]
        %80 = vst [vmem:[%s70 + $0x20] sm:$0xff] %v79
        %v81 = vld [vmem:[%s69 + $0x28] sm:$0xff]
        %82 = vst [vmem:[%s70 + $0x28] sm:$0xff] %v81
        %v83 = vld [vmem:[%s69 + $0x30] sm:$0xff]
        %84 = vst [vmem:[%s70 + $0x30] sm:$0xff] %v83
        %v85 = vld [vmem:[%s69 + $0x38] sm:$0xff]
        %86 = vst [vmem:[%s70 + $0x38] sm:$0xff] %v85
        %v87 = vld [vmem:[%s69 + $0x40] sm:$0xff]
        %88 = vst [vmem:[%s70 + $0x40] sm:$0xff] %v87
        %v89 = vld [vmem:[%s69 + $0x48] sm:$0xff]
        %90 = vst [vmem:[%s70 + $0x48] sm:$0xff] %v89
        %v91 = vld [vmem:[%s69 + $0x50] sm:$0xff]
        %92 = vst [vmem:[%s70 + $0x50] sm:$0xff] %v91
        %v93 = vld [vmem:[%s69 + $0x58] sm:$0xff]
        %94 = vst [vmem:[%s70 + $0x58] sm:$0xff] %v93
        %v95 = vld [vmem:[%s69 + $0x60] sm:$0xff]
        %96 = vst [vmem:[%s70 + $0x60] sm:$0xff] %v95
        %v97 = vld [vmem:[%s69 + $0x68] sm:$0xff]
        %98 = vst [vmem:[%s70 + $0x68] sm:$0xff] %v97
        %v99 = vld [vmem:[%s69 + $0x70] sm:$0xff]
        %100 = vst [vmem:[%s70 + $0x70] sm:$0xff] %v99
        %v101 = vld [vmem:[%s69 + $0x78] sm:$0xff]
        %102 = vst [vmem:[%s70 + $0x78] sm:$0xff] %v101
        %v103 = vld [vmem:[%s69 + $0x80] sm:$0xff]
        %104 = vst [vmem:[%s70 + $0x80] sm:$0xff] %v103
        %v105 = vld [vmem:[%s69 + $0x88] sm:$0xff]
        %106 = vst [vmem:[%s70 + $0x88] sm:$0xff] %v105
        %v107 = vld [vmem:[%s69 + $0x90] sm:$0xff]
        %108 = vst [vmem:[%s70 + $0x90] sm:$0xff] %v107
        %v109 = vld [vmem:[%s69 + $0x98] sm:$0xff]
        %110 = vst [vmem:[%s70 + $0x98] sm:$0xff] %v109
        %v111 = vld [vmem:[%s69 + $0xa0] sm:$0xff]
        %112 = vst [vmem:[%s70 + $0xa0] sm:$0xff] %v111
        %v113 = vld [vmem:[%s69 + $0xa8] sm:$0xff]
        %114 = vst [vmem:[%s70 + $0xa8] sm:$0xff] %v113
        %v115 = vld [vmem:[%s69 + $0xb0] sm:$0xff]
        %116 = vst [vmem:[%s70 + $0xb0] sm:$0xff] %v115
        %v117 = vld [vmem:[%s69 + $0xb8] sm:$0xff]
        %118 = vst [vmem:[%s70 + $0xb8] sm:$0xff] %v117
        %v119 = vld [vmem:[%s69 + $0xc0] sm:$0xff]
        %120 = vst [vmem:[%s70 + $0xc0] sm:$0xff] %v119
        %v121 = vld [vmem:[%s69 + $0xc8] sm:$0xff]
        %122 = vst [vmem:[%s70 + $0xc8] sm:$0xff] %v121
        %v123 = vld [vmem:[%s69 + $0xd0] sm:$0xff]
        %124 = vst [vmem:[%s70 + $0xd0] sm:$0xff] %v123
      $region37: #{densenet_forward.19} parent=31 // loop_footer
        %s68 = sadd.s32 1, %s64
      $region38: #{densenet_forward.19} parent=31 // loop_footer_branch
        %63 = sbr.rel target = $region34
      $region39: #{densenet_forward.19} parent=31 // loop_exit
        _
      %s125 = sshllo.u32 0, %s58
      loop: start=0, step=1, limit=1
      $region40: #{densenet_forward.19} parent=31 // loop_pre_header
        _
      $region41: #{densenet_forward.19} parent=31 // loop_header
        %s127 = sphi 0, %s131
        %p128 = scmp.ge.s32.totalorder %s127, 1
        %s132 = sphi %s60, %s60
        %s133 = sphi %s62, %s62
      $region42: #{densenet_forward.19} parent=31 // loop_header_branch
        %130 = sbr.rel (%p128) target = $region46
      $region43: #{densenet_forward.19} parent=31 // loop_body
        %v134 = vld [vmem:[%s132] sm:%s125]
        %135 = vst [vmem:[%s133] sm:%s125] %v134
      $region44: #{densenet_forward.19} parent=31 // loop_footer
        %s131 = sadd.s32 1, %s127
      $region45: #{densenet_forward.19} parent=31 // loop_footer_branch
        %126 = sbr.rel target = $region41
      $region46: #{densenet_forward.19} parent=31 // loop_exit
        _
    $region32: #{densenet_forward.19} parent=16 // pred_fallthru
      _
  $region17: #{densenet_forward.19} parent=0 // pred_fallthru
    _
  // Predicated region
  $region18: #{densenet_forward.19} parent=0 // pred_check
    %p39 = pneg %p35
  $region19: #{densenet_forward.19} parent=0 // pred_check_branch
    %41 = sbr.rel (%p39) target = $region21
  $region20: #{densenet_forward.19} parent=0 // pred_region
    %s42 = sshllo.u32 0, 222
    loop: start=0, step=1, limit=1
    $region22: #{densenet_forward.19} parent=20 // loop_pre_header
      _
    $region23: #{densenet_forward.19} parent=20 // loop_header
      %s44 = sphi 0, %s48
      %p45 = scmp.ge.s32.totalorder %s44, 1
      %s49 = sphi %s33, %s33
      %s50 = sphi [#allocation2], [#allocation2]
    $region24: #{densenet_forward.19} parent=20 // loop_header_branch
      %47 = sbr.rel (%p45) target = $region28
    $region25: #{densenet_forward.19} parent=20 // loop_body
      %v51 = vld [vmem:[%s49] sm:%s42]
      %52 = vst [vmem:[%s50] sm:%s42] %v51
    $region26: #{densenet_forward.19} parent=20 // loop_footer
      %s48 = sadd.s32 1, %s44
    $region27: #{densenet_forward.19} parent=20 // loop_footer_branch
      %43 = sbr.rel target = $region23
    $region28: #{densenet_forward.19} parent=20 // loop_exit
      _
  $region21: #{densenet_forward.19} parent=0 // pred_fallthru
    _
  // Predicated region
  $region47: #{densenet_forward.19} parent=0 // pred_check
    _
  $region48: #{densenet_forward.19} parent=0 // pred_check_branch
    %138 = sbr.rel (0) target = $region50
  $region49: #{densenet_forward.19} parent=0 // pred_region
    %139 = vsyncadd [#allocation4], 3552
  $region50: #{densenet_forward.19} parent=0 // pred_fallthru
    _
  %s140 = scalar_lea.vmem %s1, %s32
  %s141 = scalar_lea.sflag [#allocation4], 1
  %p143 = scmp.lt.u32.totalorder 222, 8
  %p144 = pneg %p143
  // Predicated region
  $region51: #{densenet_forward.19} parent=0 // pred_check
    _
  $region52: #{densenet_forward.19} parent=0 // pred_check_branch
    %146 = sbr.rel (%p143) target = $region54
  $region53: #{densenet_forward.19} parent=0 // pred_region
    %s161 = sand.u32 222, 7
    %p162 = scmp.eq.s32.totalorder %s161, 0
    %p163 = pneg %p162
    // Predicated region
    $region66: #{densenet_forward.19} parent=53 // pred_check
      _
    $region67: #{densenet_forward.19} parent=53 // pred_check_branch
      %165 = sbr.rel (%p162) target = $region69
    $region68: #{densenet_forward.19} parent=53 // pred_region
      %s166 = sand.u32 222, 7
      %s167 = ssub.s32 222, %s166
      %s168 = scalar_lea.vmem %s140, %s167
      %s169 = ssub.s32 222, %s166
      %s170 = scalar_lea.vmem [#allocation3], %s169
      loop: start=0, step=1, limit=1
      $region70: #{densenet_forward.19} parent=68 // loop_pre_header
        _
      $region71: #{densenet_forward.19} parent=68 // loop_header
        %s172 = sphi 0, %s176
        %p173 = scmp.ge.s32.totalorder %s172, 1
        %s177 = sphi %s140, %s140
        %s178 = sphi [#allocation3], [#allocation3]
      $region72: #{densenet_forward.19} parent=68 // loop_header_branch
        %175 = sbr.rel (%p173) target = $region76
      $region73: #{densenet_forward.19} parent=68 // loop_body
        %v179 = vld [vmem:[%s177] sm:$0xff]
        %180 = vst [vmem:[%s178] sm:$0xff] %v179
        %v181 = vld [vmem:[%s177 + $0x8] sm:$0xff]
        %182 = vst [vmem:[%s178 + $0x8] sm:$0xff] %v181
        %v183 = vld [vmem:[%s177 + $0x10] sm:$0xff]
        %184 = vst [vmem:[%s178 + $0x10] sm:$0xff] %v183
        %v185 = vld [vmem:[%s177 + $0x18] sm:$0xff]
        %186 = vst [vmem:[%s178 + $0x18] sm:$0xff] %v185
        %v187 = vld [vmem:[%s177 + $0x20] sm:$0xff]
        %188 = vst [vmem:[%s178 + $0x20] sm:$0xff] %v187
        %v189 = vld [vmem:[%s177 + $0x28] sm:$0xff]
        %190 = vst [vmem:[%s178 + $0x28] sm:$0xff] %v189
        %v191 = vld [vmem:[%s177 + $0x30] sm:$0xff]
        %192 = vst [vmem:[%s178 + $0x30] sm:$0xff] %v191
        %v193 = vld [vmem:[%s177 + $0x38] sm:$0xff]
        %194 = vst [vmem:[%s178 + $0x38] sm:$0xff] %v193
        %v195 = vld [vmem:[%s177 + $0x40] sm:$0xff]
        %196 = vst [vmem:[%s178 + $0x40] sm:$0xff] %v195
        %v197 = vld [vmem:[%s177 + $0x48] sm:$0xff]
        %198 = vst [vmem:[%s178 + $0x48] sm:$0xff] %v197
        %v199 = vld [vmem:[%s177 + $0x50] sm:$0xff]
        %200 = vst [vmem:[%s178 + $0x50] sm:$0xff] %v199
        %v201 = vld [vmem:[%s177 + $0x58] sm:$0xff]
        %202 = vst [vmem:[%s178 + $0x58] sm:$0xff] %v201
        %v203 = vld [vmem:[%s177 + $0x60] sm:$0xff]
        %204 = vst [vmem:[%s178 + $0x60] sm:$0xff] %v203
        %v205 = vld [vmem:[%s177 + $0x68] sm:$0xff]
        %206 = vst [vmem:[%s178 + $0x68] sm:$0xff] %v205
        %v207 = vld [vmem:[%s177 + $0x70] sm:$0xff]
        %208 = vst [vmem:[%s178 + $0x70] sm:$0xff] %v207
        %v209 = vld [vmem:[%s177 + $0x78] sm:$0xff]
        %210 = vst [vmem:[%s178 + $0x78] sm:$0xff] %v209
        %v211 = vld [vmem:[%s177 + $0x80] sm:$0xff]
        %212 = vst [vmem:[%s178 + $0x80] sm:$0xff] %v211
        %v213 = vld [vmem:[%s177 + $0x88] sm:$0xff]
        %214 = vst [vmem:[%s178 + $0x88] sm:$0xff] %v213
        %v215 = vld [vmem:[%s177 + $0x90] sm:$0xff]
        %216 = vst [vmem:[%s178 + $0x90] sm:$0xff] %v215
        %v217 = vld [vmem:[%s177 + $0x98] sm:$0xff]
        %218 = vst [vmem:[%s178 + $0x98] sm:$0xff] %v217
        %v219 = vld [vmem:[%s177 + $0xa0] sm:$0xff]
        %220 = vst [vmem:[%s178 + $0xa0] sm:$0xff] %v219
        %v221 = vld [vmem:[%s177 + $0xa8] sm:$0xff]
        %222 = vst [vmem:[%s178 + $0xa8] sm:$0xff] %v221
        %v223 = vld [vmem:[%s177 + $0xb0] sm:$0xff]
        %224 = vst [vmem:[%s178 + $0xb0] sm:$0xff] %v223
        %v225 = vld [vmem:[%s177 + $0xb8] sm:$0xff]
        %226 = vst [vmem:[%s178 + $0xb8] sm:$0xff] %v225
        %v227 = vld [vmem:[%s177 + $0xc0] sm:$0xff]
        %228 = vst [vmem:[%s178 + $0xc0] sm:$0xff] %v227
        %v229 = vld [vmem:[%s177 + $0xc8] sm:$0xff]
        %230 = vst [vmem:[%s178 + $0xc8] sm:$0xff] %v229
        %v231 = vld [vmem:[%s177 + $0xd0] sm:$0xff]
        %232 = vst [vmem:[%s178 + $0xd0] sm:$0xff] %v231
      $region74: #{densenet_forward.19} parent=68 // loop_footer
        %s176 = sadd.s32 1, %s172
      $region75: #{densenet_forward.19} parent=68 // loop_footer_branch
        %171 = sbr.rel target = $region71
      $region76: #{densenet_forward.19} parent=68 // loop_exit
        _
      %s233 = sshllo.u32 0, %s166
      loop: start=0, step=1, limit=1
      $region77: #{densenet_forward.19} parent=68 // loop_pre_header
        _
      $region78: #{densenet_forward.19} parent=68 // loop_header
        %s235 = sphi 0, %s239
        %p236 = scmp.ge.s32.totalorder %s235, 1
        %s240 = sphi %s168, %s168
        %s241 = sphi %s170, %s170
      $region79: #{densenet_forward.19} parent=68 // loop_header_branch
        %238 = sbr.rel (%p236) target = $region83
      $region80: #{densenet_forward.19} parent=68 // loop_body
        %v242 = vld [vmem:[%s240] sm:%s233]
        %243 = vst [vmem:[%s241] sm:%s233] %v242
      $region81: #{densenet_forward.19} parent=68 // loop_footer
        %s239 = sadd.s32 1, %s235
      $region82: #{densenet_forward.19} parent=68 // loop_footer_branch
        %234 = sbr.rel target = $region78
      $region83: #{densenet_forward.19} parent=68 // loop_exit
        _
    $region69: #{densenet_forward.19} parent=53 // pred_fallthru
      _
  $region54: #{densenet_forward.19} parent=0 // pred_fallthru
    _
  // Predicated region
  $region55: #{densenet_forward.19} parent=0 // pred_check
    %p147 = pneg %p143
  $region56: #{densenet_forward.19} parent=0 // pred_check_branch
    %149 = sbr.rel (%p147) target = $region58
  $region57: #{densenet_forward.19} parent=0 // pred_region
    %s150 = sshllo.u32 0, 222
    loop: start=0, step=1, limit=1
    $region59: #{densenet_forward.19} parent=57 // loop_pre_header
      _
    $region60: #{densenet_forward.19} parent=57 // loop_header
      %s152 = sphi 0, %s156
      %p153 = scmp.ge.s32.totalorder %s152, 1
      %s157 = sphi %s140, %s140
      %s158 = sphi [#allocation3], [#allocation3]
    $region61: #{densenet_forward.19} parent=57 // loop_header_branch
      %155 = sbr.rel (%p153) target = $region65
    $region62: #{densenet_forward.19} parent=57 // loop_body
      %v159 = vld [vmem:[%s157] sm:%s150]
      %160 = vst [vmem:[%s158] sm:%s150] %v159
    $region63: #{densenet_forward.19} parent=57 // loop_footer
      %s156 = sadd.s32 1, %s152
    $region64: #{densenet_forward.19} parent=57 // loop_footer_branch
      %151 = sbr.rel target = $region60
    $region65: #{densenet_forward.19} parent=57 // loop_exit
      _
  $region58: #{densenet_forward.19} parent=0 // pred_fallthru
    _
  // Predicated region
  $region84: #{densenet_forward.19} parent=0 // pred_check
    _
  $region85: #{densenet_forward.19} parent=0 // pred_check_branch
    %246 = sbr.rel (0) target = $region87
  $region86: #{densenet_forward.19} parent=0 // pred_region
    %247 = vsyncadd %s141, 3552
  $region87: #{densenet_forward.19} parent=0 // pred_fallthru
    _
  %s248 = smul.u32 222, 1
  %s249 = sshll.u32 %s248, 4
  %250 = dma.done [#allocation4], %s249
  %s251 = sshll.u32 %s248, 4
  %252 = dma.done %s141, %s251
  %v253 = vld [vmem:[#allocation3] sm:$0xff]
  %v254 = vld [vmem:[#allocation3 + $0x8] sm:$0xff]
  %v255 = vld [vmem:[#allocation3 + $0x10] sm:$0xff]
  %v256 = vld [vmem:[#allocation3 + $0x18] sm:$0xff]
  %v257 = vld [vmem:[#allocation3 + $0x20] sm:$0xff]
  %v258 = vld [vmem:[#allocation3 + $0x28] sm:$0xff]
  %v259 = vld [vmem:[#allocation3 + $0x30] sm:$0xff]
  %v260 = vld [vmem:[#allocation3 + $0x38] sm:$0xff]
  %v261 = vld [vmem:[#allocation3 + $0x40] sm:$0xff]
  %v262 = vld [vmem:[#allocation3 + $0x48] sm:$0xff]
  %v263 = vld [vmem:[#allocation3 + $0x50] sm:$0xff]
  %v264 = vld [vmem:[#allocation3 + $0x58] sm:$0xff]
  %v265 = vld [vmem:[#allocation3 + $0x60] sm:$0xff]
  %v266 = vld [vmem:[#allocation3 + $0x68] sm:$0xff]
  %v267 = vld [vmem:[#allocation3 + $0x70] sm:$0xff]
  %v268 = vld [vmem:[#allocation3 + $0x78] sm:$0xff]
  %v269 = vld [vmem:[#allocation3 + $0x80] sm:$0xff]
  %v270 = vld [vmem:[#allocation3 + $0x88] sm:$0xff]
  %v271 = vld [vmem:[#allocation3 + $0x90] sm:$0xff]
  %v272 = vld [vmem:[#allocation3 + $0x98] sm:$0xff]
  %v273 = vld [vmem:[#allocation3 + $0xa0] sm:$0xff]
  %v274 = vld [vmem:[#allocation3 + $0xa8] sm:$0xff]
  %v275 = vld [vmem:[#allocation3 + $0xb0] sm:$0xff]
  %v276 = vld [vmem:[#allocation3 + $0xb8] sm:$0xff]
  %v277 = vld [vmem:[#allocation3 + $0xc0] sm:$0xff]
  %v278 = vld [vmem:[#allocation3 + $0xc8] sm:$0xff]
  %v279 = vld [vmem:[#allocation3 + $0xd0] sm:$0xff]
  %v280 = vld [vmem:[#allocation3 + $0xd8] sm:$0x3f]
  %vm281 = vcmp.gt.f32.partialorder %v253, 0.0
  %vm282 = vcmp.gt.f32.partialorder %v254, 0.0
  %vm283 = vcmp.gt.f32.partialorder %v255, 0.0
  %vm284 = vcmp.gt.f32.partialorder %v256, 0.0
  %vm285 = vcmp.gt.f32.partialorder %v257, 0.0
  %vm286 = vcmp.gt.f32.partialorder %v258, 0.0
  %vm287 = vcmp.gt.f32.partialorder %v259, 0.0
  %vm288 = vcmp.gt.f32.partialorder %v260, 0.0
  %vm289 = vcmp.gt.f32.partialorder %v261, 0.0
  %vm290 = vcmp.gt.f32.partialorder %v262, 0.0
  %vm291 = vcmp.gt.f32.partialorder %v263, 0.0
  %vm292 = vcmp.gt.f32.partialorder %v264, 0.0
  %vm293 = vcmp.gt.f32.partialorder %v265, 0.0
  %vm294 = vcmp.gt.f32.partialorder %v266, 0.0
  %vm295 = vcmp.gt.f32.partialorder %v267, 0.0
  %vm296 = vcmp.gt.f32.partialorder %v268, 0.0
  %vm297 = vcmp.gt.f32.partialorder %v269, 0.0
  %vm298 = vcmp.gt.f32.partialorder %v270, 0.0
  %vm299 = vcmp.gt.f32.partialorder %v271, 0.0
  %vm300 = vcmp.gt.f32.partialorder %v272, 0.0
  %vm301 = vcmp.gt.f32.partialorder %v273, 0.0
  %vm302 = vcmp.gt.f32.partialorder %v274, 0.0
  %vm303 = vcmp.gt.f32.partialorder %v275, 0.0
  %vm304 = vcmp.gt.f32.partialorder %v276, 0.0
  %vm305 = vcmp.gt.f32.partialorder %v277, 0.0
  %vm306 = vcmp.gt.f32.partialorder %v278, 0.0
  %vm307 = vcmp.gt.f32.partialorder %v279, 0.0
  %vm308 = vcmp.gt.f32.partialorder %v280, 0.0
  %v309 = vld [vmem:[#allocation2] sm:$0xff]
  %v310 = vld [vmem:[#allocation2 + $0x8] sm:$0xff]
  %v311 = vld [vmem:[#allocation2 + $0x10] sm:$0xff]
  %v312 = vld [vmem:[#allocation2 + $0x18] sm:$0xff]
  %v313 = vld [vmem:[#allocation2 + $0x20] sm:$0xff]
  %v314 = vld [vmem:[#allocation2 + $0x28] sm:$0xff]
  %v315 = vld [vmem:[#allocation2 + $0x30] sm:$0xff]
  %v316 = vld [vmem:[#allocation2 + $0x38] sm:$0xff]
  %v317 = vld [vmem:[#allocation2 + $0x40] sm:$0xff]
  %v318 = vld [vmem:[#allocation2 + $0x48] sm:$0xff]
  %v319 = vld [vmem:[#allocation2 + $0x50] sm:$0xff]
  %v320 = vld [vmem:[#allocation2 + $0x58] sm:$0xff]
  %v321 = vld [vmem:[#allocation2 + $0x60] sm:$0xff]
  %v322 = vld [vmem:[#allocation2 + $0x68] sm:$0xff]
  %v323 = vld [vmem:[#allocation2 + $0x70] sm:$0xff]
  %v324 = vld [vmem:[#allocation2 + $0x78] sm:$0xff]
  %v325 = vld [vmem:[#allocation2 + $0x80] sm:$0xff]
  %v326 = vld [vmem:[#allocation2 + $0x88] sm:$0xff]
  %v327 = vld [vmem:[#allocation2 + $0x90] sm:$0xff]
  %v328 = vld [vmem:[#allocation2 + $0x98] sm:$0xff]
  %v329 = vld [vmem:[#allocation2 + $0xa0] sm:$0xff]
  %v330 = vld [vmem:[#allocation2 + $0xa8] sm:$0xff]
  %v331 = vld [vmem:[#allocation2 + $0xb0] sm:$0xff]
  %v332 = vld [vmem:[#allocation2 + $0xb8] sm:$0xff]
  %v333 = vld [vmem:[#allocation2 + $0xc0] sm:$0xff]
  %v334 = vld [vmem:[#allocation2 + $0xc8] sm:$0xff]
  %v335 = vld [vmem:[#allocation2 + $0xd0] sm:$0xff]
  %v336 = vld [vmem:[#allocation2 + $0xd8] sm:$0x3f]
  %v337 = vld [vmem:[%s2] sm:$0x1]
  %v339 = vlaneseq
  %v340 = vshrl.u32 %v339, 7
  %v341 = vsub.s32 0, %v340
  %v342 = vrot.slane %v337, %v341
  %v344 = vmul.f32 %v309, %v342
  %v345 = vmul.f32 %v310, %v342
  %v346 = vmul.f32 %v311, %v342
  %v347 = vmul.f32 %v312, %v342
  %v348 = vmul.f32 %v313, %v342
  %v349 = vmul.f32 %v314, %v342
  %v350 = vmul.f32 %v315, %v342
  %v351 = vmul.f32 %v316, %v342
  %v352 = vmul.f32 %v317, %v342
  %v353 = vmul.f32 %v318, %v342
  %v354 = vmul.f32 %v319, %v342
  %v355 = vmul.f32 %v320, %v342
  %v356 = vmul.f32 %v321, %v342
  %v357 = vmul.f32 %v322, %v342
  %v358 = vmul.f32 %v323, %v342
  %v359 = vmul.f32 %v324, %v342
  %v360 = vmul.f32 %v325, %v342
  %v361 = vmul.f32 %v326, %v342
  %v362 = vmul.f32 %v327, %v342
  %v363 = vmul.f32 %v328, %v342
  %v364 = vmul.f32 %v329, %v342
  %v365 = vmul.f32 %v330, %v342
  %v366 = vmul.f32 %v331, %v342
  %v367 = vmul.f32 %v332, %v342
  %v368 = vmul.f32 %v333, %v342
  %v369 = vmul.f32 %v334, %v342
  %v370 = vmul.f32 %v335, %v342
  %v371 = vmul.f32 %v336, %v342
  %v372 = vld [vmem:[%s3] sm:$0x1]
  %v374 = vlaneseq
  %v375 = vshrl.u32 %v374, 7
  %v376 = vsub.s32 0, %v375
  %v377 = vrot.slane %v372, %v376
  %v379 = vadd.f32 %v344, %v377
  %v380 = vadd.f32 %v345, %v377
  %v381 = vadd.f32 %v346, %v377
  %v382 = vadd.f32 %v347, %v377
  %v383 = vadd.f32 %v348, %v377
  %v384 = vadd.f32 %v349, %v377
  %v385 = vadd.f32 %v350, %v377
  %v386 = vadd.f32 %v351, %v377
  %v387 = vadd.f32 %v352, %v377
  %v388 = vadd.f32 %v353, %v377
  %v389 = vadd.f32 %v354, %v377
  %v390 = vadd.f32 %v355, %v377
  %v391 = vadd.f32 %v356, %v377
  %v392 = vadd.f32 %v357, %v377
  %v393 = vadd.f32 %v358, %v377
  %v394 = vadd.f32 %v359, %v377
  %v395 = vadd.f32 %v360, %v377
  %v396 = vadd.f32 %v361, %v377
  %v397 = vadd.f32 %v362, %v377
  %v398 = vadd.f32 %v363, %v377
  %v399 = vadd.f32 %v364, %v377
  %v400 = vadd.f32 %v365, %v377
  %v401 = vadd.f32 %v366, %v377
  %v402 = vadd.f32 %v367, %v377
  %v403 = vadd.f32 %v368, %v377
  %v404 = vadd.f32 %v369, %v377
  %v405 = vadd.f32 %v370, %v377
  %v406 = vadd.f32 %v371, %v377
  %v407 = vmax.f32 %v379, 0.0
  %v408 = vmax.f32 %v380, 0.0
  %v409 = vmax.f32 %v381, 0.0
  %v410 = vmax.f32 %v382, 0.0
  %v411 = vmax.f32 %v383, 0.0
  %v412 = vmax.f32 %v384, 0.0
  %v413 = vmax.f32 %v385, 0.0
  %v414 = vmax.f32 %v386, 0.0
  %v415 = vmax.f32 %v387, 0.0
  %v416 = vmax.f32 %v388, 0.0
  %v417 = vmax.f32 %v389, 0.0
  %v418 = vmax.f32 %v390, 0.0
  %v419 = vmax.f32 %v391, 0.0
  %v420 = vmax.f32 %v392, 0.0
  %v421 = vmax.f32 %v393, 0.0
  %v422 = vmax.f32 %v394, 0.0
  %v423 = vmax.f32 %v395, 0.0
  %v424 = vmax.f32 %v396, 0.0
  %v425 = vmax.f32 %v397, 0.0
  %v426 = vmax.f32 %v398, 0.0
  %v427 = vmax.f32 %v399, 0.0
  %v428 = vmax.f32 %v400, 0.0
  %v429 = vmax.f32 %v401, 0.0
  %v430 = vmax.f32 %v402, 0.0
  %v431 = vmax.f32 %v403, 0.0
  %v432 = vmax.f32 %v404, 0.0
  %v433 = vmax.f32 %v405, 0.0
  %v434 = vmax.f32 %v406, 0.0
  %v435 = vsel %vm281, 1, 0
  %v436 = vsel %vm282, 1, 0
  %v437 = vsel %vm283, 1, 0
  %v438 = vsel %vm284, 1, 0
  %v439 = vsel %vm285, 1, 0
  %v440 = vsel %vm286, 1, 0
  %v441 = vsel %vm287, 1, 0
  %v442 = vsel %vm288, 1, 0
  %v443 = vsel %vm289, 1, 0
  %v444 = vsel %vm290, 1, 0
  %v445 = vsel %vm291, 1, 0
  %v446 = vsel %vm292, 1, 0
  %v447 = vsel %vm293, 1, 0
  %v448 = vsel %vm294, 1, 0
  %v449 = vsel %vm295, 1, 0
  %v450 = vsel %vm296, 1, 0
  %v451 = vsel %vm297, 1, 0
  %v452 = vsel %vm298, 1, 0
  %v453 = vsel %vm299, 1, 0
  %v454 = vsel %vm300, 1, 0
  %v455 = vsel %vm301, 1, 0
  %v456 = vsel %vm302, 1, 0
  %v457 = vsel %vm303, 1, 0
  %v458 = vsel %vm304, 1, 0
  %v459 = vsel %vm305, 1, 0
  %v460 = vsel %vm306, 1, 0
  %v461 = vsel %vm307, 1, 0
  %v462 = vsel %vm308, 1, 0
  %463 = vset.pattern.permute.xlu0 0
  %464 = vperm.xlu0 %463, %v435
  %v465 = vpop.permute.xlu0 %464
  %466 = vset.pattern.permute.xlu0 0
  %467 = vperm.xlu0 %466, %v436
  %v468 = vpop.permute.xlu0 %467
  %469 = vset.pattern.permute.xlu0 0
  %470 = vperm.xlu0 %469, %v437
  %v471 = vpop.permute.xlu0 %470
  %472 = vset.pattern.permute.xlu0 0
  %473 = vperm.xlu0 %472, %v438
  %v474 = vpop.permute.xlu0 %473
  %475 = vset.pattern.permute.xlu0 0
  %476 = vperm.xlu0 %475, %v439
  %v477 = vpop.permute.xlu0 %476
  %478 = vset.pattern.permute.xlu0 0
  %479 = vperm.xlu0 %478, %v440
  %v480 = vpop.permute.xlu0 %479
  %481 = vset.pattern.permute.xlu0 0
  %482 = vperm.xlu0 %481, %v441
  %v483 = vpop.permute.xlu0 %482
  %484 = vset.pattern.permute.xlu0 0
  %485 = vperm.xlu0 %484, %v442
  %v486 = vpop.permute.xlu0 %485
  %487 = vset.pattern.permute.xlu0 0
  %488 = vperm.xlu0 %487, %v443
  %v489 = vpop.permute.xlu0 %488
  %490 = vset.pattern.permute.xlu0 0
  %491 = vperm.xlu0 %490, %v444
  %v492 = vpop.permute.xlu0 %491
  %493 = vset.pattern.permute.xlu0 0
  %494 = vperm.xlu0 %493, %v445
  %v495 = vpop.permute.xlu0 %494
  %496 = vset.pattern.permute.xlu0 0
  %497 = vperm.xlu0 %496, %v446
  %v498 = vpop.permute.xlu0 %497
  %499 = vset.pattern.permute.xlu0 0
  %500 = vperm.xlu0 %499, %v447
  %v501 = vpop.permute.xlu0 %500
  %502 = vset.pattern.permute.xlu0 0
  %503 = vperm.xlu0 %502, %v448
  %v504 = vpop.permute.xlu0 %503
  %505 = vset.pattern.permute.xlu0 0
  %506 = vperm.xlu0 %505, %v449
  %v507 = vpop.permute.xlu0 %506
  %508 = vset.pattern.permute.xlu0 0
  %509 = vperm.xlu0 %508, %v450
  %v510 = vpop.permute.xlu0 %509
  %511 = vset.pattern.permute.xlu0 0
  %512 = vperm.xlu0 %511, %v451
  %v513 = vpop.permute.xlu0 %512
  %514 = vset.pattern.permute.xlu0 0
  %515 = vperm.xlu0 %514, %v452
  %v516 = vpop.permute.xlu0 %515
  %517 = vset.pattern.permute.xlu0 0
  %518 = vperm.xlu0 %517, %v453
  %v519 = vpop.permute.xlu0 %518
  %520 = vset.pattern.permute.xlu0 0
  %521 = vperm.xlu0 %520, %v454
  %v522 = vpop.permute.xlu0 %521
  %523 = vset.pattern.permute.xlu0 0
  %524 = vperm.xlu0 %523, %v455
  %v525 = vpop.permute.xlu0 %524
  %526 = vset.pattern.permute.xlu0 0
  %527 = vperm.xlu0 %526, %v456
  %v528 = vpop.permute.xlu0 %527
  %529 = vset.pattern.permute.xlu0 0
  %530 = vperm.xlu0 %529, %v457
  %v531 = vpop.permute.xlu0 %530
  %532 = vset.pattern.permute.xlu0 0
  %533 = vperm.xlu0 %532, %v458
  %v534 = vpop.permute.xlu0 %533
  %535 = vset.pattern.permute.xlu0 0
  %536 = vperm.xlu0 %535, %v459
  %v537 = vpop.permute.xlu0 %536
  %538 = vset.pattern.permute.xlu0 0
  %539 = vperm.xlu0 %538, %v460
  %v540 = vpop.permute.xlu0 %539
  %541 = vset.pattern.permute.xlu0 0
  %542 = vperm.xlu0 %541, %v461
  %v543 = vpop.permute.xlu0 %542
  %544 = vset.pattern.permute.xlu0 0
  %545 = vperm.xlu0 %544, %v462
  %v546 = vpop.permute.xlu0 %545
  %vm547 = vcmp.eq.s32.totalorder %v465, 1
  %vm548 = vcmp.eq.s32.totalorder %v468, 1
  %vm549 = vcmp.eq.s32.totalorder %v471, 1
  %vm550 = vcmp.eq.s32.totalorder %v474, 1
  %vm551 = vcmp.eq.s32.totalorder %v477, 1
  %vm552 = vcmp.eq.s32.totalorder %v480, 1
  %vm553 = vcmp.eq.s32.totalorder %v483, 1
  %vm554 = vcmp.eq.s32.totalorder %v486, 1
  %vm555 = vcmp.eq.s32.totalorder %v489, 1
  %vm556 = vcmp.eq.s32.totalorder %v492, 1
  %vm557 = vcmp.eq.s32.totalorder %v495, 1
  %vm558 = vcmp.eq.s32.totalorder %v498, 1
  %vm559 = vcmp.eq.s32.totalorder %v501, 1
  %vm560 = vcmp.eq.s32.totalorder %v504, 1
  %vm561 = vcmp.eq.s32.totalorder %v507, 1
  %vm562 = vcmp.eq.s32.totalorder %v510, 1
  %vm563 = vcmp.eq.s32.totalorder %v513, 1
  %vm564 = vcmp.eq.s32.totalorder %v516, 1
  %vm565 = vcmp.eq.s32.totalorder %v519, 1
  %vm566 = vcmp.eq.s32.totalorder %v522, 1
  %vm567 = vcmp.eq.s32.totalorder %v525, 1
  %vm568 = vcmp.eq.s32.totalorder %v528, 1
  %vm569 = vcmp.eq.s32.totalorder %v531, 1
  %vm570 = vcmp.eq.s32.totalorder %v534, 1
  %vm571 = vcmp.eq.s32.totalorder %v537, 1
  %vm572 = vcmp.eq.s32.totalorder %v540, 1
  %vm573 = vcmp.eq.s32.totalorder %v543, 1
  %vm574 = vcmp.eq.s32.totalorder %v546, 1
  %v575 = vsel %vm547, %v407, 0.0
  %v576 = vsel %vm548, %v408, 0.0
  %v577 = vsel %vm549, %v409, 0.0
  %v578 = vsel %vm550, %v410, 0.0
  %v579 = vsel %vm551, %v411, 0.0
  %v580 = vsel %vm552, %v412, 0.0
  %v581 = vsel %vm553, %v413, 0.0
  %v582 = vsel %vm554, %v414, 0.0
  %v583 = vsel %vm555, %v415, 0.0
  %v584 = vsel %vm556, %v416, 0.0
  %v585 = vsel %vm557, %v417, 0.0
  %v586 = vsel %vm558, %v418, 0.0
  %v587 = vsel %vm559, %v419, 0.0
  %v588 = vsel %vm560, %v420, 0.0
  %v589 = vsel %vm561, %v421, 0.0
  %v590 = vsel %vm562, %v422, 0.0
  %v591 = vsel %vm563, %v423, 0.0
  %v592 = vsel %vm564, %v424, 0.0
  %v593 = vsel %vm565, %v425, 0.0
  %v594 = vsel %vm566, %v426, 0.0
  %v595 = vsel %vm567, %v427, 0.0
  %v596 = vsel %vm568, %v428, 0.0
  %v597 = vsel %vm569, %v429, 0.0
  %v598 = vsel %vm570, %v430, 0.0
  %v599 = vsel %vm571, %v431, 0.0
  %v600 = vsel %vm572, %v432, 0.0
  %v601 = vsel %vm573, %v433, 0.0
  %v602 = vsel %vm574, %v434, 0.0
  %603 = vst [vmem:[#allocation2] sm:$0xff] %v575
  %604 = vst [vmem:[#allocation2 + $0x8] sm:$0xff] %v576
  %605 = vst [vmem:[#allocation2 + $0x10] sm:$0xff] %v577
  %606 = vst [vmem:[#allocation2 + $0x18] sm:$0xff] %v578
  %607 = vst [vmem:[#allocation2 + $0x20] sm:$0xff] %v579
  %608 = vst [vmem:[#allocation2 + $0x28] sm:$0xff] %v580
  %609 = vst [vmem:[#allocation2 + $0x30] sm:$0xff] %v581
  %610 = vst [vmem:[#allocation2 + $0x38] sm:$0xff] %v582
  %611 = vst [vmem:[#allocation2 + $0x40] sm:$0xff] %v583
  %612 = vst [vmem:[#allocation2 + $0x48] sm:$0xff] %v584
  %613 = vst [vmem:[#allocation2 + $0x50] sm:$0xff] %v585
  %614 = vst [vmem:[#allocation2 + $0x58] sm:$0xff] %v586
  %615 = vst [vmem:[#allocation2 + $0x60] sm:$0xff] %v587
  %616 = vst [vmem:[#allocation2 + $0x68] sm:$0xff] %v588
  %617 = vst [vmem:[#allocation2 + $0x70] sm:$0xff] %v589
  %618 = vst [vmem:[#allocation2 + $0x78] sm:$0xff] %v590
  %619 = vst [vmem:[#allocation2 + $0x80] sm:$0xff] %v591
  %620 = vst [vmem:[#allocation2 + $0x88] sm:$0xff] %v592
  %621 = vst [vmem:[#allocation2 + $0x90] sm:$0xff] %v593
  %622 = vst [vmem:[#allocation2 + $0x98] sm:$0xff] %v594
  %623 = vst [vmem:[#allocation2 + $0xa0] sm:$0xff] %v595
  %624 = vst [vmem:[#allocation2 + $0xa8] sm:$0xff] %v596
  %625 = vst [vmem:[#allocation2 + $0xb0] sm:$0xff] %v597
  %626 = vst [vmem:[#allocation2 + $0xb8] sm:$0xff] %v598
  %627 = vst [vmem:[#allocation2 + $0xc0] sm:$0xff] %v599
  %628 = vst [vmem:[#allocation2 + $0xc8] sm:$0xff] %v600
  %629 = vst [vmem:[#allocation2 + $0xd0] sm:$0xff] %v601
  %630 = vst [vmem:[#allocation2 + $0xd8] sm:$0x3f] %v602
  %v631 = vld [vmem:[#allocation2] sm:$0xff]
  %v632 = vld [vmem:[#allocation2 + $0x8] sm:$0xff]
  %v633 = vld [vmem:[#allocation2 + $0x10] sm:$0xff]
  %v634 = vld [vmem:[#allocation2 + $0x18] sm:$0xff]
  %v635 = vld [vmem:[#allocation2 + $0x20] sm:$0xff]
  %v636 = vld [vmem:[#allocation2 + $0x28] sm:$0xff]
  %v637 = vld [vmem:[#allocation2 + $0x30] sm:$0xff]
  %v638 = vld [vmem:[#allocation2 + $0x38] sm:$0xff]
  %v639 = vld [vmem:[#allocation2 + $0x40] sm:$0xff]
  %v640 = vld [vmem:[#allocation2 + $0x48] sm:$0xff]
  %v641 = vld [vmem:[#allocation2 + $0x50] sm:$0xff]
  %v642 = vld [vmem:[#allocation2 + $0x58] sm:$0xff]
  %v643 = vld [vmem:[#allocation2 + $0x60] sm:$0xff]
  %v644 = vld [vmem:[#allocation2 + $0x68] sm:$0xff]
  %v645 = vld [vmem:[#allocation2 + $0x70] sm:$0xff]
  %v646 = vld [vmem:[#allocation2 + $0x78] sm:$0xff]
  %v647 = vld [vmem:[#allocation2 + $0x80] sm:$0xff]
  %v648 = vld [vmem:[#allocation2 + $0x88] sm:$0xff]
  %v649 = vld [vmem:[#allocation2 + $0x90] sm:$0xff]
  %v650 = vld [vmem:[#allocation2 + $0x98] sm:$0xff]
  %v651 = vld [vmem:[#allocation2 + $0xa0] sm:$0xff]
  %v652 = vld [vmem:[#allocation2 + $0xa8] sm:$0xff]
  %v653 = vld [vmem:[#allocation2 + $0xb0] sm:$0xff]
  %v654 = vld [vmem:[#allocation2 + $0xb8] sm:$0xff]
  %v655 = vld [vmem:[#allocation2 + $0xc0] sm:$0xff]
  %v656 = vld [vmem:[%s4] sm:$0xff]
  %v657 = vld [vmem:[%s4 + $0x8] sm:$0xff]
  %v658 = vld [vmem:[%s4 + $0x10] sm:$0xff]
  %v659 = vld [vmem:[%s4 + $0x18] sm:$0xff]
  %v660 = vld [vmem:[%s4 + $0x20] sm:$0xff]
  %v661 = vld [vmem:[%s4 + $0x28] sm:$0xff]
  %v662 = vld [vmem:[%s4 + $0x30] sm:$0xff]
  %v663 = vld [vmem:[%s4 + $0x38] sm:$0xff]
  %v664 = vld [vmem:[%s4 + $0x40] sm:$0xff]
  %v665 = vld [vmem:[%s4 + $0x48] sm:$0xff]
  %v666 = vld [vmem:[%s4 + $0x50] sm:$0xff]
  %v667 = vld [vmem:[%s4 + $0x58] sm:$0xff]
  %v668 = vld [vmem:[%s4 + $0x60] sm:$0xff]
  %v669 = vld [vmem:[%s4 + $0x68] sm:$0xff]
  %v670 = vld [vmem:[%s4 + $0x70] sm:$0xff]
  %v671 = vld [vmem:[%s4 + $0x78] sm:$0xff]
  %v672 = vld [vmem:[#allocation2 + $0x1] sm:$0xff]
  %v673 = vld [vmem:[#allocation2 + $0x9] sm:$0xff]
  %v674 = vld [vmem:[#allocation2 + $0x11] sm:$0xff]
  %v675 = vld [vmem:[#allocation2 + $0x19] sm:$0xff]
  %v676 = vld [vmem:[#allocation2 + $0x21] sm:$0xff]
  %v677 = vld [vmem:[#allocation2 + $0x29] sm:$0xff]
  %v678 = vld [vmem:[#allocation2 + $0x31] sm:$0xff]
  %v679 = vld [vmem:[#allocation2 + $0x39] sm:$0xff]
  %v680 = vld [vmem:[#allocation2 + $0x41] sm:$0xff]
  %v681 = vld [vmem:[#allocation2 + $0x49] sm:$0xff]
  %v682 = vld [vmem:[#allocation2 + $0x51] sm:$0xff]
  %v683 = vld [vmem:[#allocation2 + $0x59] sm:$0xff]
  %v684 = vld [vmem:[#allocation2 + $0x61] sm:$0xff]
  %v685 = vld [vmem:[#allocation2 + $0x69] sm:$0xff]
  %v686 = vld [vmem:[#allocation2 + $0x71] sm:$0xff]
  %v687 = vld [vmem:[#allocation2 + $0x79] sm:$0xff]
  %v688 = vld [vmem:[#allocation2 + $0x81] sm:$0xff]
  %v689 = vld [vmem:[#allocation2 + $0x89] sm:$0xff]
  %v690 = vld [vmem:[#allocation2 + $0x91] sm:$0xff]
  %v691 = vld [vmem:[#allocation2 + $0x99] sm:$0xff]
  %v692 = vld [vmem:[#allocation2 + $0xa1] sm:$0xff]
  %v693 = vld [vmem:[#allocation2 + $0xa9] sm:$0xff]
  %v694 = vld [vmem:[#allocation2 + $0xb1] sm:$0xff]
  %v695 = vld [vmem:[#allocation2 + $0xb9] sm:$0xff]
  %v696 = vld [vmem:[#allocation2 + $0xc1] sm:$0xff]
  %v697 = vld [vmem:[%s4 + $0x80] sm:$0xff]
  %v698 = vld [vmem:[%s4 + $0x88] sm:$0xff]
  %v699 = vld [vmem:[%s4 + $0x90] sm:$0xff]
  %v700 = vld [vmem:[%s4 + $0x98] sm:$0xff]
  %v701 = vld [vmem:[%s4 + $0xa0] sm:$0xff]
  %v702 = vld [vmem:[%s4 + $0xa8] sm:$0xff]
  %v703 = vld [vmem:[%s4 + $0xb0] sm:$0xff]
  %v704 = vld [vmem:[%s4 + $0xb8] sm:$0xff]
  %v705 = vld [vmem:[%s4 + $0xc0] sm:$0xff]
  %v706 = vld [vmem:[%s4 + $0xc8] sm:$0xff]
  %v707 = vld [vmem:[%s4 + $0xd0] sm:$0xff]
  %v708 = vld [vmem:[%s4 + $0xd8] sm:$0xff]
  %v709 = vld [vmem:[%s4 + $0xe0] sm:$0xff]
  %v710 = vld [vmem:[%s4 + $0xe8] sm:$0xff]
  %v711 = vld [vmem:[%s4 + $0xf0] sm:$0xff]
  %v712 = vld [vmem:[%s4 + $0xf8] sm:$0xff]
  %713 = vmatprep.subr.mxu0 0.0
  %714 = vmatpush1.msra.mxu0 %v697
  %715 = vmatprep.subr.mxu0 0.0
  %716 = vmatpush1.msra.mxu0 %v698
  %717 = vmatprep.subr.mxu0 0.0
  %718 = vmatpush1.msra.mxu0 %v699
  %719 = vmatprep.subr.mxu0 0.0
  %720 = vmatpush1.msra.mxu0 %v700
  %721 = vmatprep.subr.mxu0 0.0
  %722 = vmatpush1.msra.mxu0 %v701
  %723 = vmatprep.subr.mxu0 0.0
  %724 = vmatpush1.msra.mxu0 %v702
  %725 = vmatprep.subr.mxu0 0.0
  %726 = vmatpush1.msra.mxu0 %v703
  %727 = vmatprep.subr.mxu0 0.0
  %728 = vmatpush1.msra.mxu0 %v704
  %729 = vmatprep.subr.mxu0 0.0
  %730 = vmatpush1.msra.mxu0 %v705
  %731 = vmatprep.subr.mxu0 0.0
  %732 = vmatpush1.msra.mxu0 %v706
  %733 = vmatprep.subr.mxu0 0.0
  %734 = vmatpush1.msra.mxu0 %v707
  %735 = vmatprep.subr.mxu0 0.0
  %736 = vmatpush1.msra.mxu0 %v708
  %737 = vmatprep.subr.mxu0 0.0
  %738 = vmatpush1.msra.mxu0 %v709
  %739 = vmatprep.subr.mxu0 0.0
  %740 = vmatpush1.msra.mxu0 %v710
  %741 = vmatprep.subr.mxu0 0.0
  %742 = vmatpush1.msra.mxu0 %v711
  %743 = vmatprep.subr.mxu0 0.0
  %744 = vmatpush1.msra.mxu0 %v712
  %745 = vmatprep.subr.mxu0 0.0
  %746 = vmatpush1.msra.mxu0 0.0
  %747 = vmatprep.subr.mxu0 0.0
  %748 = vmatpush1.msra.mxu0 0.0
  %749 = vmatprep.subr.mxu0 0.0
  %750 = vmatpush1.msra.mxu0 0.0
  %751 = vmatprep.subr.mxu0 0.0
  %752 = vmatpush1.msra.mxu0 0.0
  %753 = vmatprep.subr.mxu0 0.0
  %754 = vmatpush1.msra.mxu0 0.0
  %755 = vmatprep.subr.mxu0 0.0
  %756 = vmatpush1.msra.mxu0 0.0
  %757 = vmatprep.subr.mxu0 0.0
  %758 = vmatpush1.msra.mxu0 0.0
  %759 = vmatprep.subr.mxu0 0.0
  %760 = vmatpush1.msra.mxu0 0.0
  %761 = vmatprep.subr.mxu0 0.0
  %762 = vmatpush1.msra.mxu0 0.0
  %763 = vmatprep.subr.mxu0 0.0
  %764 = vmatpush1.msra.mxu0 0.0
  %765 = vmatprep.subr.mxu0 0.0
  %766 = vmatpush1.msra.mxu0 0.0
  %767 = vmatprep.subr.mxu0 0.0
  %768 = vmatpush1.msra.mxu0 0.0
  %769 = vmatprep.subr.mxu0 0.0
  %770 = vmatpush1.msra.mxu0 0.0
  %771 = vmatprep.subr.mxu0 0.0
  %772 = vmatpush1.msra.mxu0 0.0
  %773 = vmatprep.subr.mxu0 0.0
  %774 = vmatpush1.msra.mxu0 0.0
  %775 = vmatprep.subr.mxu0 0.0
  %776 = vmatpush1.msra.mxu0 0.0
  %777 = vmatprep.mubr.f32.mxu0 0.0
  %778 = vmatmul.mubr.f32.gmra.mrb[0].mxu0 %v672
  %v779 = vpop.f32.mrb[0].mxu0
  %v780 = vadd.f32 0.0, %v779
  %v781 = vpop.f32.mrb[0].mxu0
  %782 = vmatprep.mubr.f32.mxu0 0.0
  %783 = vmatmul.mubr.f32.gmra.mrb[0].mxu0 %v673
  %v784 = vpop.f32.mrb[0].mxu0
  %v785 = vadd.f32 0.0, %v784
  %v786 = vpop.f32.mrb[0].mxu0
  %787 = vmatprep.mubr.f32.mxu0 0.0
  %788 = vmatmul.mubr.f32.gmra.mrb[0].mxu0 %v674
  %v789 = vpop.f32.mrb[0].mxu0
  %v790 = vadd.f32 0.0, %v789
  %v791 = vpop.f32.mrb[0].mxu0
  %792 = vmatprep.mubr.f32.mxu0 0.0
  %793 = vmatmul.mubr.f32.gmra.mrb[0].mxu0 %v675
  %v794 = vpop.f32.mrb[0].mxu0
  %v795 = vadd.f32 0.0, %v794
  %v796 = vpop.f32.mrb[0].mxu0
  %797 = vmatprep.mubr.f32.mxu0 0.0
  %798 = vmatmul.mubr.f32.gmra.mrb[0].mxu0 %v676
  %v799 = vpop.f32.mrb[0].mxu0
  %v800 = vadd.f32 0.0, %v799
  %v801 = vpop.f32.mrb[0].mxu0
  %802 = vmatprep.mubr.f32.mxu0 0.0
  %803 = vmatmul.mubr.f32.gmra.mrb[0].mxu0 %v677
  %v804 = vpop.f32.mrb[0].mxu0
  %v805 = vadd.f32 0.0, %v804
  %v806 = vpop.f32.mrb[0].mxu0
  %807 = vmatprep.mubr.f32.mxu0 0.0
  %808 = vmatmul.mubr.f32.gmra.mrb[0].mxu0 %v678
  %v809 = vpop.f32.mrb[0].mxu0
  %v810 = vadd.f32 0.0, %v809
  %v811 = vpop.f32.mrb[0].mxu0
  %812 = vmatprep.mubr.f32.mxu0 0.0
  %813 = vmatmul.mubr.f32.gmra.mrb[0].mxu0 %v679
  %v814 = vpop.f32.mrb[0].mxu0
  %v815 = vadd.f32 0.0, %v814
  %v816 = vpop.f32.mrb[0].mxu0
  %817 = vmatprep.mubr.f32.mxu0 0.0
  %818 = vmatmul.mubr.f32.gmra.mrb[0].mxu0 %v680
  %v819 = vpop.f32.mrb[0].mxu0
  %v820 = vadd.f32 0.0, %v819
  %v821 = vpop.f32.mrb[0].mxu0
  %822 = vmatprep.mubr.f32.mxu0 0.0
  %823 = vmatmul.mubr.f32.gmra.mrb[0].mxu0 %v681
  %v824 = vpop.f32.mrb[0].mxu0
  %v825 = vadd.f32 0.0, %v824
  %v826 = vpop.f32.mrb[0].mxu0
  %827 = vmatprep.mubr.f32.mxu0 0.0
  %828 = vmatmul.mubr.f32.gmra.mrb[0].mxu0 %v682
  %v829 = vpop.f32.mrb[0].mxu0
  %v830 = vadd.f32 0.0, %v829
  %v831 = vpop.f32.mrb[0].mxu0
  %832 = vmatprep.mubr.f32.mxu0 0.0
  %833 = vmatmul.mubr.f32.gmra.mrb[0].mxu0 %v683
  %v834 = vpop.f32.mrb[0].mxu0
  %v835 = vadd.f32 0.0, %v834
  %v836 = vpop.f32.mrb[0].mxu0
  %837 = vmatprep.mubr.f32.mxu0 0.0
  %838 = vmatmul.mubr.f32.gmra.mrb[0].mxu0 %v684
  %v839 = vpop.f32.mrb[0].mxu0
  %v840 = vadd.f32 0.0, %v839
  %v841 = vpop.f32.mrb[0].mxu0
  %842 = vmatprep.mubr.f32.mxu0 0.0
  %843 = vmatmul.mubr.f32.gmra.mrb[0].mxu0 %v685
  %v844 = vpop.f32.mrb[0].mxu0
  %v845 = vadd.f32 0.0, %v844
  %v846 = vpop.f32.mrb[0].mxu0
  %847 = vmatprep.mubr.f32.mxu0 0.0
  %848 = vmatmul.mubr.f32.gmra.mrb[0].mxu0 %v686
  %v849 = vpop.f32.mrb[0].mxu0
  %v850 = vadd.f32 0.0, %v849
  %v851 = vpop.f32.mrb[0].mxu0
  %852 = vmatprep.mubr.f32.mxu0 0.0
  %853 = vmatmul.mubr.f32.gmra.mrb[0].mxu0 %v687
  %v854 = vpop.f32.mrb[0].mxu0
  %v855 = vadd.f32 0.0, %v854
  %v856 = vpop.f32.mrb[0].mxu0
  %857 = vmatprep.mubr.f32.mxu0 0.0
  %858 = vmatmul.mubr.f32.gmra.mrb[0].mxu0 %v688
  %v859 = vpop.f32.mrb[0].mxu0
  %v860 = vadd.f32 0.0, %v859
  %v861 = vpop.f32.mrb[0].mxu0
  %862 = vmatprep.mubr.f32.mxu0 0.0
  %863 = vmatmul.mubr.f32.gmra.mrb[0].mxu0 %v689
  %v864 = vpop.f32.mrb[0].mxu0
  %v865 = vadd.f32 0.0, %v864
  %v866 = vpop.f32.mrb[0].mxu0
  %867 = vmatprep.mubr.f32.mxu0 0.0
  %868 = vmatmul.mubr.f32.gmra.mrb[0].mxu0 %v690
  %v869 = vpop.f32.mrb[0].mxu0
  %v870 = vadd.f32 0.0, %v869
  %v871 = vpop.f32.mrb[0].mxu0
  %872 = vmatprep.mubr.f32.mxu0 0.0
  %873 = vmatmul.mubr.f32.gmra.mrb[0].mxu0 %v691
  %v874 = vpop.f32.mrb[0].mxu0
  %v875 = vadd.f32 0.0, %v874
  %v876 = vpop.f32.mrb[0].mxu0
  %877 = vmatprep.mubr.f32.mxu0 0.0
  %878 = vmatmul.mubr.f32.gmra.mrb[0].mxu0 %v692
  %v879 = vpop.f32.mrb[0].mxu0
  %v880 = vadd.f32 0.0, %v879
  %v881 = vpop.f32.mrb[0].mxu0
  %882 = vmatprep.mubr.f32.mxu0 0.0
  %883 = vmatmul.mubr.f32.gmra.mrb[0].mxu0 %v693
  %v884 = vpop.f32.mrb[0].mxu0
  %v885 = vadd.f32 0.0, %v884
  %v886 = vpop.f32.mrb[0].mxu0
  %887 = vmatprep.mubr.f32.mxu0 0.0
  %888 = vmatmul.mubr.f32.gmra.mrb[0].mxu0 %v694
  %v889 = vpop.f32.mrb[0].mxu0
  %v890 = vadd.f32 0.0, %v889
  %v891 = vpop.f32.mrb[0].mxu0
  %892 = vmatprep.mubr.f32.mxu0 0.0
  %893 = vmatmul.mubr.f32.gmra.mrb[0].mxu0 %v695
  %v894 = vpop.f32.mrb[0].mxu0
  %v895 = vadd.f32 0.0, %v894
  %v896 = vpop.f32.mrb[0].mxu0
  %897 = vmatprep.mubr.f32.mxu0 0.0
  %898 = vmatmul.mubr.f32.gmra.mrb[0].mxu0 %v696
  %v899 = vpop.f32.mrb[0].mxu0
  %v900 = vadd.f32 0.0, %v899
  %v901 = vpop.f32.mrb[0].mxu0
  %902 = vdwg.mxu0
  %903 = vmatprep.subr.mxu0 0.0
  %904 = vmatpush1.msra.mxu0 %v656
  %905 = vmatprep.subr.mxu0 0.0
  %906 = vmatpush1.msra.mxu0 %v657
  %907 = vmatprep.subr.mxu0 0.0
  %908 = vmatpush1.msra.mxu0 %v658
  %909 = vmatprep.subr.mxu0 0.0
  %910 = vmatpush1.msra.mxu0 %v659
  %911 = vmatprep.subr.mxu0 0.0
  %912 = vmatpush1.msra.mxu0 %v660
  %913 = vmatprep.subr.mxu0 0.0
  %914 = vmatpush1.msra.mxu0 %v661
  %915 = vmatprep.subr.mxu0 0.0
  %916 = vmatpush1.msra.mxu0 %v662
  %917 = vmatprep.subr.mxu0 0.0
  %918 = vmatpush1.msra.mxu0 %v663
  %919 = vmatprep.subr.mxu0 0.0
  %920 = vmatpush1.msra.mxu0 %v664
  %921 = vmatprep.subr.mxu0 0.0
  %922 = vmatpush1.msra.mxu0 %v665
  %923 = vmatprep.subr.mxu0 0.0
  %924 = vmatpush1.msra.mxu0 %v666
  %925 = vmatprep.subr.mxu0 0.0
  %926 = vmatpush1.msra.mxu0 %v667
  %927 = vmatprep.subr.mxu0 0.0
  %928 = vmatpush1.msra.mxu0 %v668
  %929 = vmatprep.subr.mxu0 0.0
  %930 = vmatpush1.msra.mxu0 %v669
  %931 = vmatprep.subr.mxu0 0.0
  %932 = vmatpush1.msra.mxu0 %v670
  %933 = vmatprep.subr.mxu0 0.0
  %934 = vmatpush1.msra.mxu0 %v671
  %935 = vmatprep.subr.mxu0 0.0
  %936 = vmatpush1.msra.mxu0 0.0
  %937 = vmatprep.subr.mxu0 0.0
  %938 = vmatpush1.msra.mxu0 0.0
  %939 = vmatprep.subr.mxu0 0.0
  %940 = vmatpush1.msra.mxu0 0.0
  %941 = vmatprep.subr.mxu0 0.0
  %942 = vmatpush1.msra.mxu0 0.0
  %943 = vmatprep.subr.mxu0 0.0
  %944 = vmatpush1.msra.mxu0 0.0
  %945 = vmatprep.subr.mxu0 0.0
  %946 = vmatpush1.msra.mxu0 0.0
  %947 = vmatprep.subr.mxu0 0.0
  %948 = vmatpush1.msra.mxu0 0.0
  %949 = vmatprep.subr.mxu0 0.0
  %950 = vmatpush1.msra.mxu0 0.0
  %951 = vmatprep.subr.mxu0 0.0
  %952 = vmatpush1.msra.mxu0 0.0
  %953 = vmatprep.subr.mxu0 0.0
  %954 = vmatpush1.msra.mxu0 0.0
  %955 = vmatprep.subr.mxu0 0.0
  %956 = vmatpush1.msra.mxu0 0.0
  %957 = vmatprep.subr.mxu0 0.0
  %958 = vmatpush1.msra.mxu0 0.0
  %959 = vmatprep.subr.mxu0 0.0
  %960 = vmatpush1.msra.mxu0 0.0
  %961 = vmatprep.subr.mxu0 0.0
  %962 = vmatpush1.msra.mxu0 0.0
  %963 = vmatprep.subr.mxu0 0.0
  %964 = vmatpush1.msra.mxu0 0.0
  %965 = vmatprep.subr.mxu0 0.0
  %966 = vmatpush1.msra.mxu0 0.0
  %967 = vmatprep.mubr.f32.mxu0 0.0
  %968 = vmatmul.mubr.f32.gmra.mrb[0].mxu0 %v631
  %v969 = vpop.f32.mrb[0].mxu0
  %v970 = vadd.f32 %v780, %v969
  %v971 = vpop.f32.mrb[0].mxu0
  %972 = vmatprep.mubr.f32.mxu0 0.0
  %973 = vmatmul.mubr.f32.gmra.mrb[0].mxu0 %v632
  %v974 = vpop.f32.mrb[0].mxu0
  %v975 = vadd.f32 %v785, %v974
  %v976 = vpop.f32.mrb[0].mxu0
  %977 = vmatprep.mubr.f32.mxu0 0.0
  %978 = vmatmul.mubr.f32.gmra.mrb[0].mxu0 %v633
  %v979 = vpop.f32.mrb[0].mxu0
  %v980 = vadd.f32 %v790, %v979
  %v981 = vpop.f32.mrb[0].mxu0
  %982 = vmatprep.mubr.f32.mxu0 0.0
  %983 = vmatmul.mubr.f32.gmra.mrb[0].mxu0 %v634
  %v984 = vpop.f32.mrb[0].mxu0
  %v985 = vadd.f32 %v795, %v984
  %v986 = vpop.f32.mrb[0].mxu0
  %987 = vmatprep.mubr.f32.mxu0 0.0
  %988 = vmatmul.mubr.f32.gmra.mrb[0].mxu0 %v635
  %v989 = vpop.f32.mrb[0].mxu0
  %v990 = vadd.f32 %v800, %v989
  %v991 = vpop.f32.mrb[0].mxu0
  %992 = vmatprep.mubr.f32.mxu0 0.0
  %993 = vmatmul.mubr.f32.gmra.mrb[0].mxu0 %v636
  %v994 = vpop.f32.mrb[0].mxu0
  %v995 = vadd.f32 %v805, %v994
  %v996 = vpop.f32.mrb[0].mxu0
  %997 = vmatprep.mubr.f32.mxu0 0.0
  %998 = vmatmul.mubr.f32.gmra.mrb[0].mxu0 %v637
  %v999 = vpop.f32.mrb[0].mxu0
  %v1000 = vadd.f32 %v810, %v999
  %v1001 = vpop.f32.mrb[0].mxu0
  %1002 = vmatprep.mubr.f32.mxu0 0.0
  %1003 = vmatmul.mubr.f32.gmra.mrb[0].mxu0 %v638
  %v1004 = vpop.f32.mrb[0].mxu0
  %v1005 = vadd.f32 %v815, %v1004
  %v1006 = vpop.f32.mrb[0].mxu0
  %1007 = vmatprep.mubr.f32.mxu0 0.0
  %1008 = vmatmul.mubr.f32.gmra.mrb[0].mxu0 %v639
  %v1009 = vpop.f32.mrb[0].mxu0
  %v1010 = vadd.f32 %v820, %v1009
  %v1011 = vpop.f32.mrb[0].mxu0
  %1012 = vmatprep.mubr.f32.mxu0 0.0
  %1013 = vmatmul.mubr.f32.gmra.mrb[0].mxu0 %v640
  %v1014 = vpop.f32.mrb[0].mxu0
  %v1015 = vadd.f32 %v825, %v1014
  %v1016 = vpop.f32.mrb[0].mxu0
  %1017 = vmatprep.mubr.f32.mxu0 0.0
  %1018 = vmatmul.mubr.f32.gmra.mrb[0].mxu0 %v641
  %v1019 = vpop.f32.mrb[0].mxu0
  %v1020 = vadd.f32 %v830, %v1019
  %v1021 = vpop.f32.mrb[0].mxu0
  %1022 = vmatprep.mubr.f32.mxu0 0.0
  %1023 = vmatmul.mubr.f32.gmra.mrb[0].mxu0 %v642
  %v1024 = vpop.f32.mrb[0].mxu0
  %v1025 = vadd.f32 %v835, %v1024
  %v1026 = vpop.f32.mrb[0].mxu0
  %1027 = vmatprep.mubr.f32.mxu0 0.0
  %1028 = vmatmul.mubr.f32.gmra.mrb[0].mxu0 %v643
  %v1029 = vpop.f32.mrb[0].mxu0
  %v1030 = vadd.f32 %v840, %v1029
  %v1031 = vpop.f32.mrb[0].mxu0
  %1032 = vmatprep.mubr.f32.mxu0 0.0
  %1033 = vmatmul.mubr.f32.gmra.mrb[0].mxu0 %v644
  %v1034 = vpop.f32.mrb[0].mxu0
  %v1035 = vadd.f32 %v845, %v1034
  %v1036 = vpop.f32.mrb[0].mxu0
  %1037 = vmatprep.mubr.f32.mxu0 0.0
  %1038 = vmatmul.mubr.f32.gmra.mrb[0].mxu0 %v645
  %v1039 = vpop.f32.mrb[0].mxu0
  %v1040 = vadd.f32 %v850, %v1039
  %v1041 = vpop.f32.mrb[0].mxu0
  %1042 = vmatprep.mubr.f32.mxu0 0.0
  %1043 = vmatmul.mubr.f32.gmra.mrb[0].mxu0 %v646
  %v1044 = vpop.f32.mrb[0].mxu0
  %v1045 = vadd.f32 %v855, %v1044
  %v1046 = vpop.f32.mrb[0].mxu0
  %1047 = vmatprep.mubr.f32.mxu0 0.0
  %1048 = vmatmul.mubr.f32.gmra.mrb[0].mxu0 %v647
  %v1049 = vpop.f32.mrb[0].mxu0
  %v1050 = vadd.f32 %v860, %v1049
  %v1051 = vpop.f32.mrb[0].mxu0
  %1052 = vmatprep.mubr.f32.mxu0 0.0
  %1053 = vmatmul.mubr.f32.gmra.mrb[0].mxu0 %v648
  %v1054 = vpop.f32.mrb[0].mxu0
  %v1055 = vadd.f32 %v865, %v1054
  %v1056 = vpop.f32.mrb[0].mxu0
  %1057 = vmatprep.mubr.f32.mxu0 0.0
  %1058 = vmatmul.mubr.f32.gmra.mrb[0].mxu0 %v649
  %v1059 = vpop.f32.mrb[0].mxu0
  %v1060 = vadd.f32 %v870, %v1059
  %v1061 = vpop.f32.mrb[0].mxu0
  %1062 = vmatprep.mubr.f32.mxu0 0.0
  %1063 = vmatmul.mubr.f32.gmra.mrb[0].mxu0 %v650
  %v1064 = vpop.f32.mrb[0].mxu0
  %v1065 = vadd.f32 %v875, %v1064
  %v1066 = vpop.f32.mrb[0].mxu0
  %1067 = vmatprep.mubr.f32.mxu0 0.0
  %1068 = vmatmul.mubr.f32.gmra.mrb[0].mxu0 %v651
  %v1069 = vpop.f32.mrb[0].mxu0
  %v1070 = vadd.f32 %v880, %v1069
  %v1071 = vpop.f32.mrb[0].mxu0
  %1072 = vmatprep.mubr.f32.mxu0 0.0
  %1073 = vmatmul.mubr.f32.gmra.mrb[0].mxu0 %v652
  %v1074 = vpop.f32.mrb[0].mxu0
  %v1075 = vadd.f32 %v885, %v1074
  %v1076 = vpop.f32.mrb[0].mxu0
  %1077 = vmatprep.mubr.f32.mxu0 0.0
  %1078 = vmatmul.mubr.f32.gmra.mrb[0].mxu0 %v653
  %v1079 = vpop.f32.mrb[0].mxu0
  %v1080 = vadd.f32 %v890, %v1079
  %v1081 = vpop.f32.mrb[0].mxu0
  %1082 = vmatprep.mubr.f32.mxu0 0.0
  %1083 = vmatmul.mubr.f32.gmra.mrb[0].mxu0 %v654
  %v1084 = vpop.f32.mrb[0].mxu0
  %v1085 = vadd.f32 %v895, %v1084
  %v1086 = vpop.f32.mrb[0].mxu0
  %1087 = vmatprep.mubr.f32.mxu0 0.0
  %1088 = vmatmul.mubr.f32.gmra.mrb[0].mxu0 %v655
  %v1089 = vpop.f32.mrb[0].mxu0
  %v1090 = vadd.f32 %v900, %v1089
  %v1091 = vpop.f32.mrb[0].mxu0
  %1092 = vdwg.mxu0
  %v1093 = vld [vmem:[#allocation2 + $0x2] sm:$0xff]
  %v1094 = vld [vmem:[#allocation2 + $0xa] sm:$0xff]
  %v1095 = vld [vmem:[#allocation2 + $0x12] sm:$0xff]
  %v1096 = vld [vmem:[#allocation2 + $0x1a] sm:$0xff]
  %v1097 = vld [vmem:[#allocation2 + $0x22] sm:$0xff]
  %v1098 = vld [vmem:[#allocation2 + $0x2a] sm:$0xff]
  %v1099 = vld [vmem:[#allocation2 + $0x32] sm:$0xff]
  %v1100 = vld [vmem:[#allocation2 + $0x3a] sm:$0xff]
  %v1101 = vld [vmem:[#allocation2 + $0x42] sm:$0xff]
  %v1102 = vld [vmem:[#allocation2 + $0x4a] sm:$0xff]
  %v1103 = vld [vmem:[#allocation2 + $0x52] sm:$0xff]
  %v1104 = vld [vmem:[#allocation2 + $0x5a] sm:$0xff]
  %v1105 = vld [vmem:[#allocation2 + $0x62] sm:$0xff]
  %v1106 = vld [vmem:[#allocation2 + $0x6a] sm:$0xff]
  %v1107 = vld [vmem:[#allocation2 + $0x72] sm:$0xff]
  %v1108 = vld [vmem:[#allocation2 + $0x7a] sm:$0xff]
  %v1109 = vld [vmem:[#allocation2 + $0x82] sm:$0xff]
  %v1110 = vld [vmem:[#allocation2 + $0x8a] sm:$0xff]
  %v1111 = vld [vmem:[#allocation2 + $0x92] sm:$0xff]
  %v1112 = vld [vmem:[#allocation2 + $0x9a] sm:$0xff]
  %v1113 = vld [vmem:[#allocation2 + $0xa2] sm:$0xff]
  %v1114 = vld [vmem:[#allocation2 + $0xaa] sm:$0xff]
  %v1115 = vld [vmem:[#allocation2 + $0xb2] sm:$0xff]
  %v1116 = vld [vmem:[#allocation2 + $0xba] sm:$0xff]
  %v1117 = vld [vmem:[#allocation2 + $0xc2] sm:$0xff]
  %v1118 = vld [vmem:[%s4 + $0x100] sm:$0xff]
  %v1119 = vld [vmem:[%s4 + $0x108] sm:$0xff]
  %v1120 = vld [vmem:[%s4 + $0x110] sm:$0xff]
  %v1121 = vld [vmem:[%s4 + $0x118] sm:$0xff]
  %v1122 = vld [vmem:[%s4 + $0x120] sm:$0xff]
  %v1123 = vld [vmem:[%s4 + $0x128] sm:$0xff]
  %v1124 = vld [vmem:[%s4 + $0x130] sm:$0xff]
  %v1125 = vld [vmem:[%s4 + $0x138] sm:$0xff]
  %v1126 = vld [vmem:[%s4 + $0x140] sm:$0xff]
  %v1127 = vld [vmem:[%s4 + $0x148] sm:$0xff]
  %v1128 = vld [vmem:[%s4 + $0x150] sm:$0xff]
  %v1129 = vld [vmem:[%s4 + $0x158] sm:$0xff]
  %v1130 = vld [vmem:[%s4 + $0x160] sm:$0xff]
  %v1131 = vld [vmem:[%s4 + $0x168] sm:$0xff]
  %v1132 = vld [vmem:[%s4 + $0x170] sm:$0xff]
  %v1133 = vld [vmem:[%s4 + $0x178] sm:$0xff]
  %1134 = vmatprep.subr.mxu0 0.0
  %1135 = vmatpush1.msra.mxu0 %v1118
  %1136 = vmatprep.subr.mxu0 0.0
  %1137 = vmatpush1.msra.mxu0 %v1119
  %1138 = vmatprep.subr.mxu0 0.0
  %1139 = vmatpush1.msra.mxu0 %v1120
  %1140 = vmatprep.subr.mxu0 0.0
  %1141 = vmatpush1.msra.mxu0 %v1121
  %1142 = vmatprep.subr.mxu0 0.0
  %1143 = vmatpush1.msra.mxu0 %v1122
  %1144 = vmatprep.subr.mxu0 0.0
  %1145 = vmatpush1.msra.mxu0 %v1123
  %1146 = vmatprep.subr.mxu0 0.0
  %1147 = vmatpush1.msra.mxu0 %v1124
  %1148 = vmatprep.subr.mxu0 0.0
  %1149 = vmatpush1.msra.mxu0 %v1125
  %1150 = vmatprep.subr.mxu0 0.0
  %1151 = vmatpush1.msra.mxu0 %v1126
  %1152 = vmatprep.subr.mxu0 0.0
  %1153 = vmatpush1.msra.mxu0 %v1127
  %1154 = vmatprep.subr.mxu0 0.0
  %1155 = vmatpush1.msra.mxu0 %v1128
  %1156 = vmatprep.subr.mxu0 0.0
  %1157 = vmatpush1.msra.mxu0 %v1129
  %1158 = vmatprep.subr.mxu0 0.0
  %1159 = vmatpush1.msra.mxu0 %v1130
  %1160 = vmatprep.subr.mxu0 0.0
  %1161 = vmatpush1.msra.mxu0 %v1131
  %1162 = vmatprep.subr.mxu0 0.0
  %1163 = vmatpush1.msra.mxu0 %v1132
  %1164 = vmatprep.subr.mxu0 0.0
  %1165 = vmatpush1.msra.mxu0 %v1133
  %1166 = vmatprep.subr.mxu0 0.0
  %1167 = vmatpush1.msra.mxu0 0.0
  %1168 = vmatprep.subr.mxu0 0.0
  %1169 = vmatpush1.msra.mxu0 0.0
  %1170 = vmatprep.subr.mxu0 0.0
  %1171 = vmatpush1.msra.mxu0 0.0
  %1172 = vmatprep.subr.mxu0 0.0
  %1173 = vmatpush1.msra.mxu0 0.0
  %1174 = vmatprep.subr.mxu0 0.0
  %1175 = vmatpush1.msra.mxu0 0.0
  %1176 = vmatprep.subr.mxu0 0.0
  %1177 = vmatpush1.msra.mxu0 0.0
  %1178 = vmatprep.subr.mxu0 0.0
  %1179 = vmatpush1.msra.mxu0 0.0
  %1180 = vmatprep.subr.mxu0 0.0
  %1181 = vmatpush1.msra.mxu0 0.0
  %1182 = vmatprep.subr.mxu0 0.0
  %1183 = vmatpush1.msra.mxu0 0.0
  %1184 = vmatprep.subr.mxu0 0.0
  %1185 = vmatpush1.msra.mxu0 0.0
  %1186 = vmatprep.subr.mxu0 0.0
  %1187 = vmatpush1.msra.mxu0 0.0
  %1188 = vmatprep.subr.mxu0 0.0
  %1189 = vmatpush1.msra.mxu0 0.0
  %1190 = vmatprep.subr.mxu0 0.0
  %1191 = vmatpush1.msra.mxu0 0.0
  %1192 = vmatprep.subr.mxu0 0.0
  %1193 = vmatpush1.msra.mxu0 0.0
  %1194 = vmatprep.subr.mxu0 0.0
  %1195 = vmatpush1.msra.mxu0 0.0
  %1196 = vmatprep.subr.mxu0 0.0
  %1197 = vmatpush1.msra.mxu0 0.0
  %1198 = vmatprep.mubr.f32.mxu0 0.0
  %1199 = vmatmul.mubr.f32.gmra.mrb[0].mxu0 %v1093
  %v1200 = vpop.f32.mrb[0].mxu0
  %v1201 = vadd.f32 0.0, %v1200
  %v1202 = vpop.f32.mrb[0].mxu0
  %1203 = vmatprep.mubr.f32.mxu0 0.0
  %1204 = vmatmul.mubr.f32.gmra.mrb[0].mxu0 %v1094
  %v1205 = vpop.f32.mrb[0].mxu0
  %v1206 = vadd.f32 0.0, %v1205
  %v1207 = vpop.f32.mrb[0].mxu0
  %1208 = vmatprep.mubr.f32.mxu0 0.0
  %1209 = vmatmul.mubr.f32.gmra.mrb[0].mxu0 %v1095
  %v1210 = vpop.f32.mrb[0].mxu0
  %v1211 = vadd.f32 0.0, %v1210
  %v1212 = vpop.f32.mrb[0].mxu0
  %1213 = vmatprep.mubr.f32.mxu0 0.0
  %1214 = vmatmul.mubr.f32.gmra.mrb[0].mxu0 %v1096
  %v1215 = vpop.f32.mrb[0].mxu0
  %v1216 = vadd.f32 0.0, %v1215
  %v1217 = vpop.f32.mrb[0].mxu0
  %1218 = vmatprep.mubr.f32.mxu0 0.0
  %1219 = vmatmul.mubr.f32.gmra.mrb[0].mxu0 %v1097
  %v1220 = vpop.f32.mrb[0].mxu0
  %v1221 = vadd.f32 0.0, %v1220
  %v1222 = vpop.f32.mrb[0].mxu0
  %1223 = vmatprep.mubr.f32.mxu0 0.0
  %1224 = vmatmul.mubr.f32.gmra.mrb[0].mxu0 %v1098
  %v1225 = vpop.f32.mrb[0].mxu0
  %v1226 = vadd.f32 0.0, %v1225
  %v1227 = vpop.f32.mrb[0].mxu0
  %1228 = vmatprep.mubr.f32.mxu0 0.0
  %1229 = vmatmul.mubr.f32.gmra.mrb[0].mxu0 %v1099
  %v1230 = vpop.f32.mrb[0].mxu0
  %v1231 = vadd.f32 0.0, %v1230
  %v1232 = vpop.f32.mrb[0].mxu0
  %1233 = vmatprep.mubr.f32.mxu0 0.0
  %1234 = vmatmul.mubr.f32.gmra.mrb[0].mxu0 %v1100
  %v1235 = vpop.f32.mrb[0].mxu0
  %v1236 = vadd.f32 0.0, %v1235
  %v1237 = vpop.f32.mrb[0].mxu0
  %1238 = vmatprep.mubr.f32.mxu0 0.0
  %1239 = vmatmul.mubr.f32.gmra.mrb[0].mxu0 %v1101
  %v1240 = vpop.f32.mrb[0].mxu0
  %v1241 = vadd.f32 0.0, %v1240
  %v1242 = vpop.f32.mrb[0].mxu0
  %1243 = vmatprep.mubr.f32.mxu0 0.0
  %1244 = vmatmul.mubr.f32.gmra.mrb[0].mxu0 %v1102
  %v1245 = vpop.f32.mrb[0].mxu0
  %v1246 = vadd.f32 0.0, %v1245
  %v1247 = vpop.f32.mrb[0].mxu0
  %1248 = vmatprep.mubr.f32.mxu0 0.0
  %1249 = vmatmul.mubr.f32.gmra.mrb[0].mxu0 %v1103
  %v1250 = vpop.f32.mrb[0].mxu0
  %v1251 = vadd.f32 0.0, %v1250
  %v1252 = vpop.f32.mrb[0].mxu0
  %1253 = vmatprep.mubr.f32.mxu0 0.0
  %1254 = vmatmul.mubr.f32.gmra.mrb[0].mxu0 %v1104
  %v1255 = vpop.f32.mrb[0].mxu0
  %v1256 = vadd.f32 0.0, %v1255
  %v1257 = vpop.f32.mrb[0].mxu0
  %1258 = vmatprep.mubr.f32.mxu0 0.0
  %1259 = vmatmul.mubr.f32.gmra.mrb[0].mxu0 %v1105
  %v1260 = vpop.f32.mrb[0].mxu0
  %v1261 = vadd.f32 0.0, %v1260
  %v1262 = vpop.f32.mrb[0].mxu0
  %1263 = vmatprep.mubr.f32.mxu0 0.0
  %1264 = vmatmul.mubr.f32.gmra.mrb[0].mxu0 %v1106
  %v1265 = vpop.f32.mrb[0].mxu0
  %v1266 = vadd.f32 0.0, %v1265
  %v1267 = vpop.f32.mrb[0].mxu0
  %1268 = vmatprep.mubr.f32.mxu0 0.0
  %1269 = vmatmul.mubr.f32.gmra.mrb[0].mxu0 %v1107
  %v1270 = vpop.f32.mrb[0].mxu0
  %v1271 = vadd.f32 0.0, %v1270
  %v1272 = vpop.f32.mrb[0].mxu0
  %1273 = vmatprep.mubr.f32.mxu0 0.0
  %1274 = vmatmul.mubr.f32.gmra.mrb[0].mxu0 %v1108
  %v1275 = vpop.f32.mrb[0].mxu0
  %v1276 = vadd.f32 0.0, %v1275
  %v1277 = vpop.f32.mrb[0].mxu0
  %1278 = vmatprep.mubr.f32.mxu0 0.0
  %1279 = vmatmul.mubr.f32.gmra.mrb[0].mxu0 %v1109
  %v1280 = vpop.f32.mrb[0].mxu0
  %v1281 = vadd.f32 0.0, %v1280
  %v1282 = vpop.f32.mrb[0].mxu0
  %1283 = vmatprep.mubr.f32.mxu0 0.0
  %1284 = vmatmul.mubr.f32.gmra.mrb[0].mxu0 %v1110
  %v1285 = vpop.f32.mrb[0].mxu0
  %v1286 = vadd.f32 0.0, %v1285
  %v1287 = vpop.f32.mrb[0].mxu0
  %1288 = vmatprep.mubr.f32.mxu0 0.0
  %1289 = vmatmul.mubr.f32.gmra.mrb[0].mxu0 %v1111
  %v1290 = vpop.f32.mrb[0].mxu0
  %v1291 = vadd.f32 0.0, %v1290
  %v1292 = vpop.f32.mrb[0].mxu0
  %1293 = vmatprep.mubr.f32.mxu0 0.0
  %1294 = vmatmul.mubr.f32.gmra.mrb[0].mxu0 %v1112
  %v1295 = vpop.f32.mrb[0].mxu0
  %v1296 = vadd.f32 0.0, %v1295
  %v1297 = vpop.f32.mrb[0].mxu0
  %1298 = vmatprep.mubr.f32.mxu0 0.0
  %1299 = vmatmul.mubr.f32.gmra.mrb[0].mxu0 %v1113
  %v1300 = vpop.f32.mrb[0].mxu0
  %v1301 = vadd.f32 0.0, %v1300
  %v1302 = vpop.f32.mrb[0].mxu0
  %1303 = vmatprep.mubr.f32.mxu0 0.0
  %1304 = vmatmul.mubr.f32.gmra.mrb[0].mxu0 %v1114
  %v1305 = vpop.f32.mrb[0].mxu0
  %v1306 = vadd.f32 0.0, %v1305
  %v1307 = vpop.f32.mrb[0].mxu0
  %1308 = vmatprep.mubr.f32.mxu0 0.0
  %1309 = vmatmul.mubr.f32.gmra.mrb[0].mxu0 %v1115
  %v1310 = vpop.f32.mrb[0].mxu0
  %v1311 = vadd.f32 0.0, %v1310
  %v1312 = vpop.f32.mrb[0].mxu0
  %1313 = vmatprep.mubr.f32.mxu0 0.0
  %1314 = vmatmul.mubr.f32.gmra.mrb[0].mxu0 %v1116
  %v1315 = vpop.f32.mrb[0].mxu0
  %v1316 = vadd.f32 0.0, %v1315
  %v1317 = vpop.f32.mrb[0].mxu0
  %1318 = vmatprep.mubr.f32.mxu0 0.0
  %1319 = vmatmul.mubr.f32.gmra.mrb[0].mxu0 %v1117
  %v1320 = vpop.f32.mrb[0].mxu0
  %v1321 = vadd.f32 0.0, %v1320
  %v1322 = vpop.f32.mrb[0].mxu0
  %1323 = vdwg.mxu0
  %v1324 = vadd.f32 %v970, %v1201
  %v1325 = vadd.f32 %v975, %v1206
  %v1326 = vadd.f32 %v980, %v1211
  %v1327 = vadd.f32 %v985, %v1216
  %v1328 = vadd.f32 %v990, %v1221
  %v1329 = vadd.f32 %v995, %v1226
  %v1330 = vadd.f32 %v1000, %v1231
  %v1331 = vadd.f32 %v1005, %v1236
  %v1332 = vadd.f32 %v1010, %v1241
  %v1333 = vadd.f32 %v1015, %v1246
  %v1334 = vadd.f32 %v1020, %v1251
  %v1335 = vadd.f32 %v1025, %v1256
  %v1336 = vadd.f32 %v1030, %v1261
  %v1337 = vadd.f32 %v1035, %v1266
  %v1338 = vadd.f32 %v1040, %v1271
  %v1339 = vadd.f32 %v1045, %v1276
  %v1340 = vadd.f32 %v1050, %v1281
  %v1341 = vadd.f32 %v1055, %v1286
  %v1342 = vadd.f32 %v1060, %v1291
  %v1343 = vadd.f32 %v1065, %v1296
  %v1344 = vadd.f32 %v1070, %v1301
  %v1345 = vadd.f32 %v1075, %v1306
  %v1346 = vadd.f32 %v1080, %v1311
  %v1347 = vadd.f32 %v1085, %v1316
  %v1348 = vadd.f32 %v1090, %v1321
  %v1349 = vld [vmem:[#allocation2 + $0xa] sm:$0xff]
  %v1350 = vld [vmem:[#allocation2 + $0x12] sm:$0xff]
  %v1351 = vld [vmem:[#allocation2 + $0x1a] sm:$0xff]
  %v1352 = vld [vmem:[#allocation2 + $0x22] sm:$0xff]
  %v1353 = vld [vmem:[#allocation2 + $0x2a] sm:$0xff]
  %v1354 = vld [vmem:[#allocation2 + $0x32] sm:$0xff]
  %v1355 = vld [vmem:[#allocation2 + $0x3a] sm:$0xff]
  %v1356 = vld [vmem:[#allocation2 + $0x42] sm:$0xff]
  %v1357 = vld [vmem:[#allocation2 + $0x4a] sm:$0xff]
  %v1358 = vld [vmem:[#allocation2 + $0x52] sm:$0xff]
  %v1359 = vld [vmem:[#allocation2 + $0x5a] sm:$0xff]
  %v1360 = vld [vmem:[#allocation2 + $0x62] sm:$0xff]
  %v1361 = vld [vmem:[#allocation2 + $0x6a] sm:$0xff]
  %v1362 = vld [vmem:[#allocation2 + $0x72] sm:$0xff]
  %v1363 = vld [vmem:[#allocation2 + $0x7a] sm:$0xff]
  %v1364 = vld [vmem:[#allocation2 + $0x82] sm:$0xff]
  %v1365 = vld [vmem:[#allocation2 + $0x8a] sm:$0xff]
  %v1366 = vld [vmem:[#allocation2 + $0x92] sm:$0xff]
  %v1367 = vld [vmem:[#allocation2 + $0x9a] sm:$0xff]
  %v1368 = vld [vmem:[#allocation2 + $0xa2] sm:$0xff]
  %v1369 = vld [vmem:[#allocation2 + $0xaa] sm:$0xff]
  %v1370 = vld [vmem:[#allocation2 + $0xb2] sm:$0xff]
  %v1371 = vld [vmem:[#allocation2 + $0xba] sm:$0xff]
  %v1372 = vld [vmem:[#allocation2 + $0xc2] sm:$0xff]
  %v1373 = vld [vmem:[#allocation2 + $0xca] sm:$0xff]
  %v1374 = vld [vmem:[%s4 + $0x180] sm:$0xff]
  %v1375 = vld [vmem:[%s4 + $0x188] sm:$0xff]
  %v1376 = vld [vmem:[%s4 + $0x190] sm:$0xff]
  %v1377 = vld [vmem:[%s4 + $0x198] sm:$0xff]
  %v1378 = vld [vmem:[%s4 + $0x1a0] sm:$0xff]
  %v1379 = vld [vmem:[%s4 + $0x1a8] sm:$0xff]
  %v1380 = vld [vmem:[%s4 + $0x1b0] sm:$0xff]
  %v1381 = vld [vmem:[%s4 + $0x1b8] sm:$0xff]
  %v1382 = vld [vmem:[%s4 + $0x1c0] sm:$0xff]
  %v1383 = vld [vmem:[%s4 + $0x1c8] sm:$0xff]
  %v1384 = vld [vmem:[%s4 + $0x1d0] sm:$0xff]
  %v1385 = vld [vmem:[%s4 + $0x1d8] sm:$0xff]
  %v1386 = vld [vmem:[%s4 + $0x1e0] sm:$0xff]
  %v1387 = vld [vmem:[%s4 + $0x1e8] sm:$0xff]
  %v1388 = vld [vmem:[%s4 + $0x1f0] sm:$0xff]
  %v1389 = vld [vmem:[%s4 + $0x1f8] sm:$0xff]
  %1390 = vmatprep.subr.mxu0 0.0
  %1391 = vmatpush1.msra.mxu0 %v1374
  %1392 = vmatprep.subr.mxu0 0.0
  %1393 = vmatpush1.msra.mxu0 %v1375
  %1394 = vmatprep.subr.mxu0 0.0
  %1395 = vmatpush1.msra.mxu0 %v1376
  %1396 = vmatprep.subr.mxu0 0.0
  %1397 = vmatpush1.msra.mxu0 %v1377
  %1398 = vmatprep.subr.mxu0 0.0
  %1399 = vmatpush1.msra.mxu0 %v1378
  %1400 = vmatprep.subr.mxu0 0.0
  %1401 = vmatpush1.msra.mxu0 %v1379
  %1402 = vmatprep.subr.mxu0 0.0
  %1403 = vmatpush1.msra.mxu0 %v1380
  %1404 = vmatprep.subr.mxu0 0.0
  %1405 = vmatpush1.msra.mxu0 %v1381
  %1406 = vmatprep.subr.mxu0 0.0
  %1407 = vmatpush1.msra.mxu0 %v1382
  %1408 = vmatprep.subr.mxu0 0.0
  %1409 = vmatpush1.msra.mxu0 %v1383
  %1410 = vmatprep.subr.mxu0 0.0
  %1411 = vmatpush1.msra.mxu0 %v1384
  %1412 = vmatprep.subr.mxu0 0.0
  %1413 = vmatpush1.msra.mxu0 %v1385
  %1414 = vmatprep.subr.mxu0 0.0
  %1415 = vmatpush1.msra.mxu0 %v1386
  %1416 = vmatprep.subr.mxu0 0.0
  %1417 = vmatpush1.msra.mxu0 %v1387
  %1418 = vmatprep.subr.mxu0 0.0
  %1419 = vmatpush1.msra.mxu0 %v1388
  %1420 = vmatprep.subr.mxu0 0.0
  %1421 = vmatpush1.msra.mxu0 %v1389
  %1422 = vmatprep.subr.mxu0 0.0
  %1423 = vmatpush1.msra.mxu0 0.0
  %1424 = vmatprep.subr.mxu0 0.0
  %1425 = vmatpush1.msra.mxu0 0.0
  %1426 = vmatprep.subr.mxu0 0.0
  %1427 = vmatpush1.msra.mxu0 0.0
  %1428 = vmatprep.subr.mxu0 0.0
  %1429 = vmatpush1.msra.mxu0 0.0
  %1430 = vmatprep.subr.mxu0 0.0
  %1431 = vmatpush1.msra.mxu0 0.0
  %1432 = vmatprep.subr.mxu0 0.0
  %1433 = vmatpush1.msra.mxu0 0.0
  %1434 = vmatprep.subr.mxu0 0.0
  %1435 = vmatpush1.msra.mxu0 0.0
  %1436 = vmatprep.subr.mxu0 0.0
  %1437 = vmatpush1.msra.mxu0 0.0
  %1438 = vmatprep.subr.mxu0 0.0
  %1439 = vmatpush1.msra.mxu0 0.0
  %1440 = vmatprep.subr.mxu0 0.0
  %1441 = vmatpush1.msra.mxu0 0.0
  %1442 = vmatprep.subr.mxu0 0.0
  %1443 = vmatpush1.msra.mxu0 0.0
  %1444 = vmatprep.subr.mxu0 0.0
  %1445 = vmatpush1.msra.mxu0 0.0
  %1446 = vmatprep.subr.mxu0 0.0
  %1447 = vmatpush1.msra.mxu0 0.0
  %1448 = vmatprep.subr.mxu0 0.0
  %1449 = vmatpush1.msra.mxu0 0.0
  %1450 = vmatprep.subr.mxu0 0.0
  %1451 = vmatpush1.msra.mxu0 0.0
  %1452 = vmatprep.subr.mxu0 0.0
  %1453 = vmatpush1.msra.mxu0 0.0
  %1454 = vmatprep.mubr.f32.mxu0 0.0
  %1455 = vmatmul.mubr.f32.gmra.mrb[0].mxu0 %v1349
  %v1456 = vpop.f32.mrb[0].mxu0
  %v1457 = vadd.f32 0.0, %v1456
  %v1458 = vpop.f32.mrb[0].mxu0
  %1459 = vmatprep.mubr.f32.mxu0 0.0
  %1460 = vmatmul.mubr.f32.gmra.mrb[0].mxu0 %v1350
  %v1461 = vpop.f32.mrb[0].mxu0
  %v1462 = vadd.f32 0.0, %v1461
  %v1463 = vpop.f32.mrb[0].mxu0
  %1464 = vmatprep.mubr.f32.mxu0 0.0
  %1465 = vmatmul.mubr.f32.gmra.mrb[0].mxu0 %v1351
  %v1466 = vpop.f32.mrb[0].mxu0
  %v1467 = vadd.f32 0.0, %v1466
  %v1468 = vpop.f32.mrb[0].mxu0
  %1469 = vmatprep.mubr.f32.mxu0 0.0
  %1470 = vmatmul.mubr.f32.gmra.mrb[0].mxu0 %v1352
  %v1471 = vpop.f32.mrb[0].mxu0
  %v1472 = vadd.f32 0.0, %v1471
  %v1473 = vpop.f32.mrb[0].mxu0
  %1474 = vmatprep.mubr.f32.mxu0 0.0
  %1475 = vmatmul.mubr.f32.gmra.mrb[0].mxu0 %v1353
  %v1476 = vpop.f32.mrb[0].mxu0
  %v1477 = vadd.f32 0.0, %v1476
  %v1478 = vpop.f32.mrb[0].mxu0
  %1479 = vmatprep.mubr.f32.mxu0 0.0
  %1480 = vmatmul.mubr.f32.gmra.mrb[0].mxu0 %v1354
  %v1481 = vpop.f32.mrb[0].mxu0
  %v1482 = vadd.f32 0.0, %v1481
  %v1483 = vpop.f32.mrb[0].mxu0
  %1484 = vmatprep.mubr.f32.mxu0 0.0
  %1485 = vmatmul.mubr.f32.gmra.mrb[0].mxu0 %v1355
  %v1486 = vpop.f32.mrb[0].mxu0
  %v1487 = vadd.f32 0.0, %v1486
  %v1488 = vpop.f32.mrb[0].mxu0
  %1489 = vmatprep.mubr.f32.mxu0 0.0
  %1490 = vmatmul.mubr.f32.gmra.mrb[0].mxu0 %v1356
  %v1491 = vpop.f32.mrb[0].mxu0
  %v1492 = vadd.f32 0.0, %v1491
  %v1493 = vpop.f32.mrb[0].mxu0
  %1494 = vmatprep.mubr.f32.mxu0 0.0
  %1495 = vmatmul.mubr.f32.gmra.mrb[0].mxu0 %v1357
  %v1496 = vpop.f32.mrb[0].mxu0
  %v1497 = vadd.f32 0.0, %v1496
  %v1498 = vpop.f32.mrb[0].mxu0
  %1499 = vmatprep.mubr.f32.mxu0 0.0
  %1500 = vmatmul.mubr.f32.gmra.mrb[0].mxu0 %v1358
  %v1501 = vpop.f32.mrb[0].mxu0
  %v1502 = vadd.f32 0.0, %v1501
  %v1503 = vpop.f32.mrb[0].mxu0
  %1504 = vmatprep.mubr.f32.mxu0 0.0
  %1505 = vmatmul.mubr.f32.gmra.mrb[0].mxu0 %v1359
  %v1506 = vpop.f32.mrb[0].mxu0
  %v1507 = vadd.f32 0.0, %v1506
  %v1508 = vpop.f32.mrb[0].mxu0
  %1509 = vmatprep.mubr.f32.mxu0 0.0
  %1510 = vmatmul.mubr.f32.gmra.mrb[0].mxu0 %v1360
  %v1511 = vpop.f32.mrb[0].mxu0
  %v1512 = vadd.f32 0.0, %v1511
  %v1513 = vpop.f32.mrb[0].mxu0
  %1514 = vmatprep.mubr.f32.mxu0 0.0
  %1515 = vmatmul.mubr.f32.gmra.mrb[0].mxu0 %v1361
  %v1516 = vpop.f32.mrb[0].mxu0
  %v1517 = vadd.f32 0.0, %v1516
  %v1518 = vpop.f32.mrb[0].mxu0
  %1519 = vmatprep.mubr.f32.mxu0 0.0
  %1520 = vmatmul.mubr.f32.gmra.mrb[0].mxu0 %v1362
  %v1521 = vpop.f32.mrb[0].mxu0
  %v1522 = vadd.f32 0.0, %v1521
  %v1523 = vpop.f32.mrb[0].mxu0
  %1524 = vmatprep.mubr.f32.mxu0 0.0
  %1525 = vmatmul.mubr.f32.gmra.mrb[0].mxu0 %v1363
  %v1526 = vpop.f32.mrb[0].mxu0
  %v1527 = vadd.f32 0.0, %v1526
  %v1528 = vpop.f32.mrb[0].mxu0
  %1529 = vmatprep.mubr.f32.mxu0 0.0
  %1530 = vmatmul.mubr.f32.gmra.mrb[0].mxu0 %v1364
  %v1531 = vpop.f32.mrb[0].mxu0
  %v1532 = vadd.f32 0.0, %v1531
  %v1533 = vpop.f32.mrb[0].mxu0
  %1534 = vmatprep.mubr.f32.mxu0 0.0
  %1535 = vmatmul.mubr.f32.gmra.mrb[0].mxu0 %v1365
  %v1536 = vpop.f32.mrb[0].mxu0
  %v1537 = vadd.f32 0.0, %v1536
  %v1538 = vpop.f32.mrb[0].mxu0
  %1539 = vmatprep.mubr.f32.mxu0 0.0
  %1540 = vmatmul.mubr.f32.gmra.mrb[0].mxu0 %v1366
  %v1541 = vpop.f32.mrb[0].mxu0
  %v1542 = vadd.f32 0.0, %v1541
  %v1543 = vpop.f32.mrb[0].mxu0
  %1544 = vmatprep.mubr.f32.mxu0 0.0
  %1545 = vmatmul.mubr.f32.gmra.mrb[0].mxu0 %v1367
  %v1546 = vpop.f32.mrb[0].mxu0
  %v1547 = vadd.f32 0.0, %v1546
  %v1548 = vpop.f32.mrb[0].mxu0
  %1549 = vmatprep.mubr.f32.mxu0 0.0
  %1550 = vmatmul.mubr.f32.gmra.mrb[0].mxu0 %v1368
  %v1551 = vpop.f32.mrb[0].mxu0
  %v1552 = vadd.f32 0.0, %v1551
  %v1553 = vpop.f32.mrb[0].mxu0
  %1554 = vmatprep.mubr.f32.mxu0 0.0
  %1555 = vmatmul.mubr.f32.gmra.mrb[0].mxu0 %v1369
  %v1556 = vpop.f32.mrb[0].mxu0
  %v1557 = vadd.f32 0.0, %v1556
  %v1558 = vpop.f32.mrb[0].mxu0
  %1559 = vmatprep.mubr.f32.mxu0 0.0
  %1560 = vmatmul.mubr.f32.gmra.mrb[0].mxu0 %v1370
  %v1561 = vpop.f32.mrb[0].mxu0
  %v1562 = vadd.f32 0.0, %v1561
  %v1563 = vpop.f32.mrb[0].mxu0
  %1564 = vmatprep.mubr.f32.mxu0 0.0
  %1565 = vmatmul.mubr.f32.gmra.mrb[0].mxu0 %v1371
  %v1566 = vpop.f32.mrb[0].mxu0
  %v1567 = vadd.f32 0.0, %v1566
  %v1568 = vpop.f32.mrb[0].mxu0
  %1569 = vmatprep.mubr.f32.mxu0 0.0
  %1570 = vmatmul.mubr.f32.gmra.mrb[0].mxu0 %v1372
  %v1571 = vpop.f32.mrb[0].mxu0
  %v1572 = vadd.f32 0.0, %v1571
  %v1573 = vpop.f32.mrb[0].mxu0
  %1574 = vmatprep.mubr.f32.mxu0 0.0
  %1575 = vmatmul.mubr.f32.gmra.mrb[0].mxu0 %v1373
  %v1576 = vpop.f32.mrb[0].mxu0
  %v1577 = vadd.f32 0.0, %v1576
  %v1578 = vpop.f32.mrb[0].mxu0
  %1579 = vdwg.mxu0
  %v1580 = vadd.f32 %v1324, %v1457
  %v1581 = vadd.f32 %v1325, %v1462
  %v1582 = vadd.f32 %v1326, %v1467
  %v1583 = vadd.f32 %v1327, %v1472
  %v1584 = vadd.f32 %v1328, %v1477
  %v1585 = vadd.f32 %v1329, %v1482
  %v1586 = vadd.f32 %v1330, %v1487
  %v1587 = vadd.f32 %v1331, %v1492
  %v1588 = vadd.f32 %v1332, %v1497
  %v1589 = vadd.f32 %v1333, %v1502
  %v1590 = vadd.f32 %v1334, %v1507
  %v1591 = vadd.f32 %v1335, %v1512
  %v1592 = vadd.f32 %v1336, %v1517
  %v1593 = vadd.f32 %v1337, %v1522
  %v1594 = vadd.f32 %v1338, %v1527
  %v1595 = vadd.f32 %v1339, %v1532
  %v1596 = vadd.f32 %v1340, %v1537
  %v1597 = vadd.f32 %v1341, %v1542
  %v1598 = vadd.f32 %v1342, %v1547
  %v1599 = vadd.f32 %v1343, %v1552
  %v1600 = vadd.f32 %v1344, %v1557
  %v1601 = vadd.f32 %v1345, %v1562
  %v1602 = vadd.f32 %v1346, %v1567
  %v1603 = vadd.f32 %v1347, %v1572
  %v1604 = vadd.f32 %v1348, %v1577
  %v1605 = vld [vmem:[#allocation2 + $0xb] sm:$0xff]
  %v1606 = vld [vmem:[#allocation2 + $0x13] sm:$0xff]
  %v1607 = vld [vmem:[#allocation2 + $0x1b] sm:$0xff]
  %v1608 = vld [vmem:[#allocation2 + $0x23] sm:$0xff]
  %v1609 = vld [vmem:[#allocation2 + $0x2b] sm:$0xff]
  %v1610 = vld [vmem:[#allocation2 + $0x33] sm:$0xff]
  %v1611 = vld [vmem:[#allocation2 + $0x3b] sm:$0xff]
  %v1612 = vld [vmem:[#allocation2 + $0x43] sm:$0xff]
  %v1613 = vld [vmem:[#allocation2 + $0x4b] sm:$0xff]
  %v1614 = vld [vmem:[#allocation2 + $0x53] sm:$0xff]
  %v1615 = vld [vmem:[#allocation2 + $0x5b] sm:$0xff]
  %v1616 = vld [vmem:[#allocation2 + $0x63] sm:$0xff]
  %v1617 = vld [vmem:[#allocation2 + $0x6b] sm:$0xff]
  %v1618 = vld [vmem:[#allocation2 + $0x73] sm:$0xff]
  %v1619 = vld [vmem:[#allocation2 + $0x7b] sm:$0xff]
  %v1620 = vld [vmem:[#allocation2 + $0x83] sm:$0xff]
  %v1621 = vld [vmem:[#allocation2 + $0x8b] sm:$0xff]
  %v1622 = vld [vmem:[#allocation2 + $0x93] sm:$0xff]
  %v1623 = vld [vmem:[#allocation2 + $0x9b] sm:$0xff]
  %v1624 = vld [vmem:[#allocation2 + $0xa3] sm:$0xff]
  %v1625 = vld [vmem:[#allocation2 + $0xab] sm:$0xff]
  %v1626 = vld [vmem:[#allocation2 + $0xb3] sm:$0xff]
  %v1627 = vld [vmem:[#allocation2 + $0xbb] sm:$0xff]
  %v1628 = vld [vmem:[#allocation2 + $0xc3] sm:$0xff]
  %v1629 = vld [vmem:[#allocation2 + $0xcb] sm:$0xff]
  %v1630 = vld [vmem:[%s4 + $0x200] sm:$0xff]
  %v1631 = vld [vmem:[%s4 + $0x208] sm:$0xff]
  %v1632 = vld [vmem:[%s4 + $0x210] sm:$0xff]
  %v1633 = vld [vmem:[%s4 + $0x218] sm:$0xff]
  %v1634 = vld [vmem:[%s4 + $0x220] sm:$0xff]
  %v1635 = vld [vmem:[%s4 + $0x228] sm:$0xff]
  %v1636 = vld [vmem:[%s4 + $0x230] sm:$0xff]
  %v1637 = vld [vmem:[%s4 + $0x238] sm:$0xff]
  %v1638 = vld [vmem:[%s4 + $0x240] sm:$0xff]
  %v1639 = vld [vmem:[%s4 + $0x248] sm:$0xff]
  %v1640 = vld [vmem:[%s4 + $0x250] sm:$0xff]
  %v1641 = vld [vmem:[%s4 + $0x258] sm:$0xff]
  %v1642 = vld [vmem:[%s4 + $0x260] sm:$0xff]
  %v1643 = vld [vmem:[%s4 + $0x268] sm:$0xff]
  %v1644 = vld [vmem:[%s4 + $0x270] sm:$0xff]
  %v1645 = vld [vmem:[%s4 + $0x278] sm:$0xff]
  %1646 = vmatprep.subr.mxu0 0.0
  %1647 = vmatpush1.msra.mxu0 %v1630
  %1648 = vmatprep.subr.mxu0 0.0
  %1649 = vmatpush1.msra.mxu0 %v1631
  %1650 = vmatprep.subr.mxu0 0.0
  %1651 = vmatpush1.msra.mxu0 %v1632
  %1652 = vmatprep.subr.mxu0 0.0
  %1653 = vmatpush1.msra.mxu0 %v1633
  %1654 = vmatprep.subr.mxu0 0.0
  %1655 = vmatpush1.msra.mxu0 %v1634
  %1656 = vmatprep.subr.mxu0 0.0
  %1657 = vmatpush1.msra.mxu0 %v1635
  %1658 = vmatprep.subr.mxu0 0.0
  %1659 = vmatpush1.msra.mxu0 %v1636
  %1660 = vmatprep.subr.mxu0 0.0
  %1661 = vmatpush1.msra.mxu0 %v1637
  %1662 = vmatprep.subr.mxu0 0.0
  %1663 = vmatpush1.msra.mxu0 %v1638
  %1664 = vmatprep.subr.mxu0 0.0
  %1665 = vmatpush1.msra.mxu0 %v1639
  %1666 = vmatprep.subr.mxu0 0.0
  %1667 = vmatpush1.msra.mxu0 %v1640
  %1668 = vmatprep.subr.mxu0 0.0
  %1669 = vmatpush1.msra.mxu0 %v1641
  %1670 = vmatprep.subr.mxu0 0.0
  %1671 = vmatpush1.msra.mxu0 %v1642
  %1672 = vmatprep.subr.mxu0 0.0
  %1673 = vmatpush1.msra.mxu0 %v1643
  %1674 = vmatprep.subr.mxu0 0.0
  %1675 = vmatpush1.msra.mxu0 %v1644
  %1676 = vmatprep.subr.mxu0 0.0
  %1677 = vmatpush1.msra.mxu0 %v1645
  %1678 = vmatprep.subr.mxu0 0.0
  %1679 = vmatpush1.msra.mxu0 0.0
  %1680 = vmatprep.subr.mxu0 0.0
  %1681 = vmatpush1.msra.mxu0 0.0
  %1682 = vmatprep.subr.mxu0 0.0
  %1683 = vmatpush1.msra.mxu0 0.0
  %1684 = vmatprep.subr.mxu0 0.0
  %1685 = vmatpush1.msra.mxu0 0.0
  %1686 = vmatprep.subr.mxu0 0.0
  %1687 = vmatpush1.msra.mxu0 0.0
  %1688 = vmatprep.subr.mxu0 0.0
  %1689 = vmatpush1.msra.mxu0 0.0
  %1690 = vmatprep.subr.mxu0 0.0
  %1691 = vmatpush1.msra.mxu0 0.0
  %1692 = vmatprep.subr.mxu0 0.0
  %1693 = vmatpush1.msra.mxu0 0.0
  %1694 = vmatprep.subr.mxu0 0.0
  %1695 = vmatpush1.msra.mxu0 0.0
  %1696 = vmatprep.subr.mxu0 0.0
  %1697 = vmatpush1.msra.mxu0 0.0
  %1698 = vmatprep.subr.mxu0 0.0
  %1699 = vmatpush1.msra.mxu0 0.0
  %1700 = vmatprep.subr.mxu0 0.0
  %1701 = vmatpush1.msra.mxu0 0.0
  %1702 = vmatprep.subr.mxu0 0.0
  %1703 = vmatpush1.msra.mxu0 0.0
  %1704 = vmatprep.subr.mxu0 0.0
  %1705 = vmatpush1.msra.mxu0 0.0
  %1706 = vmatprep.subr.mxu0 0.0
  %1707 = vmatpush1.msra.mxu0 0.0
  %1708 = vmatprep.subr.mxu0 0.0
  %1709 = vmatpush1.msra.mxu0 0.0
  %1710 = vmatprep.mubr.f32.mxu0 0.0
  %1711 = vmatmul.mubr.f32.gmra.mrb[0].mxu0 %v1605
  %v1712 = vpop.f32.mrb[0].mxu0
  %v1713 = vadd.f32 0.0, %v1712
  %v1714 = vpop.f32.mrb[0].mxu0
  %1715 = vmatprep.mubr.f32.mxu0 0.0
  %1716 = vmatmul.mubr.f32.gmra.mrb[0].mxu0 %v1606
  %v1717 = vpop.f32.mrb[0].mxu0
  %v1718 = vadd.f32 0.0, %v1717
  %v1719 = vpop.f32.mrb[0].mxu0
  %1720 = vmatprep.mubr.f32.mxu0 0.0
  %1721 = vmatmul.mubr.f32.gmra.mrb[0].mxu0 %v1607
  %v1722 = vpop.f32.mrb[0].mxu0
  %v1723 = vadd.f32 0.0, %v1722
  %v1724 = vpop.f32.mrb[0].mxu0
  %1725 = vmatprep.mubr.f32.mxu0 0.0
  %1726 = vmatmul.mubr.f32.gmra.mrb[0].mxu0 %v1608
  %v1727 = vpop.f32.mrb[0].mxu0
  %v1728 = vadd.f32 0.0, %v1727
  %v1729 = vpop.f32.mrb[0].mxu0
  %1730 = vmatprep.mubr.f32.mxu0 0.0
  %1731 = vmatmul.mubr.f32.gmra.mrb[0].mxu0 %v1609
  %v1732 = vpop.f32.mrb[0].mxu0
  %v1733 = vadd.f32 0.0, %v1732
  %v1734 = vpop.f32.mrb[0].mxu0
  %1735 = vmatprep.mubr.f32.mxu0 0.0
  %1736 = vmatmul.mubr.f32.gmra.mrb[0].mxu0 %v1610
  %v1737 = vpop.f32.mrb[0].mxu0
  %v1738 = vadd.f32 0.0, %v1737
  %v1739 = vpop.f32.mrb[0].mxu0
  %1740 = vmatprep.mubr.f32.mxu0 0.0
  %1741 = vmatmul.mubr.f32.gmra.mrb[0].mxu0 %v1611
  %v1742 = vpop.f32.mrb[0].mxu0
  %v1743 = vadd.f32 0.0, %v1742
  %v1744 = vpop.f32.mrb[0].mxu0
  %1745 = vmatprep.mubr.f32.mxu0 0.0
  %1746 = vmatmul.mubr.f32.gmra.mrb[0].mxu0 %v1612
  %v1747 = vpop.f32.mrb[0].mxu0
  %v1748 = vadd.f32 0.0, %v1747
  %v1749 = vpop.f32.mrb[0].mxu0
  %1750 = vmatprep.mubr.f32.mxu0 0.0
  %1751 = vmatmul.mubr.f32.gmra.mrb[0].mxu0 %v1613
  %v1752 = vpop.f32.mrb[0].mxu0
  %v1753 = vadd.f32 0.0, %v1752
  %v1754 = vpop.f32.mrb[0].mxu0
  %1755 = vmatprep.mubr.f32.mxu0 0.0
  %1756 = vmatmul.mubr.f32.gmra.mrb[0].mxu0 %v1614
  %v1757 = vpop.f32.mrb[0].mxu0
  %v1758 = vadd.f32 0.0, %v1757
  %v1759 = vpop.f32.mrb[0].mxu0
  %1760 = vmatprep.mubr.f32.mxu0 0.0
  %1761 = vmatmul.mubr.f32.gmra.mrb[0].mxu0 %v1615
  %v1762 = vpop.f32.mrb[0].mxu0
  %v1763 = vadd.f32 0.0, %v1762
  %v1764 = vpop.f32.mrb[0].mxu0
  %1765 = vmatprep.mubr.f32.mxu0 0.0
  %1766 = vmatmul.mubr.f32.gmra.mrb[0].mxu0 %v1616
  %v1767 = vpop.f32.mrb[0].mxu0
  %v1768 = vadd.f32 0.0, %v1767
  %v1769 = vpop.f32.mrb[0].mxu0
  %1770 = vmatprep.mubr.f32.mxu0 0.0
  %1771 = vmatmul.mubr.f32.gmra.mrb[0].mxu0 %v1617
  %v1772 = vpop.f32.mrb[0].mxu0
  %v1773 = vadd.f32 0.0, %v1772
  %v1774 = vpop.f32.mrb[0].mxu0
  %1775 = vmatprep.mubr.f32.mxu0 0.0
  %1776 = vmatmul.mubr.f32.gmra.mrb[0].mxu0 %v1618
  %v1777 = vpop.f32.mrb[0].mxu0
  %v1778 = vadd.f32 0.0, %v1777
  %v1779 = vpop.f32.mrb[0].mxu0
  %1780 = vmatprep.mubr.f32.mxu0 0.0
  %1781 = vmatmul.mubr.f32.gmra.mrb[0].mxu0 %v1619
  %v1782 = vpop.f32.mrb[0].mxu0
  %v1783 = vadd.f32 0.0, %v1782
  %v1784 = vpop.f32.mrb[0].mxu0
  %1785 = vmatprep.mubr.f32.mxu0 0.0
  %1786 = vmatmul.mubr.f32.gmra.mrb[0].mxu0 %v1620
  %v1787 = vpop.f32.mrb[0].mxu0
  %v1788 = vadd.f32 0.0, %v1787
  %v1789 = vpop.f32.mrb[0].mxu0
  %1790 = vmatprep.mubr.f32.mxu0 0.0
  %1791 = vmatmul.mubr.f32.gmra.mrb[0].mxu0 %v1621
  %v1792 = vpop.f32.mrb[0].mxu0
  %v1793 = vadd.f32 0.0, %v1792
  %v1794 = vpop.f32.mrb[0].mxu0
  %1795 = vmatprep.mubr.f32.mxu0 0.0
  %1796 = vmatmul.mubr.f32.gmra.mrb[0].mxu0 %v1622
  %v1797 = vpop.f32.mrb[0].mxu0
  %v1798 = vadd.f32 0.0, %v1797
  %v1799 = vpop.f32.mrb[0].mxu0
  %1800 = vmatprep.mubr.f32.mxu0 0.0
  %1801 = vmatmul.mubr.f32.gmra.mrb[0].mxu0 %v1623
  %v1802 = vpop.f32.mrb[0].mxu0
  %v1803 = vadd.f32 0.0, %v1802
  %v1804 = vpop.f32.mrb[0].mxu0
  %1805 = vmatprep.mubr.f32.mxu0 0.0
  %1806 = vmatmul.mubr.f32.gmra.mrb[0].mxu0 %v1624
  %v1807 = vpop.f32.mrb[0].mxu0
  %v1808 = vadd.f32 0.0, %v1807
  %v1809 = vpop.f32.mrb[0].mxu0
  %1810 = vmatprep.mubr.f32.mxu0 0.0
  %1811 = vmatmul.mubr.f32.gmra.mrb[0].mxu0 %v1625
  %v1812 = vpop.f32.mrb[0].mxu0
  %v1813 = vadd.f32 0.0, %v1812
  %v1814 = vpop.f32.mrb[0].mxu0
  %1815 = vmatprep.mubr.f32.mxu0 0.0
  %1816 = vmatmul.mubr.f32.gmra.mrb[0].mxu0 %v1626
  %v1817 = vpop.f32.mrb[0].mxu0
  %v1818 = vadd.f32 0.0, %v1817
  %v1819 = vpop.f32.mrb[0].mxu0
  %1820 = vmatprep.mubr.f32.mxu0 0.0
  %1821 = vmatmul.mubr.f32.gmra.mrb[0].mxu0 %v1627
  %v1822 = vpop.f32.mrb[0].mxu0
  %v1823 = vadd.f32 0.0, %v1822
  %v1824 = vpop.f32.mrb[0].mxu0
  %1825 = vmatprep.mubr.f32.mxu0 0.0
  %1826 = vmatmul.mubr.f32.gmra.mrb[0].mxu0 %v1628
  %v1827 = vpop.f32.mrb[0].mxu0
  %v1828 = vadd.f32 0.0, %v1827
  %v1829 = vpop.f32.mrb[0].mxu0
  %1830 = vmatprep.mubr.f32.mxu0 0.0
  %1831 = vmatmul.mubr.f32.gmra.mrb[0].mxu0 %v1629
  %v1832 = vpop.f32.mrb[0].mxu0
  %v1833 = vadd.f32 0.0, %v1832
  %v1834 = vpop.f32.mrb[0].mxu0
  %1835 = vdwg.mxu0
  %v1836 = vadd.f32 %v1580, %v1713
  %v1837 = vadd.f32 %v1581, %v1718
  %v1838 = vadd.f32 %v1582, %v1723
  %v1839 = vadd.f32 %v1583, %v1728
  %v1840 = vadd.f32 %v1584, %v1733
  %v1841 = vadd.f32 %v1585, %v1738
  %v1842 = vadd.f32 %v1586, %v1743
  %v1843 = vadd.f32 %v1587, %v1748
  %v1844 = vadd.f32 %v1588, %v1753
  %v1845 = vadd.f32 %v1589, %v1758
  %v1846 = vadd.f32 %v1590, %v1763
  %v1847 = vadd.f32 %v1591, %v1768
  %v1848 = vadd.f32 %v1592, %v1773
  %v1849 = vadd.f32 %v1593, %v1778
  %v1850 = vadd.f32 %v1594, %v1783
  %v1851 = vadd.f32 %v1595, %v1788
  %v1852 = vadd.f32 %v1596, %v1793
  %v1853 = vadd.f32 %v1597, %v1798
  %v1854 = vadd.f32 %v1598, %v1803
  %v1855 = vadd.f32 %v1599, %v1808
  %v1856 = vadd.f32 %v1600, %v1813
  %v1857 = vadd.f32 %v1601, %v1818
  %v1858 = vadd.f32 %v1602, %v1823
  %v1859 = vadd.f32 %v1603, %v1828
  %v1860 = vadd.f32 %v1604, %v1833
  %v1861 = vld [vmem:[#allocation2 + $0xc] sm:$0xff]
  %v1862 = vld [vmem:[#allocation2 + $0x14] sm:$0xff]
  %v1863 = vld [vmem:[#allocation2 + $0x1c] sm:$0xff]
  %v1864 = vld [vmem:[#allocation2 + $0x24] sm:$0xff]
  %v1865 = vld [vmem:[#allocation2 + $0x2c] sm:$0xff]
  %v1866 = vld [vmem:[#allocation2 + $0x34] sm:$0xff]
  %v1867 = vld [vmem:[#allocation2 + $0x3c] sm:$0xff]
  %v1868 = vld [vmem:[#allocation2 + $0x44] sm:$0xff]
  %v1869 = vld [vmem:[#allocation2 + $0x4c] sm:$0xff]
  %v1870 = vld [vmem:[#allocation2 + $0x54] sm:$0xff]
  %v1871 = vld [vmem:[#allocation2 + $0x5c] sm:$0xff]
  %v1872 = vld [vmem:[#allocation2 + $0x64] sm:$0xff]
  %v1873 = vld [vmem:[#allocation2 + $0x6c] sm:$0xff]
  %v1874 = vld [vmem:[#allocation2 + $0x74] sm:$0xff]
  %v1875 = vld [vmem:[#allocation2 + $0x7c] sm:$0xff]
  %v1876 = vld [vmem:[#allocation2 + $0x84] sm:$0xff]
  %v1877 = vld [vmem:[#allocation2 + $0x8c] sm:$0xff]
  %v1878 = vld [vmem:[#allocation2 + $0x94] sm:$0xff]
  %v1879 = vld [vmem:[#allocation2 + $0x9c] sm:$0xff]
  %v1880 = vld [vmem:[#allocation2 + $0xa4] sm:$0xff]
  %v1881 = vld [vmem:[#allocation2 + $0xac] sm:$0xff]
  %v1882 = vld [vmem:[#allocation2 + $0xb4] sm:$0xff]
  %v1883 = vld [vmem:[#allocation2 + $0xbc] sm:$0xff]
  %v1884 = vld [vmem:[#allocation2 + $0xc4] sm:$0xff]
  %v1885 = vld [vmem:[#allocation2 + $0xcc] sm:$0xff]
  %v1886 = vld [vmem:[%s4 + $0x280] sm:$0xff]
  %v1887 = vld [vmem:[%s4 + $0x288] sm:$0xff]
  %v1888 = vld [vmem:[%s4 + $0x290] sm:$0xff]
  %v1889 = vld [vmem:[%s4 + $0x298] sm:$0xff]
  %v1890 = vld [vmem:[%s4 + $0x2a0] sm:$0xff]
  %v1891 = vld [vmem:[%s4 + $0x2a8] sm:$0xff]
  %v1892 = vld [vmem:[%s4 + $0x2b0] sm:$0xff]
  %v1893 = vld [vmem:[%s4 + $0x2b8] sm:$0xff]
  %v1894 = vld [vmem:[%s4 + $0x2c0] sm:$0xff]
  %v1895 = vld [vmem:[%s4 + $0x2c8] sm:$0xff]
  %v1896 = vld [vmem:[%s4 + $0x2d0] sm:$0xff]
  %v1897 = vld [vmem:[%s4 + $0x2d8] sm:$0xff]
  %v1898 = vld [vmem:[%s4 + $0x2e0] sm:$0xff]
  %v1899 = vld [vmem:[%s4 + $0x2e8] sm:$0xff]
  %v1900 = vld [vmem:[%s4 + $0x2f0] sm:$0xff]
  %v1901 = vld [vmem:[%s4 + $0x2f8] sm:$0xff]
  %1902 = vmatprep.subr.mxu0 0.0
  %1903 = vmatpush1.msra.mxu0 %v1886
  %1904 = vmatprep.subr.mxu0 0.0
  %1905 = vmatpush1.msra.mxu0 %v1887
  %1906 = vmatprep.subr.mxu0 0.0
  %1907 = vmatpush1.msra.mxu0 %v1888
  %1908 = vmatprep.subr.mxu0 0.0
  %1909 = vmatpush1.msra.mxu0 %v1889
  %1910 = vmatprep.subr.mxu0 0.0
  %1911 = vmatpush1.msra.mxu0 %v1890
  %1912 = vmatprep.subr.mxu0 0.0
  %1913 = vmatpush1.msra.mxu0 %v1891
  %1914 = vmatprep.subr.mxu0 0.0
  %1915 = vmatpush1.msra.mxu0 %v1892
  %1916 = vmatprep.subr.mxu0 0.0
  %1917 = vmatpush1.msra.mxu0 %v1893
  %1918 = vmatprep.subr.mxu0 0.0
  %1919 = vmatpush1.msra.mxu0 %v1894
  %1920 = vmatprep.subr.mxu0 0.0
  %1921 = vmatpush1.msra.mxu0 %v1895
  %1922 = vmatprep.subr.mxu0 0.0
  %1923 = vmatpush1.msra.mxu0 %v1896
  %1924 = vmatprep.subr.mxu0 0.0
  %1925 = vmatpush1.msra.mxu0 %v1897
  %1926 = vmatprep.subr.mxu0 0.0
  %1927 = vmatpush1.msra.mxu0 %v1898
  %1928 = vmatprep.subr.mxu0 0.0
  %1929 = vmatpush1.msra.mxu0 %v1899
  %1930 = vmatprep.subr.mxu0 0.0
  %1931 = vmatpush1.msra.mxu0 %v1900
  %1932 = vmatprep.subr.mxu0 0.0
  %1933 = vmatpush1.msra.mxu0 %v1901
  %1934 = vmatprep.subr.mxu0 0.0
  %1935 = vmatpush1.msra.mxu0 0.0
  %1936 = vmatprep.subr.mxu0 0.0
  %1937 = vmatpush1.msra.mxu0 0.0
  %1938 = vmatprep.subr.mxu0 0.0
  %1939 = vmatpush1.msra.mxu0 0.0
  %1940 = vmatprep.subr.mxu0 0.0
  %1941 = vmatpush1.msra.mxu0 0.0
  %1942 = vmatprep.subr.mxu0 0.0
  %1943 = vmatpush1.msra.mxu0 0.0
  %1944 = vmatprep.subr.mxu0 0.0
  %1945 = vmatpush1.msra.mxu0 0.0
  %1946 = vmatprep.subr.mxu0 0.0
  %1947 = vmatpush1.msra.mxu0 0.0
  %1948 = vmatprep.subr.mxu0 0.0
  %1949 = vmatpush1.msra.mxu0 0.0
  %1950 = vmatprep.subr.mxu0 0.0
  %1951 = vmatpush1.msra.mxu0 0.0
  %1952 = vmatprep.subr.mxu0 0.0
  %1953 = vmatpush1.msra.mxu0 0.0
  %1954 = vmatprep.subr.mxu0 0.0
  %1955 = vmatpush1.msra.mxu0 0.0
  %1956 = vmatprep.subr.mxu0 0.0
  %1957 = vmatpush1.msra.mxu0 0.0
  %1958 = vmatprep.subr.mxu0 0.0
  %1959 = vmatpush1.msra.mxu0 0.0
  %1960 = vmatprep.subr.mxu0 0.0
  %1961 = vmatpush1.msra.mxu0 0.0
  %1962 = vmatprep.subr.mxu0 0.0
  %1963 = vmatpush1.msra.mxu0 0.0
  %1964 = vmatprep.subr.mxu0 0.0
  %1965 = vmatpush1.msra.mxu0 0.0
  %1966 = vmatprep.mubr.f32.mxu0 0.0
  %1967 = vmatmul.mubr.f32.gmra.mrb[0].mxu0 %v1861
  %v1968 = vpop.f32.mrb[0].mxu0
  %v1969 = vadd.f32 0.0, %v1968
  %v1970 = vpop.f32.mrb[0].mxu0
  %1971 = vmatprep.mubr.f32.mxu0 0.0
  %1972 = vmatmul.mubr.f32.gmra.mrb[0].mxu0 %v1862
  %v1973 = vpop.f32.mrb[0].mxu0
  %v1974 = vadd.f32 0.0, %v1973
  %v1975 = vpop.f32.mrb[0].mxu0
  %1976 = vmatprep.mubr.f32.mxu0 0.0
  %1977 = vmatmul.mubr.f32.gmra.mrb[0].mxu0 %v1863
  %v1978 = vpop.f32.mrb[0].mxu0
  %v1979 = vadd.f32 0.0, %v1978
  %v1980 = vpop.f32.mrb[0].mxu0
  %1981 = vmatprep.mubr.f32.mxu0 0.0
  %1982 = vmatmul.mubr.f32.gmra.mrb[0].mxu0 %v1864
  %v1983 = vpop.f32.mrb[0].mxu0
  %v1984 = vadd.f32 0.0, %v1983
  %v1985 = vpop.f32.mrb[0].mxu0
  %1986 = vmatprep.mubr.f32.mxu0 0.0
  %1987 = vmatmul.mubr.f32.gmra.mrb[0].mxu0 %v1865
  %v1988 = vpop.f32.mrb[0].mxu0
  %v1989 = vadd.f32 0.0, %v1988
  %v1990 = vpop.f32.mrb[0].mxu0
  %1991 = vmatprep.mubr.f32.mxu0 0.0
  %1992 = vmatmul.mubr.f32.gmra.mrb[0].mxu0 %v1866
  %v1993 = vpop.f32.mrb[0].mxu0
  %v1994 = vadd.f32 0.0, %v1993
  %v1995 = vpop.f32.mrb[0].mxu0
  %1996 = vmatprep.mubr.f32.mxu0 0.0
  %1997 = vmatmul.mubr.f32.gmra.mrb[0].mxu0 %v1867
  %v1998 = vpop.f32.mrb[0].mxu0
  %v1999 = vadd.f32 0.0, %v1998
  %v2000 = vpop.f32.mrb[0].mxu0
  %2001 = vmatprep.mubr.f32.mxu0 0.0
  %2002 = vmatmul.mubr.f32.gmra.mrb[0].mxu0 %v1868
  %v2003 = vpop.f32.mrb[0].mxu0
  %v2004 = vadd.f32 0.0, %v2003
  %v2005 = vpop.f32.mrb[0].mxu0
  %2006 = vmatprep.mubr.f32.mxu0 0.0
  %2007 = vmatmul.mubr.f32.gmra.mrb[0].mxu0 %v1869
  %v2008 = vpop.f32.mrb[0].mxu0
  %v2009 = vadd.f32 0.0, %v2008
  %v2010 = vpop.f32.mrb[0].mxu0
  %2011 = vmatprep.mubr.f32.mxu0 0.0
  %2012 = vmatmul.mubr.f32.gmra.mrb[0].mxu0 %v1870
  %v2013 = vpop.f32.mrb[0].mxu0
  %v2014 = vadd.f32 0.0, %v2013
  %v2015 = vpop.f32.mrb[0].mxu0
  %2016 = vmatprep.mubr.f32.mxu0 0.0
  %2017 = vmatmul.mubr.f32.gmra.mrb[0].mxu0 %v1871
  %v2018 = vpop.f32.mrb[0].mxu0
  %v2019 = vadd.f32 0.0, %v2018
  %v2020 = vpop.f32.mrb[0].mxu0
  %2021 = vmatprep.mubr.f32.mxu0 0.0
  %2022 = vmatmul.mubr.f32.gmra.mrb[0].mxu0 %v1872
  %v2023 = vpop.f32.mrb[0].mxu0
  %v2024 = vadd.f32 0.0, %v2023
  %v2025 = vpop.f32.mrb[0].mxu0
  %2026 = vmatprep.mubr.f32.mxu0 0.0
  %2027 = vmatmul.mubr.f32.gmra.mrb[0].mxu0 %v1873
  %v2028 = vpop.f32.mrb[0].mxu0
  %v2029 = vadd.f32 0.0, %v2028
  %v2030 = vpop.f32.mrb[0].mxu0
  %2031 = vmatprep.mubr.f32.mxu0 0.0
  %2032 = vmatmul.mubr.f32.gmra.mrb[0].mxu0 %v1874
  %v2033 = vpop.f32.mrb[0].mxu0
  %v2034 = vadd.f32 0.0, %v2033
  %v2035 = vpop.f32.mrb[0].mxu0
  %2036 = vmatprep.mubr.f32.mxu0 0.0
  %2037 = vmatmul.mubr.f32.gmra.mrb[0].mxu0 %v1875
  %v2038 = vpop.f32.mrb[0].mxu0
  %v2039 = vadd.f32 0.0, %v2038
  %v2040 = vpop.f32.mrb[0].mxu0
  %2041 = vmatprep.mubr.f32.mxu0 0.0
  %2042 = vmatmul.mubr.f32.gmra.mrb[0].mxu0 %v1876
  %v2043 = vpop.f32.mrb[0].mxu0
  %v2044 = vadd.f32 0.0, %v2043
  %v2045 = vpop.f32.mrb[0].mxu0
  %2046 = vmatprep.mubr.f32.mxu0 0.0
  %2047 = vmatmul.mubr.f32.gmra.mrb[0].mxu0 %v1877
  %v2048 = vpop.f32.mrb[0].mxu0
  %v2049 = vadd.f32 0.0, %v2048
  %v2050 = vpop.f32.mrb[0].mxu0
  %2051 = vmatprep.mubr.f32.mxu0 0.0
  %2052 = vmatmul.mubr.f32.gmra.mrb[0].mxu0 %v1878
  %v2053 = vpop.f32.mrb[0].mxu0
  %v2054 = vadd.f32 0.0, %v2053
  %v2055 = vpop.f32.mrb[0].mxu0
  %2056 = vmatprep.mubr.f32.mxu0 0.0
  %2057 = vmatmul.mubr.f32.gmra.mrb[0].mxu0 %v1879
  %v2058 = vpop.f32.mrb[0].mxu0
  %v2059 = vadd.f32 0.0, %v2058
  %v2060 = vpop.f32.mrb[0].mxu0
  %2061 = vmatprep.mubr.f32.mxu0 0.0
  %2062 = vmatmul.mubr.f32.gmra.mrb[0].mxu0 %v1880
  %v2063 = vpop.f32.mrb[0].mxu0
  %v2064 = vadd.f32 0.0, %v2063
  %v2065 = vpop.f32.mrb[0].mxu0
  %2066 = vmatprep.mubr.f32.mxu0 0.0
  %2067 = vmatmul.mubr.f32.gmra.mrb[0].mxu0 %v1881
  %v2068 = vpop.f32.mrb[0].mxu0
  %v2069 = vadd.f32 0.0, %v2068
  %v2070 = vpop.f32.mrb[0].mxu0
  %2071 = vmatprep.mubr.f32.mxu0 0.0
  %2072 = vmatmul.mubr.f32.gmra.mrb[0].mxu0 %v1882
  %v2073 = vpop.f32.mrb[0].mxu0
  %v2074 = vadd.f32 0.0, %v2073
  %v2075 = vpop.f32.mrb[0].mxu0
  %2076 = vmatprep.mubr.f32.mxu0 0.0
  %2077 = vmatmul.mubr.f32.gmra.mrb[0].mxu0 %v1883
  %v2078 = vpop.f32.mrb[0].mxu0
  %v2079 = vadd.f32 0.0, %v2078
  %v2080 = vpop.f32.mrb[0].mxu0
  %2081 = vmatprep.mubr.f32.mxu0 0.0
  %2082 = vmatmul.mubr.f32.gmra.mrb[0].mxu0 %v1884
  %v2083 = vpop.f32.mrb[0].mxu0
  %v2084 = vadd.f32 0.0, %v2083
  %v2085 = vpop.f32.mrb[0].mxu0
  %2086 = vmatprep.mubr.f32.mxu0 0.0
  %2087 = vmatmul.mubr.f32.gmra.mrb[0].mxu0 %v1885
  %v2088 = vpop.f32.mrb[0].mxu0
  %v2089 = vadd.f32 0.0, %v2088
  %v2090 = vpop.f32.mrb[0].mxu0
  %2091 = vdwg.mxu0
  %v2092 = vadd.f32 %v1836, %v1969
  %v2093 = vadd.f32 %v1837, %v1974
  %v2094 = vadd.f32 %v1838, %v1979
  %v2095 = vadd.f32 %v1839, %v1984
  %v2096 = vadd.f32 %v1840, %v1989
  %v2097 = vadd.f32 %v1841, %v1994
  %v2098 = vadd.f32 %v1842, %v1999
  %v2099 = vadd.f32 %v1843, %v2004
  %v2100 = vadd.f32 %v1844, %v2009
  %v2101 = vadd.f32 %v1845, %v2014
  %v2102 = vadd.f32 %v1846, %v2019
  %v2103 = vadd.f32 %v1847, %v2024
  %v2104 = vadd.f32 %v1848, %v2029
  %v2105 = vadd.f32 %v1849, %v2034
  %v2106 = vadd.f32 %v1850, %v2039
  %v2107 = vadd.f32 %v1851, %v2044
  %v2108 = vadd.f32 %v1852, %v2049
  %v2109 = vadd.f32 %v1853, %v2054
  %v2110 = vadd.f32 %v1854, %v2059
  %v2111 = vadd.f32 %v1855, %v2064
  %v2112 = vadd.f32 %v1856, %v2069
  %v2113 = vadd.f32 %v1857, %v2074
  %v2114 = vadd.f32 %v1858, %v2079
  %v2115 = vadd.f32 %v1859, %v2084
  %v2116 = vadd.f32 %v1860, %v2089
  %v2117 = vld [vmem:[#allocation2 + $0x14] sm:$0xff]
  %v2118 = vld [vmem:[#allocation2 + $0x1c] sm:$0xff]
  %v2119 = vld [vmem:[#allocation2 + $0x24] sm:$0xff]
  %v2120 = vld [vmem:[#allocation2 + $0x2c] sm:$0xff]
  %v2121 = vld [vmem:[#allocation2 + $0x34] sm:$0xff]
  %v2122 = vld [vmem:[#allocation2 + $0x3c] sm:$0xff]
  %v2123 = vld [vmem:[#allocation2 + $0x44] sm:$0xff]
  %v2124 = vld [vmem:[#allocation2 + $0x4c] sm:$0xff]
  %v2125 = vld [vmem:[#allocation2 + $0x54] sm:$0xff]
  %v2126 = vld [vmem:[#allocation2 + $0x5c] sm:$0xff]
  %v2127 = vld [vmem:[#allocation2 + $0x64] sm:$0xff]
  %v2128 = vld [vmem:[#allocation2 + $0x6c] sm:$0xff]
  %v2129 = vld [vmem:[#allocation2 + $0x74] sm:$0xff]
  %v2130 = vld [vmem:[#allocation2 + $0x7c] sm:$0xff]
  %v2131 = vld [vmem:[#allocation2 + $0x84] sm:$0xff]
  %v2132 = vld [vmem:[#allocation2 + $0x8c] sm:$0xff]
  %v2133 = vld [vmem:[#allocation2 + $0x94] sm:$0xff]
  %v2134 = vld [vmem:[#allocation2 + $0x9c] sm:$0xff]
  %v2135 = vld [vmem:[#allocation2 + $0xa4] sm:$0xff]
  %v2136 = vld [vmem:[#allocation2 + $0xac] sm:$0xff]
  %v2137 = vld [vmem:[#allocation2 + $0xb4] sm:$0xff]
  %v2138 = vld [vmem:[#allocation2 + $0xbc] sm:$0xff]
  %v2139 = vld [vmem:[#allocation2 + $0xc4] sm:$0xff]
  %v2140 = vld [vmem:[#allocation2 + $0xcc] sm:$0xff]
  %v2141 = vld [vmem:[#allocation2 + $0xd4] sm:$0xff]
  %v2142 = vld [vmem:[%s4 + $0x300] sm:$0xff]
  %v2143 = vld [vmem:[%s4 + $0x308] sm:$0xff]
  %v2144 = vld [vmem:[%s4 + $0x310] sm:$0xff]
  %v2145 = vld [vmem:[%s4 + $0x318] sm:$0xff]
  %v2146 = vld [vmem:[%s4 + $0x320] sm:$0xff]
  %v2147 = vld [vmem:[%s4 + $0x328] sm:$0xff]
  %v2148 = vld [vmem:[%s4 + $0x330] sm:$0xff]
  %v2149 = vld [vmem:[%s4 + $0x338] sm:$0xff]
  %v2150 = vld [vmem:[%s4 + $0x340] sm:$0xff]
  %v2151 = vld [vmem:[%s4 + $0x348] sm:$0xff]
  %v2152 = vld [vmem:[%s4 + $0x350] sm:$0xff]
  %v2153 = vld [vmem:[%s4 + $0x358] sm:$0xff]
  %v2154 = vld [vmem:[%s4 + $0x360] sm:$0xff]
  %v2155 = vld [vmem:[%s4 + $0x368] sm:$0xff]
  %v2156 = vld [vmem:[%s4 + $0x370] sm:$0xff]
  %v2157 = vld [vmem:[%s4 + $0x378] sm:$0xff]
  %2158 = vmatprep.subr.mxu0 0.0
  %2159 = vmatpush1.msra.mxu0 %v2142
  %2160 = vmatprep.subr.mxu0 0.0
  %2161 = vmatpush1.msra.mxu0 %v2143
  %2162 = vmatprep.subr.mxu0 0.0
  %2163 = vmatpush1.msra.mxu0 %v2144
  %2164 = vmatprep.subr.mxu0 0.0
  %2165 = vmatpush1.msra.mxu0 %v2145
  %2166 = vmatprep.subr.mxu0 0.0
  %2167 = vmatpush1.msra.mxu0 %v2146
  %2168 = vmatprep.subr.mxu0 0.0
  %2169 = vmatpush1.msra.mxu0 %v2147
  %2170 = vmatprep.subr.mxu0 0.0
  %2171 = vmatpush1.msra.mxu0 %v2148
  %2172 = vmatprep.subr.mxu0 0.0
  %2173 = vmatpush1.msra.mxu0 %v2149
  %2174 = vmatprep.subr.mxu0 0.0
  %2175 = vmatpush1.msra.mxu0 %v2150
  %2176 = vmatprep.subr.mxu0 0.0
  %2177 = vmatpush1.msra.mxu0 %v2151
  %2178 = vmatprep.subr.mxu0 0.0
  %2179 = vmatpush1.msra.mxu0 %v2152
  %2180 = vmatprep.subr.mxu0 0.0
  %2181 = vmatpush1.msra.mxu0 %v2153
  %2182 = vmatprep.subr.mxu0 0.0
  %2183 = vmatpush1.msra.mxu0 %v2154
  %2184 = vmatprep.subr.mxu0 0.0
  %2185 = vmatpush1.msra.mxu0 %v2155
  %2186 = vmatprep.subr.mxu0 0.0
  %2187 = vmatpush1.msra.mxu0 %v2156
  %2188 = vmatprep.subr.mxu0 0.0
  %2189 = vmatpush1.msra.mxu0 %v2157
  %2190 = vmatprep.subr.mxu0 0.0
  %2191 = vmatpush1.msra.mxu0 0.0
  %2192 = vmatprep.subr.mxu0 0.0
  %2193 = vmatpush1.msra.mxu0 0.0
  %2194 = vmatprep.subr.mxu0 0.0
  %2195 = vmatpush1.msra.mxu0 0.0
  %2196 = vmatprep.subr.mxu0 0.0
  %2197 = vmatpush1.msra.mxu0 0.0
  %2198 = vmatprep.subr.mxu0 0.0
  %2199 = vmatpush1.msra.mxu0 0.0
  %2200 = vmatprep.subr.mxu0 0.0
  %2201 = vmatpush1.msra.mxu0 0.0
  %2202 = vmatprep.subr.mxu0 0.0
  %2203 = vmatpush1.msra.mxu0 0.0
  %2204 = vmatprep.subr.mxu0 0.0
  %2205 = vmatpush1.msra.mxu0 0.0
  %2206 = vmatprep.subr.mxu0 0.0
  %2207 = vmatpush1.msra.mxu0 0.0
  %2208 = vmatprep.subr.mxu0 0.0
  %2209 = vmatpush1.msra.mxu0 0.0
  %2210 = vmatprep.subr.mxu0 0.0
  %2211 = vmatpush1.msra.mxu0 0.0
  %2212 = vmatprep.subr.mxu0 0.0
  %2213 = vmatpush1.msra.mxu0 0.0
  %2214 = vmatprep.subr.mxu0 0.0
  %2215 = vmatpush1.msra.mxu0 0.0
  %2216 = vmatprep.subr.mxu0 0.0
  %2217 = vmatpush1.msra.mxu0 0.0
  %2218 = vmatprep.subr.mxu0 0.0
  %2219 = vmatpush1.msra.mxu0 0.0
  %2220 = vmatprep.subr.mxu0 0.0
  %2221 = vmatpush1.msra.mxu0 0.0
  %2222 = vmatprep.mubr.f32.mxu0 0.0
  %2223 = vmatmul.mubr.f32.gmra.mrb[0].mxu0 %v2117
  %v2224 = vpop.f32.mrb[0].mxu0
  %v2225 = vadd.f32 0.0, %v2224
  %v2226 = vpop.f32.mrb[0].mxu0
  %2227 = vmatprep.mubr.f32.mxu0 0.0
  %2228 = vmatmul.mubr.f32.gmra.mrb[0].mxu0 %v2118
  %v2229 = vpop.f32.mrb[0].mxu0
  %v2230 = vadd.f32 0.0, %v2229
  %v2231 = vpop.f32.mrb[0].mxu0
  %2232 = vmatprep.mubr.f32.mxu0 0.0
  %2233 = vmatmul.mubr.f32.gmra.mrb[0].mxu0 %v2119
  %v2234 = vpop.f32.mrb[0].mxu0
  %v2235 = vadd.f32 0.0, %v2234
  %v2236 = vpop.f32.mrb[0].mxu0
  %2237 = vmatprep.mubr.f32.mxu0 0.0
  %2238 = vmatmul.mubr.f32.gmra.mrb[0].mxu0 %v2120
  %v2239 = vpop.f32.mrb[0].mxu0
  %v2240 = vadd.f32 0.0, %v2239
  %v2241 = vpop.f32.mrb[0].mxu0
  %2242 = vmatprep.mubr.f32.mxu0 0.0
  %2243 = vmatmul.mubr.f32.gmra.mrb[0].mxu0 %v2121
  %v2244 = vpop.f32.mrb[0].mxu0
  %v2245 = vadd.f32 0.0, %v2244
  %v2246 = vpop.f32.mrb[0].mxu0
  %2247 = vmatprep.mubr.f32.mxu0 0.0
  %2248 = vmatmul.mubr.f32.gmra.mrb[0].mxu0 %v2122
  %v2249 = vpop.f32.mrb[0].mxu0
  %v2250 = vadd.f32 0.0, %v2249
  %v2251 = vpop.f32.mrb[0].mxu0
  %2252 = vmatprep.mubr.f32.mxu0 0.0
  %2253 = vmatmul.mubr.f32.gmra.mrb[0].mxu0 %v2123
  %v2254 = vpop.f32.mrb[0].mxu0
  %v2255 = vadd.f32 0.0, %v2254
  %v2256 = vpop.f32.mrb[0].mxu0
  %2257 = vmatprep.mubr.f32.mxu0 0.0
  %2258 = vmatmul.mubr.f32.gmra.mrb[0].mxu0 %v2124
  %v2259 = vpop.f32.mrb[0].mxu0
  %v2260 = vadd.f32 0.0, %v2259
  %v2261 = vpop.f32.mrb[0].mxu0
  %2262 = vmatprep.mubr.f32.mxu0 0.0
  %2263 = vmatmul.mubr.f32.gmra.mrb[0].mxu0 %v2125
  %v2264 = vpop.f32.mrb[0].mxu0
  %v2265 = vadd.f32 0.0, %v2264
  %v2266 = vpop.f32.mrb[0].mxu0
  %2267 = vmatprep.mubr.f32.mxu0 0.0
  %2268 = vmatmul.mubr.f32.gmra.mrb[0].mxu0 %v2126
  %v2269 = vpop.f32.mrb[0].mxu0
  %v2270 = vadd.f32 0.0, %v2269
  %v2271 = vpop.f32.mrb[0].mxu0
  %2272 = vmatprep.mubr.f32.mxu0 0.0
  %2273 = vmatmul.mubr.f32.gmra.mrb[0].mxu0 %v2127
  %v2274 = vpop.f32.mrb[0].mxu0
  %v2275 = vadd.f32 0.0, %v2274
  %v2276 = vpop.f32.mrb[0].mxu0
  %2277 = vmatprep.mubr.f32.mxu0 0.0
  %2278 = vmatmul.mubr.f32.gmra.mrb[0].mxu0 %v2128
  %v2279 = vpop.f32.mrb[0].mxu0
  %v2280 = vadd.f32 0.0, %v2279
  %v2281 = vpop.f32.mrb[0].mxu0
  %2282 = vmatprep.mubr.f32.mxu0 0.0
  %2283 = vmatmul.mubr.f32.gmra.mrb[0].mxu0 %v2129
  %v2284 = vpop.f32.mrb[0].mxu0
  %v2285 = vadd.f32 0.0, %v2284
  %v2286 = vpop.f32.mrb[0].mxu0
  %2287 = vmatprep.mubr.f32.mxu0 0.0
  %2288 = vmatmul.mubr.f32.gmra.mrb[0].mxu0 %v2130
  %v2289 = vpop.f32.mrb[0].mxu0
  %v2290 = vadd.f32 0.0, %v2289
  %v2291 = vpop.f32.mrb[0].mxu0
  %2292 = vmatprep.mubr.f32.mxu0 0.0
  %2293 = vmatmul.mubr.f32.gmra.mrb[0].mxu0 %v2131
  %v2294 = vpop.f32.mrb[0].mxu0
  %v2295 = vadd.f32 0.0, %v2294
  %v2296 = vpop.f32.mrb[0].mxu0
  %2297 = vmatprep.mubr.f32.mxu0 0.0
  %2298 = vmatmul.mubr.f32.gmra.mrb[0].mxu0 %v2132
  %v2299 = vpop.f32.mrb[0].mxu0
  %v2300 = vadd.f32 0.0, %v2299
  %v2301 = vpop.f32.mrb[0].mxu0
  %2302 = vmatprep.mubr.f32.mxu0 0.0
  %2303 = vmatmul.mubr.f32.gmra.mrb[0].mxu0 %v2133
  %v2304 = vpop.f32.mrb[0].mxu0
  %v2305 = vadd.f32 0.0, %v2304
  %v2306 = vpop.f32.mrb[0].mxu0
  %2307 = vmatprep.mubr.f32.mxu0 0.0
  %2308 = vmatmul.mubr.f32.gmra.mrb[0].mxu0 %v2134
  %v2309 = vpop.f32.mrb[0].mxu0
  %v2310 = vadd.f32 0.0, %v2309
  %v2311 = vpop.f32.mrb[0].mxu0
  %2312 = vmatprep.mubr.f32.mxu0 0.0
  %2313 = vmatmul.mubr.f32.gmra.mrb[0].mxu0 %v2135
  %v2314 = vpop.f32.mrb[0].mxu0
  %v2315 = vadd.f32 0.0, %v2314
  %v2316 = vpop.f32.mrb[0].mxu0
  %2317 = vmatprep.mubr.f32.mxu0 0.0
  %2318 = vmatmul.mubr.f32.gmra.mrb[0].mxu0 %v2136
  %v2319 = vpop.f32.mrb[0].mxu0
  %v2320 = vadd.f32 0.0, %v2319
  %v2321 = vpop.f32.mrb[0].mxu0
  %2322 = vmatprep.mubr.f32.mxu0 0.0
  %2323 = vmatmul.mubr.f32.gmra.mrb[0].mxu0 %v2137
  %v2324 = vpop.f32.mrb[0].mxu0
  %v2325 = vadd.f32 0.0, %v2324
  %v2326 = vpop.f32.mrb[0].mxu0
  %2327 = vmatprep.mubr.f32.mxu0 0.0
  %2328 = vmatmul.mubr.f32.gmra.mrb[0].mxu0 %v2138
  %v2329 = vpop.f32.mrb[0].mxu0
  %v2330 = vadd.f32 0.0, %v2329
  %v2331 = vpop.f32.mrb[0].mxu0
  %2332 = vmatprep.mubr.f32.mxu0 0.0
  %2333 = vmatmul.mubr.f32.gmra.mrb[0].mxu0 %v2139
  %v2334 = vpop.f32.mrb[0].mxu0
  %v2335 = vadd.f32 0.0, %v2334
  %v2336 = vpop.f32.mrb[0].mxu0
  %2337 = vmatprep.mubr.f32.mxu0 0.0
  %2338 = vmatmul.mubr.f32.gmra.mrb[0].mxu0 %v2140
  %v2339 = vpop.f32.mrb[0].mxu0
  %v2340 = vadd.f32 0.0, %v2339
  %v2341 = vpop.f32.mrb[0].mxu0
  %2342 = vmatprep.mubr.f32.mxu0 0.0
  %2343 = vmatmul.mubr.f32.gmra.mrb[0].mxu0 %v2141
  %v2344 = vpop.f32.mrb[0].mxu0
  %v2345 = vadd.f32 0.0, %v2344
  %v2346 = vpop.f32.mrb[0].mxu0
  %2347 = vdwg.mxu0
  %v2348 = vadd.f32 %v2092, %v2225
  %v2349 = vadd.f32 %v2093, %v2230
  %v2350 = vadd.f32 %v2094, %v2235
  %v2351 = vadd.f32 %v2095, %v2240
  %v2352 = vadd.f32 %v2096, %v2245
  %v2353 = vadd.f32 %v2097, %v2250
  %v2354 = vadd.f32 %v2098, %v2255
  %v2355 = vadd.f32 %v2099, %v2260
  %v2356 = vadd.f32 %v2100, %v2265
  %v2357 = vadd.f32 %v2101, %v2270
  %v2358 = vadd.f32 %v2102, %v2275
  %v2359 = vadd.f32 %v2103, %v2280
  %v2360 = vadd.f32 %v2104, %v2285
  %v2361 = vadd.f32 %v2105, %v2290
  %v2362 = vadd.f32 %v2106, %v2295
  %v2363 = vadd.f32 %v2107, %v2300
  %v2364 = vadd.f32 %v2108, %v2305
  %v2365 = vadd.f32 %v2109, %v2310
  %v2366 = vadd.f32 %v2110, %v2315
  %v2367 = vadd.f32 %v2111, %v2320
  %v2368 = vadd.f32 %v2112, %v2325
  %v2369 = vadd.f32 %v2113, %v2330
  %v2370 = vadd.f32 %v2114, %v2335
  %v2371 = vadd.f32 %v2115, %v2340
  %v2372 = vadd.f32 %v2116, %v2345
  %v2373 = vld [vmem:[#allocation2 + $0x15] sm:$0xff]
  %v2374 = vld [vmem:[#allocation2 + $0x1d] sm:$0xff]
  %v2375 = vld [vmem:[#allocation2 + $0x25] sm:$0xff]
  %v2376 = vld [vmem:[#allocation2 + $0x2d] sm:$0xff]
  %v2377 = vld [vmem:[#allocation2 + $0x35] sm:$0xff]
  %v2378 = vld [vmem:[#allocation2 + $0x3d] sm:$0xff]
  %v2379 = vld [vmem:[#allocation2 + $0x45] sm:$0xff]
  %v2380 = vld [vmem:[#allocation2 + $0x4d] sm:$0xff]
  %v2381 = vld [vmem:[#allocation2 + $0x55] sm:$0xff]
  %v2382 = vld [vmem:[#allocation2 + $0x5d] sm:$0xff]
  %v2383 = vld [vmem:[#allocation2 + $0x65] sm:$0xff]
  %v2384 = vld [vmem:[#allocation2 + $0x6d] sm:$0xff]
  %v2385 = vld [vmem:[#allocation2 + $0x75] sm:$0xff]
  %v2386 = vld [vmem:[#allocation2 + $0x7d] sm:$0xff]
  %v2387 = vld [vmem:[#allocation2 + $0x85] sm:$0xff]
  %v2388 = vld [vmem:[#allocation2 + $0x8d] sm:$0xff]
  %v2389 = vld [vmem:[#allocation2 + $0x95] sm:$0xff]
  %v2390 = vld [vmem:[#allocation2 + $0x9d] sm:$0xff]
  %v2391 = vld [vmem:[#allocation2 + $0xa5] sm:$0xff]
  %v2392 = vld [vmem:[#allocation2 + $0xad] sm:$0xff]
  %v2393 = vld [vmem:[#allocation2 + $0xb5] sm:$0xff]
  %v2394 = vld [vmem:[#allocation2 + $0xbd] sm:$0xff]
  %v2395 = vld [vmem:[#allocation2 + $0xc5] sm:$0xff]
  %v2396 = vld [vmem:[#allocation2 + $0xcd] sm:$0xff]
  %v2397 = vld [vmem:[#allocation2 + $0xd5] sm:$0xff]
  %v2398 = vld [vmem:[%s4 + $0x380] sm:$0xff]
  %v2399 = vld [vmem:[%s4 + $0x388] sm:$0xff]
  %v2400 = vld [vmem:[%s4 + $0x390] sm:$0xff]
  %v2401 = vld [vmem:[%s4 + $0x398] sm:$0xff]
  %v2402 = vld [vmem:[%s4 + $0x3a0] sm:$0xff]
  %v2403 = vld [vmem:[%s4 + $0x3a8] sm:$0xff]
  %v2404 = vld [vmem:[%s4 + $0x3b0] sm:$0xff]
  %v2405 = vld [vmem:[%s4 + $0x3b8] sm:$0xff]
  %v2406 = vld [vmem:[%s4 + $0x3c0] sm:$0xff]
  %v2407 = vld [vmem:[%s4 + $0x3c8] sm:$0xff]
  %v2408 = vld [vmem:[%s4 + $0x3d0] sm:$0xff]
  %v2409 = vld [vmem:[%s4 + $0x3d8] sm:$0xff]
  %v2410 = vld [vmem:[%s4 + $0x3e0] sm:$0xff]
  %v2411 = vld [vmem:[%s4 + $0x3e8] sm:$0xff]
  %v2412 = vld [vmem:[%s4 + $0x3f0] sm:$0xff]
  %v2413 = vld [vmem:[%s4 + $0x3f8] sm:$0xff]
  %2414 = vmatprep.subr.mxu0 0.0
  %2415 = vmatpush1.msra.mxu0 %v2398
  %2416 = vmatprep.subr.mxu0 0.0
  %2417 = vmatpush1.msra.mxu0 %v2399
  %2418 = vmatprep.subr.mxu0 0.0
  %2419 = vmatpush1.msra.mxu0 %v2400
  %2420 = vmatprep.subr.mxu0 0.0
  %2421 = vmatpush1.msra.mxu0 %v2401
  %2422 = vmatprep.subr.mxu0 0.0
  %2423 = vmatpush1.msra.mxu0 %v2402
  %2424 = vmatprep.subr.mxu0 0.0
  %2425 = vmatpush1.msra.mxu0 %v2403
  %2426 = vmatprep.subr.mxu0 0.0
  %2427 = vmatpush1.msra.mxu0 %v2404
  %2428 = vmatprep.subr.mxu0 0.0
  %2429 = vmatpush1.msra.mxu0 %v2405
  %2430 = vmatprep.subr.mxu0 0.0
  %2431 = vmatpush1.msra.mxu0 %v2406
  %2432 = vmatprep.subr.mxu0 0.0
  %2433 = vmatpush1.msra.mxu0 %v2407
  %2434 = vmatprep.subr.mxu0 0.0
  %2435 = vmatpush1.msra.mxu0 %v2408
  %2436 = vmatprep.subr.mxu0 0.0
  %2437 = vmatpush1.msra.mxu0 %v2409
  %2438 = vmatprep.subr.mxu0 0.0
  %2439 = vmatpush1.msra.mxu0 %v2410
  %2440 = vmatprep.subr.mxu0 0.0
  %2441 = vmatpush1.msra.mxu0 %v2411
  %2442 = vmatprep.subr.mxu0 0.0
  %2443 = vmatpush1.msra.mxu0 %v2412
  %2444 = vmatprep.subr.mxu0 0.0
  %2445 = vmatpush1.msra.mxu0 %v2413
  %2446 = vmatprep.subr.mxu0 0.0
  %2447 = vmatpush1.msra.mxu0 0.0
  %2448 = vmatprep.subr.mxu0 0.0
  %2449 = vmatpush1.msra.mxu0 0.0
  %2450 = vmatprep.subr.mxu0 0.0
  %2451 = vmatpush1.msra.mxu0 0.0
  %2452 = vmatprep.subr.mxu0 0.0
  %2453 = vmatpush1.msra.mxu0 0.0
  %2454 = vmatprep.subr.mxu0 0.0
  %2455 = vmatpush1.msra.mxu0 0.0
  %2456 = vmatprep.subr.mxu0 0.0
  %2457 = vmatpush1.msra.mxu0 0.0
  %2458 = vmatprep.subr.mxu0 0.0
  %2459 = vmatpush1.msra.mxu0 0.0
  %2460 = vmatprep.subr.mxu0 0.0
  %2461 = vmatpush1.msra.mxu0 0.0
  %2462 = vmatprep.subr.mxu0 0.0
  %2463 = vmatpush1.msra.mxu0 0.0
  %2464 = vmatprep.subr.mxu0 0.0
  %2465 = vmatpush1.msra.mxu0 0.0
  %2466 = vmatprep.subr.mxu0 0.0
  %2467 = vmatpush1.msra.mxu0 0.0
  %2468 = vmatprep.subr.mxu0 0.0
  %2469 = vmatpush1.msra.mxu0 0.0
  %2470 = vmatprep.subr.mxu0 0.0
  %2471 = vmatpush1.msra.mxu0 0.0
  %2472 = vmatprep.subr.mxu0 0.0
  %2473 = vmatpush1.msra.mxu0 0.0
  %2474 = vmatprep.subr.mxu0 0.0
  %2475 = vmatpush1.msra.mxu0 0.0
  %2476 = vmatprep.subr.mxu0 0.0
  %2477 = vmatpush1.msra.mxu0 0.0
  %2478 = vmatprep.mubr.f32.mxu0 0.0
  %2479 = vmatmul.mubr.f32.gmra.mrb[0].mxu0 %v2373
  %v2480 = vpop.f32.mrb[0].mxu0
  %v2481 = vadd.f32 0.0, %v2480
  %v2482 = vpop.f32.mrb[0].mxu0
  %2483 = vmatprep.mubr.f32.mxu0 0.0
  %2484 = vmatmul.mubr.f32.gmra.mrb[0].mxu0 %v2374
  %v2485 = vpop.f32.mrb[0].mxu0
  %v2486 = vadd.f32 0.0, %v2485
  %v2487 = vpop.f32.mrb[0].mxu0
  %2488 = vmatprep.mubr.f32.mxu0 0.0
  %2489 = vmatmul.mubr.f32.gmra.mrb[0].mxu0 %v2375
  %v2490 = vpop.f32.mrb[0].mxu0
  %v2491 = vadd.f32 0.0, %v2490
  %v2492 = vpop.f32.mrb[0].mxu0
  %2493 = vmatprep.mubr.f32.mxu0 0.0
  %2494 = vmatmul.mubr.f32.gmra.mrb[0].mxu0 %v2376
  %v2495 = vpop.f32.mrb[0].mxu0
  %v2496 = vadd.f32 0.0, %v2495
  %v2497 = vpop.f32.mrb[0].mxu0
  %2498 = vmatprep.mubr.f32.mxu0 0.0
  %2499 = vmatmul.mubr.f32.gmra.mrb[0].mxu0 %v2377
  %v2500 = vpop.f32.mrb[0].mxu0
  %v2501 = vadd.f32 0.0, %v2500
  %v2502 = vpop.f32.mrb[0].mxu0
  %2503 = vmatprep.mubr.f32.mxu0 0.0
  %2504 = vmatmul.mubr.f32.gmra.mrb[0].mxu0 %v2378
  %v2505 = vpop.f32.mrb[0].mxu0
  %v2506 = vadd.f32 0.0, %v2505
  %v2507 = vpop.f32.mrb[0].mxu0
  %2508 = vmatprep.mubr.f32.mxu0 0.0
  %2509 = vmatmul.mubr.f32.gmra.mrb[0].mxu0 %v2379
  %v2510 = vpop.f32.mrb[0].mxu0
  %v2511 = vadd.f32 0.0, %v2510
  %v2512 = vpop.f32.mrb[0].mxu0
  %2513 = vmatprep.mubr.f32.mxu0 0.0
  %2514 = vmatmul.mubr.f32.gmra.mrb[0].mxu0 %v2380
  %v2515 = vpop.f32.mrb[0].mxu0
  %v2516 = vadd.f32 0.0, %v2515
  %v2517 = vpop.f32.mrb[0].mxu0
  %2518 = vmatprep.mubr.f32.mxu0 0.0
  %2519 = vmatmul.mubr.f32.gmra.mrb[0].mxu0 %v2381
  %v2520 = vpop.f32.mrb[0].mxu0
  %v2521 = vadd.f32 0.0, %v2520
  %v2522 = vpop.f32.mrb[0].mxu0
  %2523 = vmatprep.mubr.f32.mxu0 0.0
  %2524 = vmatmul.mubr.f32.gmra.mrb[0].mxu0 %v2382
  %v2525 = vpop.f32.mrb[0].mxu0
  %v2526 = vadd.f32 0.0, %v2525
  %v2527 = vpop.f32.mrb[0].mxu0
  %2528 = vmatprep.mubr.f32.mxu0 0.0
  %2529 = vmatmul.mubr.f32.gmra.mrb[0].mxu0 %v2383
  %v2530 = vpop.f32.mrb[0].mxu0
  %v2531 = vadd.f32 0.0, %v2530
  %v2532 = vpop.f32.mrb[0].mxu0
  %2533 = vmatprep.mubr.f32.mxu0 0.0
  %2534 = vmatmul.mubr.f32.gmra.mrb[0].mxu0 %v2384
  %v2535 = vpop.f32.mrb[0].mxu0
  %v2536 = vadd.f32 0.0, %v2535
  %v2537 = vpop.f32.mrb[0].mxu0
  %2538 = vmatprep.mubr.f32.mxu0 0.0
  %2539 = vmatmul.mubr.f32.gmra.mrb[0].mxu0 %v2385
  %v2540 = vpop.f32.mrb[0].mxu0
  %v2541 = vadd.f32 0.0, %v2540
  %v2542 = vpop.f32.mrb[0].mxu0
  %2543 = vmatprep.mubr.f32.mxu0 0.0
  %2544 = vmatmul.mubr.f32.gmra.mrb[0].mxu0 %v2386
  %v2545 = vpop.f32.mrb[0].mxu0
  %v2546 = vadd.f32 0.0, %v2545
  %v2547 = vpop.f32.mrb[0].mxu0
  %2548 = vmatprep.mubr.f32.mxu0 0.0
  %2549 = vmatmul.mubr.f32.gmra.mrb[0].mxu0 %v2387
  %v2550 = vpop.f32.mrb[0].mxu0
  %v2551 = vadd.f32 0.0, %v2550
  %v2552 = vpop.f32.mrb[0].mxu0
  %2553 = vmatprep.mubr.f32.mxu0 0.0
  %2554 = vmatmul.mubr.f32.gmra.mrb[0].mxu0 %v2388
  %v2555 = vpop.f32.mrb[0].mxu0
  %v2556 = vadd.f32 0.0, %v2555
  %v2557 = vpop.f32.mrb[0].mxu0
  %2558 = vmatprep.mubr.f32.mxu0 0.0
  %2559 = vmatmul.mubr.f32.gmra.mrb[0].mxu0 %v2389
  %v2560 = vpop.f32.mrb[0].mxu0
  %v2561 = vadd.f32 0.0, %v2560
  %v2562 = vpop.f32.mrb[0].mxu0
  %2563 = vmatprep.mubr.f32.mxu0 0.0
  %2564 = vmatmul.mubr.f32.gmra.mrb[0].mxu0 %v2390
  %v2565 = vpop.f32.mrb[0].mxu0
  %v2566 = vadd.f32 0.0, %v2565
  %v2567 = vpop.f32.mrb[0].mxu0
  %2568 = vmatprep.mubr.f32.mxu0 0.0
  %2569 = vmatmul.mubr.f32.gmra.mrb[0].mxu0 %v2391
  %v2570 = vpop.f32.mrb[0].mxu0
  %v2571 = vadd.f32 0.0, %v2570
  %v2572 = vpop.f32.mrb[0].mxu0
  %2573 = vmatprep.mubr.f32.mxu0 0.0
  %2574 = vmatmul.mubr.f32.gmra.mrb[0].mxu0 %v2392
  %v2575 = vpop.f32.mrb[0].mxu0
  %v2576 = vadd.f32 0.0, %v2575
  %v2577 = vpop.f32.mrb[0].mxu0
  %2578 = vmatprep.mubr.f32.mxu0 0.0
  %2579 = vmatmul.mubr.f32.gmra.mrb[0].mxu0 %v2393
  %v2580 = vpop.f32.mrb[0].mxu0
  %v2581 = vadd.f32 0.0, %v2580
  %v2582 = vpop.f32.mrb[0].mxu0
  %2583 = vmatprep.mubr.f32.mxu0 0.0
  %2584 = vmatmul.mubr.f32.gmra.mrb[0].mxu0 %v2394
  %v2585 = vpop.f32.mrb[0].mxu0
  %v2586 = vadd.f32 0.0, %v2585
  %v2587 = vpop.f32.mrb[0].mxu0
  %2588 = vmatprep.mubr.f32.mxu0 0.0
  %2589 = vmatmul.mubr.f32.gmra.mrb[0].mxu0 %v2395
  %v2590 = vpop.f32.mrb[0].mxu0
  %v2591 = vadd.f32 0.0, %v2590
  %v2592 = vpop.f32.mrb[0].mxu0
  %2593 = vmatprep.mubr.f32.mxu0 0.0
  %2594 = vmatmul.mubr.f32.gmra.mrb[0].mxu0 %v2396
  %v2595 = vpop.f32.mrb[0].mxu0
  %v2596 = vadd.f32 0.0, %v2595
  %v2597 = vpop.f32.mrb[0].mxu0
  %2598 = vmatprep.mubr.f32.mxu0 0.0
  %2599 = vmatmul.mubr.f32.gmra.mrb[0].mxu0 %v2397
  %v2600 = vpop.f32.mrb[0].mxu0
  %v2601 = vadd.f32 0.0, %v2600
  %v2602 = vpop.f32.mrb[0].mxu0
  %2603 = vdwg.mxu0
  %v2604 = vadd.f32 %v2348, %v2481
  %v2605 = vadd.f32 %v2349, %v2486
  %v2606 = vadd.f32 %v2350, %v2491
  %v2607 = vadd.f32 %v2351, %v2496
  %v2608 = vadd.f32 %v2352, %v2501
  %v2609 = vadd.f32 %v2353, %v2506
  %v2610 = vadd.f32 %v2354, %v2511
  %v2611 = vadd.f32 %v2355, %v2516
  %v2612 = vadd.f32 %v2356, %v2521
  %v2613 = vadd.f32 %v2357, %v2526
  %v2614 = vadd.f32 %v2358, %v2531
  %v2615 = vadd.f32 %v2359, %v2536
  %v2616 = vadd.f32 %v2360, %v2541
  %v2617 = vadd.f32 %v2361, %v2546
  %v2618 = vadd.f32 %v2362, %v2551
  %v2619 = vadd.f32 %v2363, %v2556
  %v2620 = vadd.f32 %v2364, %v2561
  %v2621 = vadd.f32 %v2365, %v2566
  %v2622 = vadd.f32 %v2366, %v2571
  %v2623 = vadd.f32 %v2367, %v2576
  %v2624 = vadd.f32 %v2368, %v2581
  %v2625 = vadd.f32 %v2369, %v2586
  %v2626 = vadd.f32 %v2370, %v2591
  %v2627 = vadd.f32 %v2371, %v2596
  %v2628 = vadd.f32 %v2372, %v2601
  %v2629 = vld [vmem:[#allocation2 + $0x16] sm:$0xff]
  %v2630 = vld [vmem:[#allocation2 + $0x1e] sm:$0xff]
  %v2631 = vld [vmem:[#allocation2 + $0x26] sm:$0xff]
  %v2632 = vld [vmem:[#allocation2 + $0x2e] sm:$0xff]
  %v2633 = vld [vmem:[#allocation2 + $0x36] sm:$0xff]
  %v2634 = vld [vmem:[#allocation2 + $0x3e] sm:$0xff]
  %v2635 = vld [vmem:[#allocation2 + $0x46] sm:$0xff]
  %v2636 = vld [vmem:[#allocation2 + $0x4e] sm:$0xff]
  %v2637 = vld [vmem:[#allocation2 + $0x56] sm:$0xff]
  %v2638 = vld [vmem:[#allocation2 + $0x5e] sm:$0xff]
  %v2639 = vld [vmem:[#allocation2 + $0x66] sm:$0xff]
  %v2640 = vld [vmem:[#allocation2 + $0x6e] sm:$0xff]
  %v2641 = vld [vmem:[#allocation2 + $0x76] sm:$0xff]
  %v2642 = vld [vmem:[#allocation2 + $0x7e] sm:$0xff]
  %v2643 = vld [vmem:[#allocation2 + $0x86] sm:$0xff]
  %v2644 = vld [vmem:[#allocation2 + $0x8e] sm:$0xff]
  %v2645 = vld [vmem:[#allocation2 + $0x96] sm:$0xff]
  %v2646 = vld [vmem:[#allocation2 + $0x9e] sm:$0xff]
  %v2647 = vld [vmem:[#allocation2 + $0xa6] sm:$0xff]
  %v2648 = vld [vmem:[#allocation2 + $0xae] sm:$0xff]
  %v2649 = vld [vmem:[#allocation2 + $0xb6] sm:$0xff]
  %v2650 = vld [vmem:[#allocation2 + $0xbe] sm:$0xff]
  %v2651 = vld [vmem:[#allocation2 + $0xc6] sm:$0xff]
  %v2652 = vld [vmem:[#allocation2 + $0xce] sm:$0xff]
  %v2653 = vld [vmem:[#allocation2 + $0xd6] sm:$0xff]
  %v2654 = vld [vmem:[%s4 + $0x400] sm:$0xff]
  %v2655 = vld [vmem:[%s4 + $0x408] sm:$0xff]
  %v2656 = vld [vmem:[%s4 + $0x410] sm:$0xff]
  %v2657 = vld [vmem:[%s4 + $0x418] sm:$0xff]
  %v2658 = vld [vmem:[%s4 + $0x420] sm:$0xff]
  %v2659 = vld [vmem:[%s4 + $0x428] sm:$0xff]
  %v2660 = vld [vmem:[%s4 + $0x430] sm:$0xff]
  %v2661 = vld [vmem:[%s4 + $0x438] sm:$0xff]
  %v2662 = vld [vmem:[%s4 + $0x440] sm:$0xff]
  %v2663 = vld [vmem:[%s4 + $0x448] sm:$0xff]
  %v2664 = vld [vmem:[%s4 + $0x450] sm:$0xff]
  %v2665 = vld [vmem:[%s4 + $0x458] sm:$0xff]
  %v2666 = vld [vmem:[%s4 + $0x460] sm:$0xff]
  %v2667 = vld [vmem:[%s4 + $0x468] sm:$0xff]
  %v2668 = vld [vmem:[%s4 + $0x470] sm:$0xff]
  %v2669 = vld [vmem:[%s4 + $0x478] sm:$0xff]
  %2670 = vmatprep.subr.mxu0 0.0
  %2671 = vmatpush1.msra.mxu0 %v2654
  %2672 = vmatprep.subr.mxu0 0.0
  %2673 = vmatpush1.msra.mxu0 %v2655
  %2674 = vmatprep.subr.mxu0 0.0
  %2675 = vmatpush1.msra.mxu0 %v2656
  %2676 = vmatprep.subr.mxu0 0.0
  %2677 = vmatpush1.msra.mxu0 %v2657
  %2678 = vmatprep.subr.mxu0 0.0
  %2679 = vmatpush1.msra.mxu0 %v2658
  %2680 = vmatprep.subr.mxu0 0.0
  %2681 = vmatpush1.msra.mxu0 %v2659
  %2682 = vmatprep.subr.mxu0 0.0
  %2683 = vmatpush1.msra.mxu0 %v2660
  %2684 = vmatprep.subr.mxu0 0.0
  %2685 = vmatpush1.msra.mxu0 %v2661
  %2686 = vmatprep.subr.mxu0 0.0
  %2687 = vmatpush1.msra.mxu0 %v2662
  %2688 = vmatprep.subr.mxu0 0.0
  %2689 = vmatpush1.msra.mxu0 %v2663
  %2690 = vmatprep.subr.mxu0 0.0
  %2691 = vmatpush1.msra.mxu0 %v2664
  %2692 = vmatprep.subr.mxu0 0.0
  %2693 = vmatpush1.msra.mxu0 %v2665
  %2694 = vmatprep.subr.mxu0 0.0
  %2695 = vmatpush1.msra.mxu0 %v2666
  %2696 = vmatprep.subr.mxu0 0.0
  %2697 = vmatpush1.msra.mxu0 %v2667
  %2698 = vmatprep.subr.mxu0 0.0
  %2699 = vmatpush1.msra.mxu0 %v2668
  %2700 = vmatprep.subr.mxu0 0.0
  %2701 = vmatpush1.msra.mxu0 %v2669
  %2702 = vmatprep.subr.mxu0 0.0
  %2703 = vmatpush1.msra.mxu0 0.0
  %2704 = vmatprep.subr.mxu0 0.0
  %2705 = vmatpush1.msra.mxu0 0.0
  %2706 = vmatprep.subr.mxu0 0.0
  %2707 = vmatpush1.msra.mxu0 0.0
  %2708 = vmatprep.subr.mxu0 0.0
  %2709 = vmatpush1.msra.mxu0 0.0
  %2710 = vmatprep.subr.mxu0 0.0
  %2711 = vmatpush1.msra.mxu0 0.0
  %2712 = vmatprep.subr.mxu0 0.0
  %2713 = vmatpush1.msra.mxu0 0.0
  %2714 = vmatprep.subr.mxu0 0.0
  %2715 = vmatpush1.msra.mxu0 0.0
  %2716 = vmatprep.subr.mxu0 0.0
  %2717 = vmatpush1.msra.mxu0 0.0
  %2718 = vmatprep.subr.mxu0 0.0
  %2719 = vmatpush1.msra.mxu0 0.0
  %2720 = vmatprep.subr.mxu0 0.0
  %2721 = vmatpush1.msra.mxu0 0.0
  %2722 = vmatprep.subr.mxu0 0.0
  %2723 = vmatpush1.msra.mxu0 0.0
  %2724 = vmatprep.subr.mxu0 0.0
  %2725 = vmatpush1.msra.mxu0 0.0
  %2726 = vmatprep.subr.mxu0 0.0
  %2727 = vmatpush1.msra.mxu0 0.0
  %2728 = vmatprep.subr.mxu0 0.0
  %2729 = vmatpush1.msra.mxu0 0.0
  %2730 = vmatprep.subr.mxu0 0.0
  %2731 = vmatpush1.msra.mxu0 0.0
  %2732 = vmatprep.subr.mxu0 0.0
  %2733 = vmatpush1.msra.mxu0 0.0
  %2734 = vmatprep.mubr.f32.mxu0 0.0
  %2735 = vmatmul.mubr.f32.gmra.mrb[0].mxu0 %v2629
  %v2736 = vpop.f32.mrb[0].mxu0
  %v2737 = vadd.f32 0.0, %v2736
  %v2738 = vpop.f32.mrb[0].mxu0
  %2739 = vmatprep.mubr.f32.mxu0 0.0
  %2740 = vmatmul.mubr.f32.gmra.mrb[0].mxu0 %v2630
  %v2741 = vpop.f32.mrb[0].mxu0
  %v2742 = vadd.f32 0.0, %v2741
  %v2743 = vpop.f32.mrb[0].mxu0
  %2744 = vmatprep.mubr.f32.mxu0 0.0
  %2745 = vmatmul.mubr.f32.gmra.mrb[0].mxu0 %v2631
  %v2746 = vpop.f32.mrb[0].mxu0
  %v2747 = vadd.f32 0.0, %v2746
  %v2748 = vpop.f32.mrb[0].mxu0
  %2749 = vmatprep.mubr.f32.mxu0 0.0
  %2750 = vmatmul.mubr.f32.gmra.mrb[0].mxu0 %v2632
  %v2751 = vpop.f32.mrb[0].mxu0
  %v2752 = vadd.f32 0.0, %v2751
  %v2753 = vpop.f32.mrb[0].mxu0
  %2754 = vmatprep.mubr.f32.mxu0 0.0
  %2755 = vmatmul.mubr.f32.gmra.mrb[0].mxu0 %v2633
  %v2756 = vpop.f32.mrb[0].mxu0
  %v2757 = vadd.f32 0.0, %v2756
  %v2758 = vpop.f32.mrb[0].mxu0
  %2759 = vmatprep.mubr.f32.mxu0 0.0
  %2760 = vmatmul.mubr.f32.gmra.mrb[0].mxu0 %v2634
  %v2761 = vpop.f32.mrb[0].mxu0
  %v2762 = vadd.f32 0.0, %v2761
  %v2763 = vpop.f32.mrb[0].mxu0
  %2764 = vmatprep.mubr.f32.mxu0 0.0
  %2765 = vmatmul.mubr.f32.gmra.mrb[0].mxu0 %v2635
  %v2766 = vpop.f32.mrb[0].mxu0
  %v2767 = vadd.f32 0.0, %v2766
  %v2768 = vpop.f32.mrb[0].mxu0
  %2769 = vmatprep.mubr.f32.mxu0 0.0
  %2770 = vmatmul.mubr.f32.gmra.mrb[0].mxu0 %v2636
  %v2771 = vpop.f32.mrb[0].mxu0
  %v2772 = vadd.f32 0.0, %v2771
  %v2773 = vpop.f32.mrb[0].mxu0
  %2774 = vmatprep.mubr.f32.mxu0 0.0
  %2775 = vmatmul.mubr.f32.gmra.mrb[0].mxu0 %v2637
  %v2776 = vpop.f32.mrb[0].mxu0
  %v2777 = vadd.f32 0.0, %v2776
  %v2778 = vpop.f32.mrb[0].mxu0
  %2779 = vmatprep.mubr.f32.mxu0 0.0
  %2780 = vmatmul.mubr.f32.gmra.mrb[0].mxu0 %v2638
  %v2781 = vpop.f32.mrb[0].mxu0
  %v2782 = vadd.f32 0.0, %v2781
  %v2783 = vpop.f32.mrb[0].mxu0
  %2784 = vmatprep.mubr.f32.mxu0 0.0
  %2785 = vmatmul.mubr.f32.gmra.mrb[0].mxu0 %v2639
  %v2786 = vpop.f32.mrb[0].mxu0
  %v2787 = vadd.f32 0.0, %v2786
  %v2788 = vpop.f32.mrb[0].mxu0
  %2789 = vmatprep.mubr.f32.mxu0 0.0
  %2790 = vmatmul.mubr.f32.gmra.mrb[0].mxu0 %v2640
  %v2791 = vpop.f32.mrb[0].mxu0
  %v2792 = vadd.f32 0.0, %v2791
  %v2793 = vpop.f32.mrb[0].mxu0
  %2794 = vmatprep.mubr.f32.mxu0 0.0
  %2795 = vmatmul.mubr.f32.gmra.mrb[0].mxu0 %v2641
  %v2796 = vpop.f32.mrb[0].mxu0
  %v2797 = vadd.f32 0.0, %v2796
  %v2798 = vpop.f32.mrb[0].mxu0
  %2799 = vmatprep.mubr.f32.mxu0 0.0
  %2800 = vmatmul.mubr.f32.gmra.mrb[0].mxu0 %v2642
  %v2801 = vpop.f32.mrb[0].mxu0
  %v2802 = vadd.f32 0.0, %v2801
  %v2803 = vpop.f32.mrb[0].mxu0
  %2804 = vmatprep.mubr.f32.mxu0 0.0
  %2805 = vmatmul.mubr.f32.gmra.mrb[0].mxu0 %v2643
  %v2806 = vpop.f32.mrb[0].mxu0
  %v2807 = vadd.f32 0.0, %v2806
  %v2808 = vpop.f32.mrb[0].mxu0
  %2809 = vmatprep.mubr.f32.mxu0 0.0
  %2810 = vmatmul.mubr.f32.gmra.mrb[0].mxu0 %v2644
  %v2811 = vpop.f32.mrb[0].mxu0
  %v2812 = vadd.f32 0.0, %v2811
  %v2813 = vpop.f32.mrb[0].mxu0
  %2814 = vmatprep.mubr.f32.mxu0 0.0
  %2815 = vmatmul.mubr.f32.gmra.mrb[0].mxu0 %v2645
  %v2816 = vpop.f32.mrb[0].mxu0
  %v2817 = vadd.f32 0.0, %v2816
  %v2818 = vpop.f32.mrb[0].mxu0
  %2819 = vmatprep.mubr.f32.mxu0 0.0
  %2820 = vmatmul.mubr.f32.gmra.mrb[0].mxu0 %v2646
  %v2821 = vpop.f32.mrb[0].mxu0
  %v2822 = vadd.f32 0.0, %v2821
  %v2823 = vpop.f32.mrb[0].mxu0
  %2824 = vmatprep.mubr.f32.mxu0 0.0
  %2825 = vmatmul.mubr.f32.gmra.mrb[0].mxu0 %v2647
  %v2826 = vpop.f32.mrb[0].mxu0
  %v2827 = vadd.f32 0.0, %v2826
  %v2828 = vpop.f32.mrb[0].mxu0
  %2829 = vmatprep.mubr.f32.mxu0 0.0
  %2830 = vmatmul.mubr.f32.gmra.mrb[0].mxu0 %v2648
  %v2831 = vpop.f32.mrb[0].mxu0
  %v2832 = vadd.f32 0.0, %v2831
  %v2833 = vpop.f32.mrb[0].mxu0
  %2834 = vmatprep.mubr.f32.mxu0 0.0
  %2835 = vmatmul.mubr.f32.gmra.mrb[0].mxu0 %v2649
  %v2836 = vpop.f32.mrb[0].mxu0
  %v2837 = vadd.f32 0.0, %v2836
  %v2838 = vpop.f32.mrb[0].mxu0
  %2839 = vmatprep.mubr.f32.mxu0 0.0
  %2840 = vmatmul.mubr.f32.gmra.mrb[0].mxu0 %v2650
  %v2841 = vpop.f32.mrb[0].mxu0
  %v2842 = vadd.f32 0.0, %v2841
  %v2843 = vpop.f32.mrb[0].mxu0
  %2844 = vmatprep.mubr.f32.mxu0 0.0
  %2845 = vmatmul.mubr.f32.gmra.mrb[0].mxu0 %v2651
  %v2846 = vpop.f32.mrb[0].mxu0
  %v2847 = vadd.f32 0.0, %v2846
  %v2848 = vpop.f32.mrb[0].mxu0
  %2849 = vmatprep.mubr.f32.mxu0 0.0
  %2850 = vmatmul.mubr.f32.gmra.mrb[0].mxu0 %v2652
  %v2851 = vpop.f32.mrb[0].mxu0
  %v2852 = vadd.f32 0.0, %v2851
  %v2853 = vpop.f32.mrb[0].mxu0
  %2854 = vmatprep.mubr.f32.mxu0 0.0
  %2855 = vmatmul.mubr.f32.gmra.mrb[0].mxu0 %v2653
  %v2856 = vpop.f32.mrb[0].mxu0
  %v2857 = vadd.f32 0.0, %v2856
  %v2858 = vpop.f32.mrb[0].mxu0
  %2859 = vdwg.mxu0
  %v2860 = vadd.f32 %v2604, %v2737
  %v2861 = vadd.f32 %v2605, %v2742
  %v2862 = vadd.f32 %v2606, %v2747
  %v2863 = vadd.f32 %v2607, %v2752
  %v2864 = vadd.f32 %v2608, %v2757
  %v2865 = vadd.f32 %v2609, %v2762
  %v2866 = vadd.f32 %v2610, %v2767
  %v2867 = vadd.f32 %v2611, %v2772
  %v2868 = vadd.f32 %v2612, %v2777
  %v2869 = vadd.f32 %v2613, %v2782
  %v2870 = vadd.f32 %v2614, %v2787
  %v2871 = vadd.f32 %v2615, %v2792
  %v2872 = vadd.f32 %v2616, %v2797
  %v2873 = vadd.f32 %v2617, %v2802
  %v2874 = vadd.f32 %v2618, %v2807
  %v2875 = vadd.f32 %v2619, %v2812
  %v2876 = vadd.f32 %v2620, %v2817
  %v2877 = vadd.f32 %v2621, %v2822
  %v2878 = vadd.f32 %v2622, %v2827
  %v2879 = vadd.f32 %v2623, %v2832
  %v2880 = vadd.f32 %v2624, %v2837
  %v2881 = vadd.f32 %v2625, %v2842
  %v2882 = vadd.f32 %v2626, %v2847
  %v2883 = vadd.f32 %v2627, %v2852
  %v2884 = vadd.f32 %v2628, %v2857
  %2885 = vst [vmem:[%s27] sm:$0xff] %v2860
  %2886 = vst [vmem:[%s27 + $0x8] sm:$0xff] %v2861
  %2887 = vst [vmem:[%s27 + $0x10] sm:$0xff] %v2862
  %2888 = vst [vmem:[%s27 + $0x18] sm:$0xff] %v2863
  %2889 = vst [vmem:[%s27 + $0x20] sm:$0xff] %v2864
  %2890 = vst [vmem:[%s27 + $0x28] sm:$0xff] %v2865
  %2891 = vst [vmem:[%s27 + $0x30] sm:$0xff] %v2866
  %2892 = vst [vmem:[%s27 + $0x38] sm:$0xff] %v2867
  %2893 = vst [vmem:[%s27 + $0x40] sm:$0xff] %v2868
  %2894 = vst [vmem:[%s27 + $0x48] sm:$0xff] %v2869
  %2895 = vst [vmem:[%s27 + $0x50] sm:$0xff] %v2870
  %2896 = vst [vmem:[%s27 + $0x58] sm:$0xff] %v2871
  %2897 = vst [vmem:[%s27 + $0x60] sm:$0xff] %v2872
  %2898 = vst [vmem:[%s27 + $0x68] sm:$0xff] %v2873
  %2899 = vst [vmem:[%s27 + $0x70] sm:$0xff] %v2874
  %2900 = vst [vmem:[%s27 + $0x78] sm:$0xff] %v2875
  %2901 = vst [vmem:[%s27 + $0x80] sm:$0xff] %v2876
  %2902 = vst [vmem:[%s27 + $0x88] sm:$0xff] %v2877
  %2903 = vst [vmem:[%s27 + $0x90] sm:$0xff] %v2878
  %2904 = vst [vmem:[%s27 + $0x98] sm:$0xff] %v2879
  %2905 = vst [vmem:[%s27 + $0xa0] sm:$0xff] %v2880
  %2906 = vst [vmem:[%s27 + $0xa8] sm:$0xff] %v2881
  %2907 = vst [vmem:[%s27 + $0xb0] sm:$0xff] %v2882
  %2908 = vst [vmem:[%s27 + $0xb8] sm:$0xff] %v2883
  %2909 = vst [vmem:[%s27 + $0xc0] sm:$0xff] %v2884
  %s2910 = sadd.s32 0, 1
  %s2911 = smul.u32 25, %s2910
  %p2912 = scmp.lt.s32.totalorder %s2911, 74
  %s2913 = scalar_select %p2912, %s2911, 74
  %s2914 = smul.addr %s2913, 8
  %s2915 = scalar_lea.vmem %s5, %s2914
  // Predicated region
  $region88: #{densenet_forward.19} parent=0 // pred_check
    _
  $region89: #{densenet_forward.19} parent=0 // pred_check_branch
    %2917 = sbr.rel (0) target = $region91
  $region90: #{densenet_forward.19} parent=0 // pred_region
    %s2918 = sadd.s32 0, 1
    %s2919 = smul.u32 25, %s2918
  $region91: #{densenet_forward.19} parent=0 // pred_fallthru
    _
  // Predicated region
  $region92: #{densenet_forward.19} parent=0 // pred_check
    _
  $region93: #{densenet_forward.19} parent=0 // pred_check_branch
    %2921 = sbr.rel (0) target = $region95
  $region94: #{densenet_forward.19} parent=0 // pred_region
    %s2922 = sadd.s32 0, 1
    %s2923 = smul.u32 25, %s2922
    %p2924 = scmp.lt.s32.totalorder %s2923, 74
    %s2925 = scalar_select %p2924, %s2923, 74
    %s2926 = smul.addr %s2925, 8
    %s2927 = scalar_lea.vmem %s5, %s2926
  $region95: #{densenet_forward.19} parent=0 // pred_fallthru
    _
  %2928 = vsyncmov [#allocation4]
  %s2929 = vpop.sfrf %2928
  %p2930 = scmp.eq.s32.totalorder %s2929, 0
  %p2931 = pneg %p2930
  %2933 = shalt.err (%p2931)
  %s2934 = scalar_lea.sflag [#allocation4], 1
  %2935 = vsyncmov %s2934
  %s2936 = vpop.sfrf %2935
  %p2937 = scmp.eq.s32.totalorder %s2936, 0
  %p2938 = pneg %p2937
  %2940 = shalt.err (%p2938)

// kernel: densenet_forward.23
$region0: #{densenet_forward.23}
  #allocation0 [shape = 'u32[]', space=smem, size = 0x4, offset = 0x4, fixed_abs, tag = 'smem constant byte address 0x4 - core index']
  #allocation1 [shape = 'u32[144,128]{1,0:T(1,128)}', space=vmem, size = 0x12000, scoped, tag = 'internal scratch']
  %s0 = inlined_call_operand.vmem [shape: f32[32,128], index: 0, kind: input, shape index: {}]
  %s1 = inlined_call_operand.vmem [shape: f32[32,128], index: 1, kind: input, shape index: {}]
  %s2 = inlined_call_operand.vmem [shape: f32[32,128], index: 2, kind: input, shape index: {}]
  %s3 = inlined_call_operand.vmem [shape: f32[32,128], index: 3, kind: input, shape index: {}]
  %s4 = inlined_call_operand.vmem [shape: f32[32,128], index: 4, kind: output, shape index: {}]
  %s5 = sld [smem:[#allocation0]]
  $region26: #{densenet_forward.23} parent=0
    _
  %s7 = ssub.s32 1, %s5
  %s8 = scalar_select 0, %s7, %s5
  // Predicated region
  $region2: #{densenet_forward.23} parent=0 // pred_check
    _
  $region3: #{densenet_forward.23} parent=0 // pred_check_branch
    %10 = sbr.rel (0) target = $region5
  $region4: #{densenet_forward.23} parent=0 // pred_region
    _
  $region5: #{densenet_forward.23} parent=0 // pred_fallthru
    _
  // Predicated region
  $region6: #{densenet_forward.23} parent=0 // pred_check
    _
  $region7: #{densenet_forward.23} parent=0 // pred_check_branch
    %12 = sbr.rel (0) target = $region9
  $region8: #{densenet_forward.23} parent=0 // pred_region
    _
  $region9: #{densenet_forward.23} parent=0 // pred_fallthru
    _
  // Predicated region
  $region10: #{densenet_forward.23} parent=0 // pred_check
    _
  $region11: #{densenet_forward.23} parent=0 // pred_check_branch
    %14 = sbr.rel (0) target = $region13
  $region12: #{densenet_forward.23} parent=0 // pred_region
    _
  $region13: #{densenet_forward.23} parent=0 // pred_fallthru
    _
  // Predicated region
  $region14: #{densenet_forward.23} parent=0 // pred_check
    _
  $region15: #{densenet_forward.23} parent=0 // pred_check_branch
    %16 = sbr.rel (0) target = $region17
  $region16: #{densenet_forward.23} parent=0 // pred_region
    _
  $region17: #{densenet_forward.23} parent=0 // pred_fallthru
    _
  %v17 = vld [vmem:[%s0] sm:$0xff]
  %v18 = vld [vmem:[%s0 + $0x8] sm:$0xff]
  %v19 = vld [vmem:[%s0 + $0x10] sm:$0xff]
  %v20 = vld [vmem:[%s0 + $0x18] sm:$0xff]
  %v21 = vld [vmem:[%s1] sm:$0xff]
  %v22 = vld [vmem:[%s1 + $0x8] sm:$0xff]
  %v23 = vld [vmem:[%s1 + $0x10] sm:$0xff]
  %v24 = vld [vmem:[%s1 + $0x18] sm:$0xff]
  %v25 = vadd.f32 %v17, %v21
  %v26 = vadd.f32 %v18, %v22
  %v27 = vadd.f32 %v19, %v23
  %v28 = vadd.f32 %v20, %v24
  %v29 = vld [vmem:[%s2] sm:$0xff]
  %v30 = vld [vmem:[%s2 + $0x8] sm:$0xff]
  %v31 = vld [vmem:[%s2 + $0x10] sm:$0xff]
  %v32 = vld [vmem:[%s2 + $0x18] sm:$0xff]
  %v33 = vadd.f32 %v25, %v29
  %v34 = vadd.f32 %v26, %v30
  %v35 = vadd.f32 %v27, %v31
  %v36 = vadd.f32 %v28, %v32
  %v37 = vld [vmem:[%s3] sm:$0xff]
  %v38 = vld [vmem:[%s3 + $0x8] sm:$0xff]
  %v39 = vld [vmem:[%s3 + $0x10] sm:$0xff]
  %v40 = vld [vmem:[%s3 + $0x18] sm:$0xff]
  %v41 = vadd.f32 %v33, %v37
  %v42 = vadd.f32 %v34, %v38
  %v43 = vadd.f32 %v35, %v39
  %v44 = vadd.f32 %v36, %v40
  %v45 = vmul.f32 %v41, 0.25
  %v46 = vmul.f32 %v42, 0.25
  %v47 = vmul.f32 %v43, 0.25
  %v48 = vmul.f32 %v44, 0.25
  %49 = vst [vmem:[%s4] sm:$0xff] %v45
  %50 = vst [vmem:[%s4 + $0x8] sm:$0xff] %v46
  %51 = vst [vmem:[%s4 + $0x10] sm:$0xff] %v47
  %52 = vst [vmem:[%s4 + $0x18] sm:$0xff] %v48
  // Predicated region
  $region18: #{densenet_forward.23} parent=0 // pred_check
    _
  $region19: #{densenet_forward.23} parent=0 // pred_check_branch
    %54 = sbr.rel (0) target = $region21
  $region20: #{densenet_forward.23} parent=0 // pred_region
    _
  $region21: #{densenet_forward.23} parent=0 // pred_fallthru
    _
  // Predicated region
  $region22: #{densenet_forward.23} parent=0 // pred_check
    _
  $region23: #{densenet_forward.23} parent=0 // pred_check_branch
    %56 = sbr.rel (0) target = $region25
  $region24: #{densenet_forward.23} parent=0 // pred_region
    _
  $region25: #{densenet_forward.23} parent=0 // pred_fallthru
    _

// kernel: densenet_forward.24
$region0: #{densenet_forward.24}
  #allocation0 [shape = 'u32[]', space=smem, size = 0x4, offset = 0x4, fixed_abs, tag = 'smem constant byte address 0x4 - core index']
  #allocation1 [shape = 'u32[144,128]{1,0:T(1,128)}', space=vmem, size = 0x12000, scoped, tag = 'internal scratch']
  %s0 = inlined_call_operand.vmem [shape: f32[216,128], index: 0, kind: input, shape index: {}]
  %s1 = inlined_call_operand.vmem [shape: f32[216,1], index: 1, kind: input, shape index: {}]
  %s2 = inlined_call_operand.vmem [shape: f32[1,128], index: 2, kind: input, shape index: {}]
  %s3 = inlined_call_operand.vmem [shape: f32[1,128], index: 3, kind: input, shape index: {}]
  %s4 = inlined_call_operand.vmem [shape: f32[128,128], index: 4, kind: input, shape index: {}]
  %s5 = inlined_call_operand.vmem [shape: f32[216,128], index: 5, kind: output, shape index: {}]
  %s6 = sld [smem:[#allocation0]]
  $region30: #{densenet_forward.24} parent=0
    _
  %s8 = ssub.s32 1, %s6
  %s9 = scalar_select 0, %s8, %s6
  // Predicated region
  $region2: #{densenet_forward.24} parent=0 // pred_check
    _
  $region3: #{densenet_forward.24} parent=0 // pred_check_branch
    %11 = sbr.rel (0) target = $region5
  $region4: #{densenet_forward.24} parent=0 // pred_region
    %s12 = sadd.s32 0, 1
    %s13 = smul.u32 9, %s12
    %p14 = scmp.lt.s32.totalorder %s13, 26
    %s15 = scalar_select %p14, %s13, 26
    %s16 = smul.addr %s15, 8
    %s17 = scalar_lea.vmem %s0, %s16
    %s18 = sadd.s32 0, 1
    %s19 = smul.u32 9, %s18
  $region5: #{densenet_forward.24} parent=0 // pred_fallthru
    _
  // Predicated region
  $region6: #{densenet_forward.24} parent=0 // pred_check
    _
  $region7: #{densenet_forward.24} parent=0 // pred_check_branch
    %21 = sbr.rel (0) target = $region9
  $region8: #{densenet_forward.24} parent=0 // pred_region
    %s22 = sadd.s32 0, 1
    %s23 = smul.u32 9, %s22
    %p24 = scmp.lt.s32.totalorder %s23, 26
    %s25 = scalar_select %p24, %s23, 26
    %s26 = smul.addr %s25, 8
    %s27 = scalar_lea.vmem %s1, %s26
    %s28 = sadd.s32 0, 1
    %s29 = smul.u32 9, %s28
  $region9: #{densenet_forward.24} parent=0 // pred_fallthru
    _
  // Predicated region
  $region10: #{densenet_forward.24} parent=0 // pred_check
    _
  $region11: #{densenet_forward.24} parent=0 // pred_check_branch
    %31 = sbr.rel (0) target = $region13
  $region12: #{densenet_forward.24} parent=0 // pred_region
    _
  $region13: #{densenet_forward.24} parent=0 // pred_fallthru
    _
  // Predicated region
  $region14: #{densenet_forward.24} parent=0 // pred_check
    _
  $region15: #{densenet_forward.24} parent=0 // pred_check_branch
    %33 = sbr.rel (0) target = $region17
  $region16: #{densenet_forward.24} parent=0 // pred_region
    _
  $region17: #{densenet_forward.24} parent=0 // pred_fallthru
    _
  // Predicated region
  $region18: #{densenet_forward.24} parent=0 // pred_check
    _
  $region19: #{densenet_forward.24} parent=0 // pred_check_branch
    %35 = sbr.rel (0) target = $region21
  $region20: #{densenet_forward.24} parent=0 // pred_region
    _
  $region21: #{densenet_forward.24} parent=0 // pred_fallthru
    _
  %s36 = sadd.s32 0, 1
  %s37 = smul.u32 9, %s36
  %p38 = scmp.lt.s32.totalorder %s37, 26
  %s39 = scalar_select %p38, %s37, 26
  %s40 = smul.addr %s39, 8
  %s41 = scalar_lea.vmem %s0, %s40
  %s42 = sadd.s32 0, 1
  %s43 = smul.u32 9, %s42
  %p44 = scmp.lt.s32.totalorder %s43, 26
  %s45 = scalar_select %p44, %s43, 26
  %s46 = smul.addr %s45, 8
  %s47 = scalar_lea.vmem %s1, %s46
  %s48 = sadd.s32 0, 1
  %s49 = smul.u32 9, %s48
  %p50 = scmp.lt.s32.totalorder %s49, 26
  %s51 = scalar_select %p50, %s49, 26
  %s52 = smul.addr %s51, 8
  %s53 = scalar_lea.vmem %s5, %s52
  %s54 = sadd.s32 0, 1
  %s55 = smul.u32 9, %s54
  %p56 = scmp.lt.s32.totalorder %s55, 26
  %s57 = scalar_select %p56, %s55, 26
  %s58 = smul.addr %s57, 8
  %s59 = scalar_lea.vmem %s0, %s58
  %s60 = sadd.s32 0, 1
  %s61 = smul.u32 9, %s60
  %s62 = sadd.s32 0, 1
  %s63 = smul.u32 9, %s62
  %p64 = scmp.lt.s32.totalorder %s63, 26
  %s65 = scalar_select %p64, %s63, 26
  %s66 = smul.addr %s65, 8
  %s67 = scalar_lea.vmem %s1, %s66
  %s68 = sadd.s32 0, 1
  %s69 = smul.u32 9, %s68
  %s70 = sadd.s32 0, 1
  %s71 = smul.u32 9, %s70
  %p72 = scmp.lt.s32.totalorder %s71, 26
  %s73 = scalar_select %p72, %s71, 26
  %s74 = smul.addr %s73, 8
  %s75 = scalar_lea.vmem %s5, %s74
  %s76 = sadd.s32 0, 1
  %s77 = smul.u32 9, %s76
  %v78 = vld [vmem:[%s67] sm:$0xff]
  %v79 = vld [vmem:[%s67 + $0x8] sm:$0xff]
  %v80 = vld [vmem:[%s67 + $0x10] sm:$0xff]
  %v81 = vld [vmem:[%s67 + $0x18] sm:$0xff]
  %v82 = vld [vmem:[%s67 + $0x20] sm:$0xff]
  %v83 = vld [vmem:[%s67 + $0x28] sm:$0xff]
  %v84 = vld [vmem:[%s67 + $0x30] sm:$0xff]
  %v85 = vld [vmem:[%s67 + $0x38] sm:$0xff]
  %v86 = vld [vmem:[%s67 + $0x40] sm:$0xff]
  %vm87 = vcmp.gt.f32.partialorder %v78, 0.0
  %vm88 = vcmp.gt.f32.partialorder %v79, 0.0
  %vm89 = vcmp.gt.f32.partialorder %v80, 0.0
  %vm90 = vcmp.gt.f32.partialorder %v81, 0.0
  %vm91 = vcmp.gt.f32.partialorder %v82, 0.0
  %vm92 = vcmp.gt.f32.partialorder %v83, 0.0
  %vm93 = vcmp.gt.f32.partialorder %v84, 0.0
  %vm94 = vcmp.gt.f32.partialorder %v85, 0.0
  %vm95 = vcmp.gt.f32.partialorder %v86, 0.0
  %v96 = vld [vmem:[%s59] sm:$0xff]
  %v97 = vld [vmem:[%s59 + $0x8] sm:$0xff]
  %v98 = vld [vmem:[%s59 + $0x10] sm:$0xff]
  %v99 = vld [vmem:[%s59 + $0x18] sm:$0xff]
  %v100 = vld [vmem:[%s59 + $0x20] sm:$0xff]
  %v101 = vld [vmem:[%s59 + $0x28] sm:$0xff]
  %v102 = vld [vmem:[%s59 + $0x30] sm:$0xff]
  %v103 = vld [vmem:[%s59 + $0x38] sm:$0xff]
  %v104 = vld [vmem:[%s59 + $0x40] sm:$0xff]
  %v105 = vld [vmem:[%s2] sm:$0x1]
  %v107 = vlaneseq
  %v108 = vshrl.u32 %v107, 7
  %v109 = vsub.s32 0, %v108
  %v110 = vrot.slane %v105, %v109
  %v112 = vmul.f32 %v96, %v110
  %v113 = vmul.f32 %v97, %v110
  %v114 = vmul.f32 %v98, %v110
  %v115 = vmul.f32 %v99, %v110
  %v116 = vmul.f32 %v100, %v110
  %v117 = vmul.f32 %v101, %v110
  %v118 = vmul.f32 %v102, %v110
  %v119 = vmul.f32 %v103, %v110
  %v120 = vmul.f32 %v104, %v110
  %v121 = vld [vmem:[%s3] sm:$0x1]
  %v123 = vlaneseq
  %v124 = vshrl.u32 %v123, 7
  %v125 = vsub.s32 0, %v124
  %v126 = vrot.slane %v121, %v125
  %v128 = vadd.f32 %v112, %v126
  %v129 = vadd.f32 %v113, %v126
  %v130 = vadd.f32 %v114, %v126
  %v131 = vadd.f32 %v115, %v126
  %v132 = vadd.f32 %v116, %v126
  %v133 = vadd.f32 %v117, %v126
  %v134 = vadd.f32 %v118, %v126
  %v135 = vadd.f32 %v119, %v126
  %v136 = vadd.f32 %v120, %v126
  %v137 = vmax.f32 %v128, 0.0
  %v138 = vmax.f32 %v129, 0.0
  %v139 = vmax.f32 %v130, 0.0
  %v140 = vmax.f32 %v131, 0.0
  %v141 = vmax.f32 %v132, 0.0
  %v142 = vmax.f32 %v133, 0.0
  %v143 = vmax.f32 %v134, 0.0
  %v144 = vmax.f32 %v135, 0.0
  %v145 = vmax.f32 %v136, 0.0
  %v146 = vsel %vm87, 1, 0
  %v147 = vsel %vm88, 1, 0
  %v148 = vsel %vm89, 1, 0
  %v149 = vsel %vm90, 1, 0
  %v150 = vsel %vm91, 1, 0
  %v151 = vsel %vm92, 1, 0
  %v152 = vsel %vm93, 1, 0
  %v153 = vsel %vm94, 1, 0
  %v154 = vsel %vm95, 1, 0
  %155 = vset.pattern.permute.xlu0 0
  %156 = vperm.xlu0 %155, %v146
  %v157 = vpop.permute.xlu0 %156
  %158 = vset.pattern.permute.xlu0 0
  %159 = vperm.xlu0 %158, %v147
  %v160 = vpop.permute.xlu0 %159
  %161 = vset.pattern.permute.xlu0 0
  %162 = vperm.xlu0 %161, %v148
  %v163 = vpop.permute.xlu0 %162
  %164 = vset.pattern.permute.xlu0 0
  %165 = vperm.xlu0 %164, %v149
  %v166 = vpop.permute.xlu0 %165
  %167 = vset.pattern.permute.xlu0 0
  %168 = vperm.xlu0 %167, %v150
  %v169 = vpop.permute.xlu0 %168
  %170 = vset.pattern.permute.xlu0 0
  %171 = vperm.xlu0 %170, %v151
  %v172 = vpop.permute.xlu0 %171
  %173 = vset.pattern.permute.xlu0 0
  %174 = vperm.xlu0 %173, %v152
  %v175 = vpop.permute.xlu0 %174
  %176 = vset.pattern.permute.xlu0 0
  %177 = vperm.xlu0 %176, %v153
  %v178 = vpop.permute.xlu0 %177
  %179 = vset.pattern.permute.xlu0 0
  %180 = vperm.xlu0 %179, %v154
  %v181 = vpop.permute.xlu0 %180
  %vm182 = vcmp.eq.s32.totalorder %v157, 1
  %vm183 = vcmp.eq.s32.totalorder %v160, 1
  %vm184 = vcmp.eq.s32.totalorder %v163, 1
  %vm185 = vcmp.eq.s32.totalorder %v166, 1
  %vm186 = vcmp.eq.s32.totalorder %v169, 1
  %vm187 = vcmp.eq.s32.totalorder %v172, 1
  %vm188 = vcmp.eq.s32.totalorder %v175, 1
  %vm189 = vcmp.eq.s32.totalorder %v178, 1
  %vm190 = vcmp.eq.s32.totalorder %v181, 1
  %v191 = vsel %vm182, %v137, 0.0
  %v192 = vsel %vm183, %v138, 0.0
  %v193 = vsel %vm184, %v139, 0.0
  %v194 = vsel %vm185, %v140, 0.0
  %v195 = vsel %vm186, %v141, 0.0
  %v196 = vsel %vm187, %v142, 0.0
  %v197 = vsel %vm188, %v143, 0.0
  %v198 = vsel %vm189, %v144, 0.0
  %v199 = vsel %vm190, %v145, 0.0
  %v200 = vld [vmem:[%s4] sm:$0xff]
  %v201 = vld [vmem:[%s4 + $0x8] sm:$0xff]
  %v202 = vld [vmem:[%s4 + $0x10] sm:$0xff]
  %v203 = vld [vmem:[%s4 + $0x18] sm:$0xff]
  %v204 = vld [vmem:[%s4 + $0x20] sm:$0xff]
  %v205 = vld [vmem:[%s4 + $0x28] sm:$0xff]
  %v206 = vld [vmem:[%s4 + $0x30] sm:$0xff]
  %v207 = vld [vmem:[%s4 + $0x38] sm:$0xff]
  %v208 = vld [vmem:[%s4 + $0x40] sm:$0xff]
  %v209 = vld [vmem:[%s4 + $0x48] sm:$0xff]
  %v210 = vld [vmem:[%s4 + $0x50] sm:$0xff]
  %v211 = vld [vmem:[%s4 + $0x58] sm:$0xff]
  %v212 = vld [vmem:[%s4 + $0x60] sm:$0xff]
  %v213 = vld [vmem:[%s4 + $0x68] sm:$0xff]
  %v214 = vld [vmem:[%s4 + $0x70] sm:$0xff]
  %v215 = vld [vmem:[%s4 + $0x78] sm:$0xff]
  %216 = vmatprep.subr.mxu0 0.0
  %217 = vmatpush1.msra.mxu0 %v200
  %218 = vmatprep.subr.mxu0 0.0
  %219 = vmatpush1.msra.mxu0 %v201
  %220 = vmatprep.subr.mxu0 0.0
  %221 = vmatpush1.msra.mxu0 %v202
  %222 = vmatprep.subr.mxu0 0.0
  %223 = vmatpush1.msra.mxu0 %v203
  %224 = vmatprep.subr.mxu0 0.0
  %225 = vmatpush1.msra.mxu0 %v204
  %226 = vmatprep.subr.mxu0 0.0
  %227 = vmatpush1.msra.mxu0 %v205
  %228 = vmatprep.subr.mxu0 0.0
  %229 = vmatpush1.msra.mxu0 %v206
  %230 = vmatprep.subr.mxu0 0.0
  %231 = vmatpush1.msra.mxu0 %v207
  %232 = vmatprep.subr.mxu0 0.0
  %233 = vmatpush1.msra.mxu0 %v208
  %234 = vmatprep.subr.mxu0 0.0
  %235 = vmatpush1.msra.mxu0 %v209
  %236 = vmatprep.subr.mxu0 0.0
  %237 = vmatpush1.msra.mxu0 %v210
  %238 = vmatprep.subr.mxu0 0.0
  %239 = vmatpush1.msra.mxu0 %v211
  %240 = vmatprep.subr.mxu0 0.0
  %241 = vmatpush1.msra.mxu0 %v212
  %242 = vmatprep.subr.mxu0 0.0
  %243 = vmatpush1.msra.mxu0 %v213
  %244 = vmatprep.subr.mxu0 0.0
  %245 = vmatpush1.msra.mxu0 %v214
  %246 = vmatprep.subr.mxu0 0.0
  %247 = vmatpush1.msra.mxu0 %v215
  %248 = vmatprep.subr.mxu0 0.0
  %249 = vmatpush1.msra.mxu0 0.0
  %250 = vmatprep.subr.mxu0 0.0
  %251 = vmatpush1.msra.mxu0 0.0
  %252 = vmatprep.subr.mxu0 0.0
  %253 = vmatpush1.msra.mxu0 0.0
  %254 = vmatprep.subr.mxu0 0.0
  %255 = vmatpush1.msra.mxu0 0.0
  %256 = vmatprep.subr.mxu0 0.0
  %257 = vmatpush1.msra.mxu0 0.0
  %258 = vmatprep.subr.mxu0 0.0
  %259 = vmatpush1.msra.mxu0 0.0
  %260 = vmatprep.subr.mxu0 0.0
  %261 = vmatpush1.msra.mxu0 0.0
  %262 = vmatprep.subr.mxu0 0.0
  %263 = vmatpush1.msra.mxu0 0.0
  %264 = vmatprep.subr.mxu0 0.0
  %265 = vmatpush1.msra.mxu0 0.0
  %266 = vmatprep.subr.mxu0 0.0
  %267 = vmatpush1.msra.mxu0 0.0
  %268 = vmatprep.subr.mxu0 0.0
  %269 = vmatpush1.msra.mxu0 0.0
  %270 = vmatprep.subr.mxu0 0.0
  %271 = vmatpush1.msra.mxu0 0.0
  %272 = vmatprep.subr.mxu0 0.0
  %273 = vmatpush1.msra.mxu0 0.0
  %274 = vmatprep.subr.mxu0 0.0
  %275 = vmatpush1.msra.mxu0 0.0
  %276 = vmatprep.subr.mxu0 0.0
  %277 = vmatpush1.msra.mxu0 0.0
  %278 = vmatprep.subr.mxu0 0.0
  %279 = vmatpush1.msra.mxu0 0.0
  %280 = vmatprep.mubr.f32.mxu0 0.0
  %281 = vmatmul.mubr.f32.gmra.mrb[0].mxu0 %v191
  %v282 = vpop.f32.mrb[0].mxu0
  %v283 = vadd.f32 0.0, %v282
  %v284 = vpop.f32.mrb[0].mxu0
  %285 = vmatprep.mubr.f32.mxu0 0.0
  %286 = vmatmul.mubr.f32.gmra.mrb[0].mxu0 %v192
  %v287 = vpop.f32.mrb[0].mxu0
  %v288 = vadd.f32 0.0, %v287
  %v289 = vpop.f32.mrb[0].mxu0
  %290 = vmatprep.mubr.f32.mxu0 0.0
  %291 = vmatmul.mubr.f32.gmra.mrb[0].mxu0 %v193
  %v292 = vpop.f32.mrb[0].mxu0
  %v293 = vadd.f32 0.0, %v292
  %v294 = vpop.f32.mrb[0].mxu0
  %295 = vmatprep.mubr.f32.mxu0 0.0
  %296 = vmatmul.mubr.f32.gmra.mrb[0].mxu0 %v194
  %v297 = vpop.f32.mrb[0].mxu0
  %v298 = vadd.f32 0.0, %v297
  %v299 = vpop.f32.mrb[0].mxu0
  %300 = vmatprep.mubr.f32.mxu0 0.0
  %301 = vmatmul.mubr.f32.gmra.mrb[0].mxu0 %v195
  %v302 = vpop.f32.mrb[0].mxu0
  %v303 = vadd.f32 0.0, %v302
  %v304 = vpop.f32.mrb[0].mxu0
  %305 = vmatprep.mubr.f32.mxu0 0.0
  %306 = vmatmul.mubr.f32.gmra.mrb[0].mxu0 %v196
  %v307 = vpop.f32.mrb[0].mxu0
  %v308 = vadd.f32 0.0, %v307
  %v309 = vpop.f32.mrb[0].mxu0
  %310 = vmatprep.mubr.f32.mxu0 0.0
  %311 = vmatmul.mubr.f32.gmra.mrb[0].mxu0 %v197
  %v312 = vpop.f32.mrb[0].mxu0
  %v313 = vadd.f32 0.0, %v312
  %v314 = vpop.f32.mrb[0].mxu0
  %315 = vmatprep.mubr.f32.mxu0 0.0
  %316 = vmatmul.mubr.f32.gmra.mrb[0].mxu0 %v198
  %v317 = vpop.f32.mrb[0].mxu0
  %v318 = vadd.f32 0.0, %v317
  %v319 = vpop.f32.mrb[0].mxu0
  %320 = vmatprep.mubr.f32.mxu0 0.0
  %321 = vmatmul.mubr.f32.gmra.mrb[0].mxu0 %v199
  %v322 = vpop.f32.mrb[0].mxu0
  %v323 = vadd.f32 0.0, %v322
  %v324 = vpop.f32.mrb[0].mxu0
  %325 = vdwg.mxu0
  %326 = vst [vmem:[%s75] sm:$0xff] %v283
  %327 = vst [vmem:[%s75 + $0x8] sm:$0xff] %v288
  %328 = vst [vmem:[%s75 + $0x10] sm:$0xff] %v293
  %329 = vst [vmem:[%s75 + $0x18] sm:$0xff] %v298
  %330 = vst [vmem:[%s75 + $0x20] sm:$0xff] %v303
  %331 = vst [vmem:[%s75 + $0x28] sm:$0xff] %v308
  %332 = vst [vmem:[%s75 + $0x30] sm:$0xff] %v313
  %333 = vst [vmem:[%s75 + $0x38] sm:$0xff] %v318
  %334 = vst [vmem:[%s75 + $0x40] sm:$0xff] %v323
  %s335 = sadd.s32 0, 1
  %s336 = smul.u32 9, %s335
  %p337 = scmp.lt.s32.totalorder %s336, 26
  %s338 = scalar_select %p337, %s336, 26
  %s339 = smul.addr %s338, 8
  %s340 = scalar_lea.vmem %s5, %s339
  // Predicated region
  $region22: #{densenet_forward.24} parent=0 // pred_check
    _
  $region23: #{densenet_forward.24} parent=0 // pred_check_branch
    %342 = sbr.rel (0) target = $region25
  $region24: #{densenet_forward.24} parent=0 // pred_region
    %s343 = sadd.s32 0, 1
    %s344 = smul.u32 9, %s343
  $region25: #{densenet_forward.24} parent=0 // pred_fallthru
    _
  // Predicated region
  $region26: #{densenet_forward.24} parent=0 // pred_check
    _
  $region27: #{densenet_forward.24} parent=0 // pred_check_branch
    %346 = sbr.rel (0) target = $region29
  $region28: #{densenet_forward.24} parent=0 // pred_region
    %s347 = sadd.s32 0, 1
    %s348 = smul.u32 9, %s347
    %p349 = scmp.lt.s32.totalorder %s348, 26
    %s350 = scalar_select %p349, %s348, 26
    %s351 = smul.addr %s350, 8
    %s352 = scalar_lea.vmem %s5, %s351
  $region29: #{densenet_forward.24} parent=0 // pred_fallthru
    _

// kernel: densenet_forward.25
$region0: #{densenet_forward.25}
  #allocation0 [shape = 'u32[]', space=smem, size = 0x4, offset = 0x4, fixed_abs, tag = 'smem constant byte address 0x4 - core index']
  #allocation1 [shape = 'u32[144,128]{1,0:T(1,128)}', space=vmem, size = 0x12000, scoped, tag = 'internal scratch']
  #allocation2 [shape = 'f32[86,128]{1,0:T(8,128)}', space=vmem, size = 0xb000, scoped, tag = 'scratch operand']
  #allocation3 [shape = 'f32[86,1]{1,0:T(8,128)}', space=vmem, size = 0xb000, scoped, tag = 'scratch operand']
  #allocation4 [shape = 's32[2]{0}', space=sflag, size = 0x8, scoped, tag = 'scratch operand']
  #allocation5 [shape = 's32[]', space=sflag, size = 0x4, offset = 0, fixed_abs, tag = 'sflag constant byte address 0x0 - dummy sync flag']
  #allocation6 [shape = 's32[]', space=sflag, size = 0x4, offset = 0, fixed_abs, tag = 'sflag constant byte address 0x0 - dummy sync flag']
  %s0 = inlined_call_operand.vmem [shape: f32[216,128], index: 0, kind: input, shape index: {}]
  %s1 = inlined_call_operand.vmem [shape: f32[216,1], index: 1, kind: input, shape index: {}]
  %s2 = inlined_call_operand.vmem [shape: f32[1,128], index: 2, kind: input, shape index: {}]
  %s3 = inlined_call_operand.vmem [shape: f32[1,128], index: 3, kind: input, shape index: {}]
  %s4 = inlined_call_operand.vmem [shape: f32[1152,128], index: 4, kind: input, shape index: {}]
  %s5 = inlined_call_operand.vmem [shape: f32[216,128], index: 5, kind: output, shape index: {}]
  %s6 = sld [smem:[#allocation0]]
  $region96: #{densenet_forward.25} parent=0
    _
  %s8 = ssub.s32 1, %s6
  %s9 = scalar_select 0, %s8, %s6
  // Predicated region
  $region2: #{densenet_forward.25} parent=0 // pred_check
    _
  $region3: #{densenet_forward.25} parent=0 // pred_check_branch
    %11 = sbr.rel (0) target = $region5
  $region4: #{densenet_forward.25} parent=0 // pred_region
    _
  $region5: #{densenet_forward.25} parent=0 // pred_fallthru
    _
  // Predicated region
  $region6: #{densenet_forward.25} parent=0 // pred_check
    _
  $region7: #{densenet_forward.25} parent=0 // pred_check_branch
    %13 = sbr.rel (0) target = $region9
  $region8: #{densenet_forward.25} parent=0 // pred_region
    _
  $region9: #{densenet_forward.25} parent=0 // pred_fallthru
    _
  // Predicated region
  $region10: #{densenet_forward.25} parent=0 // pred_check
    _
  $region11: #{densenet_forward.25} parent=0 // pred_check_branch
    %15 = sbr.rel (0) target = $region13
  $region12: #{densenet_forward.25} parent=0 // pred_region
    _
  $region13: #{densenet_forward.25} parent=0 // pred_fallthru
    _
  %s16 = sadd.s32 0, 1
  %s17 = smul.u32 9, %s16
  %p18 = scmp.lt.s32.totalorder %s17, 26
  %s19 = scalar_select %p18, %s17, 26
  %s20 = smul.addr %s19, 8
  %s21 = scalar_lea.vmem %s5, %s20
  %s22 = sadd.s32 0, 1
  %s23 = smul.u32 9, %s22
  %p24 = scmp.lt.s32.totalorder %s23, 26
  %s25 = scalar_select %p24, %s23, 26
  %s26 = smul.addr %s25, 8
  %s27 = scalar_lea.vmem %s5, %s26
  %s28 = sadd.s32 0, 1
  %s29 = smul.u32 9, %s28
  %s30 = sadd.s32 0, 1
  %s31 = smul.u32 %s30, 72
  %s32 = ssub.s32 %s31, 7
  %s33 = scalar_lea.vmem %s0, %s32
  %p35 = scmp.lt.u32.totalorder 86, 8
  %p36 = pneg %p35
  // Predicated region
  $region14: #{densenet_forward.25} parent=0 // pred_check
    _
  $region15: #{densenet_forward.25} parent=0 // pred_check_branch
    %38 = sbr.rel (%p35) target = $region17
  $region16: #{densenet_forward.25} parent=0 // pred_region
    %s53 = sand.u32 86, 7
    %p54 = scmp.eq.s32.totalorder %s53, 0
    %p55 = pneg %p54
    // Predicated region
    $region29: #{densenet_forward.25} parent=16 // pred_check
      _
    $region30: #{densenet_forward.25} parent=16 // pred_check_branch
      %57 = sbr.rel (%p54) target = $region32
    $region31: #{densenet_forward.25} parent=16 // pred_region
      %s58 = sand.u32 86, 7
      %s59 = ssub.s32 86, %s58
      %s60 = scalar_lea.vmem %s33, %s59
      %s61 = ssub.s32 86, %s58
      %s62 = scalar_lea.vmem [#allocation2], %s61
      loop: start=0, step=1, limit=1
      $region33: #{densenet_forward.25} parent=31 // loop_pre_header
        _
      $region34: #{densenet_forward.25} parent=31 // loop_header
        %s64 = sphi 0, %s68
        %p65 = scmp.ge.s32.totalorder %s64, 1
        %s69 = sphi %s33, %s33
        %s70 = sphi [#allocation2], [#allocation2]
      $region35: #{densenet_forward.25} parent=31 // loop_header_branch
        %67 = sbr.rel (%p65) target = $region39
      $region36: #{densenet_forward.25} parent=31 // loop_body
        %v71 = vld [vmem:[%s69] sm:$0xff]
        %72 = vst [vmem:[%s70] sm:$0xff] %v71
        %v73 = vld [vmem:[%s69 + $0x8] sm:$0xff]
        %74 = vst [vmem:[%s70 + $0x8] sm:$0xff] %v73
        %v75 = vld [vmem:[%s69 + $0x10] sm:$0xff]
        %76 = vst [vmem:[%s70 + $0x10] sm:$0xff] %v75
        %v77 = vld [vmem:[%s69 + $0x18] sm:$0xff]
        %78 = vst [vmem:[%s70 + $0x18] sm:$0xff] %v77
        %v79 = vld [vmem:[%s69 + $0x20] sm:$0xff]
        %80 = vst [vmem:[%s70 + $0x20] sm:$0xff] %v79
        %v81 = vld [vmem:[%s69 + $0x28] sm:$0xff]
        %82 = vst [vmem:[%s70 + $0x28] sm:$0xff] %v81
        %v83 = vld [vmem:[%s69 + $0x30] sm:$0xff]
        %84 = vst [vmem:[%s70 + $0x30] sm:$0xff] %v83
        %v85 = vld [vmem:[%s69 + $0x38] sm:$0xff]
        %86 = vst [vmem:[%s70 + $0x38] sm:$0xff] %v85
        %v87 = vld [vmem:[%s69 + $0x40] sm:$0xff]
        %88 = vst [vmem:[%s70 + $0x40] sm:$0xff] %v87
        %v89 = vld [vmem:[%s69 + $0x48] sm:$0xff]
        %90 = vst [vmem:[%s70 + $0x48] sm:$0xff] %v89
      $region37: #{densenet_forward.25} parent=31 // loop_footer
        %s68 = sadd.s32 1, %s64
      $region38: #{densenet_forward.25} parent=31 // loop_footer_branch
        %63 = sbr.rel target = $region34
      $region39: #{densenet_forward.25} parent=31 // loop_exit
        _
      %s91 = sshllo.u32 0, %s58
      loop: start=0, step=1, limit=1
      $region40: #{densenet_forward.25} parent=31 // loop_pre_header
        _
      $region41: #{densenet_forward.25} parent=31 // loop_header
        %s93 = sphi 0, %s97
        %p94 = scmp.ge.s32.totalorder %s93, 1
        %s98 = sphi %s60, %s60
        %s99 = sphi %s62, %s62
      $region42: #{densenet_forward.25} parent=31 // loop_header_branch
        %96 = sbr.rel (%p94) target = $region46
      $region43: #{densenet_forward.25} parent=31 // loop_body
        %v100 = vld [vmem:[%s98] sm:%s91]
        %101 = vst [vmem:[%s99] sm:%s91] %v100
      $region44: #{densenet_forward.25} parent=31 // loop_footer
        %s97 = sadd.s32 1, %s93
      $region45: #{densenet_forward.25} parent=31 // loop_footer_branch
        %92 = sbr.rel target = $region41
      $region46: #{densenet_forward.25} parent=31 // loop_exit
        _
    $region32: #{densenet_forward.25} parent=16 // pred_fallthru
      _
  $region17: #{densenet_forward.25} parent=0 // pred_fallthru
    _
  // Predicated region
  $region18: #{densenet_forward.25} parent=0 // pred_check
    %p39 = pneg %p35
  $region19: #{densenet_forward.25} parent=0 // pred_check_branch
    %41 = sbr.rel (%p39) target = $region21
  $region20: #{densenet_forward.25} parent=0 // pred_region
    %s42 = sshllo.u32 0, 86
    loop: start=0, step=1, limit=1
    $region22: #{densenet_forward.25} parent=20 // loop_pre_header
      _
    $region23: #{densenet_forward.25} parent=20 // loop_header
      %s44 = sphi 0, %s48
      %p45 = scmp.ge.s32.totalorder %s44, 1
      %s49 = sphi %s33, %s33
      %s50 = sphi [#allocation2], [#allocation2]
    $region24: #{densenet_forward.25} parent=20 // loop_header_branch
      %47 = sbr.rel (%p45) target = $region28
    $region25: #{densenet_forward.25} parent=20 // loop_body
      %v51 = vld [vmem:[%s49] sm:%s42]
      %52 = vst [vmem:[%s50] sm:%s42] %v51
    $region26: #{densenet_forward.25} parent=20 // loop_footer
      %s48 = sadd.s32 1, %s44
    $region27: #{densenet_forward.25} parent=20 // loop_footer_branch
      %43 = sbr.rel target = $region23
    $region28: #{densenet_forward.25} parent=20 // loop_exit
      _
  $region21: #{densenet_forward.25} parent=0 // pred_fallthru
    _
  // Predicated region
  $region47: #{densenet_forward.25} parent=0 // pred_check
    _
  $region48: #{densenet_forward.25} parent=0 // pred_check_branch
    %104 = sbr.rel (0) target = $region50
  $region49: #{densenet_forward.25} parent=0 // pred_region
    %105 = vsyncadd [#allocation4], 1376
  $region50: #{densenet_forward.25} parent=0 // pred_fallthru
    _
  %s106 = scalar_lea.vmem %s1, %s32
  %s107 = scalar_lea.sflag [#allocation4], 1
  %p109 = scmp.lt.u32.totalorder 86, 8
  %p110 = pneg %p109
  // Predicated region
  $region51: #{densenet_forward.25} parent=0 // pred_check
    _
  $region52: #{densenet_forward.25} parent=0 // pred_check_branch
    %112 = sbr.rel (%p109) target = $region54
  $region53: #{densenet_forward.25} parent=0 // pred_region
    %s127 = sand.u32 86, 7
    %p128 = scmp.eq.s32.totalorder %s127, 0
    %p129 = pneg %p128
    // Predicated region
    $region66: #{densenet_forward.25} parent=53 // pred_check
      _
    $region67: #{densenet_forward.25} parent=53 // pred_check_branch
      %131 = sbr.rel (%p128) target = $region69
    $region68: #{densenet_forward.25} parent=53 // pred_region
      %s132 = sand.u32 86, 7
      %s133 = ssub.s32 86, %s132
      %s134 = scalar_lea.vmem %s106, %s133
      %s135 = ssub.s32 86, %s132
      %s136 = scalar_lea.vmem [#allocation3], %s135
      loop: start=0, step=1, limit=1
      $region70: #{densenet_forward.25} parent=68 // loop_pre_header
        _
      $region71: #{densenet_forward.25} parent=68 // loop_header
        %s138 = sphi 0, %s142
        %p139 = scmp.ge.s32.totalorder %s138, 1
        %s143 = sphi %s106, %s106
        %s144 = sphi [#allocation3], [#allocation3]
      $region72: #{densenet_forward.25} parent=68 // loop_header_branch
        %141 = sbr.rel (%p139) target = $region76
      $region73: #{densenet_forward.25} parent=68 // loop_body
        %v145 = vld [vmem:[%s143] sm:$0xff]
        %146 = vst [vmem:[%s144] sm:$0xff] %v145
        %v147 = vld [vmem:[%s143 + $0x8] sm:$0xff]
        %148 = vst [vmem:[%s144 + $0x8] sm:$0xff] %v147
        %v149 = vld [vmem:[%s143 + $0x10] sm:$0xff]
        %150 = vst [vmem:[%s144 + $0x10] sm:$0xff] %v149
        %v151 = vld [vmem:[%s143 + $0x18] sm:$0xff]
        %152 = vst [vmem:[%s144 + $0x18] sm:$0xff] %v151
        %v153 = vld [vmem:[%s143 + $0x20] sm:$0xff]
        %154 = vst [vmem:[%s144 + $0x20] sm:$0xff] %v153
        %v155 = vld [vmem:[%s143 + $0x28] sm:$0xff]
        %156 = vst [vmem:[%s144 + $0x28] sm:$0xff] %v155
        %v157 = vld [vmem:[%s143 + $0x30] sm:$0xff]
        %158 = vst [vmem:[%s144 + $0x30] sm:$0xff] %v157
        %v159 = vld [vmem:[%s143 + $0x38] sm:$0xff]
        %160 = vst [vmem:[%s144 + $0x38] sm:$0xff] %v159
        %v161 = vld [vmem:[%s143 + $0x40] sm:$0xff]
        %162 = vst [vmem:[%s144 + $0x40] sm:$0xff] %v161
        %v163 = vld [vmem:[%s143 + $0x48] sm:$0xff]
        %164 = vst [vmem:[%s144 + $0x48] sm:$0xff] %v163
      $region74: #{densenet_forward.25} parent=68 // loop_footer
        %s142 = sadd.s32 1, %s138
      $region75: #{densenet_forward.25} parent=68 // loop_footer_branch
        %137 = sbr.rel target = $region71
      $region76: #{densenet_forward.25} parent=68 // loop_exit
        _
      %s165 = sshllo.u32 0, %s132
      loop: start=0, step=1, limit=1
      $region77: #{densenet_forward.25} parent=68 // loop_pre_header
        _
      $region78: #{densenet_forward.25} parent=68 // loop_header
        %s167 = sphi 0, %s171
        %p168 = scmp.ge.s32.totalorder %s167, 1
        %s172 = sphi %s134, %s134
        %s173 = sphi %s136, %s136
      $region79: #{densenet_forward.25} parent=68 // loop_header_branch
        %170 = sbr.rel (%p168) target = $region83
      $region80: #{densenet_forward.25} parent=68 // loop_body
        %v174 = vld [vmem:[%s172] sm:%s165]
        %175 = vst [vmem:[%s173] sm:%s165] %v174
      $region81: #{densenet_forward.25} parent=68 // loop_footer
        %s171 = sadd.s32 1, %s167
      $region82: #{densenet_forward.25} parent=68 // loop_footer_branch
        %166 = sbr.rel target = $region78
      $region83: #{densenet_forward.25} parent=68 // loop_exit
        _
    $region69: #{densenet_forward.25} parent=53 // pred_fallthru
      _
  $region54: #{densenet_forward.25} parent=0 // pred_fallthru
    _
  // Predicated region
  $region55: #{densenet_forward.25} parent=0 // pred_check
    %p113 = pneg %p109
  $region56: #{densenet_forward.25} parent=0 // pred_check_branch
    %115 = sbr.rel (%p113) target = $region58
  $region57: #{densenet_forward.25} parent=0 // pred_region
    %s116 = sshllo.u32 0, 86
    loop: start=0, step=1, limit=1
    $region59: #{densenet_forward.25} parent=57 // loop_pre_header
      _
    $region60: #{densenet_forward.25} parent=57 // loop_header
      %s118 = sphi 0, %s122
      %p119 = scmp.ge.s32.totalorder %s118, 1
      %s123 = sphi %s106, %s106
      %s124 = sphi [#allocation3], [#allocation3]
    $region61: #{densenet_forward.25} parent=57 // loop_header_branch
      %121 = sbr.rel (%p119) target = $region65
    $region62: #{densenet_forward.25} parent=57 // loop_body
      %v125 = vld [vmem:[%s123] sm:%s116]
      %126 = vst [vmem:[%s124] sm:%s116] %v125
    $region63: #{densenet_forward.25} parent=57 // loop_footer
      %s122 = sadd.s32 1, %s118
    $region64: #{densenet_forward.25} parent=57 // loop_footer_branch
      %117 = sbr.rel target = $region60
    $region65: #{densenet_forward.25} parent=57 // loop_exit
      _
  $region58: #{densenet_forward.25} parent=0 // pred_fallthru
    _
  // Predicated region
  $region84: #{densenet_forward.25} parent=0 // pred_check
    _
  $region85: #{densenet_forward.25} parent=0 // pred_check_branch
    %178 = sbr.rel (0) target = $region87
  $region86: #{densenet_forward.25} parent=0 // pred_region
    %179 = vsyncadd %s107, 1376
  $region87: #{densenet_forward.25} parent=0 // pred_fallthru
    _
  %s180 = smul.u32 86, 1
  %s181 = sshll.u32 %s180, 4
  %182 = dma.done [#allocation4], %s181
  %s183 = sshll.u32 %s180, 4
  %184 = dma.done %s107, %s183
  %v185 = vld [vmem:[#allocation3] sm:$0xff]
  %v186 = vld [vmem:[#allocation3 + $0x8] sm:$0xff]
  %v187 = vld [vmem:[#allocation3 + $0x10] sm:$0xff]
  %v188 = vld [vmem:[#allocation3 + $0x18] sm:$0xff]
  %v189 = vld [vmem:[#allocation3 + $0x20] sm:$0xff]
  %v190 = vld [vmem:[#allocation3 + $0x28] sm:$0xff]
  %v191 = vld [vmem:[#allocation3 + $0x30] sm:$0xff]
  %v192 = vld [vmem:[#allocation3 + $0x38] sm:$0xff]
  %v193 = vld [vmem:[#allocation3 + $0x40] sm:$0xff]
  %v194 = vld [vmem:[#allocation3 + $0x48] sm:$0xff]
  %v195 = vld [vmem:[#allocation3 + $0x50] sm:$0x3f]
  %vm196 = vcmp.gt.f32.partialorder %v185, 0.0
  %vm197 = vcmp.gt.f32.partialorder %v186, 0.0
  %vm198 = vcmp.gt.f32.partialorder %v187, 0.0
  %vm199 = vcmp.gt.f32.partialorder %v188, 0.0
  %vm200 = vcmp.gt.f32.partialorder %v189, 0.0
  %vm201 = vcmp.gt.f32.partialorder %v190, 0.0
  %vm202 = vcmp.gt.f32.partialorder %v191, 0.0
  %vm203 = vcmp.gt.f32.partialorder %v192, 0.0
  %vm204 = vcmp.gt.f32.partialorder %v193, 0.0
  %vm205 = vcmp.gt.f32.partialorder %v194, 0.0
  %vm206 = vcmp.gt.f32.partialorder %v195, 0.0
  %v207 = vld [vmem:[#allocation2] sm:$0xff]
  %v208 = vld [vmem:[#allocation2 + $0x8] sm:$0xff]
  %v209 = vld [vmem:[#allocation2 + $0x10] sm:$0xff]
  %v210 = vld [vmem:[#allocation2 + $0x18] sm:$0xff]
  %v211 = vld [vmem:[#allocation2 + $0x20] sm:$0xff]
  %v212 = vld [vmem:[#allocation2 + $0x28] sm:$0xff]
  %v213 = vld [vmem:[#allocation2 + $0x30] sm:$0xff]
  %v214 = vld [vmem:[#allocation2 + $0x38] sm:$0xff]
  %v215 = vld [vmem:[#allocation2 + $0x40] sm:$0xff]
  %v216 = vld [vmem:[#allocation2 + $0x48] sm:$0xff]
  %v217 = vld [vmem:[#allocation2 + $0x50] sm:$0x3f]
  %v218 = vld [vmem:[%s2] sm:$0x1]
  %v220 = vlaneseq
  %v221 = vshrl.u32 %v220, 7
  %v222 = vsub.s32 0, %v221
  %v223 = vrot.slane %v218, %v222
  %v225 = vmul.f32 %v207, %v223
  %v226 = vmul.f32 %v208, %v223
  %v227 = vmul.f32 %v209, %v223
  %v228 = vmul.f32 %v210, %v223
  %v229 = vmul.f32 %v211, %v223
  %v230 = vmul.f32 %v212, %v223
  %v231 = vmul.f32 %v213, %v223
  %v232 = vmul.f32 %v214, %v223
  %v233 = vmul.f32 %v215, %v223
  %v234 = vmul.f32 %v216, %v223
  %v235 = vmul.f32 %v217, %v223
  %v236 = vld [vmem:[%s3] sm:$0x1]
  %v238 = vlaneseq
  %v239 = vshrl.u32 %v238, 7
  %v240 = vsub.s32 0, %v239
  %v241 = vrot.slane %v236, %v240
  %v243 = vadd.f32 %v225, %v241
  %v244 = vadd.f32 %v226, %v241
  %v245 = vadd.f32 %v227, %v241
  %v246 = vadd.f32 %v228, %v241
  %v247 = vadd.f32 %v229, %v241
  %v248 = vadd.f32 %v230, %v241
  %v249 = vadd.f32 %v231, %v241
  %v250 = vadd.f32 %v232, %v241
  %v251 = vadd.f32 %v233, %v241
  %v252 = vadd.f32 %v234, %v241
  %v253 = vadd.f32 %v235, %v241
  %v254 = vmax.f32 %v243, 0.0
  %v255 = vmax.f32 %v244, 0.0
  %v256 = vmax.f32 %v245, 0.0
  %v257 = vmax.f32 %v246, 0.0
  %v258 = vmax.f32 %v247, 0.0
  %v259 = vmax.f32 %v248, 0.0
  %v260 = vmax.f32 %v249, 0.0
  %v261 = vmax.f32 %v250, 0.0
  %v262 = vmax.f32 %v251, 0.0
  %v263 = vmax.f32 %v252, 0.0
  %v264 = vmax.f32 %v253, 0.0
  %v265 = vsel %vm196, 1, 0
  %v266 = vsel %vm197, 1, 0
  %v267 = vsel %vm198, 1, 0
  %v268 = vsel %vm199, 1, 0
  %v269 = vsel %vm200, 1, 0
  %v270 = vsel %vm201, 1, 0
  %v271 = vsel %vm202, 1, 0
  %v272 = vsel %vm203, 1, 0
  %v273 = vsel %vm204, 1, 0
  %v274 = vsel %vm205, 1, 0
  %v275 = vsel %vm206, 1, 0
  %276 = vset.pattern.permute.xlu0 0
  %277 = vperm.xlu0 %276, %v265
  %v278 = vpop.permute.xlu0 %277
  %279 = vset.pattern.permute.xlu0 0
  %280 = vperm.xlu0 %279, %v266
  %v281 = vpop.permute.xlu0 %280
  %282 = vset.pattern.permute.xlu0 0
  %283 = vperm.xlu0 %282, %v267
  %v284 = vpop.permute.xlu0 %283
  %285 = vset.pattern.permute.xlu0 0
  %286 = vperm.xlu0 %285, %v268
  %v287 = vpop.permute.xlu0 %286
  %288 = vset.pattern.permute.xlu0 0
  %289 = vperm.xlu0 %288, %v269
  %v290 = vpop.permute.xlu0 %289
  %291 = vset.pattern.permute.xlu0 0
  %292 = vperm.xlu0 %291, %v270
  %v293 = vpop.permute.xlu0 %292
  %294 = vset.pattern.permute.xlu0 0
  %295 = vperm.xlu0 %294, %v271
  %v296 = vpop.permute.xlu0 %295
  %297 = vset.pattern.permute.xlu0 0
  %298 = vperm.xlu0 %297, %v272
  %v299 = vpop.permute.xlu0 %298
  %300 = vset.pattern.permute.xlu0 0
  %301 = vperm.xlu0 %300, %v273
  %v302 = vpop.permute.xlu0 %301
  %303 = vset.pattern.permute.xlu0 0
  %304 = vperm.xlu0 %303, %v274
  %v305 = vpop.permute.xlu0 %304
  %306 = vset.pattern.permute.xlu0 0
  %307 = vperm.xlu0 %306, %v275
  %v308 = vpop.permute.xlu0 %307
  %vm309 = vcmp.eq.s32.totalorder %v278, 1
  %vm310 = vcmp.eq.s32.totalorder %v281, 1
  %vm311 = vcmp.eq.s32.totalorder %v284, 1
  %vm312 = vcmp.eq.s32.totalorder %v287, 1
  %vm313 = vcmp.eq.s32.totalorder %v290, 1
  %vm314 = vcmp.eq.s32.totalorder %v293, 1
  %vm315 = vcmp.eq.s32.totalorder %v296, 1
  %vm316 = vcmp.eq.s32.totalorder %v299, 1
  %vm317 = vcmp.eq.s32.totalorder %v302, 1
  %vm318 = vcmp.eq.s32.totalorder %v305, 1
  %vm319 = vcmp.eq.s32.totalorder %v308, 1
  %v320 = vsel %vm309, %v254, 0.0
  %v321 = vsel %vm310, %v255, 0.0
  %v322 = vsel %vm311, %v256, 0.0
  %v323 = vsel %vm312, %v257, 0.0
  %v324 = vsel %vm313, %v258, 0.0
  %v325 = vsel %vm314, %v259, 0.0
  %v326 = vsel %vm315, %v260, 0.0
  %v327 = vsel %vm316, %v261, 0.0
  %v328 = vsel %vm317, %v262, 0.0
  %v329 = vsel %vm318, %v263, 0.0
  %v330 = vsel %vm319, %v264, 0.0
  %331 = vst [vmem:[#allocation2] sm:$0xff] %v320
  %332 = vst [vmem:[#allocation2 + $0x8] sm:$0xff] %v321
  %333 = vst [vmem:[#allocation2 + $0x10] sm:$0xff] %v322
  %334 = vst [vmem:[#allocation2 + $0x18] sm:$0xff] %v323
  %335 = vst [vmem:[#allocation2 + $0x20] sm:$0xff] %v324
  %336 = vst [vmem:[#allocation2 + $0x28] sm:$0xff] %v325
  %337 = vst [vmem:[#allocation2 + $0x30] sm:$0xff] %v326
  %338 = vst [vmem:[#allocation2 + $0x38] sm:$0xff] %v327
  %339 = vst [vmem:[#allocation2 + $0x40] sm:$0xff] %v328
  %340 = vst [vmem:[#allocation2 + $0x48] sm:$0xff] %v329
  %341 = vst [vmem:[#allocation2 + $0x50] sm:$0x3f] %v330
  %v342 = vld [vmem:[#allocation2] sm:$0xff]
  %v343 = vld [vmem:[#allocation2 + $0x8] sm:$0xff]
  %v344 = vld [vmem:[#allocation2 + $0x10] sm:$0xff]
  %v345 = vld [vmem:[#allocation2 + $0x18] sm:$0xff]
  %v346 = vld [vmem:[#allocation2 + $0x20] sm:$0xff]
  %v347 = vld [vmem:[#allocation2 + $0x28] sm:$0xff]
  %v348 = vld [vmem:[#allocation2 + $0x30] sm:$0xff]
  %v349 = vld [vmem:[#allocation2 + $0x38] sm:$0xff]
  %v350 = vld [vmem:[#allocation2 + $0x40] sm:$0xff]
  %v351 = vld [vmem:[%s4] sm:$0xff]
  %v352 = vld [vmem:[%s4 + $0x8] sm:$0xff]
  %v353 = vld [vmem:[%s4 + $0x10] sm:$0xff]
  %v354 = vld [vmem:[%s4 + $0x18] sm:$0xff]
  %v355 = vld [vmem:[%s4 + $0x20] sm:$0xff]
  %v356 = vld [vmem:[%s4 + $0x28] sm:$0xff]
  %v357 = vld [vmem:[%s4 + $0x30] sm:$0xff]
  %v358 = vld [vmem:[%s4 + $0x38] sm:$0xff]
  %v359 = vld [vmem:[%s4 + $0x40] sm:$0xff]
  %v360 = vld [vmem:[%s4 + $0x48] sm:$0xff]
  %v361 = vld [vmem:[%s4 + $0x50] sm:$0xff]
  %v362 = vld [vmem:[%s4 + $0x58] sm:$0xff]
  %v363 = vld [vmem:[%s4 + $0x60] sm:$0xff]
  %v364 = vld [vmem:[%s4 + $0x68] sm:$0xff]
  %v365 = vld [vmem:[%s4 + $0x70] sm:$0xff]
  %v366 = vld [vmem:[%s4 + $0x78] sm:$0xff]
  %v367 = vld [vmem:[#allocation2 + $0x1] sm:$0xff]
  %v368 = vld [vmem:[#allocation2 + $0x9] sm:$0xff]
  %v369 = vld [vmem:[#allocation2 + $0x11] sm:$0xff]
  %v370 = vld [vmem:[#allocation2 + $0x19] sm:$0xff]
  %v371 = vld [vmem:[#allocation2 + $0x21] sm:$0xff]
  %v372 = vld [vmem:[#allocation2 + $0x29] sm:$0xff]
  %v373 = vld [vmem:[#allocation2 + $0x31] sm:$0xff]
  %v374 = vld [vmem:[#allocation2 + $0x39] sm:$0xff]
  %v375 = vld [vmem:[#allocation2 + $0x41] sm:$0xff]
  %v376 = vld [vmem:[%s4 + $0x80] sm:$0xff]
  %v377 = vld [vmem:[%s4 + $0x88] sm:$0xff]
  %v378 = vld [vmem:[%s4 + $0x90] sm:$0xff]
  %v379 = vld [vmem:[%s4 + $0x98] sm:$0xff]
  %v380 = vld [vmem:[%s4 + $0xa0] sm:$0xff]
  %v381 = vld [vmem:[%s4 + $0xa8] sm:$0xff]
  %v382 = vld [vmem:[%s4 + $0xb0] sm:$0xff]
  %v383 = vld [vmem:[%s4 + $0xb8] sm:$0xff]
  %v384 = vld [vmem:[%s4 + $0xc0] sm:$0xff]
  %v385 = vld [vmem:[%s4 + $0xc8] sm:$0xff]
  %v386 = vld [vmem:[%s4 + $0xd0] sm:$0xff]
  %v387 = vld [vmem:[%s4 + $0xd8] sm:$0xff]
  %v388 = vld [vmem:[%s4 + $0xe0] sm:$0xff]
  %v389 = vld [vmem:[%s4 + $0xe8] sm:$0xff]
  %v390 = vld [vmem:[%s4 + $0xf0] sm:$0xff]
  %v391 = vld [vmem:[%s4 + $0xf8] sm:$0xff]
  %392 = vmatprep.subr.mxu0 0.0
  %393 = vmatpush1.msra.mxu0 %v376
  %394 = vmatprep.subr.mxu0 0.0
  %395 = vmatpush1.msra.mxu0 %v377
  %396 = vmatprep.subr.mxu0 0.0
  %397 = vmatpush1.msra.mxu0 %v378
  %398 = vmatprep.subr.mxu0 0.0
  %399 = vmatpush1.msra.mxu0 %v379
  %400 = vmatprep.subr.mxu0 0.0
  %401 = vmatpush1.msra.mxu0 %v380
  %402 = vmatprep.subr.mxu0 0.0
  %403 = vmatpush1.msra.mxu0 %v381
  %404 = vmatprep.subr.mxu0 0.0
  %405 = vmatpush1.msra.mxu0 %v382
  %406 = vmatprep.subr.mxu0 0.0
  %407 = vmatpush1.msra.mxu0 %v383
  %408 = vmatprep.subr.mxu0 0.0
  %409 = vmatpush1.msra.mxu0 %v384
  %410 = vmatprep.subr.mxu0 0.0
  %411 = vmatpush1.msra.mxu0 %v385
  %412 = vmatprep.subr.mxu0 0.0
  %413 = vmatpush1.msra.mxu0 %v386
  %414 = vmatprep.subr.mxu0 0.0
  %415 = vmatpush1.msra.mxu0 %v387
  %416 = vmatprep.subr.mxu0 0.0
  %417 = vmatpush1.msra.mxu0 %v388
  %418 = vmatprep.subr.mxu0 0.0
  %419 = vmatpush1.msra.mxu0 %v389
  %420 = vmatprep.subr.mxu0 0.0
  %421 = vmatpush1.msra.mxu0 %v390
  %422 = vmatprep.subr.mxu0 0.0
  %423 = vmatpush1.msra.mxu0 %v391
  %424 = vmatprep.subr.mxu0 0.0
  %425 = vmatpush1.msra.mxu0 0.0
  %426 = vmatprep.subr.mxu0 0.0
  %427 = vmatpush1.msra.mxu0 0.0
  %428 = vmatprep.subr.mxu0 0.0
  %429 = vmatpush1.msra.mxu0 0.0
  %430 = vmatprep.subr.mxu0 0.0
  %431 = vmatpush1.msra.mxu0 0.0
  %432 = vmatprep.subr.mxu0 0.0
  %433 = vmatpush1.msra.mxu0 0.0
  %434 = vmatprep.subr.mxu0 0.0
  %435 = vmatpush1.msra.mxu0 0.0
  %436 = vmatprep.subr.mxu0 0.0
  %437 = vmatpush1.msra.mxu0 0.0
  %438 = vmatprep.subr.mxu0 0.0
  %439 = vmatpush1.msra.mxu0 0.0
  %440 = vmatprep.subr.mxu0 0.0
  %441 = vmatpush1.msra.mxu0 0.0
  %442 = vmatprep.subr.mxu0 0.0
  %443 = vmatpush1.msra.mxu0 0.0
  %444 = vmatprep.subr.mxu0 0.0
  %445 = vmatpush1.msra.mxu0 0.0
  %446 = vmatprep.subr.mxu0 0.0
  %447 = vmatpush1.msra.mxu0 0.0
  %448 = vmatprep.subr.mxu0 0.0
  %449 = vmatpush1.msra.mxu0 0.0
  %450 = vmatprep.subr.mxu0 0.0
  %451 = vmatpush1.msra.mxu0 0.0
  %452 = vmatprep.subr.mxu0 0.0
  %453 = vmatpush1.msra.mxu0 0.0
  %454 = vmatprep.subr.mxu0 0.0
  %455 = vmatpush1.msra.mxu0 0.0
  %456 = vmatprep.mubr.f32.mxu0 0.0
  %457 = vmatmul.mubr.f32.gmra.mrb[0].mxu0 %v367
  %v458 = vpop.f32.mrb[0].mxu0
  %v459 = vadd.f32 0.0, %v458
  %v460 = vpop.f32.mrb[0].mxu0
  %461 = vmatprep.mubr.f32.mxu0 0.0
  %462 = vmatmul.mubr.f32.gmra.mrb[0].mxu0 %v368
  %v463 = vpop.f32.mrb[0].mxu0
  %v464 = vadd.f32 0.0, %v463
  %v465 = vpop.f32.mrb[0].mxu0
  %466 = vmatprep.mubr.f32.mxu0 0.0
  %467 = vmatmul.mubr.f32.gmra.mrb[0].mxu0 %v369
  %v468 = vpop.f32.mrb[0].mxu0
  %v469 = vadd.f32 0.0, %v468
  %v470 = vpop.f32.mrb[0].mxu0
  %471 = vmatprep.mubr.f32.mxu0 0.0
  %472 = vmatmul.mubr.f32.gmra.mrb[0].mxu0 %v370
  %v473 = vpop.f32.mrb[0].mxu0
  %v474 = vadd.f32 0.0, %v473
  %v475 = vpop.f32.mrb[0].mxu0
  %476 = vmatprep.mubr.f32.mxu0 0.0
  %477 = vmatmul.mubr.f32.gmra.mrb[0].mxu0 %v371
  %v478 = vpop.f32.mrb[0].mxu0
  %v479 = vadd.f32 0.0, %v478
  %v480 = vpop.f32.mrb[0].mxu0
  %481 = vmatprep.mubr.f32.mxu0 0.0
  %482 = vmatmul.mubr.f32.gmra.mrb[0].mxu0 %v372
  %v483 = vpop.f32.mrb[0].mxu0
  %v484 = vadd.f32 0.0, %v483
  %v485 = vpop.f32.mrb[0].mxu0
  %486 = vmatprep.mubr.f32.mxu0 0.0
  %487 = vmatmul.mubr.f32.gmra.mrb[0].mxu0 %v373
  %v488 = vpop.f32.mrb[0].mxu0
  %v489 = vadd.f32 0.0, %v488
  %v490 = vpop.f32.mrb[0].mxu0
  %491 = vmatprep.mubr.f32.mxu0 0.0
  %492 = vmatmul.mubr.f32.gmra.mrb[0].mxu0 %v374
  %v493 = vpop.f32.mrb[0].mxu0
  %v494 = vadd.f32 0.0, %v493
  %v495 = vpop.f32.mrb[0].mxu0
  %496 = vmatprep.mubr.f32.mxu0 0.0
  %497 = vmatmul.mubr.f32.gmra.mrb[0].mxu0 %v375
  %v498 = vpop.f32.mrb[0].mxu0
  %v499 = vadd.f32 0.0, %v498
  %v500 = vpop.f32.mrb[0].mxu0
  %501 = vdwg.mxu0
  %502 = vmatprep.subr.mxu0 0.0
  %503 = vmatpush1.msra.mxu0 %v351
  %504 = vmatprep.subr.mxu0 0.0
  %505 = vmatpush1.msra.mxu0 %v352
  %506 = vmatprep.subr.mxu0 0.0
  %507 = vmatpush1.msra.mxu0 %v353
  %508 = vmatprep.subr.mxu0 0.0
  %509 = vmatpush1.msra.mxu0 %v354
  %510 = vmatprep.subr.mxu0 0.0
  %511 = vmatpush1.msra.mxu0 %v355
  %512 = vmatprep.subr.mxu0 0.0
  %513 = vmatpush1.msra.mxu0 %v356
  %514 = vmatprep.subr.mxu0 0.0
  %515 = vmatpush1.msra.mxu0 %v357
  %516 = vmatprep.subr.mxu0 0.0
  %517 = vmatpush1.msra.mxu0 %v358
  %518 = vmatprep.subr.mxu0 0.0
  %519 = vmatpush1.msra.mxu0 %v359
  %520 = vmatprep.subr.mxu0 0.0
  %521 = vmatpush1.msra.mxu0 %v360
  %522 = vmatprep.subr.mxu0 0.0
  %523 = vmatpush1.msra.mxu0 %v361
  %524 = vmatprep.subr.mxu0 0.0
  %525 = vmatpush1.msra.mxu0 %v362
  %526 = vmatprep.subr.mxu0 0.0
  %527 = vmatpush1.msra.mxu0 %v363
  %528 = vmatprep.subr.mxu0 0.0
  %529 = vmatpush1.msra.mxu0 %v364
  %530 = vmatprep.subr.mxu0 0.0
  %531 = vmatpush1.msra.mxu0 %v365
  %532 = vmatprep.subr.mxu0 0.0
  %533 = vmatpush1.msra.mxu0 %v366
  %534 = vmatprep.subr.mxu0 0.0
  %535 = vmatpush1.msra.mxu0 0.0
  %536 = vmatprep.subr.mxu0 0.0
  %537 = vmatpush1.msra.mxu0 0.0
  %538 = vmatprep.subr.mxu0 0.0
  %539 = vmatpush1.msra.mxu0 0.0
  %540 = vmatprep.subr.mxu0 0.0
  %541 = vmatpush1.msra.mxu0 0.0
  %542 = vmatprep.subr.mxu0 0.0
  %543 = vmatpush1.msra.mxu0 0.0
  %544 = vmatprep.subr.mxu0 0.0
  %545 = vmatpush1.msra.mxu0 0.0
  %546 = vmatprep.subr.mxu0 0.0
  %547 = vmatpush1.msra.mxu0 0.0
  %548 = vmatprep.subr.mxu0 0.0
  %549 = vmatpush1.msra.mxu0 0.0
  %550 = vmatprep.subr.mxu0 0.0
  %551 = vmatpush1.msra.mxu0 0.0
  %552 = vmatprep.subr.mxu0 0.0
  %553 = vmatpush1.msra.mxu0 0.0
  %554 = vmatprep.subr.mxu0 0.0
  %555 = vmatpush1.msra.mxu0 0.0
  %556 = vmatprep.subr.mxu0 0.0
  %557 = vmatpush1.msra.mxu0 0.0
  %558 = vmatprep.subr.mxu0 0.0
  %559 = vmatpush1.msra.mxu0 0.0
  %560 = vmatprep.subr.mxu0 0.0
  %561 = vmatpush1.msra.mxu0 0.0
  %562 = vmatprep.subr.mxu0 0.0
  %563 = vmatpush1.msra.mxu0 0.0
  %564 = vmatprep.subr.mxu0 0.0
  %565 = vmatpush1.msra.mxu0 0.0
  %566 = vmatprep.mubr.f32.mxu0 0.0
  %567 = vmatmul.mubr.f32.gmra.mrb[0].mxu0 %v342
  %v568 = vpop.f32.mrb[0].mxu0
  %v569 = vadd.f32 %v459, %v568
  %v570 = vpop.f32.mrb[0].mxu0
  %571 = vmatprep.mubr.f32.mxu0 0.0
  %572 = vmatmul.mubr.f32.gmra.mrb[0].mxu0 %v343
  %v573 = vpop.f32.mrb[0].mxu0
  %v574 = vadd.f32 %v464, %v573
  %v575 = vpop.f32.mrb[0].mxu0
  %576 = vmatprep.mubr.f32.mxu0 0.0
  %577 = vmatmul.mubr.f32.gmra.mrb[0].mxu0 %v344
  %v578 = vpop.f32.mrb[0].mxu0
  %v579 = vadd.f32 %v469, %v578
  %v580 = vpop.f32.mrb[0].mxu0
  %581 = vmatprep.mubr.f32.mxu0 0.0
  %582 = vmatmul.mubr.f32.gmra.mrb[0].mxu0 %v345
  %v583 = vpop.f32.mrb[0].mxu0
  %v584 = vadd.f32 %v474, %v583
  %v585 = vpop.f32.mrb[0].mxu0
  %586 = vmatprep.mubr.f32.mxu0 0.0
  %587 = vmatmul.mubr.f32.gmra.mrb[0].mxu0 %v346
  %v588 = vpop.f32.mrb[0].mxu0
  %v589 = vadd.f32 %v479, %v588
  %v590 = vpop.f32.mrb[0].mxu0
  %591 = vmatprep.mubr.f32.mxu0 0.0
  %592 = vmatmul.mubr.f32.gmra.mrb[0].mxu0 %v347
  %v593 = vpop.f32.mrb[0].mxu0
  %v594 = vadd.f32 %v484, %v593
  %v595 = vpop.f32.mrb[0].mxu0
  %596 = vmatprep.mubr.f32.mxu0 0.0
  %597 = vmatmul.mubr.f32.gmra.mrb[0].mxu0 %v348
  %v598 = vpop.f32.mrb[0].mxu0
  %v599 = vadd.f32 %v489, %v598
  %v600 = vpop.f32.mrb[0].mxu0
  %601 = vmatprep.mubr.f32.mxu0 0.0
  %602 = vmatmul.mubr.f32.gmra.mrb[0].mxu0 %v349
  %v603 = vpop.f32.mrb[0].mxu0
  %v604 = vadd.f32 %v494, %v603
  %v605 = vpop.f32.mrb[0].mxu0
  %606 = vmatprep.mubr.f32.mxu0 0.0
  %607 = vmatmul.mubr.f32.gmra.mrb[0].mxu0 %v350
  %v608 = vpop.f32.mrb[0].mxu0
  %v609 = vadd.f32 %v499, %v608
  %v610 = vpop.f32.mrb[0].mxu0
  %611 = vdwg.mxu0
  %v612 = vld [vmem:[#allocation2 + $0x2] sm:$0xff]
  %v613 = vld [vmem:[#allocation2 + $0xa] sm:$0xff]
  %v614 = vld [vmem:[#allocation2 + $0x12] sm:$0xff]
  %v615 = vld [vmem:[#allocation2 + $0x1a] sm:$0xff]
  %v616 = vld [vmem:[#allocation2 + $0x22] sm:$0xff]
  %v617 = vld [vmem:[#allocation2 + $0x2a] sm:$0xff]
  %v618 = vld [vmem:[#allocation2 + $0x32] sm:$0xff]
  %v619 = vld [vmem:[#allocation2 + $0x3a] sm:$0xff]
  %v620 = vld [vmem:[#allocation2 + $0x42] sm:$0xff]
  %v621 = vld [vmem:[%s4 + $0x100] sm:$0xff]
  %v622 = vld [vmem:[%s4 + $0x108] sm:$0xff]
  %v623 = vld [vmem:[%s4 + $0x110] sm:$0xff]
  %v624 = vld [vmem:[%s4 + $0x118] sm:$0xff]
  %v625 = vld [vmem:[%s4 + $0x120] sm:$0xff]
  %v626 = vld [vmem:[%s4 + $0x128] sm:$0xff]
  %v627 = vld [vmem:[%s4 + $0x130] sm:$0xff]
  %v628 = vld [vmem:[%s4 + $0x138] sm:$0xff]
  %v629 = vld [vmem:[%s4 + $0x140] sm:$0xff]
  %v630 = vld [vmem:[%s4 + $0x148] sm:$0xff]
  %v631 = vld [vmem:[%s4 + $0x150] sm:$0xff]
  %v632 = vld [vmem:[%s4 + $0x158] sm:$0xff]
  %v633 = vld [vmem:[%s4 + $0x160] sm:$0xff]
  %v634 = vld [vmem:[%s4 + $0x168] sm:$0xff]
  %v635 = vld [vmem:[%s4 + $0x170] sm:$0xff]
  %v636 = vld [vmem:[%s4 + $0x178] sm:$0xff]
  %637 = vmatprep.subr.mxu0 0.0
  %638 = vmatpush1.msra.mxu0 %v621
  %639 = vmatprep.subr.mxu0 0.0
  %640 = vmatpush1.msra.mxu0 %v622
  %641 = vmatprep.subr.mxu0 0.0
  %642 = vmatpush1.msra.mxu0 %v623
  %643 = vmatprep.subr.mxu0 0.0
  %644 = vmatpush1.msra.mxu0 %v624
  %645 = vmatprep.subr.mxu0 0.0
  %646 = vmatpush1.msra.mxu0 %v625
  %647 = vmatprep.subr.mxu0 0.0
  %648 = vmatpush1.msra.mxu0 %v626
  %649 = vmatprep.subr.mxu0 0.0
  %650 = vmatpush1.msra.mxu0 %v627
  %651 = vmatprep.subr.mxu0 0.0
  %652 = vmatpush1.msra.mxu0 %v628
  %653 = vmatprep.subr.mxu0 0.0
  %654 = vmatpush1.msra.mxu0 %v629
  %655 = vmatprep.subr.mxu0 0.0
  %656 = vmatpush1.msra.mxu0 %v630
  %657 = vmatprep.subr.mxu0 0.0
  %658 = vmatpush1.msra.mxu0 %v631
  %659 = vmatprep.subr.mxu0 0.0
  %660 = vmatpush1.msra.mxu0 %v632
  %661 = vmatprep.subr.mxu0 0.0
  %662 = vmatpush1.msra.mxu0 %v633
  %663 = vmatprep.subr.mxu0 0.0
  %664 = vmatpush1.msra.mxu0 %v634
  %665 = vmatprep.subr.mxu0 0.0
  %666 = vmatpush1.msra.mxu0 %v635
  %667 = vmatprep.subr.mxu0 0.0
  %668 = vmatpush1.msra.mxu0 %v636
  %669 = vmatprep.subr.mxu0 0.0
  %670 = vmatpush1.msra.mxu0 0.0
  %671 = vmatprep.subr.mxu0 0.0
  %672 = vmatpush1.msra.mxu0 0.0
  %673 = vmatprep.subr.mxu0 0.0
  %674 = vmatpush1.msra.mxu0 0.0
  %675 = vmatprep.subr.mxu0 0.0
  %676 = vmatpush1.msra.mxu0 0.0
  %677 = vmatprep.subr.mxu0 0.0
  %678 = vmatpush1.msra.mxu0 0.0
  %679 = vmatprep.subr.mxu0 0.0
  %680 = vmatpush1.msra.mxu0 0.0
  %681 = vmatprep.subr.mxu0 0.0
  %682 = vmatpush1.msra.mxu0 0.0
  %683 = vmatprep.subr.mxu0 0.0
  %684 = vmatpush1.msra.mxu0 0.0
  %685 = vmatprep.subr.mxu0 0.0
  %686 = vmatpush1.msra.mxu0 0.0
  %687 = vmatprep.subr.mxu0 0.0
  %688 = vmatpush1.msra.mxu0 0.0
  %689 = vmatprep.subr.mxu0 0.0
  %690 = vmatpush1.msra.mxu0 0.0
  %691 = vmatprep.subr.mxu0 0.0
  %692 = vmatpush1.msra.mxu0 0.0
  %693 = vmatprep.subr.mxu0 0.0
  %694 = vmatpush1.msra.mxu0 0.0
  %695 = vmatprep.subr.mxu0 0.0
  %696 = vmatpush1.msra.mxu0 0.0
  %697 = vmatprep.subr.mxu0 0.0
  %698 = vmatpush1.msra.mxu0 0.0
  %699 = vmatprep.subr.mxu0 0.0
  %700 = vmatpush1.msra.mxu0 0.0
  %701 = vmatprep.mubr.f32.mxu0 0.0
  %702 = vmatmul.mubr.f32.gmra.mrb[0].mxu0 %v612
  %v703 = vpop.f32.mrb[0].mxu0
  %v704 = vadd.f32 0.0, %v703
  %v705 = vpop.f32.mrb[0].mxu0
  %706 = vmatprep.mubr.f32.mxu0 0.0
  %707 = vmatmul.mubr.f32.gmra.mrb[0].mxu0 %v613
  %v708 = vpop.f32.mrb[0].mxu0
  %v709 = vadd.f32 0.0, %v708
  %v710 = vpop.f32.mrb[0].mxu0
  %711 = vmatprep.mubr.f32.mxu0 0.0
  %712 = vmatmul.mubr.f32.gmra.mrb[0].mxu0 %v614
  %v713 = vpop.f32.mrb[0].mxu0
  %v714 = vadd.f32 0.0, %v713
  %v715 = vpop.f32.mrb[0].mxu0
  %716 = vmatprep.mubr.f32.mxu0 0.0
  %717 = vmatmul.mubr.f32.gmra.mrb[0].mxu0 %v615
  %v718 = vpop.f32.mrb[0].mxu0
  %v719 = vadd.f32 0.0, %v718
  %v720 = vpop.f32.mrb[0].mxu0
  %721 = vmatprep.mubr.f32.mxu0 0.0
  %722 = vmatmul.mubr.f32.gmra.mrb[0].mxu0 %v616
  %v723 = vpop.f32.mrb[0].mxu0
  %v724 = vadd.f32 0.0, %v723
  %v725 = vpop.f32.mrb[0].mxu0
  %726 = vmatprep.mubr.f32.mxu0 0.0
  %727 = vmatmul.mubr.f32.gmra.mrb[0].mxu0 %v617
  %v728 = vpop.f32.mrb[0].mxu0
  %v729 = vadd.f32 0.0, %v728
  %v730 = vpop.f32.mrb[0].mxu0
  %731 = vmatprep.mubr.f32.mxu0 0.0
  %732 = vmatmul.mubr.f32.gmra.mrb[0].mxu0 %v618
  %v733 = vpop.f32.mrb[0].mxu0
  %v734 = vadd.f32 0.0, %v733
  %v735 = vpop.f32.mrb[0].mxu0
  %736 = vmatprep.mubr.f32.mxu0 0.0
  %737 = vmatmul.mubr.f32.gmra.mrb[0].mxu0 %v619
  %v738 = vpop.f32.mrb[0].mxu0
  %v739 = vadd.f32 0.0, %v738
  %v740 = vpop.f32.mrb[0].mxu0
  %741 = vmatprep.mubr.f32.mxu0 0.0
  %742 = vmatmul.mubr.f32.gmra.mrb[0].mxu0 %v620
  %v743 = vpop.f32.mrb[0].mxu0
  %v744 = vadd.f32 0.0, %v743
  %v745 = vpop.f32.mrb[0].mxu0
  %746 = vdwg.mxu0
  %v747 = vadd.f32 %v569, %v704
  %v748 = vadd.f32 %v574, %v709
  %v749 = vadd.f32 %v579, %v714
  %v750 = vadd.f32 %v584, %v719
  %v751 = vadd.f32 %v589, %v724
  %v752 = vadd.f32 %v594, %v729
  %v753 = vadd.f32 %v599, %v734
  %v754 = vadd.f32 %v604, %v739
  %v755 = vadd.f32 %v609, %v744
  %v756 = vld [vmem:[#allocation2 + $0x6] sm:$0xff]
  %v757 = vld [vmem:[#allocation2 + $0xe] sm:$0xff]
  %v758 = vld [vmem:[#allocation2 + $0x16] sm:$0xff]
  %v759 = vld [vmem:[#allocation2 + $0x1e] sm:$0xff]
  %v760 = vld [vmem:[#allocation2 + $0x26] sm:$0xff]
  %v761 = vld [vmem:[#allocation2 + $0x2e] sm:$0xff]
  %v762 = vld [vmem:[#allocation2 + $0x36] sm:$0xff]
  %v763 = vld [vmem:[#allocation2 + $0x3e] sm:$0xff]
  %v764 = vld [vmem:[#allocation2 + $0x46] sm:$0xff]
  %v765 = vld [vmem:[%s4 + $0x180] sm:$0xff]
  %v766 = vld [vmem:[%s4 + $0x188] sm:$0xff]
  %v767 = vld [vmem:[%s4 + $0x190] sm:$0xff]
  %v768 = vld [vmem:[%s4 + $0x198] sm:$0xff]
  %v769 = vld [vmem:[%s4 + $0x1a0] sm:$0xff]
  %v770 = vld [vmem:[%s4 + $0x1a8] sm:$0xff]
  %v771 = vld [vmem:[%s4 + $0x1b0] sm:$0xff]
  %v772 = vld [vmem:[%s4 + $0x1b8] sm:$0xff]
  %v773 = vld [vmem:[%s4 + $0x1c0] sm:$0xff]
  %v774 = vld [vmem:[%s4 + $0x1c8] sm:$0xff]
  %v775 = vld [vmem:[%s4 + $0x1d0] sm:$0xff]
  %v776 = vld [vmem:[%s4 + $0x1d8] sm:$0xff]
  %v777 = vld [vmem:[%s4 + $0x1e0] sm:$0xff]
  %v778 = vld [vmem:[%s4 + $0x1e8] sm:$0xff]
  %v779 = vld [vmem:[%s4 + $0x1f0] sm:$0xff]
  %v780 = vld [vmem:[%s4 + $0x1f8] sm:$0xff]
  %781 = vmatprep.subr.mxu0 0.0
  %782 = vmatpush1.msra.mxu0 %v765
  %783 = vmatprep.subr.mxu0 0.0
  %784 = vmatpush1.msra.mxu0 %v766
  %785 = vmatprep.subr.mxu0 0.0
  %786 = vmatpush1.msra.mxu0 %v767
  %787 = vmatprep.subr.mxu0 0.0
  %788 = vmatpush1.msra.mxu0 %v768
  %789 = vmatprep.subr.mxu0 0.0
  %790 = vmatpush1.msra.mxu0 %v769
  %791 = vmatprep.subr.mxu0 0.0
  %792 = vmatpush1.msra.mxu0 %v770
  %793 = vmatprep.subr.mxu0 0.0
  %794 = vmatpush1.msra.mxu0 %v771
  %795 = vmatprep.subr.mxu0 0.0
  %796 = vmatpush1.msra.mxu0 %v772
  %797 = vmatprep.subr.mxu0 0.0
  %798 = vmatpush1.msra.mxu0 %v773
  %799 = vmatprep.subr.mxu0 0.0
  %800 = vmatpush1.msra.mxu0 %v774
  %801 = vmatprep.subr.mxu0 0.0
  %802 = vmatpush1.msra.mxu0 %v775
  %803 = vmatprep.subr.mxu0 0.0
  %804 = vmatpush1.msra.mxu0 %v776
  %805 = vmatprep.subr.mxu0 0.0
  %806 = vmatpush1.msra.mxu0 %v777
  %807 = vmatprep.subr.mxu0 0.0
  %808 = vmatpush1.msra.mxu0 %v778
  %809 = vmatprep.subr.mxu0 0.0
  %810 = vmatpush1.msra.mxu0 %v779
  %811 = vmatprep.subr.mxu0 0.0
  %812 = vmatpush1.msra.mxu0 %v780
  %813 = vmatprep.subr.mxu0 0.0
  %814 = vmatpush1.msra.mxu0 0.0
  %815 = vmatprep.subr.mxu0 0.0
  %816 = vmatpush1.msra.mxu0 0.0
  %817 = vmatprep.subr.mxu0 0.0
  %818 = vmatpush1.msra.mxu0 0.0
  %819 = vmatprep.subr.mxu0 0.0
  %820 = vmatpush1.msra.mxu0 0.0
  %821 = vmatprep.subr.mxu0 0.0
  %822 = vmatpush1.msra.mxu0 0.0
  %823 = vmatprep.subr.mxu0 0.0
  %824 = vmatpush1.msra.mxu0 0.0
  %825 = vmatprep.subr.mxu0 0.0
  %826 = vmatpush1.msra.mxu0 0.0
  %827 = vmatprep.subr.mxu0 0.0
  %828 = vmatpush1.msra.mxu0 0.0
  %829 = vmatprep.subr.mxu0 0.0
  %830 = vmatpush1.msra.mxu0 0.0
  %831 = vmatprep.subr.mxu0 0.0
  %832 = vmatpush1.msra.mxu0 0.0
  %833 = vmatprep.subr.mxu0 0.0
  %834 = vmatpush1.msra.mxu0 0.0
  %835 = vmatprep.subr.mxu0 0.0
  %836 = vmatpush1.msra.mxu0 0.0
  %837 = vmatprep.subr.mxu0 0.0
  %838 = vmatpush1.msra.mxu0 0.0
  %839 = vmatprep.subr.mxu0 0.0
  %840 = vmatpush1.msra.mxu0 0.0
  %841 = vmatprep.subr.mxu0 0.0
  %842 = vmatpush1.msra.mxu0 0.0
  %843 = vmatprep.subr.mxu0 0.0
  %844 = vmatpush1.msra.mxu0 0.0
  %845 = vmatprep.mubr.f32.mxu0 0.0
  %846 = vmatmul.mubr.f32.gmra.mrb[0].mxu0 %v756
  %v847 = vpop.f32.mrb[0].mxu0
  %v848 = vadd.f32 0.0, %v847
  %v849 = vpop.f32.mrb[0].mxu0
  %850 = vmatprep.mubr.f32.mxu0 0.0
  %851 = vmatmul.mubr.f32.gmra.mrb[0].mxu0 %v757
  %v852 = vpop.f32.mrb[0].mxu0
  %v853 = vadd.f32 0.0, %v852
  %v854 = vpop.f32.mrb[0].mxu0
  %855 = vmatprep.mubr.f32.mxu0 0.0
  %856 = vmatmul.mubr.f32.gmra.mrb[0].mxu0 %v758
  %v857 = vpop.f32.mrb[0].mxu0
  %v858 = vadd.f32 0.0, %v857
  %v859 = vpop.f32.mrb[0].mxu0
  %860 = vmatprep.mubr.f32.mxu0 0.0
  %861 = vmatmul.mubr.f32.gmra.mrb[0].mxu0 %v759
  %v862 = vpop.f32.mrb[0].mxu0
  %v863 = vadd.f32 0.0, %v862
  %v864 = vpop.f32.mrb[0].mxu0
  %865 = vmatprep.mubr.f32.mxu0 0.0
  %866 = vmatmul.mubr.f32.gmra.mrb[0].mxu0 %v760
  %v867 = vpop.f32.mrb[0].mxu0
  %v868 = vadd.f32 0.0, %v867
  %v869 = vpop.f32.mrb[0].mxu0
  %870 = vmatprep.mubr.f32.mxu0 0.0
  %871 = vmatmul.mubr.f32.gmra.mrb[0].mxu0 %v761
  %v872 = vpop.f32.mrb[0].mxu0
  %v873 = vadd.f32 0.0, %v872
  %v874 = vpop.f32.mrb[0].mxu0
  %875 = vmatprep.mubr.f32.mxu0 0.0
  %876 = vmatmul.mubr.f32.gmra.mrb[0].mxu0 %v762
  %v877 = vpop.f32.mrb[0].mxu0
  %v878 = vadd.f32 0.0, %v877
  %v879 = vpop.f32.mrb[0].mxu0
  %880 = vmatprep.mubr.f32.mxu0 0.0
  %881 = vmatmul.mubr.f32.gmra.mrb[0].mxu0 %v763
  %v882 = vpop.f32.mrb[0].mxu0
  %v883 = vadd.f32 0.0, %v882
  %v884 = vpop.f32.mrb[0].mxu0
  %885 = vmatprep.mubr.f32.mxu0 0.0
  %886 = vmatmul.mubr.f32.gmra.mrb[0].mxu0 %v764
  %v887 = vpop.f32.mrb[0].mxu0
  %v888 = vadd.f32 0.0, %v887
  %v889 = vpop.f32.mrb[0].mxu0
  %890 = vdwg.mxu0
  %v891 = vadd.f32 %v747, %v848
  %v892 = vadd.f32 %v748, %v853
  %v893 = vadd.f32 %v749, %v858
  %v894 = vadd.f32 %v750, %v863
  %v895 = vadd.f32 %v751, %v868
  %v896 = vadd.f32 %v752, %v873
  %v897 = vadd.f32 %v753, %v878
  %v898 = vadd.f32 %v754, %v883
  %v899 = vadd.f32 %v755, %v888
  %v900 = vld [vmem:[#allocation2 + $0x7] sm:$0xff]
  %v901 = vld [vmem:[#allocation2 + $0xf] sm:$0xff]
  %v902 = vld [vmem:[#allocation2 + $0x17] sm:$0xff]
  %v903 = vld [vmem:[#allocation2 + $0x1f] sm:$0xff]
  %v904 = vld [vmem:[#allocation2 + $0x27] sm:$0xff]
  %v905 = vld [vmem:[#allocation2 + $0x2f] sm:$0xff]
  %v906 = vld [vmem:[#allocation2 + $0x37] sm:$0xff]
  %v907 = vld [vmem:[#allocation2 + $0x3f] sm:$0xff]
  %v908 = vld [vmem:[#allocation2 + $0x47] sm:$0xff]
  %v909 = vld [vmem:[%s4 + $0x200] sm:$0xff]
  %v910 = vld [vmem:[%s4 + $0x208] sm:$0xff]
  %v911 = vld [vmem:[%s4 + $0x210] sm:$0xff]
  %v912 = vld [vmem:[%s4 + $0x218] sm:$0xff]
  %v913 = vld [vmem:[%s4 + $0x220] sm:$0xff]
  %v914 = vld [vmem:[%s4 + $0x228] sm:$0xff]
  %v915 = vld [vmem:[%s4 + $0x230] sm:$0xff]
  %v916 = vld [vmem:[%s4 + $0x238] sm:$0xff]
  %v917 = vld [vmem:[%s4 + $0x240] sm:$0xff]
  %v918 = vld [vmem:[%s4 + $0x248] sm:$0xff]
  %v919 = vld [vmem:[%s4 + $0x250] sm:$0xff]
  %v920 = vld [vmem:[%s4 + $0x258] sm:$0xff]
  %v921 = vld [vmem:[%s4 + $0x260] sm:$0xff]
  %v922 = vld [vmem:[%s4 + $0x268] sm:$0xff]
  %v923 = vld [vmem:[%s4 + $0x270] sm:$0xff]
  %v924 = vld [vmem:[%s4 + $0x278] sm:$0xff]
  %925 = vmatprep.subr.mxu0 0.0
  %926 = vmatpush1.msra.mxu0 %v909
  %927 = vmatprep.subr.mxu0 0.0
  %928 = vmatpush1.msra.mxu0 %v910
  %929 = vmatprep.subr.mxu0 0.0
  %930 = vmatpush1.msra.mxu0 %v911
  %931 = vmatprep.subr.mxu0 0.0
  %932 = vmatpush1.msra.mxu0 %v912
  %933 = vmatprep.subr.mxu0 0.0
  %934 = vmatpush1.msra.mxu0 %v913
  %935 = vmatprep.subr.mxu0 0.0
  %936 = vmatpush1.msra.mxu0 %v914
  %937 = vmatprep.subr.mxu0 0.0
  %938 = vmatpush1.msra.mxu0 %v915
  %939 = vmatprep.subr.mxu0 0.0
  %940 = vmatpush1.msra.mxu0 %v916
  %941 = vmatprep.subr.mxu0 0.0
  %942 = vmatpush1.msra.mxu0 %v917
  %943 = vmatprep.subr.mxu0 0.0
  %944 = vmatpush1.msra.mxu0 %v918
  %945 = vmatprep.subr.mxu0 0.0
  %946 = vmatpush1.msra.mxu0 %v919
  %947 = vmatprep.subr.mxu0 0.0
  %948 = vmatpush1.msra.mxu0 %v920
  %949 = vmatprep.subr.mxu0 0.0
  %950 = vmatpush1.msra.mxu0 %v921
  %951 = vmatprep.subr.mxu0 0.0
  %952 = vmatpush1.msra.mxu0 %v922
  %953 = vmatprep.subr.mxu0 0.0
  %954 = vmatpush1.msra.mxu0 %v923
  %955 = vmatprep.subr.mxu0 0.0
  %956 = vmatpush1.msra.mxu0 %v924
  %957 = vmatprep.subr.mxu0 0.0
  %958 = vmatpush1.msra.mxu0 0.0
  %959 = vmatprep.subr.mxu0 0.0
  %960 = vmatpush1.msra.mxu0 0.0
  %961 = vmatprep.subr.mxu0 0.0
  %962 = vmatpush1.msra.mxu0 0.0
  %963 = vmatprep.subr.mxu0 0.0
  %964 = vmatpush1.msra.mxu0 0.0
  %965 = vmatprep.subr.mxu0 0.0
  %966 = vmatpush1.msra.mxu0 0.0
  %967 = vmatprep.subr.mxu0 0.0
  %968 = vmatpush1.msra.mxu0 0.0
  %969 = vmatprep.subr.mxu0 0.0
  %970 = vmatpush1.msra.mxu0 0.0
  %971 = vmatprep.subr.mxu0 0.0
  %972 = vmatpush1.msra.mxu0 0.0
  %973 = vmatprep.subr.mxu0 0.0
  %974 = vmatpush1.msra.mxu0 0.0
  %975 = vmatprep.subr.mxu0 0.0
  %976 = vmatpush1.msra.mxu0 0.0
  %977 = vmatprep.subr.mxu0 0.0
  %978 = vmatpush1.msra.mxu0 0.0
  %979 = vmatprep.subr.mxu0 0.0
  %980 = vmatpush1.msra.mxu0 0.0
  %981 = vmatprep.subr.mxu0 0.0
  %982 = vmatpush1.msra.mxu0 0.0
  %983 = vmatprep.subr.mxu0 0.0
  %984 = vmatpush1.msra.mxu0 0.0
  %985 = vmatprep.subr.mxu0 0.0
  %986 = vmatpush1.msra.mxu0 0.0
  %987 = vmatprep.subr.mxu0 0.0
  %988 = vmatpush1.msra.mxu0 0.0
  %989 = vmatprep.mubr.f32.mxu0 0.0
  %990 = vmatmul.mubr.f32.gmra.mrb[0].mxu0 %v900
  %v991 = vpop.f32.mrb[0].mxu0
  %v992 = vadd.f32 0.0, %v991
  %v993 = vpop.f32.mrb[0].mxu0
  %994 = vmatprep.mubr.f32.mxu0 0.0
  %995 = vmatmul.mubr.f32.gmra.mrb[0].mxu0 %v901
  %v996 = vpop.f32.mrb[0].mxu0
  %v997 = vadd.f32 0.0, %v996
  %v998 = vpop.f32.mrb[0].mxu0
  %999 = vmatprep.mubr.f32.mxu0 0.0
  %1000 = vmatmul.mubr.f32.gmra.mrb[0].mxu0 %v902
  %v1001 = vpop.f32.mrb[0].mxu0
  %v1002 = vadd.f32 0.0, %v1001
  %v1003 = vpop.f32.mrb[0].mxu0
  %1004 = vmatprep.mubr.f32.mxu0 0.0
  %1005 = vmatmul.mubr.f32.gmra.mrb[0].mxu0 %v903
  %v1006 = vpop.f32.mrb[0].mxu0
  %v1007 = vadd.f32 0.0, %v1006
  %v1008 = vpop.f32.mrb[0].mxu0
  %1009 = vmatprep.mubr.f32.mxu0 0.0
  %1010 = vmatmul.mubr.f32.gmra.mrb[0].mxu0 %v904
  %v1011 = vpop.f32.mrb[0].mxu0
  %v1012 = vadd.f32 0.0, %v1011
  %v1013 = vpop.f32.mrb[0].mxu0
  %1014 = vmatprep.mubr.f32.mxu0 0.0
  %1015 = vmatmul.mubr.f32.gmra.mrb[0].mxu0 %v905
  %v1016 = vpop.f32.mrb[0].mxu0
  %v1017 = vadd.f32 0.0, %v1016
  %v1018 = vpop.f32.mrb[0].mxu0
  %1019 = vmatprep.mubr.f32.mxu0 0.0
  %1020 = vmatmul.mubr.f32.gmra.mrb[0].mxu0 %v906
  %v1021 = vpop.f32.mrb[0].mxu0
  %v1022 = vadd.f32 0.0, %v1021
  %v1023 = vpop.f32.mrb[0].mxu0
  %1024 = vmatprep.mubr.f32.mxu0 0.0
  %1025 = vmatmul.mubr.f32.gmra.mrb[0].mxu0 %v907
  %v1026 = vpop.f32.mrb[0].mxu0
  %v1027 = vadd.f32 0.0, %v1026
  %v1028 = vpop.f32.mrb[0].mxu0
  %1029 = vmatprep.mubr.f32.mxu0 0.0
  %1030 = vmatmul.mubr.f32.gmra.mrb[0].mxu0 %v908
  %v1031 = vpop.f32.mrb[0].mxu0
  %v1032 = vadd.f32 0.0, %v1031
  %v1033 = vpop.f32.mrb[0].mxu0
  %1034 = vdwg.mxu0
  %v1035 = vadd.f32 %v891, %v992
  %v1036 = vadd.f32 %v892, %v997
  %v1037 = vadd.f32 %v893, %v1002
  %v1038 = vadd.f32 %v894, %v1007
  %v1039 = vadd.f32 %v895, %v1012
  %v1040 = vadd.f32 %v896, %v1017
  %v1041 = vadd.f32 %v897, %v1022
  %v1042 = vadd.f32 %v898, %v1027
  %v1043 = vadd.f32 %v899, %v1032
  %v1044 = vld [vmem:[#allocation2 + $0x8] sm:$0xff]
  %v1045 = vld [vmem:[#allocation2 + $0x10] sm:$0xff]
  %v1046 = vld [vmem:[#allocation2 + $0x18] sm:$0xff]
  %v1047 = vld [vmem:[#allocation2 + $0x20] sm:$0xff]
  %v1048 = vld [vmem:[#allocation2 + $0x28] sm:$0xff]
  %v1049 = vld [vmem:[#allocation2 + $0x30] sm:$0xff]
  %v1050 = vld [vmem:[#allocation2 + $0x38] sm:$0xff]
  %v1051 = vld [vmem:[#allocation2 + $0x40] sm:$0xff]
  %v1052 = vld [vmem:[#allocation2 + $0x48] sm:$0xff]
  %v1053 = vld [vmem:[%s4 + $0x280] sm:$0xff]
  %v1054 = vld [vmem:[%s4 + $0x288] sm:$0xff]
  %v1055 = vld [vmem:[%s4 + $0x290] sm:$0xff]
  %v1056 = vld [vmem:[%s4 + $0x298] sm:$0xff]
  %v1057 = vld [vmem:[%s4 + $0x2a0] sm:$0xff]
  %v1058 = vld [vmem:[%s4 + $0x2a8] sm:$0xff]
  %v1059 = vld [vmem:[%s4 + $0x2b0] sm:$0xff]
  %v1060 = vld [vmem:[%s4 + $0x2b8] sm:$0xff]
  %v1061 = vld [vmem:[%s4 + $0x2c0] sm:$0xff]
  %v1062 = vld [vmem:[%s4 + $0x2c8] sm:$0xff]
  %v1063 = vld [vmem:[%s4 + $0x2d0] sm:$0xff]
  %v1064 = vld [vmem:[%s4 + $0x2d8] sm:$0xff]
  %v1065 = vld [vmem:[%s4 + $0x2e0] sm:$0xff]
  %v1066 = vld [vmem:[%s4 + $0x2e8] sm:$0xff]
  %v1067 = vld [vmem:[%s4 + $0x2f0] sm:$0xff]
  %v1068 = vld [vmem:[%s4 + $0x2f8] sm:$0xff]
  %1069 = vmatprep.subr.mxu0 0.0
  %1070 = vmatpush1.msra.mxu0 %v1053
  %1071 = vmatprep.subr.mxu0 0.0
  %1072 = vmatpush1.msra.mxu0 %v1054
  %1073 = vmatprep.subr.mxu0 0.0
  %1074 = vmatpush1.msra.mxu0 %v1055
  %1075 = vmatprep.subr.mxu0 0.0
  %1076 = vmatpush1.msra.mxu0 %v1056
  %1077 = vmatprep.subr.mxu0 0.0
  %1078 = vmatpush1.msra.mxu0 %v1057
  %1079 = vmatprep.subr.mxu0 0.0
  %1080 = vmatpush1.msra.mxu0 %v1058
  %1081 = vmatprep.subr.mxu0 0.0
  %1082 = vmatpush1.msra.mxu0 %v1059
  %1083 = vmatprep.subr.mxu0 0.0
  %1084 = vmatpush1.msra.mxu0 %v1060
  %1085 = vmatprep.subr.mxu0 0.0
  %1086 = vmatpush1.msra.mxu0 %v1061
  %1087 = vmatprep.subr.mxu0 0.0
  %1088 = vmatpush1.msra.mxu0 %v1062
  %1089 = vmatprep.subr.mxu0 0.0
  %1090 = vmatpush1.msra.mxu0 %v1063
  %1091 = vmatprep.subr.mxu0 0.0
  %1092 = vmatpush1.msra.mxu0 %v1064
  %1093 = vmatprep.subr.mxu0 0.0
  %1094 = vmatpush1.msra.mxu0 %v1065
  %1095 = vmatprep.subr.mxu0 0.0
  %1096 = vmatpush1.msra.mxu0 %v1066
  %1097 = vmatprep.subr.mxu0 0.0
  %1098 = vmatpush1.msra.mxu0 %v1067
  %1099 = vmatprep.subr.mxu0 0.0
  %1100 = vmatpush1.msra.mxu0 %v1068
  %1101 = vmatprep.subr.mxu0 0.0
  %1102 = vmatpush1.msra.mxu0 0.0
  %1103 = vmatprep.subr.mxu0 0.0
  %1104 = vmatpush1.msra.mxu0 0.0
  %1105 = vmatprep.subr.mxu0 0.0
  %1106 = vmatpush1.msra.mxu0 0.0
  %1107 = vmatprep.subr.mxu0 0.0
  %1108 = vmatpush1.msra.mxu0 0.0
  %1109 = vmatprep.subr.mxu0 0.0
  %1110 = vmatpush1.msra.mxu0 0.0
  %1111 = vmatprep.subr.mxu0 0.0
  %1112 = vmatpush1.msra.mxu0 0.0
  %1113 = vmatprep.subr.mxu0 0.0
  %1114 = vmatpush1.msra.mxu0 0.0
  %1115 = vmatprep.subr.mxu0 0.0
  %1116 = vmatpush1.msra.mxu0 0.0
  %1117 = vmatprep.subr.mxu0 0.0
  %1118 = vmatpush1.msra.mxu0 0.0
  %1119 = vmatprep.subr.mxu0 0.0
  %1120 = vmatpush1.msra.mxu0 0.0
  %1121 = vmatprep.subr.mxu0 0.0
  %1122 = vmatpush1.msra.mxu0 0.0
  %1123 = vmatprep.subr.mxu0 0.0
  %1124 = vmatpush1.msra.mxu0 0.0
  %1125 = vmatprep.subr.mxu0 0.0
  %1126 = vmatpush1.msra.mxu0 0.0
  %1127 = vmatprep.subr.mxu0 0.0
  %1128 = vmatpush1.msra.mxu0 0.0
  %1129 = vmatprep.subr.mxu0 0.0
  %1130 = vmatpush1.msra.mxu0 0.0
  %1131 = vmatprep.subr.mxu0 0.0
  %1132 = vmatpush1.msra.mxu0 0.0
  %1133 = vmatprep.mubr.f32.mxu0 0.0
  %1134 = vmatmul.mubr.f32.gmra.mrb[0].mxu0 %v1044
  %v1135 = vpop.f32.mrb[0].mxu0
  %v1136 = vadd.f32 0.0, %v1135
  %v1137 = vpop.f32.mrb[0].mxu0
  %1138 = vmatprep.mubr.f32.mxu0 0.0
  %1139 = vmatmul.mubr.f32.gmra.mrb[0].mxu0 %v1045
  %v1140 = vpop.f32.mrb[0].mxu0
  %v1141 = vadd.f32 0.0, %v1140
  %v1142 = vpop.f32.mrb[0].mxu0
  %1143 = vmatprep.mubr.f32.mxu0 0.0
  %1144 = vmatmul.mubr.f32.gmra.mrb[0].mxu0 %v1046
  %v1145 = vpop.f32.mrb[0].mxu0
  %v1146 = vadd.f32 0.0, %v1145
  %v1147 = vpop.f32.mrb[0].mxu0
  %1148 = vmatprep.mubr.f32.mxu0 0.0
  %1149 = vmatmul.mubr.f32.gmra.mrb[0].mxu0 %v1047
  %v1150 = vpop.f32.mrb[0].mxu0
  %v1151 = vadd.f32 0.0, %v1150
  %v1152 = vpop.f32.mrb[0].mxu0
  %1153 = vmatprep.mubr.f32.mxu0 0.0
  %1154 = vmatmul.mubr.f32.gmra.mrb[0].mxu0 %v1048
  %v1155 = vpop.f32.mrb[0].mxu0
  %v1156 = vadd.f32 0.0, %v1155
  %v1157 = vpop.f32.mrb[0].mxu0
  %1158 = vmatprep.mubr.f32.mxu0 0.0
  %1159 = vmatmul.mubr.f32.gmra.mrb[0].mxu0 %v1049
  %v1160 = vpop.f32.mrb[0].mxu0
  %v1161 = vadd.f32 0.0, %v1160
  %v1162 = vpop.f32.mrb[0].mxu0
  %1163 = vmatprep.mubr.f32.mxu0 0.0
  %1164 = vmatmul.mubr.f32.gmra.mrb[0].mxu0 %v1050
  %v1165 = vpop.f32.mrb[0].mxu0
  %v1166 = vadd.f32 0.0, %v1165
  %v1167 = vpop.f32.mrb[0].mxu0
  %1168 = vmatprep.mubr.f32.mxu0 0.0
  %1169 = vmatmul.mubr.f32.gmra.mrb[0].mxu0 %v1051
  %v1170 = vpop.f32.mrb[0].mxu0
  %v1171 = vadd.f32 0.0, %v1170
  %v1172 = vpop.f32.mrb[0].mxu0
  %1173 = vmatprep.mubr.f32.mxu0 0.0
  %1174 = vmatmul.mubr.f32.gmra.mrb[0].mxu0 %v1052
  %v1175 = vpop.f32.mrb[0].mxu0
  %v1176 = vadd.f32 0.0, %v1175
  %v1177 = vpop.f32.mrb[0].mxu0
  %1178 = vdwg.mxu0
  %v1179 = vadd.f32 %v1035, %v1136
  %v1180 = vadd.f32 %v1036, %v1141
  %v1181 = vadd.f32 %v1037, %v1146
  %v1182 = vadd.f32 %v1038, %v1151
  %v1183 = vadd.f32 %v1039, %v1156
  %v1184 = vadd.f32 %v1040, %v1161
  %v1185 = vadd.f32 %v1041, %v1166
  %v1186 = vadd.f32 %v1042, %v1171
  %v1187 = vadd.f32 %v1043, %v1176
  %v1188 = vld [vmem:[#allocation2 + $0xc] sm:$0xff]
  %v1189 = vld [vmem:[#allocation2 + $0x14] sm:$0xff]
  %v1190 = vld [vmem:[#allocation2 + $0x1c] sm:$0xff]
  %v1191 = vld [vmem:[#allocation2 + $0x24] sm:$0xff]
  %v1192 = vld [vmem:[#allocation2 + $0x2c] sm:$0xff]
  %v1193 = vld [vmem:[#allocation2 + $0x34] sm:$0xff]
  %v1194 = vld [vmem:[#allocation2 + $0x3c] sm:$0xff]
  %v1195 = vld [vmem:[#allocation2 + $0x44] sm:$0xff]
  %v1196 = vld [vmem:[#allocation2 + $0x4c] sm:$0xff]
  %v1197 = vld [vmem:[%s4 + $0x300] sm:$0xff]
  %v1198 = vld [vmem:[%s4 + $0x308] sm:$0xff]
  %v1199 = vld [vmem:[%s4 + $0x310] sm:$0xff]
  %v1200 = vld [vmem:[%s4 + $0x318] sm:$0xff]
  %v1201 = vld [vmem:[%s4 + $0x320] sm:$0xff]
  %v1202 = vld [vmem:[%s4 + $0x328] sm:$0xff]
  %v1203 = vld [vmem:[%s4 + $0x330] sm:$0xff]
  %v1204 = vld [vmem:[%s4 + $0x338] sm:$0xff]
  %v1205 = vld [vmem:[%s4 + $0x340] sm:$0xff]
  %v1206 = vld [vmem:[%s4 + $0x348] sm:$0xff]
  %v1207 = vld [vmem:[%s4 + $0x350] sm:$0xff]
  %v1208 = vld [vmem:[%s4 + $0x358] sm:$0xff]
  %v1209 = vld [vmem:[%s4 + $0x360] sm:$0xff]
  %v1210 = vld [vmem:[%s4 + $0x368] sm:$0xff]
  %v1211 = vld [vmem:[%s4 + $0x370] sm:$0xff]
  %v1212 = vld [vmem:[%s4 + $0x378] sm:$0xff]
  %1213 = vmatprep.subr.mxu0 0.0
  %1214 = vmatpush1.msra.mxu0 %v1197
  %1215 = vmatprep.subr.mxu0 0.0
  %1216 = vmatpush1.msra.mxu0 %v1198
  %1217 = vmatprep.subr.mxu0 0.0
  %1218 = vmatpush1.msra.mxu0 %v1199
  %1219 = vmatprep.subr.mxu0 0.0
  %1220 = vmatpush1.msra.mxu0 %v1200
  %1221 = vmatprep.subr.mxu0 0.0
  %1222 = vmatpush1.msra.mxu0 %v1201
  %1223 = vmatprep.subr.mxu0 0.0
  %1224 = vmatpush1.msra.mxu0 %v1202
  %1225 = vmatprep.subr.mxu0 0.0
  %1226 = vmatpush1.msra.mxu0 %v1203
  %1227 = vmatprep.subr.mxu0 0.0
  %1228 = vmatpush1.msra.mxu0 %v1204
  %1229 = vmatprep.subr.mxu0 0.0
  %1230 = vmatpush1.msra.mxu0 %v1205
  %1231 = vmatprep.subr.mxu0 0.0
  %1232 = vmatpush1.msra.mxu0 %v1206
  %1233 = vmatprep.subr.mxu0 0.0
  %1234 = vmatpush1.msra.mxu0 %v1207
  %1235 = vmatprep.subr.mxu0 0.0
  %1236 = vmatpush1.msra.mxu0 %v1208
  %1237 = vmatprep.subr.mxu0 0.0
  %1238 = vmatpush1.msra.mxu0 %v1209
  %1239 = vmatprep.subr.mxu0 0.0
  %1240 = vmatpush1.msra.mxu0 %v1210
  %1241 = vmatprep.subr.mxu0 0.0
  %1242 = vmatpush1.msra.mxu0 %v1211
  %1243 = vmatprep.subr.mxu0 0.0
  %1244 = vmatpush1.msra.mxu0 %v1212
  %1245 = vmatprep.subr.mxu0 0.0
  %1246 = vmatpush1.msra.mxu0 0.0
  %1247 = vmatprep.subr.mxu0 0.0
  %1248 = vmatpush1.msra.mxu0 0.0
  %1249 = vmatprep.subr.mxu0 0.0
  %1250 = vmatpush1.msra.mxu0 0.0
  %1251 = vmatprep.subr.mxu0 0.0
  %1252 = vmatpush1.msra.mxu0 0.0
  %1253 = vmatprep.subr.mxu0 0.0
  %1254 = vmatpush1.msra.mxu0 0.0
  %1255 = vmatprep.subr.mxu0 0.0
  %1256 = vmatpush1.msra.mxu0 0.0
  %1257 = vmatprep.subr.mxu0 0.0
  %1258 = vmatpush1.msra.mxu0 0.0
  %1259 = vmatprep.subr.mxu0 0.0
  %1260 = vmatpush1.msra.mxu0 0.0
  %1261 = vmatprep.subr.mxu0 0.0
  %1262 = vmatpush1.msra.mxu0 0.0
  %1263 = vmatprep.subr.mxu0 0.0
  %1264 = vmatpush1.msra.mxu0 0.0
  %1265 = vmatprep.subr.mxu0 0.0
  %1266 = vmatpush1.msra.mxu0 0.0
  %1267 = vmatprep.subr.mxu0 0.0
  %1268 = vmatpush1.msra.mxu0 0.0
  %1269 = vmatprep.subr.mxu0 0.0
  %1270 = vmatpush1.msra.mxu0 0.0
  %1271 = vmatprep.subr.mxu0 0.0
  %1272 = vmatpush1.msra.mxu0 0.0
  %1273 = vmatprep.subr.mxu0 0.0
  %1274 = vmatpush1.msra.mxu0 0.0
  %1275 = vmatprep.subr.mxu0 0.0
  %1276 = vmatpush1.msra.mxu0 0.0
  %1277 = vmatprep.mubr.f32.mxu0 0.0
  %1278 = vmatmul.mubr.f32.gmra.mrb[0].mxu0 %v1188
  %v1279 = vpop.f32.mrb[0].mxu0
  %v1280 = vadd.f32 0.0, %v1279
  %v1281 = vpop.f32.mrb[0].mxu0
  %1282 = vmatprep.mubr.f32.mxu0 0.0
  %1283 = vmatmul.mubr.f32.gmra.mrb[0].mxu0 %v1189
  %v1284 = vpop.f32.mrb[0].mxu0
  %v1285 = vadd.f32 0.0, %v1284
  %v1286 = vpop.f32.mrb[0].mxu0
  %1287 = vmatprep.mubr.f32.mxu0 0.0
  %1288 = vmatmul.mubr.f32.gmra.mrb[0].mxu0 %v1190
  %v1289 = vpop.f32.mrb[0].mxu0
  %v1290 = vadd.f32 0.0, %v1289
  %v1291 = vpop.f32.mrb[0].mxu0
  %1292 = vmatprep.mubr.f32.mxu0 0.0
  %1293 = vmatmul.mubr.f32.gmra.mrb[0].mxu0 %v1191
  %v1294 = vpop.f32.mrb[0].mxu0
  %v1295 = vadd.f32 0.0, %v1294
  %v1296 = vpop.f32.mrb[0].mxu0
  %1297 = vmatprep.mubr.f32.mxu0 0.0
  %1298 = vmatmul.mubr.f32.gmra.mrb[0].mxu0 %v1192
  %v1299 = vpop.f32.mrb[0].mxu0
  %v1300 = vadd.f32 0.0, %v1299
  %v1301 = vpop.f32.mrb[0].mxu0
  %1302 = vmatprep.mubr.f32.mxu0 0.0
  %1303 = vmatmul.mubr.f32.gmra.mrb[0].mxu0 %v1193
  %v1304 = vpop.f32.mrb[0].mxu0
  %v1305 = vadd.f32 0.0, %v1304
  %v1306 = vpop.f32.mrb[0].mxu0
  %1307 = vmatprep.mubr.f32.mxu0 0.0
  %1308 = vmatmul.mubr.f32.gmra.mrb[0].mxu0 %v1194
  %v1309 = vpop.f32.mrb[0].mxu0
  %v1310 = vadd.f32 0.0, %v1309
  %v1311 = vpop.f32.mrb[0].mxu0
  %1312 = vmatprep.mubr.f32.mxu0 0.0
  %1313 = vmatmul.mubr.f32.gmra.mrb[0].mxu0 %v1195
  %v1314 = vpop.f32.mrb[0].mxu0
  %v1315 = vadd.f32 0.0, %v1314
  %v1316 = vpop.f32.mrb[0].mxu0
  %1317 = vmatprep.mubr.f32.mxu0 0.0
  %1318 = vmatmul.mubr.f32.gmra.mrb[0].mxu0 %v1196
  %v1319 = vpop.f32.mrb[0].mxu0
  %v1320 = vadd.f32 0.0, %v1319
  %v1321 = vpop.f32.mrb[0].mxu0
  %1322 = vdwg.mxu0
  %v1323 = vadd.f32 %v1179, %v1280
  %v1324 = vadd.f32 %v1180, %v1285
  %v1325 = vadd.f32 %v1181, %v1290
  %v1326 = vadd.f32 %v1182, %v1295
  %v1327 = vadd.f32 %v1183, %v1300
  %v1328 = vadd.f32 %v1184, %v1305
  %v1329 = vadd.f32 %v1185, %v1310
  %v1330 = vadd.f32 %v1186, %v1315
  %v1331 = vadd.f32 %v1187, %v1320
  %v1332 = vld [vmem:[#allocation2 + $0xd] sm:$0xff]
  %v1333 = vld [vmem:[#allocation2 + $0x15] sm:$0xff]
  %v1334 = vld [vmem:[#allocation2 + $0x1d] sm:$0xff]
  %v1335 = vld [vmem:[#allocation2 + $0x25] sm:$0xff]
  %v1336 = vld [vmem:[#allocation2 + $0x2d] sm:$0xff]
  %v1337 = vld [vmem:[#allocation2 + $0x35] sm:$0xff]
  %v1338 = vld [vmem:[#allocation2 + $0x3d] sm:$0xff]
  %v1339 = vld [vmem:[#allocation2 + $0x45] sm:$0xff]
  %v1340 = vld [vmem:[#allocation2 + $0x4d] sm:$0xff]
  %v1341 = vld [vmem:[%s4 + $0x380] sm:$0xff]
  %v1342 = vld [vmem:[%s4 + $0x388] sm:$0xff]
  %v1343 = vld [vmem:[%s4 + $0x390] sm:$0xff]
  %v1344 = vld [vmem:[%s4 + $0x398] sm:$0xff]
  %v1345 = vld [vmem:[%s4 + $0x3a0] sm:$0xff]
  %v1346 = vld [vmem:[%s4 + $0x3a8] sm:$0xff]
  %v1347 = vld [vmem:[%s4 + $0x3b0] sm:$0xff]
  %v1348 = vld [vmem:[%s4 + $0x3b8] sm:$0xff]
  %v1349 = vld [vmem:[%s4 + $0x3c0] sm:$0xff]
  %v1350 = vld [vmem:[%s4 + $0x3c8] sm:$0xff]
  %v1351 = vld [vmem:[%s4 + $0x3d0] sm:$0xff]
  %v1352 = vld [vmem:[%s4 + $0x3d8] sm:$0xff]
  %v1353 = vld [vmem:[%s4 + $0x3e0] sm:$0xff]
  %v1354 = vld [vmem:[%s4 + $0x3e8] sm:$0xff]
  %v1355 = vld [vmem:[%s4 + $0x3f0] sm:$0xff]
  %v1356 = vld [vmem:[%s4 + $0x3f8] sm:$0xff]
  %1357 = vmatprep.subr.mxu0 0.0
  %1358 = vmatpush1.msra.mxu0 %v1341
  %1359 = vmatprep.subr.mxu0 0.0
  %1360 = vmatpush1.msra.mxu0 %v1342
  %1361 = vmatprep.subr.mxu0 0.0
  %1362 = vmatpush1.msra.mxu0 %v1343
  %1363 = vmatprep.subr.mxu0 0.0
  %1364 = vmatpush1.msra.mxu0 %v1344
  %1365 = vmatprep.subr.mxu0 0.0
  %1366 = vmatpush1.msra.mxu0 %v1345
  %1367 = vmatprep.subr.mxu0 0.0
  %1368 = vmatpush1.msra.mxu0 %v1346
  %1369 = vmatprep.subr.mxu0 0.0
  %1370 = vmatpush1.msra.mxu0 %v1347
  %1371 = vmatprep.subr.mxu0 0.0
  %1372 = vmatpush1.msra.mxu0 %v1348
  %1373 = vmatprep.subr.mxu0 0.0
  %1374 = vmatpush1.msra.mxu0 %v1349
  %1375 = vmatprep.subr.mxu0 0.0
  %1376 = vmatpush1.msra.mxu0 %v1350
  %1377 = vmatprep.subr.mxu0 0.0
  %1378 = vmatpush1.msra.mxu0 %v1351
  %1379 = vmatprep.subr.mxu0 0.0
  %1380 = vmatpush1.msra.mxu0 %v1352
  %1381 = vmatprep.subr.mxu0 0.0
  %1382 = vmatpush1.msra.mxu0 %v1353
  %1383 = vmatprep.subr.mxu0 0.0
  %1384 = vmatpush1.msra.mxu0 %v1354
  %1385 = vmatprep.subr.mxu0 0.0
  %1386 = vmatpush1.msra.mxu0 %v1355
  %1387 = vmatprep.subr.mxu0 0.0
  %1388 = vmatpush1.msra.mxu0 %v1356
  %1389 = vmatprep.subr.mxu0 0.0
  %1390 = vmatpush1.msra.mxu0 0.0
  %1391 = vmatprep.subr.mxu0 0.0
  %1392 = vmatpush1.msra.mxu0 0.0
  %1393 = vmatprep.subr.mxu0 0.0
  %1394 = vmatpush1.msra.mxu0 0.0
  %1395 = vmatprep.subr.mxu0 0.0
  %1396 = vmatpush1.msra.mxu0 0.0
  %1397 = vmatprep.subr.mxu0 0.0
  %1398 = vmatpush1.msra.mxu0 0.0
  %1399 = vmatprep.subr.mxu0 0.0
  %1400 = vmatpush1.msra.mxu0 0.0
  %1401 = vmatprep.subr.mxu0 0.0
  %1402 = vmatpush1.msra.mxu0 0.0
  %1403 = vmatprep.subr.mxu0 0.0
  %1404 = vmatpush1.msra.mxu0 0.0
  %1405 = vmatprep.subr.mxu0 0.0
  %1406 = vmatpush1.msra.mxu0 0.0
  %1407 = vmatprep.subr.mxu0 0.0
  %1408 = vmatpush1.msra.mxu0 0.0
  %1409 = vmatprep.subr.mxu0 0.0
  %1410 = vmatpush1.msra.mxu0 0.0
  %1411 = vmatprep.subr.mxu0 0.0
  %1412 = vmatpush1.msra.mxu0 0.0
  %1413 = vmatprep.subr.mxu0 0.0
  %1414 = vmatpush1.msra.mxu0 0.0
  %1415 = vmatprep.subr.mxu0 0.0
  %1416 = vmatpush1.msra.mxu0 0.0
  %1417 = vmatprep.subr.mxu0 0.0
  %1418 = vmatpush1.msra.mxu0 0.0
  %1419 = vmatprep.subr.mxu0 0.0
  %1420 = vmatpush1.msra.mxu0 0.0
  %1421 = vmatprep.mubr.f32.mxu0 0.0
  %1422 = vmatmul.mubr.f32.gmra.mrb[0].mxu0 %v1332
  %v1423 = vpop.f32.mrb[0].mxu0
  %v1424 = vadd.f32 0.0, %v1423
  %v1425 = vpop.f32.mrb[0].mxu0
  %1426 = vmatprep.mubr.f32.mxu0 0.0
  %1427 = vmatmul.mubr.f32.gmra.mrb[0].mxu0 %v1333
  %v1428 = vpop.f32.mrb[0].mxu0
  %v1429 = vadd.f32 0.0, %v1428
  %v1430 = vpop.f32.mrb[0].mxu0
  %1431 = vmatprep.mubr.f32.mxu0 0.0
  %1432 = vmatmul.mubr.f32.gmra.mrb[0].mxu0 %v1334
  %v1433 = vpop.f32.mrb[0].mxu0
  %v1434 = vadd.f32 0.0, %v1433
  %v1435 = vpop.f32.mrb[0].mxu0
  %1436 = vmatprep.mubr.f32.mxu0 0.0
  %1437 = vmatmul.mubr.f32.gmra.mrb[0].mxu0 %v1335
  %v1438 = vpop.f32.mrb[0].mxu0
  %v1439 = vadd.f32 0.0, %v1438
  %v1440 = vpop.f32.mrb[0].mxu0
  %1441 = vmatprep.mubr.f32.mxu0 0.0
  %1442 = vmatmul.mubr.f32.gmra.mrb[0].mxu0 %v1336
  %v1443 = vpop.f32.mrb[0].mxu0
  %v1444 = vadd.f32 0.0, %v1443
  %v1445 = vpop.f32.mrb[0].mxu0
  %1446 = vmatprep.mubr.f32.mxu0 0.0
  %1447 = vmatmul.mubr.f32.gmra.mrb[0].mxu0 %v1337
  %v1448 = vpop.f32.mrb[0].mxu0
  %v1449 = vadd.f32 0.0, %v1448
  %v1450 = vpop.f32.mrb[0].mxu0
  %1451 = vmatprep.mubr.f32.mxu0 0.0
  %1452 = vmatmul.mubr.f32.gmra.mrb[0].mxu0 %v1338
  %v1453 = vpop.f32.mrb[0].mxu0
  %v1454 = vadd.f32 0.0, %v1453
  %v1455 = vpop.f32.mrb[0].mxu0
  %1456 = vmatprep.mubr.f32.mxu0 0.0
  %1457 = vmatmul.mubr.f32.gmra.mrb[0].mxu0 %v1339
  %v1458 = vpop.f32.mrb[0].mxu0
  %v1459 = vadd.f32 0.0, %v1458
  %v1460 = vpop.f32.mrb[0].mxu0
  %1461 = vmatprep.mubr.f32.mxu0 0.0
  %1462 = vmatmul.mubr.f32.gmra.mrb[0].mxu0 %v1340
  %v1463 = vpop.f32.mrb[0].mxu0
  %v1464 = vadd.f32 0.0, %v1463
  %v1465 = vpop.f32.mrb[0].mxu0
  %1466 = vdwg.mxu0
  %v1467 = vadd.f32 %v1323, %v1424
  %v1468 = vadd.f32 %v1324, %v1429
  %v1469 = vadd.f32 %v1325, %v1434
  %v1470 = vadd.f32 %v1326, %v1439
  %v1471 = vadd.f32 %v1327, %v1444
  %v1472 = vadd.f32 %v1328, %v1449
  %v1473 = vadd.f32 %v1329, %v1454
  %v1474 = vadd.f32 %v1330, %v1459
  %v1475 = vadd.f32 %v1331, %v1464
  %v1476 = vld [vmem:[#allocation2 + $0xe] sm:$0xff]
  %v1477 = vld [vmem:[#allocation2 + $0x16] sm:$0xff]
  %v1478 = vld [vmem:[#allocation2 + $0x1e] sm:$0xff]
  %v1479 = vld [vmem:[#allocation2 + $0x26] sm:$0xff]
  %v1480 = vld [vmem:[#allocation2 + $0x2e] sm:$0xff]
  %v1481 = vld [vmem:[#allocation2 + $0x36] sm:$0xff]
  %v1482 = vld [vmem:[#allocation2 + $0x3e] sm:$0xff]
  %v1483 = vld [vmem:[#allocation2 + $0x46] sm:$0xff]
  %v1484 = vld [vmem:[#allocation2 + $0x4e] sm:$0xff]
  %v1485 = vld [vmem:[%s4 + $0x400] sm:$0xff]
  %v1486 = vld [vmem:[%s4 + $0x408] sm:$0xff]
  %v1487 = vld [vmem:[%s4 + $0x410] sm:$0xff]
  %v1488 = vld [vmem:[%s4 + $0x418] sm:$0xff]
  %v1489 = vld [vmem:[%s4 + $0x420] sm:$0xff]
  %v1490 = vld [vmem:[%s4 + $0x428] sm:$0xff]
  %v1491 = vld [vmem:[%s4 + $0x430] sm:$0xff]
  %v1492 = vld [vmem:[%s4 + $0x438] sm:$0xff]
  %v1493 = vld [vmem:[%s4 + $0x440] sm:$0xff]
  %v1494 = vld [vmem:[%s4 + $0x448] sm:$0xff]
  %v1495 = vld [vmem:[%s4 + $0x450] sm:$0xff]
  %v1496 = vld [vmem:[%s4 + $0x458] sm:$0xff]
  %v1497 = vld [vmem:[%s4 + $0x460] sm:$0xff]
  %v1498 = vld [vmem:[%s4 + $0x468] sm:$0xff]
  %v1499 = vld [vmem:[%s4 + $0x470] sm:$0xff]
  %v1500 = vld [vmem:[%s4 + $0x478] sm:$0xff]
  %1501 = vmatprep.subr.mxu0 0.0
  %1502 = vmatpush1.msra.mxu0 %v1485
  %1503 = vmatprep.subr.mxu0 0.0
  %1504 = vmatpush1.msra.mxu0 %v1486
  %1505 = vmatprep.subr.mxu0 0.0
  %1506 = vmatpush1.msra.mxu0 %v1487
  %1507 = vmatprep.subr.mxu0 0.0
  %1508 = vmatpush1.msra.mxu0 %v1488
  %1509 = vmatprep.subr.mxu0 0.0
  %1510 = vmatpush1.msra.mxu0 %v1489
  %1511 = vmatprep.subr.mxu0 0.0
  %1512 = vmatpush1.msra.mxu0 %v1490
  %1513 = vmatprep.subr.mxu0 0.0
  %1514 = vmatpush1.msra.mxu0 %v1491
  %1515 = vmatprep.subr.mxu0 0.0
  %1516 = vmatpush1.msra.mxu0 %v1492
  %1517 = vmatprep.subr.mxu0 0.0
  %1518 = vmatpush1.msra.mxu0 %v1493
  %1519 = vmatprep.subr.mxu0 0.0
  %1520 = vmatpush1.msra.mxu0 %v1494
  %1521 = vmatprep.subr.mxu0 0.0
  %1522 = vmatpush1.msra.mxu0 %v1495
  %1523 = vmatprep.subr.mxu0 0.0
  %1524 = vmatpush1.msra.mxu0 %v1496
  %1525 = vmatprep.subr.mxu0 0.0
  %1526 = vmatpush1.msra.mxu0 %v1497
  %1527 = vmatprep.subr.mxu0 0.0
  %1528 = vmatpush1.msra.mxu0 %v1498
  %1529 = vmatprep.subr.mxu0 0.0
  %1530 = vmatpush1.msra.mxu0 %v1499
  %1531 = vmatprep.subr.mxu0 0.0
  %1532 = vmatpush1.msra.mxu0 %v1500
  %1533 = vmatprep.subr.mxu0 0.0
  %1534 = vmatpush1.msra.mxu0 0.0
  %1535 = vmatprep.subr.mxu0 0.0
  %1536 = vmatpush1.msra.mxu0 0.0
  %1537 = vmatprep.subr.mxu0 0.0
  %1538 = vmatpush1.msra.mxu0 0.0
  %1539 = vmatprep.subr.mxu0 0.0
  %1540 = vmatpush1.msra.mxu0 0.0
  %1541 = vmatprep.subr.mxu0 0.0
  %1542 = vmatpush1.msra.mxu0 0.0
  %1543 = vmatprep.subr.mxu0 0.0
  %1544 = vmatpush1.msra.mxu0 0.0
  %1545 = vmatprep.subr.mxu0 0.0
  %1546 = vmatpush1.msra.mxu0 0.0
  %1547 = vmatprep.subr.mxu0 0.0
  %1548 = vmatpush1.msra.mxu0 0.0
  %1549 = vmatprep.subr.mxu0 0.0
  %1550 = vmatpush1.msra.mxu0 0.0
  %1551 = vmatprep.subr.mxu0 0.0
  %1552 = vmatpush1.msra.mxu0 0.0
  %1553 = vmatprep.subr.mxu0 0.0
  %1554 = vmatpush1.msra.mxu0 0.0
  %1555 = vmatprep.subr.mxu0 0.0
  %1556 = vmatpush1.msra.mxu0 0.0
  %1557 = vmatprep.subr.mxu0 0.0
  %1558 = vmatpush1.msra.mxu0 0.0
  %1559 = vmatprep.subr.mxu0 0.0
  %1560 = vmatpush1.msra.mxu0 0.0
  %1561 = vmatprep.subr.mxu0 0.0
  %1562 = vmatpush1.msra.mxu0 0.0
  %1563 = vmatprep.subr.mxu0 0.0
  %1564 = vmatpush1.msra.mxu0 0.0
  %1565 = vmatprep.mubr.f32.mxu0 0.0
  %1566 = vmatmul.mubr.f32.gmra.mrb[0].mxu0 %v1476
  %v1567 = vpop.f32.mrb[0].mxu0
  %v1568 = vadd.f32 0.0, %v1567
  %v1569 = vpop.f32.mrb[0].mxu0
  %1570 = vmatprep.mubr.f32.mxu0 0.0
  %1571 = vmatmul.mubr.f32.gmra.mrb[0].mxu0 %v1477
  %v1572 = vpop.f32.mrb[0].mxu0
  %v1573 = vadd.f32 0.0, %v1572
  %v1574 = vpop.f32.mrb[0].mxu0
  %1575 = vmatprep.mubr.f32.mxu0 0.0
  %1576 = vmatmul.mubr.f32.gmra.mrb[0].mxu0 %v1478
  %v1577 = vpop.f32.mrb[0].mxu0
  %v1578 = vadd.f32 0.0, %v1577
  %v1579 = vpop.f32.mrb[0].mxu0
  %1580 = vmatprep.mubr.f32.mxu0 0.0
  %1581 = vmatmul.mubr.f32.gmra.mrb[0].mxu0 %v1479
  %v1582 = vpop.f32.mrb[0].mxu0
  %v1583 = vadd.f32 0.0, %v1582
  %v1584 = vpop.f32.mrb[0].mxu0
  %1585 = vmatprep.mubr.f32.mxu0 0.0
  %1586 = vmatmul.mubr.f32.gmra.mrb[0].mxu0 %v1480
  %v1587 = vpop.f32.mrb[0].mxu0
  %v1588 = vadd.f32 0.0, %v1587
  %v1589 = vpop.f32.mrb[0].mxu0
  %1590 = vmatprep.mubr.f32.mxu0 0.0
  %1591 = vmatmul.mubr.f32.gmra.mrb[0].mxu0 %v1481
  %v1592 = vpop.f32.mrb[0].mxu0
  %v1593 = vadd.f32 0.0, %v1592
  %v1594 = vpop.f32.mrb[0].mxu0
  %1595 = vmatprep.mubr.f32.mxu0 0.0
  %1596 = vmatmul.mubr.f32.gmra.mrb[0].mxu0 %v1482
  %v1597 = vpop.f32.mrb[0].mxu0
  %v1598 = vadd.f32 0.0, %v1597
  %v1599 = vpop.f32.mrb[0].mxu0
  %1600 = vmatprep.mubr.f32.mxu0 0.0
  %1601 = vmatmul.mubr.f32.gmra.mrb[0].mxu0 %v1483
  %v1602 = vpop.f32.mrb[0].mxu0
  %v1603 = vadd.f32 0.0, %v1602
  %v1604 = vpop.f32.mrb[0].mxu0
  %1605 = vmatprep.mubr.f32.mxu0 0.0
  %1606 = vmatmul.mubr.f32.gmra.mrb[0].mxu0 %v1484
  %v1607 = vpop.f32.mrb[0].mxu0
  %v1608 = vadd.f32 0.0, %v1607
  %v1609 = vpop.f32.mrb[0].mxu0
  %1610 = vdwg.mxu0
  %v1611 = vadd.f32 %v1467, %v1568
  %v1612 = vadd.f32 %v1468, %v1573
  %v1613 = vadd.f32 %v1469, %v1578
  %v1614 = vadd.f32 %v1470, %v1583
  %v1615 = vadd.f32 %v1471, %v1588
  %v1616 = vadd.f32 %v1472, %v1593
  %v1617 = vadd.f32 %v1473, %v1598
  %v1618 = vadd.f32 %v1474, %v1603
  %v1619 = vadd.f32 %v1475, %v1608
  %1620 = vst [vmem:[%s27] sm:$0xff] %v1611
  %1621 = vst [vmem:[%s27 + $0x8] sm:$0xff] %v1612
  %1622 = vst [vmem:[%s27 + $0x10] sm:$0xff] %v1613
  %1623 = vst [vmem:[%s27 + $0x18] sm:$0xff] %v1614
  %1624 = vst [vmem:[%s27 + $0x20] sm:$0xff] %v1615
  %1625 = vst [vmem:[%s27 + $0x28] sm:$0xff] %v1616
  %1626 = vst [vmem:[%s27 + $0x30] sm:$0xff] %v1617
  %1627 = vst [vmem:[%s27 + $0x38] sm:$0xff] %v1618
  %1628 = vst [vmem:[%s27 + $0x40] sm:$0xff] %v1619
  %s1629 = sadd.s32 0, 1
  %s1630 = smul.u32 9, %s1629
  %p1631 = scmp.lt.s32.totalorder %s1630, 26
  %s1632 = scalar_select %p1631, %s1630, 26
  %s1633 = smul.addr %s1632, 8
  %s1634 = scalar_lea.vmem %s5, %s1633
  // Predicated region
  $region88: #{densenet_forward.25} parent=0 // pred_check
    _
  $region89: #{densenet_forward.25} parent=0 // pred_check_branch
    %1636 = sbr.rel (0) target = $region91
  $region90: #{densenet_forward.25} parent=0 // pred_region
    %s1637 = sadd.s32 0, 1
    %s1638 = smul.u32 9, %s1637
  $region91: #{densenet_forward.25} parent=0 // pred_fallthru
    _
  // Predicated region
  $region92: #{densenet_forward.25} parent=0 // pred_check
    _
  $region93: #{densenet_forward.25} parent=0 // pred_check_branch
    %1640 = sbr.rel (0) target = $region95
  $region94: #{densenet_forward.25} parent=0 // pred_region
    %s1641 = sadd.s32 0, 1
    %s1642 = smul.u32 9, %s1641
    %p1643 = scmp.lt.s32.totalorder %s1642, 26
    %s1644 = scalar_select %p1643, %s1642, 26
    %s1645 = smul.addr %s1644, 8
    %s1646 = scalar_lea.vmem %s5, %s1645
  $region95: #{densenet_forward.25} parent=0 // pred_fallthru
    _
  %1647 = vsyncmov [#allocation4]
  %s1648 = vpop.sfrf %1647
  %p1649 = scmp.eq.s32.totalorder %s1648, 0
  %p1650 = pneg %p1649
  %1652 = shalt.err (%p1650)
  %s1653 = scalar_lea.sflag [#allocation4], 1
  %1654 = vsyncmov %s1653
  %s1655 = vpop.sfrf %1654
  %p1656 = scmp.eq.s32.totalorder %s1655, 0
  %p1657 = pneg %p1656
  %1659 = shalt.err (%p1657)

// kernel: densenet_forward.29
$region0: #{densenet_forward.29}
  #allocation0 [shape = 'u32[]', space=smem, size = 0x4, offset = 0x4, fixed_abs, tag = 'smem constant byte address 0x4 - core index']
  #allocation1 [shape = 'u32[144,128]{1,0:T(1,128)}', space=vmem, size = 0x12000, scoped, tag = 'internal scratch']
  %s0 = inlined_call_operand.vmem [shape: f32[2,16,128], index: 0, kind: input, shape index: {}]
  %s1 = inlined_call_operand.vmem [shape: f32[128,128], index: 1, kind: input, shape index: {}]
  %s2 = inlined_call_operand.vmem [shape: f32[1,128], index: 2, kind: input, shape index: {}]
  %s3 = inlined_call_operand.hbm [shape: f32[2,1,128], index: 3, kind: output, shape index: {}]
  %s4 = sld [smem:[#allocation0]]
  $region45: #{densenet_forward.29} parent=0
    _
  %s6 = ssub.s32 1, %s4
  %s7 = scalar_select 0, %s6, %s4
  $region1: #{densenet_forward.29} parent=0
    #allocation2 [shape = 'u8[1024]{0}', space=vmem, size = 0x400, scoped, tag = 'output window, operand 0']
    #allocation3 [shape = 's32[2]{0}', space=sflag, size = 0x8, scoped, tag = 'scoped memory for densenet_forward.29']
    %8 = vsyncpa [#allocation3], 0
    %s9 = scalar_lea.sflag [#allocation3], 1
    %10 = vsyncpa %s9, 0
    loop: start=0, step=1, limit=4
    $region2: #{densenet_forward.29} parent=1 // loop_pre_header
      _
    $region3: #{densenet_forward.29} parent=1 // loop_header
      %s12 = sphi 0, %s16
      %p13 = scmp.ge.s32.totalorder %s12, 4
      %s22 = sphi 0, %s24
      %s25 = sphi 0, %s22
      %s26 = sphi 0, %s25
      %s42 = sphi 0, %s26
      %s46 = sphi 0, %s46
      %s48 = sphi 0, %s46
      %s49 = sphi 0, %s48
      %s63 = sphi 0, %s49
      %s67 = sphi 0, %s67
      %s69 = sphi 0, %s67
      %s70 = sphi 0, %s69
      %s84 = sphi 0, %s70
      %s90 = sphi 0, %s92
      %s93 = sphi 0, %s90
      %s94 = sphi 0, %s93
      %s110 = sphi 0, %s94
    $region4: #{densenet_forward.29} parent=1 // loop_header_branch
      %15 = sbr.rel (%p13) target = $region8
    $region5: #{densenet_forward.29} parent=1 // loop_body
      %s17 = ssub.s32 %s12, 1
      %s18 = ssub.s32 %s12, 2
      %s19 = sadd.s32 %s12, 1
      %s20 = ssub.s32 %s12, %s19
      %p21 = scmp.eq.s32.totalorder %s20, 0
      %s23 = sadd.s32 %s22, 1
      %s24 = scalar_select %p21, %s22, %s23
      %p27 = pneg %p21
      %p28 = scmp.eq.s32.totalorder %s12, 1
      %p29 = por %p27, %p28
      %p30 = scmp.ne.s32.totalorder %s22, %s25
      %p31 = scmp.eq.s32.totalorder %s12, 0
      %p32 = por %p30, %p31
      %p33 = scmp.ne.s32.totalorder %s22, %s25
      %p34 = scmp.eq.s32.totalorder %s17, 1
      %p35 = por %p33, %p34
      %p36 = scmp.ne.s32.totalorder %s25, %s26
      %p37 = scmp.eq.s32.totalorder %s17, 0
      %p38 = por %p36, %p37
      %p39 = scmp.ne.s32.totalorder %s25, %s26
      %p40 = scmp.eq.s32.totalorder %s18, 1
      %p41 = por %p39, %p40
      %p43 = scmp.ne.s32.totalorder %s26, %s42
      %p44 = scmp.eq.s32.totalorder %s18, 0
      %p45 = por %p43, %p44
      %s47 = sadd.s32 %s46, 1
      %p50 = scmp.eq.s32.totalorder %s12, 1
      %p51 = scmp.ne.s32.totalorder %s46, %s48
      %p52 = scmp.eq.s32.totalorder %s12, 0
      %p53 = por %p51, %p52
      %p54 = scmp.ne.s32.totalorder %s46, %s48
      %p55 = scmp.eq.s32.totalorder %s17, 1
      %p56 = por %p54, %p55
      %p57 = scmp.ne.s32.totalorder %s48, %s49
      %p58 = scmp.eq.s32.totalorder %s17, 0
      %p59 = por %p57, %p58
      %p60 = scmp.ne.s32.totalorder %s48, %s49
      %p61 = scmp.eq.s32.totalorder %s18, 1
      %p62 = por %p60, %p61
      %p64 = scmp.ne.s32.totalorder %s49, %s63
      %p65 = scmp.eq.s32.totalorder %s18, 0
      %p66 = por %p64, %p65
      %s68 = sadd.s32 %s67, 1
      %p71 = scmp.eq.s32.totalorder %s12, 1
      %p72 = scmp.ne.s32.totalorder %s67, %s69
      %p73 = scmp.eq.s32.totalorder %s12, 0
      %p74 = por %p72, %p73
      %p75 = scmp.ne.s32.totalorder %s67, %s69
      %p76 = scmp.eq.s32.totalorder %s17, 1
      %p77 = por %p75, %p76
      %p78 = scmp.ne.s32.totalorder %s69, %s70
      %p79 = scmp.eq.s32.totalorder %s17, 0
      %p80 = por %p78, %p79
      %p81 = scmp.ne.s32.totalorder %s69, %s70
      %p82 = scmp.eq.s32.totalorder %s18, 1
      %p83 = por %p81, %p82
      %p85 = scmp.ne.s32.totalorder %s70, %s84
      %p86 = scmp.eq.s32.totalorder %s18, 0
      %p87 = por %p85, %p86
      %s88 = ssub.s32 %s12, %s19
      %p89 = scmp.eq.s32.totalorder %s88, 0
      %s91 = sadd.s32 %s90, 1
      %s92 = scalar_select %p89, %s90, %s91
      %p95 = pneg %p89
      %p96 = scmp.eq.s32.totalorder %s12, 1
      %p97 = por %p95, %p96
      %p98 = scmp.ne.s32.totalorder %s90, %s93
      %p99 = scmp.eq.s32.totalorder %s12, 0
      %p100 = por %p98, %p99
      %p101 = scmp.ne.s32.totalorder %s90, %s93
      %p102 = scmp.eq.s32.totalorder %s17, 1
      %p103 = por %p101, %p102
      %p104 = scmp.ne.s32.totalorder %s93, %s94
      %p105 = scmp.eq.s32.totalorder %s17, 0
      %p106 = por %p104, %p105
      %p107 = scmp.ne.s32.totalorder %s93, %s94
      %p108 = scmp.eq.s32.totalorder %s18, 1
      %p109 = por %p107, %p108
      %p111 = scmp.ne.s32.totalorder %s94, %s110
      %p112 = scmp.eq.s32.totalorder %s18, 0
      %p113 = por %p111, %p112
      %p114 = scmp.le.s32.totalorder 1, %s12
      %p115 = scmp.lt.s32.totalorder %s12, 3
      %p116 = pnand %p114, %p115
      %p117 = pneg %p116
      // Predicated region
      $region9: #{densenet_forward.29} parent=5 // pred_check
        _
      $region10: #{densenet_forward.29} parent=5 // pred_check_branch
        %119 = sbr.rel (%p116) target = $region12
      $region11: #{densenet_forward.29} parent=5 // pred_region
        %s120 = ssub.s32 %s12, 1
        // Predicated region
        $region13: #{densenet_forward.29} parent=11 // pred_check
          %p121 = pneg %p59
        $region14: #{densenet_forward.29} parent=11 // pred_check_branch
          %123 = sbr.rel (%p121) target = $region16
        $region15: #{densenet_forward.29} parent=11 // pred_region
          _
        $region16: #{densenet_forward.29} parent=11 // pred_fallthru
          _
        // Predicated region
        $region17: #{densenet_forward.29} parent=11 // pred_check
          %p124 = pneg %p80
        $region18: #{densenet_forward.29} parent=11 // pred_check_branch
          %126 = sbr.rel (%p124) target = $region20
        $region19: #{densenet_forward.29} parent=11 // pred_region
          _
        $region20: #{densenet_forward.29} parent=11 // pred_fallthru
          _
      $region12: #{densenet_forward.29} parent=5 // pred_fallthru
        _
      %p127 = scmp.lt.s32.totalorder %s12, 2
      // Predicated region
      $region21: #{densenet_forward.29} parent=5 // pred_check
        %p128 = pneg %p127
      $region22: #{densenet_forward.29} parent=5 // pred_check_branch
        %130 = sbr.rel (%p128) target = $region24
      $region23: #{densenet_forward.29} parent=5 // pred_region
        // Predicated region
        $region25: #{densenet_forward.29} parent=23 // pred_check
          %p131 = pneg %p32
        $region26: #{densenet_forward.29} parent=23 // pred_check_branch
          %133 = sbr.rel (%p131) target = $region28
        $region27: #{densenet_forward.29} parent=23 // pred_region
          %p134 = scmp.lt.s32.totalorder %s12, 1
          %s135 = scalar_select %p134, %s12, 1
          %s136 = smul.addr %s135, 2
          %s137 = smul.addr %s136, 8
          %s138 = scalar_lea.vmem %s0, %s137
        $region28: #{densenet_forward.29} parent=23 // pred_fallthru
          _
      $region24: #{densenet_forward.29} parent=5 // pred_fallthru
        _
      %p139 = scmp.le.s32.totalorder 1, %s12
      %p140 = scmp.lt.s32.totalorder %s12, 3
      %p141 = pnand %p139, %p140
      %p142 = pneg %p141
      // Predicated region
      $region29: #{densenet_forward.29} parent=5 // pred_check
        _
      $region30: #{densenet_forward.29} parent=5 // pred_check_branch
        %144 = sbr.rel (%p141) target = $region32
      $region31: #{densenet_forward.29} parent=5 // pred_region
        %s145 = ssub.s32 %s12, 1
        %p146 = scmp.lt.s32.totalorder %s17, 1
        %s147 = scalar_select %p146, %s17, 1
        %s148 = smul.addr %s147, 2
        %s149 = smul.addr %s148, 8
        %s150 = scalar_lea.vmem %s0, %s149
        %p151 = pneg %p38
        %p152 = pneg %p35
        %p153 = pneg %p59
        %p154 = pneg %p56
        %p155 = pneg %p80
        %p156 = pneg %p77
        %p157 = pneg %p106
        %p158 = pneg %p103
        %s159 = sand.u32 %s93, 1
        %s160 = scalar_lea.sflag [#allocation3], %s159
        %s161 = sand.u32 %s93, 1
        %s162 = scalar_lea.vmem [#allocation2], %s161
        %p163 = scmp.lt.s32.totalorder %s17, 1
        %s164 = scalar_select %p163, %s17, 1
        %s165 = smul.addr %s164, 2
        %s166 = smul.addr %s165, 8
        %s167 = scalar_lea.vmem %s0, %s166
        %v168 = vld [vmem:[%s167] sm:$0xff]
        %v169 = vld [vmem:[%s167 + $0x8] sm:$0xff]
        %v170 = vadd.f32 %v168, %v169
        %v171 = vrot.slane %v170, 4
        %v172 = vadd.f32 %v170, %v171
        %v173 = vrot.slane %v172, 2
        %v174 = vadd.f32 %v172, %v173
        %v175 = vrot.slane %v174, 1
        %v176 = vadd.f32 %v174, %v175
        %v177 = vrcp.pop 16.0
        %v178 = vmul.f32 %v176, %v177
        %v179 = vld [vmem:[%s1] sm:$0xff]
        %v180 = vld [vmem:[%s1 + $0x8] sm:$0xff]
        %v181 = vld [vmem:[%s1 + $0x10] sm:$0xff]
        %v182 = vld [vmem:[%s1 + $0x18] sm:$0xff]
        %v183 = vld [vmem:[%s1 + $0x20] sm:$0xff]
        %v184 = vld [vmem:[%s1 + $0x28] sm:$0xff]
        %v185 = vld [vmem:[%s1 + $0x30] sm:$0xff]
        %v186 = vld [vmem:[%s1 + $0x38] sm:$0xff]
        %v187 = vld [vmem:[%s1 + $0x40] sm:$0xff]
        %v188 = vld [vmem:[%s1 + $0x48] sm:$0xff]
        %v189 = vld [vmem:[%s1 + $0x50] sm:$0xff]
        %v190 = vld [vmem:[%s1 + $0x58] sm:$0xff]
        %v191 = vld [vmem:[%s1 + $0x60] sm:$0xff]
        %v192 = vld [vmem:[%s1 + $0x68] sm:$0xff]
        %v193 = vld [vmem:[%s1 + $0x70] sm:$0xff]
        %v194 = vld [vmem:[%s1 + $0x78] sm:$0xff]
        %v195 = vld [vmem:[%s2] sm:$0x1]
        %196 = vmatprep.subr.mxu0 0.0
        %197 = vmatpush1.msra.mxu0 %v179
        %198 = vmatprep.subr.mxu0 0.0
        %199 = vmatpush1.msra.mxu0 %v180
        %200 = vmatprep.subr.mxu0 0.0
        %201 = vmatpush1.msra.mxu0 %v181
        %202 = vmatprep.subr.mxu0 0.0
        %203 = vmatpush1.msra.mxu0 %v182
        %204 = vmatprep.subr.mxu0 0.0
        %205 = vmatpush1.msra.mxu0 %v183
        %206 = vmatprep.subr.mxu0 0.0
        %207 = vmatpush1.msra.mxu0 %v184
        %208 = vmatprep.subr.mxu0 0.0
        %209 = vmatpush1.msra.mxu0 %v185
        %210 = vmatprep.subr.mxu0 0.0
        %211 = vmatpush1.msra.mxu0 %v186
        %212 = vmatprep.subr.mxu0 0.0
        %213 = vmatpush1.msra.mxu0 %v187
        %214 = vmatprep.subr.mxu0 0.0
        %215 = vmatpush1.msra.mxu0 %v188
        %216 = vmatprep.subr.mxu0 0.0
        %217 = vmatpush1.msra.mxu0 %v189
        %218 = vmatprep.subr.mxu0 0.0
        %219 = vmatpush1.msra.mxu0 %v190
        %220 = vmatprep.subr.mxu0 0.0
        %221 = vmatpush1.msra.mxu0 %v191
        %222 = vmatprep.subr.mxu0 0.0
        %223 = vmatpush1.msra.mxu0 %v192
        %224 = vmatprep.subr.mxu0 0.0
        %225 = vmatpush1.msra.mxu0 %v193
        %226 = vmatprep.subr.mxu0 0.0
        %227 = vmatpush1.msra.mxu0 %v194
        %228 = vmatprep.subr.mxu0 0.0
        %229 = vmatpush1.msra.mxu0 0.0
        %230 = vmatprep.subr.mxu0 0.0
        %231 = vmatpush1.msra.mxu0 0.0
        %232 = vmatprep.subr.mxu0 0.0
        %233 = vmatpush1.msra.mxu0 0.0
        %234 = vmatprep.subr.mxu0 0.0
        %235 = vmatpush1.msra.mxu0 0.0
        %236 = vmatprep.subr.mxu0 0.0
        %237 = vmatpush1.msra.mxu0 0.0
        %238 = vmatprep.subr.mxu0 0.0
        %239 = vmatpush1.msra.mxu0 0.0
        %240 = vmatprep.subr.mxu0 0.0
        %241 = vmatpush1.msra.mxu0 0.0
        %242 = vmatprep.subr.mxu0 0.0
        %243 = vmatpush1.msra.mxu0 0.0
        %244 = vmatprep.subr.mxu0 0.0
        %245 = vmatpush1.msra.mxu0 0.0
        %246 = vmatprep.subr.mxu0 0.0
        %247 = vmatpush1.msra.mxu0 0.0
        %248 = vmatprep.subr.mxu0 0.0
        %249 = vmatpush1.msra.mxu0 0.0
        %250 = vmatprep.subr.mxu0 0.0
        %251 = vmatpush1.msra.mxu0 0.0
        %252 = vmatprep.subr.mxu0 0.0
        %253 = vmatpush1.msra.mxu0 0.0
        %254 = vmatprep.subr.mxu0 0.0
        %255 = vmatpush1.msra.mxu0 0.0
        %256 = vmatprep.subr.mxu0 0.0
        %257 = vmatpush1.msra.mxu0 0.0
        %258 = vmatprep.subr.mxu0 0.0
        %259 = vmatpush1.msra.mxu0 0.0
        %260 = vmatprep.mubr.f32.mxu0 0.0
        %261 = vmatmul.mubr.f32.gmra.mrb[0].mxu0 %v178
        %v262 = vpop.f32.mrb[0].mxu0
        %v263 = vadd.f32 %v195, %v262
        %v264 = vpop.f32.mrb[0].mxu0
        %265 = vdwg.mxu0
        %266 = vst [vmem:[%s162] sm:$0x1] %v263
        %s267 = sand.u32 %s93, 1
        %s268 = scalar_lea.sflag [#allocation3], %s267
        %s269 = sand.u32 %s93, 1
        %s270 = scalar_lea.vmem [#allocation2], %s269
        // Predicated region
        $region33: #{densenet_forward.29} parent=31 // pred_check
          %p271 = pneg %p103
        $region34: #{densenet_forward.29} parent=31 // pred_check_branch
          %273 = sbr.rel (%p271) target = $region36
        $region35: #{densenet_forward.29} parent=31 // pred_region
          %s275 = ssub.s32 16, 16
          %276 = vsyncadd %s268, %s275
          %s277 = smul.addr %s17, 16
          %s278 = scalar_lea.hbm %s3, %s277
          %s280 = sshll.u32 %s270, 4
          %s281 = int_to_ptr.vmem [resolvable:$true] %s280
          %283 = dma.vmem_to_hbm [thread:$0]  %s281, 16, %s278, %s268
        $region36: #{densenet_forward.29} parent=31 // pred_fallthru
          _
      $region32: #{densenet_forward.29} parent=5 // pred_fallthru
        _
      %p284 = scmp.le.s32.totalorder 2, %s12
      // Predicated region
      $region37: #{densenet_forward.29} parent=5 // pred_check
        %p285 = pneg %p284
      $region38: #{densenet_forward.29} parent=5 // pred_check_branch
        %287 = sbr.rel (%p285) target = $region40
      $region39: #{densenet_forward.29} parent=5 // pred_region
        %s288 = ssub.s32 %s12, 2
        // Predicated region
        $region41: #{densenet_forward.29} parent=39 // pred_check
          %p289 = pneg %p109
        $region42: #{densenet_forward.29} parent=39 // pred_check_branch
          %291 = sbr.rel (%p289) target = $region44
        $region43: #{densenet_forward.29} parent=39 // pred_region
          %s292 = sand.u32 %s94, 1
          %s293 = scalar_lea.sflag [#allocation3], %s292
          %s294 = sand.u32 %s94, 1
          %s295 = scalar_lea.vmem [#allocation2], %s294
          %296 = dma.done %s293, 16
        $region44: #{densenet_forward.29} parent=39 // pred_fallthru
          _
      $region40: #{densenet_forward.29} parent=5 // pred_fallthru
        _
    $region6: #{densenet_forward.29} parent=1 // loop_footer
      %s16 = sadd.s32 1, %s12
    $region7: #{densenet_forward.29} parent=1 // loop_footer_branch
      %11 = sbr.rel target = $region3
    $region8: #{densenet_forward.29} parent=1 // loop_exit
      _
    %297 = vsyncpa [#allocation3], 1
    %s298 = scalar_lea.sflag [#allocation3], 1
    %299 = vsyncpa %s298, 1

// kernel: densenet_forward.28
$region0: #{densenet_forward.28}
  #allocation0 [shape = 'u32[]', space=smem, size = 0x4, offset = 0x4, fixed_abs, tag = 'smem constant byte address 0x4 - core index']
  #allocation1 [shape = 'u32[144,128]{1,0:T(1,128)}', space=vmem, size = 0x12000, scoped, tag = 'internal scratch']
  %s0 = inlined_call_operand.vmem [shape: f32[32,128], index: 0, kind: input, shape index: {}]
  %s1 = inlined_call_operand.vmem [shape: f32[1,128], index: 1, kind: input, shape index: {}]
  %s2 = inlined_call_operand.vmem [shape: f32[1,128], index: 2, kind: input, shape index: {}]
  %s3 = inlined_call_operand.vmem [shape: f32[32,1], index: 3, kind: input, shape index: {}]
  %s4 = inlined_call_operand.vmem [shape: f32[32,128], index: 4, kind: output, shape index: {}]
  %s5 = sld [smem:[#allocation0]]
  $region26: #{densenet_forward.28} parent=0
    _
  %s7 = ssub.s32 1, %s5
  %s8 = scalar_select 0, %s7, %s5
  // Predicated region
  $region2: #{densenet_forward.28} parent=0 // pred_check
    _
  $region3: #{densenet_forward.28} parent=0 // pred_check_branch
    %10 = sbr.rel (0) target = $region5
  $region4: #{densenet_forward.28} parent=0 // pred_region
    _
  $region5: #{densenet_forward.28} parent=0 // pred_fallthru
    _
  // Predicated region
  $region6: #{densenet_forward.28} parent=0 // pred_check
    _
  $region7: #{densenet_forward.28} parent=0 // pred_check_branch
    %12 = sbr.rel (0) target = $region9
  $region8: #{densenet_forward.28} parent=0 // pred_region
    _
  $region9: #{densenet_forward.28} parent=0 // pred_fallthru
    _
  // Predicated region
  $region10: #{densenet_forward.28} parent=0 // pred_check
    _
  $region11: #{densenet_forward.28} parent=0 // pred_check_branch
    %14 = sbr.rel (0) target = $region13
  $region12: #{densenet_forward.28} parent=0 // pred_region
    _
  $region13: #{densenet_forward.28} parent=0 // pred_fallthru
    _
  // Predicated region
  $region14: #{densenet_forward.28} parent=0 // pred_check
    _
  $region15: #{densenet_forward.28} parent=0 // pred_check_branch
    %16 = sbr.rel (0) target = $region17
  $region16: #{densenet_forward.28} parent=0 // pred_region
    _
  $region17: #{densenet_forward.28} parent=0 // pred_fallthru
    _
  %v17 = vld [vmem:[%s3] sm:$0xff]
  %v18 = vld [vmem:[%s3 + $0x8] sm:$0xff]
  %v19 = vld [vmem:[%s3 + $0x10] sm:$0xff]
  %v20 = vld [vmem:[%s3 + $0x18] sm:$0xff]
  %vm21 = vcmp.gt.f32.partialorder %v17, 0.0
  %vm22 = vcmp.gt.f32.partialorder %v18, 0.0
  %vm23 = vcmp.gt.f32.partialorder %v19, 0.0
  %vm24 = vcmp.gt.f32.partialorder %v20, 0.0
  %v25 = vld [vmem:[%s0] sm:$0xff]
  %v26 = vld [vmem:[%s0 + $0x8] sm:$0xff]
  %v27 = vld [vmem:[%s0 + $0x10] sm:$0xff]
  %v28 = vld [vmem:[%s0 + $0x18] sm:$0xff]
  %v29 = vld [vmem:[%s1] sm:$0x1]
  %v31 = vlaneseq
  %v32 = vshrl.u32 %v31, 7
  %v33 = vsub.s32 0, %v32
  %v34 = vrot.slane %v29, %v33
  %v36 = vmul.f32 %v25, %v34
  %v37 = vmul.f32 %v26, %v34
  %v38 = vmul.f32 %v27, %v34
  %v39 = vmul.f32 %v28, %v34
  %v40 = vld [vmem:[%s2] sm:$0x1]
  %v42 = vlaneseq
  %v43 = vshrl.u32 %v42, 7
  %v44 = vsub.s32 0, %v43
  %v45 = vrot.slane %v40, %v44
  %v47 = vadd.f32 %v36, %v45
  %v48 = vadd.f32 %v37, %v45
  %v49 = vadd.f32 %v38, %v45
  %v50 = vadd.f32 %v39, %v45
  %v51 = vmax.f32 %v47, 0.0
  %v52 = vmax.f32 %v48, 0.0
  %v53 = vmax.f32 %v49, 0.0
  %v54 = vmax.f32 %v50, 0.0
  %v55 = vsel %vm21, 1, 0
  %v56 = vsel %vm22, 1, 0
  %v57 = vsel %vm23, 1, 0
  %v58 = vsel %vm24, 1, 0
  %59 = vset.pattern.permute.xlu0 0
  %60 = vperm.xlu0 %59, %v55
  %v61 = vpop.permute.xlu0 %60
  %62 = vset.pattern.permute.xlu0 0
  %63 = vperm.xlu0 %62, %v56
  %v64 = vpop.permute.xlu0 %63
  %65 = vset.pattern.permute.xlu0 0
  %66 = vperm.xlu0 %65, %v57
  %v67 = vpop.permute.xlu0 %66
  %68 = vset.pattern.permute.xlu0 0
  %69 = vperm.xlu0 %68, %v58
  %v70 = vpop.permute.xlu0 %69
  %vm71 = vcmp.eq.s32.totalorder %v61, 1
  %vm72 = vcmp.eq.s32.totalorder %v64, 1
  %vm73 = vcmp.eq.s32.totalorder %v67, 1
  %vm74 = vcmp.eq.s32.totalorder %v70, 1
  %v75 = vsel %vm71, %v51, 0.0
  %v76 = vsel %vm72, %v52, 0.0
  %v77 = vsel %vm73, %v53, 0.0
  %v78 = vsel %vm74, %v54, 0.0
  %79 = vst [vmem:[%s4] sm:$0xff] %v75
  %80 = vst [vmem:[%s4 + $0x8] sm:$0xff] %v76
  %81 = vst [vmem:[%s4 + $0x10] sm:$0xff] %v77
  %82 = vst [vmem:[%s4 + $0x18] sm:$0xff] %v78
  // Predicated region
  $region18: #{densenet_forward.28} parent=0 // pred_check
    _
  $region19: #{densenet_forward.28} parent=0 // pred_check_branch
    %84 = sbr.rel (0) target = $region21
  $region20: #{densenet_forward.28} parent=0 // pred_region
    _
  $region21: #{densenet_forward.28} parent=0 // pred_fallthru
    _
  // Predicated region
  $region22: #{densenet_forward.28} parent=0 // pred_check
    _
  $region23: #{densenet_forward.28} parent=0 // pred_check_branch
    %86 = sbr.rel (0) target = $region25
  $region24: #{densenet_forward.28} parent=0 // pred_region
    _
  $region25: #{densenet_forward.28} parent=0 // pred_fallthru
    _

</llo_original>
